<compile_context>
chip_gen: v6e
topology: v6e:2x2x1
jax: 0.10.0
libtpu: 0.0.40
codegen_flags: <defaults>
</compile_context>

<pallas_src>
import math
import numpy as np
import jax
import jax.numpy as jnp
from jax import lax
from jax.experimental import pallas as pl
from jax.experimental.pallas import tpu as pltpu


# --------------------------------------------------------------------------- #
# Fused BasicBlock kernel
# --------------------------------------------------------------------------- #
def make_basic_block_kernel(T, C, M, H, W, alpha, v_threshold=1.0):
    Hp, Wp = H + 2, W + 2
    S = Hp * Wp                      # flattened padded plane
    MARGIN = Wp + 1                  # max |flat offset| of a 3x3 tap
    S_EXT = S + 2 * MARGIN           # flat plane + zero halo (so taps are static slices)
    offsets = [(ky - 1) * Wp + (kx - 1) for ky in range(3) for kx in range(3)]
    alpha = float(alpha)
    v_th = float(v_threshold)

    def kernel(x_ref, w1_ref, b1_ref, w2_ref, b2_ref, mask_ref, o_ref, s1x_ref):
        # x_ref  : (T, C, S_EXT) f32   padded + flattened input, one batch element
        # w1_ref : (9, M, C) f32       per-tap conv1 weights (BN1 scale folded in)
        # b1_ref : (M, 1)   f32        folded BN1 bias
        # w2_ref : (9, C, M) f32       per-tap conv2 weights (BN2 scale folded in)
        # b2_ref : (C, 1)   f32        folded BN2 bias
        # mask   : (1, S)   f32        1 on real HxW pixels of the padded plane, 0 on the ring
        # o_ref  : (T, C, S) f32       output spikes on the padded plane
        # s1x_ref: (M, S_EXT) f32      scratch: stage-1 spike plane with a zero halo
        s1x_ref[...] = jnp.zeros_like(s1x_ref)

        # bf16 operands for the MXU (f32 accumulation).  Weights are tiny -> cast once.
        w1 = w1_ref[...].astype(jnp.bfloat16)          # (9, M, C)
        w2 = w2_ref[...].astype(jnp.bfloat16)          # (9, C, M)
        b1 = b1_ref[...]                               # (M, 1)
        b2 = b2_ref[...]                               # (C, 1)
        mask = mask_ref[...]                           # (1, S)

        def step(t, carry):
            v1, v2 = carry
            x_t = x_ref[t]                             # (C, S_EXT) f32
            x_bf = x_t.astype(jnp.bfloat16)

            # ---- conv1 + BN1: fused im2col = 9 shifted-window matmuls, f32 accumulate.
            acc1 = jnp.zeros((M, S), jnp.float32)
            for tap in range(9):
                lo = MARGIN + offsets[tap]
                win = x_bf[:, lo:lo + S]               # (C, S) static lane slice
                acc1 = acc1 + jnp.dot(w1[tap], win,
                                      preferred_element_type=jnp.float32)
            y1 = acc1 + b1                             # (M, S)

            # ---- PLIF1 (hard reset, v_reset=0)
            v1 = v1 + (y1 - v1) * alpha
            s1 = (v1 >= v_th).astype(jnp.float32)
            v1 = v1 * (1.0 - s1)

            # Zero the padding ring (conv2's zero padding) and park s1 in the haloed scratch
            # so conv2's taps are again plain static slices.
            s1x_ref[:, MARGIN:MARGIN + S] = s1 * mask
            s1x = s1x_ref[...].astype(jnp.bfloat16)    # (M, S_EXT), spikes exact in bf16

            # ---- conv2 + BN2
            acc2 = jnp.zeros((C, S), jnp.float32)
            for tap in range(9):
                lo = MARGIN + offsets[tap]
                win = s1x[:, lo:lo + S]                # (M, S)
                acc2 = acc2 + jnp.dot(w2[tap], win,
                                      preferred_element_type=jnp.float32)
            y2 = acc2 + b2                             # (C, S)

            # ---- residual (f32, exact) + PLIF2, fused (no HBM round-trip for z)
            z = x_t[:, MARGIN:MARGIN + S] + y2
            v2 = v2 + (z - v2) * alpha
            s2 = (v2 >= v_th).astype(jnp.float32)
            v2 = v2 * (1.0 - s2)

            o_ref[t] = s2                              # lane-dense store (S >= 128 lanes)
            return (v1, v2)

        lax.fori_loop(
            0, T, step,
            (jnp.zeros((M, S), jnp.float32), jnp.zeros((C, S), jnp.float32)),
            unroll=(T <= 8))

    return kernel


def basic_block_forward(x, params):
    """x: [T, N, C, H, W] float32 -> [T, N, C, H, W] spikes (0/1 float32)."""
    T, N, C, H, W = x.shape
    M = params["w1_taps"].shape[1]
    Hp, Wp = H + 2, W + 2
    S = Hp * Wp
    MARGIN = Wp + 1
    S_EXT = S + 2 * MARGIN

    # Spatial zero-pad (conv pad=1), flatten HxW row-major (stays NCHW -> no transpose),
    # and add a flat halo of MARGIN zeros so every 3x3 tap is a static in-kernel slice.
    xp = jnp.pad(x, ((0, 0), (0, 0), (0, 0), (1, 1), (1, 1)))
    xf = xp.reshape(T, N, C, S)
    xe = jnp.pad(xf, ((0, 0), (0, 0), (0, 0), (MARGIN, MARGIN)))    # [T, N, C, S_EXT]

    # Interior mask: 1 where a padded-plane position is a real output pixel.
    hp = jnp.arange(Hp)
    wp = jnp.arange(Wp)
    interior = ((hp[:, None] >= 1) & (hp[:, None] <= H)
                & (wp[None, :] >= 1) & (wp[None, :] <= W))
    mask = interior.astype(jnp.float32).reshape(1, S)

    kernel = make_basic_block_kernel(T, C, M, H, W, params["alpha"])

    out_flat = pl.pallas_call(
        kernel,
        out_shape=jax.ShapeDtypeStruct((T, N, C, S), jnp.float32),
        grid_spec=pltpu.PrefetchScalarGridSpec(
            num_scalar_prefetch=0,
            grid=(N,),                     # batch-parallel; >=2 steps keeps both v7x TCs busy
            in_specs=[
                pl.BlockSpec((T, None, C, S_EXT), lambda n: (0, n, 0, 0)),
                pl.BlockSpec((9, M, C), lambda n: (0, 0, 0)),
                pl.BlockSpec((M, 1), lambda n: (0, 0)),
                pl.BlockSpec((9, C, M), lambda n: (0, 0, 0)),
                pl.BlockSpec((C, 1), lambda n: (0, 0)),
                pl.BlockSpec((1, S), lambda n: (0, 0)),
            ],
            out_specs=pl.BlockSpec((T, None, C, S), lambda n: (0, n, 0, 0)),
            scratch_shapes=[pltpu.VMEM((M, S_EXT), jnp.float32)],
        ),
        compiler_params=pltpu.CompilerParams(dimension_semantics=("parallel",)),
    )(xe, params["w1_taps"], params["bias1"].reshape(M, 1),
      params["w2_taps"], params["bias2"].reshape(C, 1), mask)

    # Un-flatten and drop the padded ring -> [T, N, C, H, W].
    return out_flat.reshape(T, N, C, Hp, Wp)[:, :, :, 1:H + 1, 1:W + 1]


# --------------------------------------------------------------------------- #
# Pure-JAX reference (independent indexing path, same bf16 operand quantization)
# --------------------------------------------------------------------------- #
def _conv3x3_bn_ref(x, w_taps, bias):
    """x: [T,N,Cin,H,W]; w_taps: [9,Cout,Cin] (BN scale folded); bias: [Cout]."""
    T, N, Ci, H, W = x.shape
    xp = jnp.pad(x, ((0, 0), (0, 0), (0, 0), (1, 1), (1, 1)))
    out = 0.0
    for ky in range(3):
        for kx in range(3):
            win = xp[:, :, :, ky:ky + H, kx:kx + W]
            win = win.astype(jnp.bfloat16).astype(jnp.float32)
            wt = w_taps[ky * 3 + kx].astype(jnp.bfloat16).astype(jnp.float32)
            out = out + jnp.einsum("oc,tnchw->tnohw", wt, win,
                                   precision=lax.Precision.HIGHEST)
    return out + bias[None, None, :, None, None]


def _plif_ref(x_seq, alpha, v_th=1.0):
    def step(v, x_t):
        v = v + (x_t - v) * alpha
        s = (v >= v_th).astype(jnp.float32)
        return v * (1.0 - s), s
    _, s = lax.scan(step, jnp.zeros_like(x_seq[0]), x_seq)
    return s


def basic_block_ref(x, params):
    a = params["alpha"]
    y1 = _conv3x3_bn_ref(x, params["w1_taps"], params["bias1"])
    s1 = _plif_ref(y1, a)
    y2 = _conv3x3_bn_ref(s1, params["w2_taps"], params["bias2"])
    return _plif_ref(x + y2, a)


# --------------------------------------------------------------------------- #
# Parameter construction (synthetic weights + eval-mode BN folding)
# --------------------------------------------------------------------------- #
def init_params(key, in_channels, mid_channels, eps=1e-5):
    ks = jax.random.split(key, 10)
    C, M = in_channels, mid_channels
    w1 = jax.random.normal(ks[0], (M, C, 3, 3), jnp.float32) / math.sqrt(9 * C)
    w2 = jax.random.normal(ks[1], (C, M, 3, 3), jnp.float32) / math.sqrt(9 * M)
    # BatchNorm (eval mode) synthetic affine / running stats
    g1 = 1.0 + 0.1 * jax.random.normal(ks[2], (M,), jnp.float32)
    b1 = 0.1 * jax.random.normal(ks[3], (M,), jnp.float32)
    m1 = 0.1 * jax.random.normal(ks[4], (M,), jnp.float32)
    v1 = 1.0 + 0.1 * jax.random.uniform(ks[5], (M,), jnp.float32)
    g2 = 1.0 + 0.1 * jax.random.normal(ks[6], (C,), jnp.float32)
    b2 = 0.1 * jax.random.normal(ks[7], (C,), jnp.float32)
    m2 = 0.1 * jax.random.normal(ks[8], (C,), jnp.float32)
    v2 = 1.0 + 0.1 * jax.random.uniform(ks[9], (C,), jnp.float32)

    scale1 = g1 / jnp.sqrt(v1 + eps)
    bias1 = b1 - m1 * scale1
    scale2 = g2 / jnp.sqrt(v2 + eps)
    bias2 = b2 - m2 * scale2

    # Fold BN scale into conv weights (kernel only adds bias); per-tap layout [9, Cout, Cin].
    w1f = w1 * scale1[:, None, None, None]
    w2f = w2 * scale2[:, None, None, None]
    w1_taps = jnp.transpose(w1f, (2, 3, 0, 1)).reshape(9, M, C)
    w2_taps = jnp.transpose(w2f, (2, 3, 0, 1)).reshape(9, C, M)

    # ParametricLIF: w = -log(init_tau - 1) = 0 -> alpha = sigmoid(0) = 0.5
    alpha = 1.0 / (1.0 + math.exp(math.log(2.0 - 1.0)))
    return dict(w1_taps=w1_taps, bias1=bias1, w2_taps=w2_taps, bias2=bias2, alpha=alpha)


# --------------------------------------------------------------------------- #
if __name__ == "__main__":
    T, N, C, H, W = 4, 2, 4, 16, 16       # time-steps, batch, channels, spatial
    MID = 8
    key = jax.random.PRNGKey(0)
    k_x, k_p = jax.random.split(key)
    x = jax.random.normal(k_x, (T, N, C, H, W), jnp.float32)
    params = init_params(k_p, C, MID)

    out = jax.block_until_ready(basic_block_forward(x, params))

    assert out.shape == (T, N, C, H, W)
    o = np.asarray(out)
    assert np.all((o == 0.0) | (o == 1.0)), "spikes must be binary"

    # Compare against a pure-JAX reference using the same bf16 operand quantization
    # (spikes are binary; allow a tiny fraction of threshold-boundary flips from
    # accumulation-order differences).
    ref = np.asarray(jax.block_until_ready(basic_block_ref(x, params)))
    mismatch = float(np.mean(o != ref))
    assert mismatch < 1e-2, f"mismatch fraction too high: {mismatch}"

    print("KERNEL_OK")
</pallas_src>

<mosaic_0001>
module attributes {stable_mosaic.version = 11 : i64} {
  func.func @kernel(%arg0: i32, %arg1: memref<4x1x4x362xf32, #tpu.memory_space<vmem>>, %arg2: memref<9x8x4xf32, #tpu.memory_space<vmem>>, %arg3: memref<8x1xf32, #tpu.memory_space<vmem>>, %arg4: memref<9x4x8xf32, #tpu.memory_space<vmem>>, %arg5: memref<4x1xf32, #tpu.memory_space<vmem>>, %arg6: memref<1x324xf32, #tpu.memory_space<vmem>>, %arg7: memref<4x1x4x324xf32, #tpu.memory_space<vmem>>, %arg8: memref<8x362xf32, #tpu.memory_space<vmem>>) attributes {dimension_semantics = [#tpu.dimension_semantics<parallel>], iteration_bounds = array<i64: 2>, scalar_prefetch = 0 : i64, scratch_operands = 1 : i64, tpu.core_type = #tpu.core_type<tc>, window_params = [{transform_indices = @transform_0, window_bounds = array<i64: 4, 1, 4, 362>}, {pipeline_mode = #tpu.pipeline_mode<synchronous>, transform_indices = @transform_1, window_bounds = array<i64: 9, 8, 4>}, {pipeline_mode = #tpu.pipeline_mode<synchronous>, transform_indices = @transform_2, window_bounds = array<i64: 8, 1>}, {pipeline_mode = #tpu.pipeline_mode<synchronous>, transform_indices = @transform_3, window_bounds = array<i64: 9, 4, 8>}, {pipeline_mode = #tpu.pipeline_mode<synchronous>, transform_indices = @transform_4, window_bounds = array<i64: 4, 1>}, {pipeline_mode = #tpu.pipeline_mode<synchronous>, transform_indices = @transform_5, window_bounds = array<i64: 1, 324>}, {transform_indices = @transform_6, window_bounds = array<i64: 4, 1, 4, 324>}]} {
    %cst = arith.constant 0.000000e+00 : f32
    %0 = vector.broadcast %cst : f32 to vector<8x362xf32>
    %c0 = arith.constant 0 : index
    %c0_0 = arith.constant 0 : index
    %1 = vector.load %arg8[%c0, %c0_0] : memref<8x362xf32, #tpu.memory_space<vmem>>, vector<8x362xf32>
    tpu.vector_store %arg8[%c0, %c0_0], %0 {strides = array<i32>} : memref<8x362xf32, #tpu.memory_space<vmem>>, vector<8x362xf32>,
    %c0_1 = arith.constant 0 : index
    %c0_2 = arith.constant 0 : index
    %c0_3 = arith.constant 0 : index
    %2 = vector.load %arg2[%c0_1, %c0_2, %c0_3] : memref<9x8x4xf32, #tpu.memory_space<vmem>>, vector<9x8x4xf32>
    %3 = arith.truncf %2 : vector<9x8x4xf32> to vector<9x8x4xbf16>
    %c0_4 = arith.constant 0 : index
    %c0_5 = arith.constant 0 : index
    %c0_6 = arith.constant 0 : index
    %4 = vector.load %arg4[%c0_4, %c0_5, %c0_6] : memref<9x4x8xf32, #tpu.memory_space<vmem>>, vector<9x4x8xf32>
    %5 = arith.truncf %4 : vector<9x4x8xf32> to vector<9x4x8xbf16>
    %c0_7 = arith.constant 0 : index
    %c0_8 = arith.constant 0 : index
    %6 = vector.load %arg3[%c0_7, %c0_8] : memref<8x1xf32, #tpu.memory_space<vmem>>, vector<8x1xf32>
    %c0_9 = arith.constant 0 : index
    %c0_10 = arith.constant 0 : index
    %7 = vector.load %arg5[%c0_9, %c0_10] : memref<4x1xf32, #tpu.memory_space<vmem>>, vector<4x1xf32>
    %c0_11 = arith.constant 0 : index
    %c0_12 = arith.constant 0 : index
    %8 = vector.load %arg6[%c0_11, %c0_12] : memref<1x324xf32, #tpu.memory_space<vmem>>, vector<1x324xf32>
    %cst_13 = arith.constant 0.000000e+00 : f32
    %9 = vector.broadcast %cst_13 : f32 to vector<8x324xf32>
    %cst_14 = arith.constant 0.000000e+00 : f32
    %10 = vector.broadcast %cst_14 : f32 to vector<4x324xf32>
    %c0_i32 = arith.constant 0 : i32
    %11 = arith.index_cast %c0_i32 : i32 to index
    %c0_15 = arith.constant 0 : index
    %c0_16 = arith.constant 0 : index
    %c0_17 = arith.constant 0 : index
    %12 = vector.load %arg1[%11, %c0_15, %c0_16, %c0_17] : memref<4x1x4x362xf32, #tpu.memory_space<vmem>>, vector<1x1x4x362xf32>
    %13 = vector.shape_cast %12 : vector<1x1x4x362xf32> to vector<4x362xf32>
    %14 = arith.truncf %13 : vector<4x362xf32> to vector<4x362xbf16>
    %cst_18 = arith.constant 0.000000e+00 : f32
    %15 = vector.broadcast %cst_18 : f32 to vector<8x324xf32>
    %16 = vector.extract_strided_slice %14 {offsets = [0, 0], sizes = [4, 324], strides = [1, 1]} : vector<4x362xbf16> to vector<4x324xbf16>
    %17 = vector.extract_strided_slice %3 {offsets = [0, 0, 0], sizes = [1, 8, 4], strides = [1, 1, 1]} : vector<9x8x4xbf16> to vector<1x8x4xbf16>
    %18 = vector.shape_cast %17 : vector<1x8x4xbf16> to vector<8x4xbf16>
    %cst_19 = arith.constant dense<0.000000e+00> : vector<8x324xf32>
    %19 = tpu.matmul %18, %16, %cst_19 {dimension_numbers = #tpu.dot_dimension_numbers<[1], [0], [0], [1], [0, 0, 1, 1], [], []>} : vector<8x4xbf16>, vector<4x324xbf16>, vector<8x324xf32> -> vector<8x324xf32>
    %20 = arith.addf %15, %19 : vector<8x324xf32>
    %21 = vector.extract_strided_slice %14 {offsets = [0, 1], sizes = [4, 324], strides = [1, 1]} : vector<4x362xbf16> to vector<4x324xbf16>
    %22 = vector.extract_strided_slice %3 {offsets = [1, 0, 0], sizes = [1, 8, 4], strides = [1, 1, 1]} : vector<9x8x4xbf16> to vector<1x8x4xbf16>
    %23 = vector.shape_cast %22 : vector<1x8x4xbf16> to vector<8x4xbf16>
    %cst_20 = arith.constant dense<0.000000e+00> : vector<8x324xf32>
    %24 = tpu.matmul %23, %21, %cst_20 {dimension_numbers = #tpu.dot_dimension_numbers<[1], [0], [0], [1], [0, 0, 1, 1], [], []>} : vector<8x4xbf16>, vector<4x324xbf16>, vector<8x324xf32> -> vector<8x324xf32>
    %25 = arith.addf %20, %24 : vector<8x324xf32>
    %26 = vector.extract_strided_slice %14 {offsets = [0, 2], sizes = [4, 324], strides = [1, 1]} : vector<4x362xbf16> to vector<4x324xbf16>
    %27 = vector.extract_strided_slice %3 {offsets = [2, 0, 0], sizes = [1, 8, 4], strides = [1, 1, 1]} : vector<9x8x4xbf16> to vector<1x8x4xbf16>
    %28 = vector.shape_cast %27 : vector<1x8x4xbf16> to vector<8x4xbf16>
    %cst_21 = arith.constant dense<0.000000e+00> : vector<8x324xf32>
    %29 = tpu.matmul %28, %26, %cst_21 {dimension_numbers = #tpu.dot_dimension_numbers<[1], [0], [0], [1], [0, 0, 1, 1], [], []>} : vector<8x4xbf16>, vector<4x324xbf16>, vector<8x324xf32> -> vector<8x324xf32>
    %30 = arith.addf %25, %29 : vector<8x324xf32>
    %31 = vector.extract_strided_slice %14 {offsets = [0, 18], sizes = [4, 324], strides = [1, 1]} : vector<4x362xbf16> to vector<4x324xbf16>
    %32 = vector.extract_strided_slice %3 {offsets = [3, 0, 0], sizes = [1, 8, 4], strides = [1, 1, 1]} : vector<9x8x4xbf16> to vector<1x8x4xbf16>
    %33 = vector.shape_cast %32 : vector<1x8x4xbf16> to vector<8x4xbf16>
    %cst_22 = arith.constant dense<0.000000e+00> : vector<8x324xf32>
    %34 = tpu.matmul %33, %31, %cst_22 {dimension_numbers = #tpu.dot_dimension_numbers<[1], [0], [0], [1], [0, 0, 1, 1], [], []>} : vector<8x4xbf16>, vector<4x324xbf16>, vector<8x324xf32> -> vector<8x324xf32>
    %35 = arith.addf %30, %34 : vector<8x324xf32>
    %36 = vector.extract_strided_slice %14 {offsets = [0, 19], sizes = [4, 324], strides = [1, 1]} : vector<4x362xbf16> to vector<4x324xbf16>
    %37 = vector.extract_strided_slice %3 {offsets = [4, 0, 0], sizes = [1, 8, 4], strides = [1, 1, 1]} : vector<9x8x4xbf16> to vector<1x8x4xbf16>
    %38 = vector.shape_cast %37 : vector<1x8x4xbf16> to vector<8x4xbf16>
    %cst_23 = arith.constant dense<0.000000e+00> : vector<8x324xf32>
    %39 = tpu.matmul %38, %36, %cst_23 {dimension_numbers = #tpu.dot_dimension_numbers<[1], [0], [0], [1], [0, 0, 1, 1], [], []>} : vector<8x4xbf16>, vector<4x324xbf16>, vector<8x324xf32> -> vector<8x324xf32>
    %40 = arith.addf %35, %39 : vector<8x324xf32>
    %41 = vector.extract_strided_slice %14 {offsets = [0, 20], sizes = [4, 324], strides = [1, 1]} : vector<4x362xbf16> to vector<4x324xbf16>
    %42 = vector.extract_strided_slice %3 {offsets = [5, 0, 0], sizes = [1, 8, 4], strides = [1, 1, 1]} : vector<9x8x4xbf16> to vector<1x8x4xbf16>
    %43 = vector.shape_cast %42 : vector<1x8x4xbf16> to vector<8x4xbf16>
    %cst_24 = arith.constant dense<0.000000e+00> : vector<8x324xf32>
    %44 = tpu.matmul %43, %41, %cst_24 {dimension_numbers = #tpu.dot_dimension_numbers<[1], [0], [0], [1], [0, 0, 1, 1], [], []>} : vector<8x4xbf16>, vector<4x324xbf16>, vector<8x324xf32> -> vector<8x324xf32>
    %45 = arith.addf %40, %44 : vector<8x324xf32>
    %46 = vector.extract_strided_slice %14 {offsets = [0, 36], sizes = [4, 324], strides = [1, 1]} : vector<4x362xbf16> to vector<4x324xbf16>
    %47 = vector.extract_strided_slice %3 {offsets = [6, 0, 0], sizes = [1, 8, 4], strides = [1, 1, 1]} : vector<9x8x4xbf16> to vector<1x8x4xbf16>
    %48 = vector.shape_cast %47 : vector<1x8x4xbf16> to vector<8x4xbf16>
    %cst_25 = arith.constant dense<0.000000e+00> : vector<8x324xf32>
    %49 = tpu.matmul %48, %46, %cst_25 {dimension_numbers = #tpu.dot_dimension_numbers<[1], [0], [0], [1], [0, 0, 1, 1], [], []>} : vector<8x4xbf16>, vector<4x324xbf16>, vector<8x324xf32> -> vector<8x324xf32>
    %50 = arith.addf %45, %49 : vector<8x324xf32>
    %51 = vector.extract_strided_slice %14 {offsets = [0, 37], sizes = [4, 324], strides = [1, 1]} : vector<4x362xbf16> to vector<4x324xbf16>
    %52 = vector.extract_strided_slice %3 {offsets = [7, 0, 0], sizes = [1, 8, 4], strides = [1, 1, 1]} : vector<9x8x4xbf16> to vector<1x8x4xbf16>
    %53 = vector.shape_cast %52 : vector<1x8x4xbf16> to vector<8x4xbf16>
    %cst_26 = arith.constant dense<0.000000e+00> : vector<8x324xf32>
    %54 = tpu.matmul %53, %51, %cst_26 {dimension_numbers = #tpu.dot_dimension_numbers<[1], [0], [0], [1], [0, 0, 1, 1], [], []>} : vector<8x4xbf16>, vector<4x324xbf16>, vector<8x324xf32> -> vector<8x324xf32>
    %55 = arith.addf %50, %54 : vector<8x324xf32>
    %56 = vector.extract_strided_slice %14 {offsets = [0, 38], sizes = [4, 324], strides = [1, 1]} : vector<4x362xbf16> to vector<4x324xbf16>
    %57 = vector.extract_strided_slice %3 {offsets = [8, 0, 0], sizes = [1, 8, 4], strides = [1, 1, 1]} : vector<9x8x4xbf16> to vector<1x8x4xbf16>
    %58 = vector.shape_cast %57 : vector<1x8x4xbf16> to vector<8x4xbf16>
    %cst_27 = arith.constant dense<0.000000e+00> : vector<8x324xf32>
    %59 = tpu.matmul %58, %56, %cst_27 {dimension_numbers = #tpu.dot_dimension_numbers<[1], [0], [0], [1], [0, 0, 1, 1], [], []>} : vector<8x4xbf16>, vector<4x324xbf16>, vector<8x324xf32> -> vector<8x324xf32>
    %60 = arith.addf %55, %59 : vector<8x324xf32>
    %61 = vector.broadcast %6 : vector<8x1xf32> to vector<8x324xf32>
    %62 = arith.addf %60, %61 : vector<8x324xf32>
    %63 = arith.subf %62, %9 : vector<8x324xf32>
    %cst_28 = arith.constant 5.000000e-01 : f32
    %64 = vector.broadcast %cst_28 : f32 to vector<8x324xf32>
    %65 = arith.mulf %63, %64 : vector<8x324xf32>
    %66 = arith.addf %9, %65 : vector<8x324xf32>
    %cst_29 = arith.constant 1.000000e+00 : f32
    %67 = vector.broadcast %cst_29 : f32 to vector<8x324xf32>
    %68 = arith.cmpf oge, %66, %67 : vector<8x324xf32>
    %69 = arith.extui %68 : vector<8x324xi1> to vector<8x324xi32>
    %70 = arith.sitofp %69 : vector<8x324xi32> to vector<8x324xf32>
    %cst_30 = arith.constant 1.000000e+00 : f32
    %71 = vector.broadcast %cst_30 : f32 to vector<8x324xf32>
    %72 = arith.subf %71, %70 : vector<8x324xf32>
    %73 = arith.mulf %66, %72 : vector<8x324xf32>
    %74 = vector.broadcast %8 : vector<1x324xf32> to vector<8x324xf32>
    %75 = arith.mulf %70, %74 : vector<8x324xf32>
    %c0_31 = arith.constant 0 : index
    %c19 = arith.constant 19 : index
    %76 = vector.load %arg8[%c0_31, %c19] : memref<8x362xf32, #tpu.memory_space<vmem>>, vector<8x324xf32>
    tpu.vector_store %arg8[%c0_31, %c19], %75 {strides = array<i32>} : memref<8x362xf32, #tpu.memory_space<vmem>>, vector<8x324xf32>,
    %c0_32 = arith.constant 0 : index
    %c0_33 = arith.constant 0 : index
    %77 = vector.load %arg8[%c0_32, %c0_33] : memref<8x362xf32, #tpu.memory_space<vmem>>, vector<8x362xf32>
    %78 = arith.truncf %77 : vector<8x362xf32> to vector<8x362xbf16>
    %cst_34 = arith.constant 0.000000e+00 : f32
    %79 = vector.broadcast %cst_34 : f32 to vector<4x324xf32>
    %80 = vector.extract_strided_slice %78 {offsets = [0, 0], sizes = [8, 324], strides = [1, 1]} : vector<8x362xbf16> to vector<8x324xbf16>
    %81 = vector.extract_strided_slice %5 {offsets = [0, 0, 0], sizes = [1, 4, 8], strides = [1, 1, 1]} : vector<9x4x8xbf16> to vector<1x4x8xbf16>
    %82 = vector.shape_cast %81 : vector<1x4x8xbf16> to vector<4x8xbf16>
    %cst_35 = arith.constant dense<0.000000e+00> : vector<4x324xf32>
    %83 = tpu.matmul %82, %80, %cst_35 {dimension_numbers = #tpu.dot_dimension_numbers<[1], [0], [0], [1], [0, 0, 1, 1], [], []>} : vector<4x8xbf16>, vector<8x324xbf16>, vector<4x324xf32> -> vector<4x324xf32>
    %84 = arith.addf %79, %83 : vector<4x324xf32>
    %85 = vector.extract_strided_slice %78 {offsets = [0, 1], sizes = [8, 324], strides = [1, 1]} : vector<8x362xbf16> to vector<8x324xbf16>
    %86 = vector.extract_strided_slice %5 {offsets = [1, 0, 0], sizes = [1, 4, 8], strides = [1, 1, 1]} : vector<9x4x8xbf16> to vector<1x4x8xbf16>
    %87 = vector.shape_cast %86 : vector<1x4x8xbf16> to vector<4x8xbf16>
    %cst_36 = arith.constant dense<0.000000e+00> : vector<4x324xf32>
    %88 = tpu.matmul %87, %85, %cst_36 {dimension_numbers = #tpu.dot_dimension_numbers<[1], [0], [0], [1], [0, 0, 1, 1], [], []>} : vector<4x8xbf16>, vector<8x324xbf16>, vector<4x324xf32> -> vector<4x324xf32>
    %89 = arith.addf %84, %88 : vector<4x324xf32>
    %90 = vector.extract_strided_slice %78 {offsets = [0, 2], sizes = [8, 324], strides = [1, 1]} : vector<8x362xbf16> to vector<8x324xbf16>
    %91 = vector.extract_strided_slice %5 {offsets = [2, 0, 0], sizes = [1, 4, 8], strides = [1, 1, 1]} : vector<9x4x8xbf16> to vector<1x4x8xbf16>
    %92 = vector.shape_cast %91 : vector<1x4x8xbf16> to vector<4x8xbf16>
    %cst_37 = arith.constant dense<0.000000e+00> : vector<4x324xf32>
    %93 = tpu.matmul %92, %90, %cst_37 {dimension_numbers = #tpu.dot_dimension_numbers<[1], [0], [0], [1], [0, 0, 1, 1], [], []>} : vector<4x8xbf16>, vector<8x324xbf16>, vector<4x324xf32> -> vector<4x324xf32>
    %94 = arith.addf %89, %93 : vector<4x324xf32>
    %95 = vector.extract_strided_slice %78 {offsets = [0, 18], sizes = [8, 324], strides = [1, 1]} : vector<8x362xbf16> to vector<8x324xbf16>
    %96 = vector.extract_strided_slice %5 {offsets = [3, 0, 0], sizes = [1, 4, 8], strides = [1, 1, 1]} : vector<9x4x8xbf16> to vector<1x4x8xbf16>
    %97 = vector.shape_cast %96 : vector<1x4x8xbf16> to vector<4x8xbf16>
    %cst_38 = arith.constant dense<0.000000e+00> : vector<4x324xf32>
    %98 = tpu.matmul %97, %95, %cst_38 {dimension_numbers = #tpu.dot_dimension_numbers<[1], [0], [0], [1], [0, 0, 1, 1], [], []>} : vector<4x8xbf16>, vector<8x324xbf16>, vector<4x324xf32> -> vector<4x324xf32>
    %99 = arith.addf %94, %98 : vector<4x324xf32>
    %100 = vector.extract_strided_slice %78 {offsets = [0, 19], sizes = [8, 324], strides = [1, 1]} : vector<8x362xbf16> to vector<8x324xbf16>
    %101 = vector.extract_strided_slice %5 {offsets = [4, 0, 0], sizes = [1, 4, 8], strides = [1, 1, 1]} : vector<9x4x8xbf16> to vector<1x4x8xbf16>
    %102 = vector.shape_cast %101 : vector<1x4x8xbf16> to vector<4x8xbf16>
    %cst_39 = arith.constant dense<0.000000e+00> : vector<4x324xf32>
    %103 = tpu.matmul %102, %100, %cst_39 {dimension_numbers = #tpu.dot_dimension_numbers<[1], [0], [0], [1], [0, 0, 1, 1], [], []>} : vector<4x8xbf16>, vector<8x324xbf16>, vector<4x324xf32> -> vector<4x324xf32>
    %104 = arith.addf %99, %103 : vector<4x324xf32>
    %105 = vector.extract_strided_slice %78 {offsets = [0, 20], sizes = [8, 324], strides = [1, 1]} : vector<8x362xbf16> to vector<8x324xbf16>
    %106 = vector.extract_strided_slice %5 {offsets = [5, 0, 0], sizes = [1, 4, 8], strides = [1, 1, 1]} : vector<9x4x8xbf16> to vector<1x4x8xbf16>
    %107 = vector.shape_cast %106 : vector<1x4x8xbf16> to vector<4x8xbf16>
    %cst_40 = arith.constant dense<0.000000e+00> : vector<4x324xf32>
    %108 = tpu.matmul %107, %105, %cst_40 {dimension_numbers = #tpu.dot_dimension_numbers<[1], [0], [0], [1], [0, 0, 1, 1], [], []>} : vector<4x8xbf16>, vector<8x324xbf16>, vector<4x324xf32> -> vector<4x324xf32>
    %109 = arith.addf %104, %108 : vector<4x324xf32>
    %110 = vector.extract_strided_slice %78 {offsets = [0, 36], sizes = [8, 324], strides = [1, 1]} : vector<8x362xbf16> to vector<8x324xbf16>
    %111 = vector.extract_strided_slice %5 {offsets = [6, 0, 0], sizes = [1, 4, 8], strides = [1, 1, 1]} : vector<9x4x8xbf16> to vector<1x4x8xbf16>
    %112 = vector.shape_cast %111 : vector<1x4x8xbf16> to vector<4x8xbf16>
    %cst_41 = arith.constant dense<0.000000e+00> : vector<4x324xf32>
    %113 = tpu.matmul %112, %110, %cst_41 {dimension_numbers = #tpu.dot_dimension_numbers<[1], [0], [0], [1], [0, 0, 1, 1], [], []>} : vector<4x8xbf16>, vector<8x324xbf16>, vector<4x324xf32> -> vector<4x324xf32>
    %114 = arith.addf %109, %113 : vector<4x324xf32>
    %115 = vector.extract_strided_slice %78 {offsets = [0, 37], sizes = [8, 324], strides = [1, 1]} : vector<8x362xbf16> to vector<8x324xbf16>
    %116 = vector.extract_strided_slice %5 {offsets = [7, 0, 0], sizes = [1, 4, 8], strides = [1, 1, 1]} : vector<9x4x8xbf16> to vector<1x4x8xbf16>
    %117 = vector.shape_cast %116 : vector<1x4x8xbf16> to vector<4x8xbf16>
    %cst_42 = arith.constant dense<0.000000e+00> : vector<4x324xf32>
    %118 = tpu.matmul %117, %115, %cst_42 {dimension_numbers = #tpu.dot_dimension_numbers<[1], [0], [0], [1], [0, 0, 1, 1], [], []>} : vector<4x8xbf16>, vector<8x324xbf16>, vector<4x324xf32> -> vector<4x324xf32>
    %119 = arith.addf %114, %118 : vector<4x324xf32>
    %120 = vector.extract_strided_slice %78 {offsets = [0, 38], sizes = [8, 324], strides = [1, 1]} : vector<8x362xbf16> to vector<8x324xbf16>
    %121 = vector.extract_strided_slice %5 {offsets = [8, 0, 0], sizes = [1, 4, 8], strides = [1, 1, 1]} : vector<9x4x8xbf16> to vector<1x4x8xbf16>
    %122 = vector.shape_cast %121 : vector<1x4x8xbf16> to vector<4x8xbf16>
    %cst_43 = arith.constant dense<0.000000e+00> : vector<4x324xf32>
    %123 = tpu.matmul %122, %120, %cst_43 {dimension_numbers = #tpu.dot_dimension_numbers<[1], [0], [0], [1], [0, 0, 1, 1], [], []>} : vector<4x8xbf16>, vector<8x324xbf16>, vector<4x324xf32> -> vector<4x324xf32>
    %124 = arith.addf %119, %123 : vector<4x324xf32>
    %125 = vector.broadcast %7 : vector<4x1xf32> to vector<4x324xf32>
    %126 = arith.addf %124, %125 : vector<4x324xf32>
    %127 = vector.extract_strided_slice %13 {offsets = [0, 19], sizes = [4, 324], strides = [1, 1]} : vector<4x362xf32> to vector<4x324xf32>
    %128 = arith.addf %127, %126 : vector<4x324xf32>
    %129 = arith.subf %128, %10 : vector<4x324xf32>
    %cst_44 = arith.constant 5.000000e-01 : f32
    %130 = vector.broadcast %cst_44 : f32 to vector<4x324xf32>
    %131 = arith.mulf %129, %130 : vector<4x324xf32>
    %132 = arith.addf %10, %131 : vector<4x324xf32>
    %cst_45 = arith.constant 1.000000e+00 : f32
    %133 = vector.broadcast %cst_45 : f32 to vector<4x324xf32>
    %134 = arith.cmpf oge, %132, %133 : vector<4x324xf32>
    %135 = arith.extui %134 : vector<4x324xi1> to vector<4x324xi32>
    %136 = arith.sitofp %135 : vector<4x324xi32> to vector<4x324xf32>
    %cst_46 = arith.constant 1.000000e+00 : f32
    %137 = vector.broadcast %cst_46 : f32 to vector<4x324xf32>
    %138 = arith.subf %137, %136 : vector<4x324xf32>
    %139 = arith.mulf %132, %138 : vector<4x324xf32>
    %140 = arith.index_cast %c0_i32 : i32 to index
    %c0_47 = arith.constant 0 : index
    %c0_48 = arith.constant 0 : index
    %c0_49 = arith.constant 0 : index
    %141 = vector.load %arg7[%140, %c0_47, %c0_48, %c0_49] : memref<4x1x4x324xf32, #tpu.memory_space<vmem>>, vector<1x1x4x324xf32>
    %142 = vector.shape_cast %141 : vector<1x1x4x324xf32> to vector<4x324xf32>
    %143 = vector.shape_cast %136 : vector<4x324xf32> to vector<1x1x4x324xf32>
    tpu.vector_store %arg7[%140, %c0_47, %c0_48, %c0_49], %143 {strides = array<i32>} : memref<4x1x4x324xf32, #tpu.memory_space<vmem>>, vector<1x1x4x324xf32>,
    %c1_i32 = arith.constant 1 : i32
    %144 = arith.index_cast %c1_i32 : i32 to index
    %c0_50 = arith.constant 0 : index
    %c0_51 = arith.constant 0 : index
    %c0_52 = arith.constant 0 : index
    %145 = vector.load %arg1[%144, %c0_50, %c0_51, %c0_52] : memref<4x1x4x362xf32, #tpu.memory_space<vmem>>, vector<1x1x4x362xf32>
    %146 = vector.shape_cast %145 : vector<1x1x4x362xf32> to vector<4x362xf32>
    %147 = arith.truncf %146 : vector<4x362xf32> to vector<4x362xbf16>
    %cst_53 = arith.constant 0.000000e+00 : f32
    %148 = vector.broadcast %cst_53 : f32 to vector<8x324xf32>
    %149 = vector.extract_strided_slice %147 {offsets = [0, 0], sizes = [4, 324], strides = [1, 1]} : vector<4x362xbf16> to vector<4x324xbf16>
    %150 = vector.extract_strided_slice %3 {offsets = [0, 0, 0], sizes = [1, 8, 4], strides = [1, 1, 1]} : vector<9x8x4xbf16> to vector<1x8x4xbf16>
    %151 = vector.shape_cast %150 : vector<1x8x4xbf16> to vector<8x4xbf16>
    %cst_54 = arith.constant dense<0.000000e+00> : vector<8x324xf32>
    %152 = tpu.matmul %151, %149, %cst_54 {dimension_numbers = #tpu.dot_dimension_numbers<[1], [0], [0], [1], [0, 0, 1, 1], [], []>} : vector<8x4xbf16>, vector<4x324xbf16>, vector<8x324xf32> -> vector<8x324xf32>
    %153 = arith.addf %148, %152 : vector<8x324xf32>
    %154 = vector.extract_strided_slice %147 {offsets = [0, 1], sizes = [4, 324], strides = [1, 1]} : vector<4x362xbf16> to vector<4x324xbf16>
    %155 = vector.extract_strided_slice %3 {offsets = [1, 0, 0], sizes = [1, 8, 4], strides = [1, 1, 1]} : vector<9x8x4xbf16> to vector<1x8x4xbf16>
    %156 = vector.shape_cast %155 : vector<1x8x4xbf16> to vector<8x4xbf16>
    %cst_55 = arith.constant dense<0.000000e+00> : vector<8x324xf32>
    %157 = tpu.matmul %156, %154, %cst_55 {dimension_numbers = #tpu.dot_dimension_numbers<[1], [0], [0], [1], [0, 0, 1, 1], [], []>} : vector<8x4xbf16>, vector<4x324xbf16>, vector<8x324xf32> -> vector<8x324xf32>
    %158 = arith.addf %153, %157 : vector<8x324xf32>
    %159 = vector.extract_strided_slice %147 {offsets = [0, 2], sizes = [4, 324], strides = [1, 1]} : vector<4x362xbf16> to vector<4x324xbf16>
    %160 = vector.extract_strided_slice %3 {offsets = [2, 0, 0], sizes = [1, 8, 4], strides = [1, 1, 1]} : vector<9x8x4xbf16> to vector<1x8x4xbf16>
    %161 = vector.shape_cast %160 : vector<1x8x4xbf16> to vector<8x4xbf16>
    %cst_56 = arith.constant dense<0.000000e+00> : vector<8x324xf32>
    %162 = tpu.matmul %161, %159, %cst_56 {dimension_numbers = #tpu.dot_dimension_numbers<[1], [0], [0], [1], [0, 0, 1, 1], [], []>} : vector<8x4xbf16>, vector<4x324xbf16>, vector<8x324xf32> -> vector<8x324xf32>
    %163 = arith.addf %158, %162 : vector<8x324xf32>
    %164 = vector.extract_strided_slice %147 {offsets = [0, 18], sizes = [4, 324], strides = [1, 1]} : vector<4x362xbf16> to vector<4x324xbf16>
    %165 = vector.extract_strided_slice %3 {offsets = [3, 0, 0], sizes = [1, 8, 4], strides = [1, 1, 1]} : vector<9x8x4xbf16> to vector<1x8x4xbf16>
    %166 = vector.shape_cast %165 : vector<1x8x4xbf16> to vector<8x4xbf16>
    %cst_57 = arith.constant dense<0.000000e+00> : vector<8x324xf32>
    %167 = tpu.matmul %166, %164, %cst_57 {dimension_numbers = #tpu.dot_dimension_numbers<[1], [0], [0], [1], [0, 0, 1, 1], [], []>} : vector<8x4xbf16>, vector<4x324xbf16>, vector<8x324xf32> -> vector<8x324xf32>
    %168 = arith.addf %163, %167 : vector<8x324xf32>
    %169 = vector.extract_strided_slice %147 {offsets = [0, 19], sizes = [4, 324], strides = [1, 1]} : vector<4x362xbf16> to vector<4x324xbf16>
    %170 = vector.extract_strided_slice %3 {offsets = [4, 0, 0], sizes = [1, 8, 4], strides = [1, 1, 1]} : vector<9x8x4xbf16> to vector<1x8x4xbf16>
    %171 = vector.shape_cast %170 : vector<1x8x4xbf16> to vector<8x4xbf16>
    %cst_58 = arith.constant dense<0.000000e+00> : vector<8x324xf32>
    %172 = tpu.matmul %171, %169, %cst_58 {dimension_numbers = #tpu.dot_dimension_numbers<[1], [0], [0], [1], [0, 0, 1, 1], [], []>} : vector<8x4xbf16>, vector<4x324xbf16>, vector<8x324xf32> -> vector<8x324xf32>
    %173 = arith.addf %168, %172 : vector<8x324xf32>
    %174 = vector.extract_strided_slice %147 {offsets = [0, 20], sizes = [4, 324], strides = [1, 1]} : vector<4x362xbf16> to vector<4x324xbf16>
    %175 = vector.extract_strided_slice %3 {offsets = [5, 0, 0], sizes = [1, 8, 4], strides = [1, 1, 1]} : vector<9x8x4xbf16> to vector<1x8x4xbf16>
    %176 = vector.shape_cast %175 : vector<1x8x4xbf16> to vector<8x4xbf16>
    %cst_59 = arith.constant dense<0.000000e+00> : vector<8x324xf32>
    %177 = tpu.matmul %176, %174, %cst_59 {dimension_numbers = #tpu.dot_dimension_numbers<[1], [0], [0], [1], [0, 0, 1, 1], [], []>} : vector<8x4xbf16>, vector<4x324xbf16>, vector<8x324xf32> -> vector<8x324xf32>
    %178 = arith.addf %173, %177 : vector<8x324xf32>
    %179 = vector.extract_strided_slice %147 {offsets = [0, 36], sizes = [4, 324], strides = [1, 1]} : vector<4x362xbf16> to vector<4x324xbf16>
    %180 = vector.extract_strided_slice %3 {offsets = [6, 0, 0], sizes = [1, 8, 4], strides = [1, 1, 1]} : vector<9x8x4xbf16> to vector<1x8x4xbf16>
    %181 = vector.shape_cast %180 : vector<1x8x4xbf16> to vector<8x4xbf16>
    %cst_60 = arith.constant dense<0.000000e+00> : vector<8x324xf32>
    %182 = tpu.matmul %181, %179, %cst_60 {dimension_numbers = #tpu.dot_dimension_numbers<[1], [0], [0], [1], [0, 0, 1, 1], [], []>} : vector<8x4xbf16>, vector<4x324xbf16>, vector<8x324xf32> -> vector<8x324xf32>
    %183 = arith.addf %178, %182 : vector<8x324xf32>
    %184 = vector.extract_strided_slice %147 {offsets = [0, 37], sizes = [4, 324], strides = [1, 1]} : vector<4x362xbf16> to vector<4x324xbf16>
    %185 = vector.extract_strided_slice %3 {offsets = [7, 0, 0], sizes = [1, 8, 4], strides = [1, 1, 1]} : vector<9x8x4xbf16> to vector<1x8x4xbf16>
    %186 = vector.shape_cast %185 : vector<1x8x4xbf16> to vector<8x4xbf16>
    %cst_61 = arith.constant dense<0.000000e+00> : vector<8x324xf32>
    %187 = tpu.matmul %186, %184, %cst_61 {dimension_numbers = #tpu.dot_dimension_numbers<[1], [0], [0], [1], [0, 0, 1, 1], [], []>} : vector<8x4xbf16>, vector<4x324xbf16>, vector<8x324xf32> -> vector<8x324xf32>
    %188 = arith.addf %183, %187 : vector<8x324xf32>
    %189 = vector.extract_strided_slice %147 {offsets = [0, 38], sizes = [4, 324], strides = [1, 1]} : vector<4x362xbf16> to vector<4x324xbf16>
    %190 = vector.extract_strided_slice %3 {offsets = [8, 0, 0], sizes = [1, 8, 4], strides = [1, 1, 1]} : vector<9x8x4xbf16> to vector<1x8x4xbf16>
    %191 = vector.shape_cast %190 : vector<1x8x4xbf16> to vector<8x4xbf16>
    %cst_62 = arith.constant dense<0.000000e+00> : vector<8x324xf32>
    %192 = tpu.matmul %191, %189, %cst_62 {dimension_numbers = #tpu.dot_dimension_numbers<[1], [0], [0], [1], [0, 0, 1, 1], [], []>} : vector<8x4xbf16>, vector<4x324xbf16>, vector<8x324xf32> -> vector<8x324xf32>
    %193 = arith.addf %188, %192 : vector<8x324xf32>
    %194 = vector.broadcast %6 : vector<8x1xf32> to vector<8x324xf32>
    %195 = arith.addf %193, %194 : vector<8x324xf32>
    %196 = arith.subf %195, %73 : vector<8x324xf32>
    %cst_63 = arith.constant 5.000000e-01 : f32
    %197 = vector.broadcast %cst_63 : f32 to vector<8x324xf32>
    %198 = arith.mulf %196, %197 : vector<8x324xf32>
    %199 = arith.addf %73, %198 : vector<8x324xf32>
    %cst_64 = arith.constant 1.000000e+00 : f32
    %200 = vector.broadcast %cst_64 : f32 to vector<8x324xf32>
    %201 = arith.cmpf oge, %199, %200 : vector<8x324xf32>
    %202 = arith.extui %201 : vector<8x324xi1> to vector<8x324xi32>
    %203 = arith.sitofp %202 : vector<8x324xi32> to vector<8x324xf32>
    %cst_65 = arith.constant 1.000000e+00 : f32
    %204 = vector.broadcast %cst_65 : f32 to vector<8x324xf32>
    %205 = arith.subf %204, %203 : vector<8x324xf32>
    %206 = arith.mulf %199, %205 : vector<8x324xf32>
    %207 = vector.broadcast %8 : vector<1x324xf32> to vector<8x324xf32>
    %208 = arith.mulf %203, %207 : vector<8x324xf32>
    %c0_66 = arith.constant 0 : index
    %c19_67 = arith.constant 19 : index
    %209 = vector.load %arg8[%c0_66, %c19_67] : memref<8x362xf32, #tpu.memory_space<vmem>>, vector<8x324xf32>
    tpu.vector_store %arg8[%c0_66, %c19_67], %208 {strides = array<i32>} : memref<8x362xf32, #tpu.memory_space<vmem>>, vector<8x324xf32>,
    %c0_68 = arith.constant 0 : index
    %c0_69 = arith.constant 0 : index
    %210 = vector.load %arg8[%c0_68, %c0_69] : memref<8x362xf32, #tpu.memory_space<vmem>>, vector<8x362xf32>
    %211 = arith.truncf %210 : vector<8x362xf32> to vector<8x362xbf16>
    %cst_70 = arith.constant 0.000000e+00 : f32
    %212 = vector.broadcast %cst_70 : f32 to vector<4x324xf32>
    %213 = vector.extract_strided_slice %211 {offsets = [0, 0], sizes = [8, 324], strides = [1, 1]} : vector<8x362xbf16> to vector<8x324xbf16>
    %214 = vector.extract_strided_slice %5 {offsets = [0, 0, 0], sizes = [1, 4, 8], strides = [1, 1, 1]} : vector<9x4x8xbf16> to vector<1x4x8xbf16>
    %215 = vector.shape_cast %214 : vector<1x4x8xbf16> to vector<4x8xbf16>
    %cst_71 = arith.constant dense<0.000000e+00> : vector<4x324xf32>
    %216 = tpu.matmul %215, %213, %cst_71 {dimension_numbers = #tpu.dot_dimension_numbers<[1], [0], [0], [1], [0, 0, 1, 1], [], []>} : vector<4x8xbf16>, vector<8x324xbf16>, vector<4x324xf32> -> vector<4x324xf32>
    %217 = arith.addf %212, %216 : vector<4x324xf32>
    %218 = vector.extract_strided_slice %211 {offsets = [0, 1], sizes = [8, 324], strides = [1, 1]} : vector<8x362xbf16> to vector<8x324xbf16>
    %219 = vector.extract_strided_slice %5 {offsets = [1, 0, 0], sizes = [1, 4, 8], strides = [1, 1, 1]} : vector<9x4x8xbf16> to vector<1x4x8xbf16>
    %220 = vector.shape_cast %219 : vector<1x4x8xbf16> to vector<4x8xbf16>
    %cst_72 = arith.constant dense<0.000000e+00> : vector<4x324xf32>
    %221 = tpu.matmul %220, %218, %cst_72 {dimension_numbers = #tpu.dot_dimension_numbers<[1], [0], [0], [1], [0, 0, 1, 1], [], []>} : vector<4x8xbf16>, vector<8x324xbf16>, vector<4x324xf32> -> vector<4x324xf32>
    %222 = arith.addf %217, %221 : vector<4x324xf32>
    %223 = vector.extract_strided_slice %211 {offsets = [0, 2], sizes = [8, 324], strides = [1, 1]} : vector<8x362xbf16> to vector<8x324xbf16>
    %224 = vector.extract_strided_slice %5 {offsets = [2, 0, 0], sizes = [1, 4, 8], strides = [1, 1, 1]} : vector<9x4x8xbf16> to vector<1x4x8xbf16>
    %225 = vector.shape_cast %224 : vector<1x4x8xbf16> to vector<4x8xbf16>
    %cst_73 = arith.constant dense<0.000000e+00> : vector<4x324xf32>
    %226 = tpu.matmul %225, %223, %cst_73 {dimension_numbers = #tpu.dot_dimension_numbers<[1], [0], [0], [1], [0, 0, 1, 1], [], []>} : vector<4x8xbf16>, vector<8x324xbf16>, vector<4x324xf32> -> vector<4x324xf32>
    %227 = arith.addf %222, %226 : vector<4x324xf32>
    %228 = vector.extract_strided_slice %211 {offsets = [0, 18], sizes = [8, 324], strides = [1, 1]} : vector<8x362xbf16> to vector<8x324xbf16>
    %229 = vector.extract_strided_slice %5 {offsets = [3, 0, 0], sizes = [1, 4, 8], strides = [1, 1, 1]} : vector<9x4x8xbf16> to vector<1x4x8xbf16>
    %230 = vector.shape_cast %229 : vector<1x4x8xbf16> to vector<4x8xbf16>
    %cst_74 = arith.constant dense<0.000000e+00> : vector<4x324xf32>
    %231 = tpu.matmul %230, %228, %cst_74 {dimension_numbers = #tpu.dot_dimension_numbers<[1], [0], [0], [1], [0, 0, 1, 1], [], []>} : vector<4x8xbf16>, vector<8x324xbf16>, vector<4x324xf32> -> vector<4x324xf32>
    %232 = arith.addf %227, %231 : vector<4x324xf32>
    %233 = vector.extract_strided_slice %211 {offsets = [0, 19], sizes = [8, 324], strides = [1, 1]} : vector<8x362xbf16> to vector<8x324xbf16>
    %234 = vector.extract_strided_slice %5 {offsets = [4, 0, 0], sizes = [1, 4, 8], strides = [1, 1, 1]} : vector<9x4x8xbf16> to vector<1x4x8xbf16>
    %235 = vector.shape_cast %234 : vector<1x4x8xbf16> to vector<4x8xbf16>
    %cst_75 = arith.constant dense<0.000000e+00> : vector<4x324xf32>
    %236 = tpu.matmul %235, %233, %cst_75 {dimension_numbers = #tpu.dot_dimension_numbers<[1], [0], [0], [1], [0, 0, 1, 1], [], []>} : vector<4x8xbf16>, vector<8x324xbf16>, vector<4x324xf32> -> vector<4x324xf32>
    %237 = arith.addf %232, %236 : vector<4x324xf32>
    %238 = vector.extract_strided_slice %211 {offsets = [0, 20], sizes = [8, 324], strides = [1, 1]} : vector<8x362xbf16> to vector<8x324xbf16>
    %239 = vector.extract_strided_slice %5 {offsets = [5, 0, 0], sizes = [1, 4, 8], strides = [1, 1, 1]} : vector<9x4x8xbf16> to vector<1x4x8xbf16>
    %240 = vector.shape_cast %239 : vector<1x4x8xbf16> to vector<4x8xbf16>
    %cst_76 = arith.constant dense<0.000000e+00> : vector<4x324xf32>
    %241 = tpu.matmul %240, %238, %cst_76 {dimension_numbers = #tpu.dot_dimension_numbers<[1], [0], [0], [1], [0, 0, 1, 1], [], []>} : vector<4x8xbf16>, vector<8x324xbf16>, vector<4x324xf32> -> vector<4x324xf32>
    %242 = arith.addf %237, %241 : vector<4x324xf32>
    %243 = vector.extract_strided_slice %211 {offsets = [0, 36], sizes = [8, 324], strides = [1, 1]} : vector<8x362xbf16> to vector<8x324xbf16>
    %244 = vector.extract_strided_slice %5 {offsets = [6, 0, 0], sizes = [1, 4, 8], strides = [1, 1, 1]} : vector<9x4x8xbf16> to vector<1x4x8xbf16>
    %245 = vector.shape_cast %244 : vector<1x4x8xbf16> to vector<4x8xbf16>
    %cst_77 = arith.constant dense<0.000000e+00> : vector<4x324xf32>
    %246 = tpu.matmul %245, %243, %cst_77 {dimension_numbers = #tpu.dot_dimension_numbers<[1], [0], [0], [1], [0, 0, 1, 1], [], []>} : vector<4x8xbf16>, vector<8x324xbf16>, vector<4x324xf32> -> vector<4x324xf32>
    %247 = arith.addf %242, %246 : vector<4x324xf32>
    %248 = vector.extract_strided_slice %211 {offsets = [0, 37], sizes = [8, 324], strides = [1, 1]} : vector<8x362xbf16> to vector<8x324xbf16>
    %249 = vector.extract_strided_slice %5 {offsets = [7, 0, 0], sizes = [1, 4, 8], strides = [1, 1, 1]} : vector<9x4x8xbf16> to vector<1x4x8xbf16>
    %250 = vector.shape_cast %249 : vector<1x4x8xbf16> to vector<4x8xbf16>
    %cst_78 = arith.constant dense<0.000000e+00> : vector<4x324xf32>
    %251 = tpu.matmul %250, %248, %cst_78 {dimension_numbers = #tpu.dot_dimension_numbers<[1], [0], [0], [1], [0, 0, 1, 1], [], []>} : vector<4x8xbf16>, vector<8x324xbf16>, vector<4x324xf32> -> vector<4x324xf32>
    %252 = arith.addf %247, %251 : vector<4x324xf32>
    %253 = vector.extract_strided_slice %211 {offsets = [0, 38], sizes = [8, 324], strides = [1, 1]} : vector<8x362xbf16> to vector<8x324xbf16>
    %254 = vector.extract_strided_slice %5 {offsets = [8, 0, 0], sizes = [1, 4, 8], strides = [1, 1, 1]} : vector<9x4x8xbf16> to vector<1x4x8xbf16>
    %255 = vector.shape_cast %254 : vector<1x4x8xbf16> to vector<4x8xbf16>
    %cst_79 = arith.constant dense<0.000000e+00> : vector<4x324xf32>
    %256 = tpu.matmul %255, %253, %cst_79 {dimension_numbers = #tpu.dot_dimension_numbers<[1], [0], [0], [1], [0, 0, 1, 1], [], []>} : vector<4x8xbf16>, vector<8x324xbf16>, vector<4x324xf32> -> vector<4x324xf32>
    %257 = arith.addf %252, %256 : vector<4x324xf32>
    %258 = vector.broadcast %7 : vector<4x1xf32> to vector<4x324xf32>
    %259 = arith.addf %257, %258 : vector<4x324xf32>
    %260 = vector.extract_strided_slice %146 {offsets = [0, 19], sizes = [4, 324], strides = [1, 1]} : vector<4x362xf32> to vector<4x324xf32>
    %261 = arith.addf %260, %259 : vector<4x324xf32>
    %262 = arith.subf %261, %139 : vector<4x324xf32>
    %cst_80 = arith.constant 5.000000e-01 : f32
    %263 = vector.broadcast %cst_80 : f32 to vector<4x324xf32>
    %264 = arith.mulf %262, %263 : vector<4x324xf32>
    %265 = arith.addf %139, %264 : vector<4x324xf32>
    %cst_81 = arith.constant 1.000000e+00 : f32
    %266 = vector.broadcast %cst_81 : f32 to vector<4x324xf32>
    %267 = arith.cmpf oge, %265, %266 : vector<4x324xf32>
    %268 = arith.extui %267 : vector<4x324xi1> to vector<4x324xi32>
    %269 = arith.sitofp %268 : vector<4x324xi32> to vector<4x324xf32>
    %cst_82 = arith.constant 1.000000e+00 : f32
    %270 = vector.broadcast %cst_82 : f32 to vector<4x324xf32>
    %271 = arith.subf %270, %269 : vector<4x324xf32>
    %272 = arith.mulf %265, %271 : vector<4x324xf32>
    %273 = arith.index_cast %c1_i32 : i32 to index
    %c0_83 = arith.constant 0 : index
    %c0_84 = arith.constant 0 : index
    %c0_85 = arith.constant 0 : index
    %274 = vector.load %arg7[%273, %c0_83, %c0_84, %c0_85] : memref<4x1x4x324xf32, #tpu.memory_space<vmem>>, vector<1x1x4x324xf32>
    %275 = vector.shape_cast %274 : vector<1x1x4x324xf32> to vector<4x324xf32>
    %276 = vector.shape_cast %269 : vector<4x324xf32> to vector<1x1x4x324xf32>
    tpu.vector_store %arg7[%273, %c0_83, %c0_84, %c0_85], %276 {strides = array<i32>} : memref<4x1x4x324xf32, #tpu.memory_space<vmem>>, vector<1x1x4x324xf32>,
    %c2_i32 = arith.constant 2 : i32
    %277 = arith.index_cast %c2_i32 : i32 to index
    %c0_86 = arith.constant 0 : index
    %c0_87 = arith.constant 0 : index
    %c0_88 = arith.constant 0 : index
    %278 = vector.load %arg1[%277, %c0_86, %c0_87, %c0_88] : memref<4x1x4x362xf32, #tpu.memory_space<vmem>>, vector<1x1x4x362xf32>
    %279 = vector.shape_cast %278 : vector<1x1x4x362xf32> to vector<4x362xf32>
    %280 = arith.truncf %279 : vector<4x362xf32> to vector<4x362xbf16>
    %cst_89 = arith.constant 0.000000e+00 : f32
    %281 = vector.broadcast %cst_89 : f32 to vector<8x324xf32>
    %282 = vector.extract_strided_slice %280 {offsets = [0, 0], sizes = [4, 324], strides = [1, 1]} : vector<4x362xbf16> to vector<4x324xbf16>
    %283 = vector.extract_strided_slice %3 {offsets = [0, 0, 0], sizes = [1, 8, 4], strides = [1, 1, 1]} : vector<9x8x4xbf16> to vector<1x8x4xbf16>
    %284 = vector.shape_cast %283 : vector<1x8x4xbf16> to vector<8x4xbf16>
    %cst_90 = arith.constant dense<0.000000e+00> : vector<8x324xf32>
    %285 = tpu.matmul %284, %282, %cst_90 {dimension_numbers = #tpu.dot_dimension_numbers<[1], [0], [0], [1], [0, 0, 1, 1], [], []>} : vector<8x4xbf16>, vector<4x324xbf16>, vector<8x324xf32> -> vector<8x324xf32>
    %286 = arith.addf %281, %285 : vector<8x324xf32>
    %287 = vector.extract_strided_slice %280 {offsets = [0, 1], sizes = [4, 324], strides = [1, 1]} : vector<4x362xbf16> to vector<4x324xbf16>
    %288 = vector.extract_strided_slice %3 {offsets = [1, 0, 0], sizes = [1, 8, 4], strides = [1, 1, 1]} : vector<9x8x4xbf16> to vector<1x8x4xbf16>
    %289 = vector.shape_cast %288 : vector<1x8x4xbf16> to vector<8x4xbf16>
    %cst_91 = arith.constant dense<0.000000e+00> : vector<8x324xf32>
    %290 = tpu.matmul %289, %287, %cst_91 {dimension_numbers = #tpu.dot_dimension_numbers<[1], [0], [0], [1], [0, 0, 1, 1], [], []>} : vector<8x4xbf16>, vector<4x324xbf16>, vector<8x324xf32> -> vector<8x324xf32>
    %291 = arith.addf %286, %290 : vector<8x324xf32>
    %292 = vector.extract_strided_slice %280 {offsets = [0, 2], sizes = [4, 324], strides = [1, 1]} : vector<4x362xbf16> to vector<4x324xbf16>
    %293 = vector.extract_strided_slice %3 {offsets = [2, 0, 0], sizes = [1, 8, 4], strides = [1, 1, 1]} : vector<9x8x4xbf16> to vector<1x8x4xbf16>
    %294 = vector.shape_cast %293 : vector<1x8x4xbf16> to vector<8x4xbf16>
    %cst_92 = arith.constant dense<0.000000e+00> : vector<8x324xf32>
    %295 = tpu.matmul %294, %292, %cst_92 {dimension_numbers = #tpu.dot_dimension_numbers<[1], [0], [0], [1], [0, 0, 1, 1], [], []>} : vector<8x4xbf16>, vector<4x324xbf16>, vector<8x324xf32> -> vector<8x324xf32>
    %296 = arith.addf %291, %295 : vector<8x324xf32>
    %297 = vector.extract_strided_slice %280 {offsets = [0, 18], sizes = [4, 324], strides = [1, 1]} : vector<4x362xbf16> to vector<4x324xbf16>
    %298 = vector.extract_strided_slice %3 {offsets = [3, 0, 0], sizes = [1, 8, 4], strides = [1, 1, 1]} : vector<9x8x4xbf16> to vector<1x8x4xbf16>
    %299 = vector.shape_cast %298 : vector<1x8x4xbf16> to vector<8x4xbf16>
    %cst_93 = arith.constant dense<0.000000e+00> : vector<8x324xf32>
    %300 = tpu.matmul %299, %297, %cst_93 {dimension_numbers = #tpu.dot_dimension_numbers<[1], [0], [0], [1], [0, 0, 1, 1], [], []>} : vector<8x4xbf16>, vector<4x324xbf16>, vector<8x324xf32> -> vector<8x324xf32>
    %301 = arith.addf %296, %300 : vector<8x324xf32>
    %302 = vector.extract_strided_slice %280 {offsets = [0, 19], sizes = [4, 324], strides = [1, 1]} : vector<4x362xbf16> to vector<4x324xbf16>
    %303 = vector.extract_strided_slice %3 {offsets = [4, 0, 0], sizes = [1, 8, 4], strides = [1, 1, 1]} : vector<9x8x4xbf16> to vector<1x8x4xbf16>
    %304 = vector.shape_cast %303 : vector<1x8x4xbf16> to vector<8x4xbf16>
    %cst_94 = arith.constant dense<0.000000e+00> : vector<8x324xf32>
    %305 = tpu.matmul %304, %302, %cst_94 {dimension_numbers = #tpu.dot_dimension_numbers<[1], [0], [0], [1], [0, 0, 1, 1], [], []>} : vector<8x4xbf16>, vector<4x324xbf16>, vector<8x324xf32> -> vector<8x324xf32>
    %306 = arith.addf %301, %305 : vector<8x324xf32>
    %307 = vector.extract_strided_slice %280 {offsets = [0, 20], sizes = [4, 324], strides = [1, 1]} : vector<4x362xbf16> to vector<4x324xbf16>
    %308 = vector.extract_strided_slice %3 {offsets = [5, 0, 0], sizes = [1, 8, 4], strides = [1, 1, 1]} : vector<9x8x4xbf16> to vector<1x8x4xbf16>
    %309 = vector.shape_cast %308 : vector<1x8x4xbf16> to vector<8x4xbf16>
    %cst_95 = arith.constant dense<0.000000e+00> : vector<8x324xf32>
    %310 = tpu.matmul %309, %307, %cst_95 {dimension_numbers = #tpu.dot_dimension_numbers<[1], [0], [0], [1], [0, 0, 1, 1], [], []>} : vector<8x4xbf16>, vector<4x324xbf16>, vector<8x324xf32> -> vector<8x324xf32>
    %311 = arith.addf %306, %310 : vector<8x324xf32>
    %312 = vector.extract_strided_slice %280 {offsets = [0, 36], sizes = [4, 324], strides = [1, 1]} : vector<4x362xbf16> to vector<4x324xbf16>
    %313 = vector.extract_strided_slice %3 {offsets = [6, 0, 0], sizes = [1, 8, 4], strides = [1, 1, 1]} : vector<9x8x4xbf16> to vector<1x8x4xbf16>
    %314 = vector.shape_cast %313 : vector<1x8x4xbf16> to vector<8x4xbf16>
    %cst_96 = arith.constant dense<0.000000e+00> : vector<8x324xf32>
    %315 = tpu.matmul %314, %312, %cst_96 {dimension_numbers = #tpu.dot_dimension_numbers<[1], [0], [0], [1], [0, 0, 1, 1], [], []>} : vector<8x4xbf16>, vector<4x324xbf16>, vector<8x324xf32> -> vector<8x324xf32>
    %316 = arith.addf %311, %315 : vector<8x324xf32>
    %317 = vector.extract_strided_slice %280 {offsets = [0, 37], sizes = [4, 324], strides = [1, 1]} : vector<4x362xbf16> to vector<4x324xbf16>
    %318 = vector.extract_strided_slice %3 {offsets = [7, 0, 0], sizes = [1, 8, 4], strides = [1, 1, 1]} : vector<9x8x4xbf16> to vector<1x8x4xbf16>
    %319 = vector.shape_cast %318 : vector<1x8x4xbf16> to vector<8x4xbf16>
    %cst_97 = arith.constant dense<0.000000e+00> : vector<8x324xf32>
    %320 = tpu.matmul %319, %317, %cst_97 {dimension_numbers = #tpu.dot_dimension_numbers<[1], [0], [0], [1], [0, 0, 1, 1], [], []>} : vector<8x4xbf16>, vector<4x324xbf16>, vector<8x324xf32> -> vector<8x324xf32>
    %321 = arith.addf %316, %320 : vector<8x324xf32>
    %322 = vector.extract_strided_slice %280 {offsets = [0, 38], sizes = [4, 324], strides = [1, 1]} : vector<4x362xbf16> to vector<4x324xbf16>
    %323 = vector.extract_strided_slice %3 {offsets = [8, 0, 0], sizes = [1, 8, 4], strides = [1, 1, 1]} : vector<9x8x4xbf16> to vector<1x8x4xbf16>
    %324 = vector.shape_cast %323 : vector<1x8x4xbf16> to vector<8x4xbf16>
    %cst_98 = arith.constant dense<0.000000e+00> : vector<8x324xf32>
    %325 = tpu.matmul %324, %322, %cst_98 {dimension_numbers = #tpu.dot_dimension_numbers<[1], [0], [0], [1], [0, 0, 1, 1], [], []>} : vector<8x4xbf16>, vector<4x324xbf16>, vector<8x324xf32> -> vector<8x324xf32>
    %326 = arith.addf %321, %325 : vector<8x324xf32>
    %327 = vector.broadcast %6 : vector<8x1xf32> to vector<8x324xf32>
    %328 = arith.addf %326, %327 : vector<8x324xf32>
    %329 = arith.subf %328, %206 : vector<8x324xf32>
    %cst_99 = arith.constant 5.000000e-01 : f32
    %330 = vector.broadcast %cst_99 : f32 to vector<8x324xf32>
    %331 = arith.mulf %329, %330 : vector<8x324xf32>
    %332 = arith.addf %206, %331 : vector<8x324xf32>
    %cst_100 = arith.constant 1.000000e+00 : f32
    %333 = vector.broadcast %cst_100 : f32 to vector<8x324xf32>
    %334 = arith.cmpf oge, %332, %333 : vector<8x324xf32>
    %335 = arith.extui %334 : vector<8x324xi1> to vector<8x324xi32>
    %336 = arith.sitofp %335 : vector<8x324xi32> to vector<8x324xf32>
    %cst_101 = arith.constant 1.000000e+00 : f32
    %337 = vector.broadcast %cst_101 : f32 to vector<8x324xf32>
    %338 = arith.subf %337, %336 : vector<8x324xf32>
    %339 = arith.mulf %332, %338 : vector<8x324xf32>
    %340 = vector.broadcast %8 : vector<1x324xf32> to vector<8x324xf32>
    %341 = arith.mulf %336, %340 : vector<8x324xf32>
    %c0_102 = arith.constant 0 : index
    %c19_103 = arith.constant 19 : index
    %342 = vector.load %arg8[%c0_102, %c19_103] : memref<8x362xf32, #tpu.memory_space<vmem>>, vector<8x324xf32>
    tpu.vector_store %arg8[%c0_102, %c19_103], %341 {strides = array<i32>} : memref<8x362xf32, #tpu.memory_space<vmem>>, vector<8x324xf32>,
    %c0_104 = arith.constant 0 : index
    %c0_105 = arith.constant 0 : index
    %343 = vector.load %arg8[%c0_104, %c0_105] : memref<8x362xf32, #tpu.memory_space<vmem>>, vector<8x362xf32>
    %344 = arith.truncf %343 : vector<8x362xf32> to vector<8x362xbf16>
    %cst_106 = arith.constant 0.000000e+00 : f32
    %345 = vector.broadcast %cst_106 : f32 to vector<4x324xf32>
    %346 = vector.extract_strided_slice %344 {offsets = [0, 0], sizes = [8, 324], strides = [1, 1]} : vector<8x362xbf16> to vector<8x324xbf16>
    %347 = vector.extract_strided_slice %5 {offsets = [0, 0, 0], sizes = [1, 4, 8], strides = [1, 1, 1]} : vector<9x4x8xbf16> to vector<1x4x8xbf16>
    %348 = vector.shape_cast %347 : vector<1x4x8xbf16> to vector<4x8xbf16>
    %cst_107 = arith.constant dense<0.000000e+00> : vector<4x324xf32>
    %349 = tpu.matmul %348, %346, %cst_107 {dimension_numbers = #tpu.dot_dimension_numbers<[1], [0], [0], [1], [0, 0, 1, 1], [], []>} : vector<4x8xbf16>, vector<8x324xbf16>, vector<4x324xf32> -> vector<4x324xf32>
    %350 = arith.addf %345, %349 : vector<4x324xf32>
    %351 = vector.extract_strided_slice %344 {offsets = [0, 1], sizes = [8, 324], strides = [1, 1]} : vector<8x362xbf16> to vector<8x324xbf16>
    %352 = vector.extract_strided_slice %5 {offsets = [1, 0, 0], sizes = [1, 4, 8], strides = [1, 1, 1]} : vector<9x4x8xbf16> to vector<1x4x8xbf16>
    %353 = vector.shape_cast %352 : vector<1x4x8xbf16> to vector<4x8xbf16>
    %cst_108 = arith.constant dense<0.000000e+00> : vector<4x324xf32>
    %354 = tpu.matmul %353, %351, %cst_108 {dimension_numbers = #tpu.dot_dimension_numbers<[1], [0], [0], [1], [0, 0, 1, 1], [], []>} : vector<4x8xbf16>, vector<8x324xbf16>, vector<4x324xf32> -> vector<4x324xf32>
    %355 = arith.addf %350, %354 : vector<4x324xf32>
    %356 = vector.extract_strided_slice %344 {offsets = [0, 2], sizes = [8, 324], strides = [1, 1]} : vector<8x362xbf16> to vector<8x324xbf16>
    %357 = vector.extract_strided_slice %5 {offsets = [2, 0, 0], sizes = [1, 4, 8], strides = [1, 1, 1]} : vector<9x4x8xbf16> to vector<1x4x8xbf16>
    %358 = vector.shape_cast %357 : vector<1x4x8xbf16> to vector<4x8xbf16>
    %cst_109 = arith.constant dense<0.000000e+00> : vector<4x324xf32>
    %359 = tpu.matmul %358, %356, %cst_109 {dimension_numbers = #tpu.dot_dimension_numbers<[1], [0], [0], [1], [0, 0, 1, 1], [], []>} : vector<4x8xbf16>, vector<8x324xbf16>, vector<4x324xf32> -> vector<4x324xf32>
    %360 = arith.addf %355, %359 : vector<4x324xf32>
    %361 = vector.extract_strided_slice %344 {offsets = [0, 18], sizes = [8, 324], strides = [1, 1]} : vector<8x362xbf16> to vector<8x324xbf16>
    %362 = vector.extract_strided_slice %5 {offsets = [3, 0, 0], sizes = [1, 4, 8], strides = [1, 1, 1]} : vector<9x4x8xbf16> to vector<1x4x8xbf16>
    %363 = vector.shape_cast %362 : vector<1x4x8xbf16> to vector<4x8xbf16>
    %cst_110 = arith.constant dense<0.000000e+00> : vector<4x324xf32>
    %364 = tpu.matmul %363, %361, %cst_110 {dimension_numbers = #tpu.dot_dimension_numbers<[1], [0], [0], [1], [0, 0, 1, 1], [], []>} : vector<4x8xbf16>, vector<8x324xbf16>, vector<4x324xf32> -> vector<4x324xf32>
    %365 = arith.addf %360, %364 : vector<4x324xf32>
    %366 = vector.extract_strided_slice %344 {offsets = [0, 19], sizes = [8, 324], strides = [1, 1]} : vector<8x362xbf16> to vector<8x324xbf16>
    %367 = vector.extract_strided_slice %5 {offsets = [4, 0, 0], sizes = [1, 4, 8], strides = [1, 1, 1]} : vector<9x4x8xbf16> to vector<1x4x8xbf16>
    %368 = vector.shape_cast %367 : vector<1x4x8xbf16> to vector<4x8xbf16>
    %cst_111 = arith.constant dense<0.000000e+00> : vector<4x324xf32>
    %369 = tpu.matmul %368, %366, %cst_111 {dimension_numbers = #tpu.dot_dimension_numbers<[1], [0], [0], [1], [0, 0, 1, 1], [], []>} : vector<4x8xbf16>, vector<8x324xbf16>, vector<4x324xf32> -> vector<4x324xf32>
    %370 = arith.addf %365, %369 : vector<4x324xf32>
    %371 = vector.extract_strided_slice %344 {offsets = [0, 20], sizes = [8, 324], strides = [1, 1]} : vector<8x362xbf16> to vector<8x324xbf16>
    %372 = vector.extract_strided_slice %5 {offsets = [5, 0, 0], sizes = [1, 4, 8], strides = [1, 1, 1]} : vector<9x4x8xbf16> to vector<1x4x8xbf16>
    %373 = vector.shape_cast %372 : vector<1x4x8xbf16> to vector<4x8xbf16>
    %cst_112 = arith.constant dense<0.000000e+00> : vector<4x324xf32>
    %374 = tpu.matmul %373, %371, %cst_112 {dimension_numbers = #tpu.dot_dimension_numbers<[1], [0], [0], [1], [0, 0, 1, 1], [], []>} : vector<4x8xbf16>, vector<8x324xbf16>, vector<4x324xf32> -> vector<4x324xf32>
    %375 = arith.addf %370, %374 : vector<4x324xf32>
    %376 = vector.extract_strided_slice %344 {offsets = [0, 36], sizes = [8, 324], strides = [1, 1]} : vector<8x362xbf16> to vector<8x324xbf16>
    %377 = vector.extract_strided_slice %5 {offsets = [6, 0, 0], sizes = [1, 4, 8], strides = [1, 1, 1]} : vector<9x4x8xbf16> to vector<1x4x8xbf16>
    %378 = vector.shape_cast %377 : vector<1x4x8xbf16> to vector<4x8xbf16>
    %cst_113 = arith.constant dense<0.000000e+00> : vector<4x324xf32>
    %379 = tpu.matmul %378, %376, %cst_113 {dimension_numbers = #tpu.dot_dimension_numbers<[1], [0], [0], [1], [0, 0, 1, 1], [], []>} : vector<4x8xbf16>, vector<8x324xbf16>, vector<4x324xf32> -> vector<4x324xf32>
    %380 = arith.addf %375, %379 : vector<4x324xf32>
    %381 = vector.extract_strided_slice %344 {offsets = [0, 37], sizes = [8, 324], strides = [1, 1]} : vector<8x362xbf16> to vector<8x324xbf16>
    %382 = vector.extract_strided_slice %5 {offsets = [7, 0, 0], sizes = [1, 4, 8], strides = [1, 1, 1]} : vector<9x4x8xbf16> to vector<1x4x8xbf16>
    %383 = vector.shape_cast %382 : vector<1x4x8xbf16> to vector<4x8xbf16>
    %cst_114 = arith.constant dense<0.000000e+00> : vector<4x324xf32>
    %384 = tpu.matmul %383, %381, %cst_114 {dimension_numbers = #tpu.dot_dimension_numbers<[1], [0], [0], [1], [0, 0, 1, 1], [], []>} : vector<4x8xbf16>, vector<8x324xbf16>, vector<4x324xf32> -> vector<4x324xf32>
    %385 = arith.addf %380, %384 : vector<4x324xf32>
    %386 = vector.extract_strided_slice %344 {offsets = [0, 38], sizes = [8, 324], strides = [1, 1]} : vector<8x362xbf16> to vector<8x324xbf16>
    %387 = vector.extract_strided_slice %5 {offsets = [8, 0, 0], sizes = [1, 4, 8], strides = [1, 1, 1]} : vector<9x4x8xbf16> to vector<1x4x8xbf16>
    %388 = vector.shape_cast %387 : vector<1x4x8xbf16> to vector<4x8xbf16>
    %cst_115 = arith.constant dense<0.000000e+00> : vector<4x324xf32>
    %389 = tpu.matmul %388, %386, %cst_115 {dimension_numbers = #tpu.dot_dimension_numbers<[1], [0], [0], [1], [0, 0, 1, 1], [], []>} : vector<4x8xbf16>, vector<8x324xbf16>, vector<4x324xf32> -> vector<4x324xf32>
    %390 = arith.addf %385, %389 : vector<4x324xf32>
    %391 = vector.broadcast %7 : vector<4x1xf32> to vector<4x324xf32>
    %392 = arith.addf %390, %391 : vector<4x324xf32>
    %393 = vector.extract_strided_slice %279 {offsets = [0, 19], sizes = [4, 324], strides = [1, 1]} : vector<4x362xf32> to vector<4x324xf32>
    %394 = arith.addf %393, %392 : vector<4x324xf32>
    %395 = arith.subf %394, %272 : vector<4x324xf32>
    %cst_116 = arith.constant 5.000000e-01 : f32
    %396 = vector.broadcast %cst_116 : f32 to vector<4x324xf32>
    %397 = arith.mulf %395, %396 : vector<4x324xf32>
    %398 = arith.addf %272, %397 : vector<4x324xf32>
    %cst_117 = arith.constant 1.000000e+00 : f32
    %399 = vector.broadcast %cst_117 : f32 to vector<4x324xf32>
    %400 = arith.cmpf oge, %398, %399 : vector<4x324xf32>
    %401 = arith.extui %400 : vector<4x324xi1> to vector<4x324xi32>
    %402 = arith.sitofp %401 : vector<4x324xi32> to vector<4x324xf32>
    %cst_118 = arith.constant 1.000000e+00 : f32
    %403 = vector.broadcast %cst_118 : f32 to vector<4x324xf32>
    %404 = arith.subf %403, %402 : vector<4x324xf32>
    %405 = arith.mulf %398, %404 : vector<4x324xf32>
    %406 = arith.index_cast %c2_i32 : i32 to index
    %c0_119 = arith.constant 0 : index
    %c0_120 = arith.constant 0 : index
    %c0_121 = arith.constant 0 : index
    %407 = vector.load %arg7[%406, %c0_119, %c0_120, %c0_121] : memref<4x1x4x324xf32, #tpu.memory_space<vmem>>, vector<1x1x4x324xf32>
    %408 = vector.shape_cast %407 : vector<1x1x4x324xf32> to vector<4x324xf32>
    %409 = vector.shape_cast %402 : vector<4x324xf32> to vector<1x1x4x324xf32>
    tpu.vector_store %arg7[%406, %c0_119, %c0_120, %c0_121], %409 {strides = array<i32>} : memref<4x1x4x324xf32, #tpu.memory_space<vmem>>, vector<1x1x4x324xf32>,
    %c3_i32 = arith.constant 3 : i32
    %410 = arith.index_cast %c3_i32 : i32 to index
    %c0_122 = arith.constant 0 : index
    %c0_123 = arith.constant 0 : index
    %c0_124 = arith.constant 0 : index
    %411 = vector.load %arg1[%410, %c0_122, %c0_123, %c0_124] : memref<4x1x4x362xf32, #tpu.memory_space<vmem>>, vector<1x1x4x362xf32>
    %412 = vector.shape_cast %411 : vector<1x1x4x362xf32> to vector<4x362xf32>
    %413 = arith.truncf %412 : vector<4x362xf32> to vector<4x362xbf16>
    %cst_125 = arith.constant 0.000000e+00 : f32
    %414 = vector.broadcast %cst_125 : f32 to vector<8x324xf32>
    %415 = vector.extract_strided_slice %413 {offsets = [0, 0], sizes = [4, 324], strides = [1, 1]} : vector<4x362xbf16> to vector<4x324xbf16>
    %416 = vector.extract_strided_slice %3 {offsets = [0, 0, 0], sizes = [1, 8, 4], strides = [1, 1, 1]} : vector<9x8x4xbf16> to vector<1x8x4xbf16>
    %417 = vector.shape_cast %416 : vector<1x8x4xbf16> to vector<8x4xbf16>
    %cst_126 = arith.constant dense<0.000000e+00> : vector<8x324xf32>
    %418 = tpu.matmul %417, %415, %cst_126 {dimension_numbers = #tpu.dot_dimension_numbers<[1], [0], [0], [1], [0, 0, 1, 1], [], []>} : vector<8x4xbf16>, vector<4x324xbf16>, vector<8x324xf32> -> vector<8x324xf32>
    %419 = arith.addf %414, %418 : vector<8x324xf32>
    %420 = vector.extract_strided_slice %413 {offsets = [0, 1], sizes = [4, 324], strides = [1, 1]} : vector<4x362xbf16> to vector<4x324xbf16>
    %421 = vector.extract_strided_slice %3 {offsets = [1, 0, 0], sizes = [1, 8, 4], strides = [1, 1, 1]} : vector<9x8x4xbf16> to vector<1x8x4xbf16>
    %422 = vector.shape_cast %421 : vector<1x8x4xbf16> to vector<8x4xbf16>
    %cst_127 = arith.constant dense<0.000000e+00> : vector<8x324xf32>
    %423 = tpu.matmul %422, %420, %cst_127 {dimension_numbers = #tpu.dot_dimension_numbers<[1], [0], [0], [1], [0, 0, 1, 1], [], []>} : vector<8x4xbf16>, vector<4x324xbf16>, vector<8x324xf32> -> vector<8x324xf32>
    %424 = arith.addf %419, %423 : vector<8x324xf32>
    %425 = vector.extract_strided_slice %413 {offsets = [0, 2], sizes = [4, 324], strides = [1, 1]} : vector<4x362xbf16> to vector<4x324xbf16>
    %426 = vector.extract_strided_slice %3 {offsets = [2, 0, 0], sizes = [1, 8, 4], strides = [1, 1, 1]} : vector<9x8x4xbf16> to vector<1x8x4xbf16>
    %427 = vector.shape_cast %426 : vector<1x8x4xbf16> to vector<8x4xbf16>
    %cst_128 = arith.constant dense<0.000000e+00> : vector<8x324xf32>
    %428 = tpu.matmul %427, %425, %cst_128 {dimension_numbers = #tpu.dot_dimension_numbers<[1], [0], [0], [1], [0, 0, 1, 1], [], []>} : vector<8x4xbf16>, vector<4x324xbf16>, vector<8x324xf32> -> vector<8x324xf32>
    %429 = arith.addf %424, %428 : vector<8x324xf32>
    %430 = vector.extract_strided_slice %413 {offsets = [0, 18], sizes = [4, 324], strides = [1, 1]} : vector<4x362xbf16> to vector<4x324xbf16>
    %431 = vector.extract_strided_slice %3 {offsets = [3, 0, 0], sizes = [1, 8, 4], strides = [1, 1, 1]} : vector<9x8x4xbf16> to vector<1x8x4xbf16>
    %432 = vector.shape_cast %431 : vector<1x8x4xbf16> to vector<8x4xbf16>
    %cst_129 = arith.constant dense<0.000000e+00> : vector<8x324xf32>
    %433 = tpu.matmul %432, %430, %cst_129 {dimension_numbers = #tpu.dot_dimension_numbers<[1], [0], [0], [1], [0, 0, 1, 1], [], []>} : vector<8x4xbf16>, vector<4x324xbf16>, vector<8x324xf32> -> vector<8x324xf32>
    %434 = arith.addf %429, %433 : vector<8x324xf32>
    %435 = vector.extract_strided_slice %413 {offsets = [0, 19], sizes = [4, 324], strides = [1, 1]} : vector<4x362xbf16> to vector<4x324xbf16>
    %436 = vector.extract_strided_slice %3 {offsets = [4, 0, 0], sizes = [1, 8, 4], strides = [1, 1, 1]} : vector<9x8x4xbf16> to vector<1x8x4xbf16>
    %437 = vector.shape_cast %436 : vector<1x8x4xbf16> to vector<8x4xbf16>
    %cst_130 = arith.constant dense<0.000000e+00> : vector<8x324xf32>
    %438 = tpu.matmul %437, %435, %cst_130 {dimension_numbers = #tpu.dot_dimension_numbers<[1], [0], [0], [1], [0, 0, 1, 1], [], []>} : vector<8x4xbf16>, vector<4x324xbf16>, vector<8x324xf32> -> vector<8x324xf32>
    %439 = arith.addf %434, %438 : vector<8x324xf32>
    %440 = vector.extract_strided_slice %413 {offsets = [0, 20], sizes = [4, 324], strides = [1, 1]} : vector<4x362xbf16> to vector<4x324xbf16>
    %441 = vector.extract_strided_slice %3 {offsets = [5, 0, 0], sizes = [1, 8, 4], strides = [1, 1, 1]} : vector<9x8x4xbf16> to vector<1x8x4xbf16>
    %442 = vector.shape_cast %441 : vector<1x8x4xbf16> to vector<8x4xbf16>
    %cst_131 = arith.constant dense<0.000000e+00> : vector<8x324xf32>
    %443 = tpu.matmul %442, %440, %cst_131 {dimension_numbers = #tpu.dot_dimension_numbers<[1], [0], [0], [1], [0, 0, 1, 1], [], []>} : vector<8x4xbf16>, vector<4x324xbf16>, vector<8x324xf32> -> vector<8x324xf32>
    %444 = arith.addf %439, %443 : vector<8x324xf32>
    %445 = vector.extract_strided_slice %413 {offsets = [0, 36], sizes = [4, 324], strides = [1, 1]} : vector<4x362xbf16> to vector<4x324xbf16>
    %446 = vector.extract_strided_slice %3 {offsets = [6, 0, 0], sizes = [1, 8, 4], strides = [1, 1, 1]} : vector<9x8x4xbf16> to vector<1x8x4xbf16>
    %447 = vector.shape_cast %446 : vector<1x8x4xbf16> to vector<8x4xbf16>
    %cst_132 = arith.constant dense<0.000000e+00> : vector<8x324xf32>
    %448 = tpu.matmul %447, %445, %cst_132 {dimension_numbers = #tpu.dot_dimension_numbers<[1], [0], [0], [1], [0, 0, 1, 1], [], []>} : vector<8x4xbf16>, vector<4x324xbf16>, vector<8x324xf32> -> vector<8x324xf32>
    %449 = arith.addf %444, %448 : vector<8x324xf32>
    %450 = vector.extract_strided_slice %413 {offsets = [0, 37], sizes = [4, 324], strides = [1, 1]} : vector<4x362xbf16> to vector<4x324xbf16>
    %451 = vector.extract_strided_slice %3 {offsets = [7, 0, 0], sizes = [1, 8, 4], strides = [1, 1, 1]} : vector<9x8x4xbf16> to vector<1x8x4xbf16>
    %452 = vector.shape_cast %451 : vector<1x8x4xbf16> to vector<8x4xbf16>
    %cst_133 = arith.constant dense<0.000000e+00> : vector<8x324xf32>
    %453 = tpu.matmul %452, %450, %cst_133 {dimension_numbers = #tpu.dot_dimension_numbers<[1], [0], [0], [1], [0, 0, 1, 1], [], []>} : vector<8x4xbf16>, vector<4x324xbf16>, vector<8x324xf32> -> vector<8x324xf32>
    %454 = arith.addf %449, %453 : vector<8x324xf32>
    %455 = vector.extract_strided_slice %413 {offsets = [0, 38], sizes = [4, 324], strides = [1, 1]} : vector<4x362xbf16> to vector<4x324xbf16>
    %456 = vector.extract_strided_slice %3 {offsets = [8, 0, 0], sizes = [1, 8, 4], strides = [1, 1, 1]} : vector<9x8x4xbf16> to vector<1x8x4xbf16>
    %457 = vector.shape_cast %456 : vector<1x8x4xbf16> to vector<8x4xbf16>
    %cst_134 = arith.constant dense<0.000000e+00> : vector<8x324xf32>
    %458 = tpu.matmul %457, %455, %cst_134 {dimension_numbers = #tpu.dot_dimension_numbers<[1], [0], [0], [1], [0, 0, 1, 1], [], []>} : vector<8x4xbf16>, vector<4x324xbf16>, vector<8x324xf32> -> vector<8x324xf32>
    %459 = arith.addf %454, %458 : vector<8x324xf32>
    %460 = vector.broadcast %6 : vector<8x1xf32> to vector<8x324xf32>
    %461 = arith.addf %459, %460 : vector<8x324xf32>
    %462 = arith.subf %461, %339 : vector<8x324xf32>
    %cst_135 = arith.constant 5.000000e-01 : f32
    %463 = vector.broadcast %cst_135 : f32 to vector<8x324xf32>
    %464 = arith.mulf %462, %463 : vector<8x324xf32>
    %465 = arith.addf %339, %464 : vector<8x324xf32>
    %cst_136 = arith.constant 1.000000e+00 : f32
    %466 = vector.broadcast %cst_136 : f32 to vector<8x324xf32>
    %467 = arith.cmpf oge, %465, %466 : vector<8x324xf32>
    %468 = arith.extui %467 : vector<8x324xi1> to vector<8x324xi32>
    %469 = arith.sitofp %468 : vector<8x324xi32> to vector<8x324xf32>
    %cst_137 = arith.constant 1.000000e+00 : f32
    %470 = vector.broadcast %cst_137 : f32 to vector<8x324xf32>
    %471 = arith.subf %470, %469 : vector<8x324xf32>
    %472 = arith.mulf %465, %471 : vector<8x324xf32>
    %473 = vector.broadcast %8 : vector<1x324xf32> to vector<8x324xf32>
    %474 = arith.mulf %469, %473 : vector<8x324xf32>
    %c0_138 = arith.constant 0 : index
    %c19_139 = arith.constant 19 : index
    %475 = vector.load %arg8[%c0_138, %c19_139] : memref<8x362xf32, #tpu.memory_space<vmem>>, vector<8x324xf32>
    tpu.vector_store %arg8[%c0_138, %c19_139], %474 {strides = array<i32>} : memref<8x362xf32, #tpu.memory_space<vmem>>, vector<8x324xf32>,
    %c0_140 = arith.constant 0 : index
    %c0_141 = arith.constant 0 : index
    %476 = vector.load %arg8[%c0_140, %c0_141] : memref<8x362xf32, #tpu.memory_space<vmem>>, vector<8x362xf32>
    %477 = arith.truncf %476 : vector<8x362xf32> to vector<8x362xbf16>
    %cst_142 = arith.constant 0.000000e+00 : f32
    %478 = vector.broadcast %cst_142 : f32 to vector<4x324xf32>
    %479 = vector.extract_strided_slice %477 {offsets = [0, 0], sizes = [8, 324], strides = [1, 1]} : vector<8x362xbf16> to vector<8x324xbf16>
    %480 = vector.extract_strided_slice %5 {offsets = [0, 0, 0], sizes = [1, 4, 8], strides = [1, 1, 1]} : vector<9x4x8xbf16> to vector<1x4x8xbf16>
    %481 = vector.shape_cast %480 : vector<1x4x8xbf16> to vector<4x8xbf16>
    %cst_143 = arith.constant dense<0.000000e+00> : vector<4x324xf32>
    %482 = tpu.matmul %481, %479, %cst_143 {dimension_numbers = #tpu.dot_dimension_numbers<[1], [0], [0], [1], [0, 0, 1, 1], [], []>} : vector<4x8xbf16>, vector<8x324xbf16>, vector<4x324xf32> -> vector<4x324xf32>
    %483 = arith.addf %478, %482 : vector<4x324xf32>
    %484 = vector.extract_strided_slice %477 {offsets = [0, 1], sizes = [8, 324], strides = [1, 1]} : vector<8x362xbf16> to vector<8x324xbf16>
    %485 = vector.extract_strided_slice %5 {offsets = [1, 0, 0], sizes = [1, 4, 8], strides = [1, 1, 1]} : vector<9x4x8xbf16> to vector<1x4x8xbf16>
    %486 = vector.shape_cast %485 : vector<1x4x8xbf16> to vector<4x8xbf16>
    %cst_144 = arith.constant dense<0.000000e+00> : vector<4x324xf32>
    %487 = tpu.matmul %486, %484, %cst_144 {dimension_numbers = #tpu.dot_dimension_numbers<[1], [0], [0], [1], [0, 0, 1, 1], [], []>} : vector<4x8xbf16>, vector<8x324xbf16>, vector<4x324xf32> -> vector<4x324xf32>
    %488 = arith.addf %483, %487 : vector<4x324xf32>
    %489 = vector.extract_strided_slice %477 {offsets = [0, 2], sizes = [8, 324], strides = [1, 1]} : vector<8x362xbf16> to vector<8x324xbf16>
    %490 = vector.extract_strided_slice %5 {offsets = [2, 0, 0], sizes = [1, 4, 8], strides = [1, 1, 1]} : vector<9x4x8xbf16> to vector<1x4x8xbf16>
    %491 = vector.shape_cast %490 : vector<1x4x8xbf16> to vector<4x8xbf16>
    %cst_145 = arith.constant dense<0.000000e+00> : vector<4x324xf32>
    %492 = tpu.matmul %491, %489, %cst_145 {dimension_numbers = #tpu.dot_dimension_numbers<[1], [0], [0], [1], [0, 0, 1, 1], [], []>} : vector<4x8xbf16>, vector<8x324xbf16>, vector<4x324xf32> -> vector<4x324xf32>
    %493 = arith.addf %488, %492 : vector<4x324xf32>
    %494 = vector.extract_strided_slice %477 {offsets = [0, 18], sizes = [8, 324], strides = [1, 1]} : vector<8x362xbf16> to vector<8x324xbf16>
    %495 = vector.extract_strided_slice %5 {offsets = [3, 0, 0], sizes = [1, 4, 8], strides = [1, 1, 1]} : vector<9x4x8xbf16> to vector<1x4x8xbf16>
    %496 = vector.shape_cast %495 : vector<1x4x8xbf16> to vector<4x8xbf16>
    %cst_146 = arith.constant dense<0.000000e+00> : vector<4x324xf32>
    %497 = tpu.matmul %496, %494, %cst_146 {dimension_numbers = #tpu.dot_dimension_numbers<[1], [0], [0], [1], [0, 0, 1, 1], [], []>} : vector<4x8xbf16>, vector<8x324xbf16>, vector<4x324xf32> -> vector<4x324xf32>
    %498 = arith.addf %493, %497 : vector<4x324xf32>
    %499 = vector.extract_strided_slice %477 {offsets = [0, 19], sizes = [8, 324], strides = [1, 1]} : vector<8x362xbf16> to vector<8x324xbf16>
    %500 = vector.extract_strided_slice %5 {offsets = [4, 0, 0], sizes = [1, 4, 8], strides = [1, 1, 1]} : vector<9x4x8xbf16> to vector<1x4x8xbf16>
    %501 = vector.shape_cast %500 : vector<1x4x8xbf16> to vector<4x8xbf16>
    %cst_147 = arith.constant dense<0.000000e+00> : vector<4x324xf32>
    %502 = tpu.matmul %501, %499, %cst_147 {dimension_numbers = #tpu.dot_dimension_numbers<[1], [0], [0], [1], [0, 0, 1, 1], [], []>} : vector<4x8xbf16>, vector<8x324xbf16>, vector<4x324xf32> -> vector<4x324xf32>
    %503 = arith.addf %498, %502 : vector<4x324xf32>
    %504 = vector.extract_strided_slice %477 {offsets = [0, 20], sizes = [8, 324], strides = [1, 1]} : vector<8x362xbf16> to vector<8x324xbf16>
    %505 = vector.extract_strided_slice %5 {offsets = [5, 0, 0], sizes = [1, 4, 8], strides = [1, 1, 1]} : vector<9x4x8xbf16> to vector<1x4x8xbf16>
    %506 = vector.shape_cast %505 : vector<1x4x8xbf16> to vector<4x8xbf16>
    %cst_148 = arith.constant dense<0.000000e+00> : vector<4x324xf32>
    %507 = tpu.matmul %506, %504, %cst_148 {dimension_numbers = #tpu.dot_dimension_numbers<[1], [0], [0], [1], [0, 0, 1, 1], [], []>} : vector<4x8xbf16>, vector<8x324xbf16>, vector<4x324xf32> -> vector<4x324xf32>
    %508 = arith.addf %503, %507 : vector<4x324xf32>
    %509 = vector.extract_strided_slice %477 {offsets = [0, 36], sizes = [8, 324], strides = [1, 1]} : vector<8x362xbf16> to vector<8x324xbf16>
    %510 = vector.extract_strided_slice %5 {offsets = [6, 0, 0], sizes = [1, 4, 8], strides = [1, 1, 1]} : vector<9x4x8xbf16> to vector<1x4x8xbf16>
    %511 = vector.shape_cast %510 : vector<1x4x8xbf16> to vector<4x8xbf16>
    %cst_149 = arith.constant dense<0.000000e+00> : vector<4x324xf32>
    %512 = tpu.matmul %511, %509, %cst_149 {dimension_numbers = #tpu.dot_dimension_numbers<[1], [0], [0], [1], [0, 0, 1, 1], [], []>} : vector<4x8xbf16>, vector<8x324xbf16>, vector<4x324xf32> -> vector<4x324xf32>
    %513 = arith.addf %508, %512 : vector<4x324xf32>
    %514 = vector.extract_strided_slice %477 {offsets = [0, 37], sizes = [8, 324], strides = [1, 1]} : vector<8x362xbf16> to vector<8x324xbf16>
    %515 = vector.extract_strided_slice %5 {offsets = [7, 0, 0], sizes = [1, 4, 8], strides = [1, 1, 1]} : vector<9x4x8xbf16> to vector<1x4x8xbf16>
    %516 = vector.shape_cast %515 : vector<1x4x8xbf16> to vector<4x8xbf16>
    %cst_150 = arith.constant dense<0.000000e+00> : vector<4x324xf32>
    %517 = tpu.matmul %516, %514, %cst_150 {dimension_numbers = #tpu.dot_dimension_numbers<[1], [0], [0], [1], [0, 0, 1, 1], [], []>} : vector<4x8xbf16>, vector<8x324xbf16>, vector<4x324xf32> -> vector<4x324xf32>
    %518 = arith.addf %513, %517 : vector<4x324xf32>
    %519 = vector.extract_strided_slice %477 {offsets = [0, 38], sizes = [8, 324], strides = [1, 1]} : vector<8x362xbf16> to vector<8x324xbf16>
    %520 = vector.extract_strided_slice %5 {offsets = [8, 0, 0], sizes = [1, 4, 8], strides = [1, 1, 1]} : vector<9x4x8xbf16> to vector<1x4x8xbf16>
    %521 = vector.shape_cast %520 : vector<1x4x8xbf16> to vector<4x8xbf16>
    %cst_151 = arith.constant dense<0.000000e+00> : vector<4x324xf32>
    %522 = tpu.matmul %521, %519, %cst_151 {dimension_numbers = #tpu.dot_dimension_numbers<[1], [0], [0], [1], [0, 0, 1, 1], [], []>} : vector<4x8xbf16>, vector<8x324xbf16>, vector<4x324xf32> -> vector<4x324xf32>
    %523 = arith.addf %518, %522 : vector<4x324xf32>
    %524 = vector.broadcast %7 : vector<4x1xf32> to vector<4x324xf32>
    %525 = arith.addf %523, %524 : vector<4x324xf32>
    %526 = vector.extract_strided_slice %412 {offsets = [0, 19], sizes = [4, 324], strides = [1, 1]} : vector<4x362xf32> to vector<4x324xf32>
    %527 = arith.addf %526, %525 : vector<4x324xf32>
    %528 = arith.subf %527, %405 : vector<4x324xf32>
    %cst_152 = arith.constant 5.000000e-01 : f32
    %529 = vector.broadcast %cst_152 : f32 to vector<4x324xf32>
    %530 = arith.mulf %528, %529 : vector<4x324xf32>
    %531 = arith.addf %405, %530 : vector<4x324xf32>
    %cst_153 = arith.constant 1.000000e+00 : f32
    %532 = vector.broadcast %cst_153 : f32 to vector<4x324xf32>
    %533 = arith.cmpf oge, %531, %532 : vector<4x324xf32>
    %534 = arith.extui %533 : vector<4x324xi1> to vector<4x324xi32>
    %535 = arith.sitofp %534 : vector<4x324xi32> to vector<4x324xf32>
    %cst_154 = arith.constant 1.000000e+00 : f32
    %536 = vector.broadcast %cst_154 : f32 to vector<4x324xf32>
    %537 = arith.subf %536, %535 : vector<4x324xf32>
    %538 = arith.mulf %531, %537 : vector<4x324xf32>
    %539 = arith.index_cast %c3_i32 : i32 to index
    %c0_155 = arith.constant 0 : index
    %c0_156 = arith.constant 0 : index
    %c0_157 = arith.constant 0 : index
    %540 = vector.load %arg7[%539, %c0_155, %c0_156, %c0_157] : memref<4x1x4x324xf32, #tpu.memory_space<vmem>>, vector<1x1x4x324xf32>
    %541 = vector.shape_cast %540 : vector<1x1x4x324xf32> to vector<4x324xf32>
    %542 = vector.shape_cast %535 : vector<4x324xf32> to vector<1x1x4x324xf32>
    tpu.vector_store %arg7[%539, %c0_155, %c0_156, %c0_157], %542 {strides = array<i32>} : memref<4x1x4x324xf32, #tpu.memory_space<vmem>>, vector<1x1x4x324xf32>,
    %c4_i32 = arith.constant 4 : i32
    return
  }
  func.func @transform_0(%arg0: i32) -> (i32, i32, i32, i32) {
    %c0_i32 = arith.constant 0 : i32
    %c0_i32_0 = arith.constant 0 : i32
    %c0_i32_1 = arith.constant 0 : i32
    %c0_i32_2 = arith.constant 0 : i32
    return %c0_i32, %arg0, %c0_i32_0, %c0_i32_1 : i32, i32, i32, i32
  }
  func.func @transform_1(%arg0: i32) -> (i32, i32, i32) {
    %c0_i32 = arith.constant 0 : i32
    %c0_i32_0 = arith.constant 0 : i32
    %c0_i32_1 = arith.constant 0 : i32
    %c0_i32_2 = arith.constant 0 : i32
    return %c0_i32, %c0_i32_0, %c0_i32_1 : i32, i32, i32
  }
  func.func @transform_2(%arg0: i32) -> (i32, i32) {
    %c0_i32 = arith.constant 0 : i32
    %c0_i32_0 = arith.constant 0 : i32
    %c0_i32_1 = arith.constant 0 : i32
    return %c0_i32, %c0_i32_0 : i32, i32
  }
  func.func @transform_3(%arg0: i32) -> (i32, i32, i32) {
    %c0_i32 = arith.constant 0 : i32
    %c0_i32_0 = arith.constant 0 : i32
    %c0_i32_1 = arith.constant 0 : i32
    %c0_i32_2 = arith.constant 0 : i32
    return %c0_i32, %c0_i32_0, %c0_i32_1 : i32, i32, i32
  }
  func.func @transform_4(%arg0: i32) -> (i32, i32) {
    %c0_i32 = arith.constant 0 : i32
    %c0_i32_0 = arith.constant 0 : i32
    %c0_i32_1 = arith.constant 0 : i32
    return %c0_i32, %c0_i32_0 : i32, i32
  }
  func.func @transform_5(%arg0: i32) -> (i32, i32) {
    %c0_i32 = arith.constant 0 : i32
    %c0_i32_0 = arith.constant 0 : i32
    %c0_i32_1 = arith.constant 0 : i32
    return %c0_i32, %c0_i32_0 : i32, i32
  }
  func.func @transform_6(%arg0: i32) -> (i32, i32, i32, i32) {
    %c0_i32 = arith.constant 0 : i32
    %c0_i32_0 = arith.constant 0 : i32
    %c0_i32_1 = arith.constant 0 : i32
    %c0_i32_2 = arith.constant 0 : i32
    return %c0_i32, %arg0, %c0_i32_0, %c0_i32_1 : i32, i32, i32, i32
  }
}

</mosaic_0001>

<llo_original>
// kernel: tpu_custom_call.1
$region0: #{tpu_custom_call.1}
  #allocation0 [shape = 'u32[]', space=smem, size = 0x4, offset = 0x4, fixed_abs, tag = 'smem constant byte address 0x4 - core index']
  #allocation1 [shape = 'u32[144,128]{1,0:T(1,128)}', space=vmem, size = 0x12000, scoped, tag = 'internal scratch']
  #allocation2 [shape = 'f32[8,362]{1,0:T(8,128)}', space=vmem, size = 0x3000, scoped, tag = 'scratch operand']
  %s0 = inlined_call_operand.vmem [shape: f32[4,2,4,362], index: 0, kind: input, shape index: {}]
  %s1 = inlined_call_operand.vmem [shape: f32[9,8,4], index: 1, kind: input, shape index: {}]
  %s2 = inlined_call_operand.vmem [shape: f32[8,1], index: 2, kind: input, shape index: {}]
  %s3 = inlined_call_operand.vmem [shape: f32[9,4,8], index: 3, kind: input, shape index: {}]
  %s4 = inlined_call_operand.vmem [shape: f32[4,1], index: 4, kind: input, shape index: {}]
  %s5 = inlined_call_operand.vmem [shape: f32[1,324], index: 5, kind: input, shape index: {}]
  %s6 = inlined_call_operand.hbm [shape: f32[4,2,4,324], index: 6, kind: output, shape index: {}]
  %s7 = sld [smem:[#allocation0]]
  $region83: #{tpu_custom_call.1} parent=0
    _
  %s9 = ssub.s32 1, %s7
  %s10 = scalar_select 0, %s9, %s7
  $region1: #{tpu_custom_call.1} parent=0
    #allocation3 [shape = 'u8[49152]{0}', space=vmem, size = 0xc000, scoped, tag = 'input window, operand 0']
    #allocation4 [shape = 'u8[49152]{0}', space=vmem, size = 0xc000, scoped, tag = 'output window, operand 0']
    #allocation5 [shape = 's32[2]{0}', space=sflag, size = 0x8, scoped, tag = 'scoped memory for tpu_custom_call.1']
    %11 = vsyncpa [#allocation5], 0
    %s12 = scalar_lea.sflag [#allocation5], 1
    %13 = vsyncpa %s12, 0
    loop: start=0, step=1, limit=4
    $region2: #{tpu_custom_call.1} parent=1 // loop_pre_header
      _
    $region3: #{tpu_custom_call.1} parent=1 // loop_header
      %s15 = sphi 0, %s19
      %p16 = scmp.ge.s32.totalorder %s15, 4
      %s25 = sphi 0, %s27
      %s28 = sphi 0, %s25
      %s29 = sphi 0, %s28
      %s45 = sphi 0, %s29
      %s49 = sphi 0, %s49
      %s51 = sphi 0, %s49
      %s52 = sphi 0, %s51
      %s66 = sphi 0, %s52
      %s70 = sphi 0, %s70
      %s72 = sphi 0, %s70
      %s73 = sphi 0, %s72
      %s87 = sphi 0, %s73
      %s91 = sphi 0, %s91
      %s93 = sphi 0, %s91
      %s94 = sphi 0, %s93
      %s108 = sphi 0, %s94
      %s112 = sphi 0, %s112
      %s114 = sphi 0, %s112
      %s115 = sphi 0, %s114
      %s129 = sphi 0, %s115
      %s133 = sphi 0, %s133
      %s135 = sphi 0, %s133
      %s136 = sphi 0, %s135
      %s150 = sphi 0, %s136
      %s156 = sphi 0, %s158
      %s159 = sphi 0, %s156
      %s160 = sphi 0, %s159
      %s176 = sphi 0, %s160
    $region4: #{tpu_custom_call.1} parent=1 // loop_header_branch
      %18 = sbr.rel (%p16) target = $region8
    $region5: #{tpu_custom_call.1} parent=1 // loop_body
      %s20 = ssub.s32 %s15, 1
      %s21 = ssub.s32 %s15, 2
      %s22 = sadd.s32 %s15, 1
      %s23 = ssub.s32 %s15, %s22
      %p24 = scmp.eq.s32.totalorder %s23, 0
      %s26 = sadd.s32 %s25, 1
      %s27 = scalar_select %p24, %s25, %s26
      %p30 = pneg %p24
      %p31 = scmp.eq.s32.totalorder %s15, 1
      %p32 = por %p30, %p31
      %p33 = scmp.ne.s32.totalorder %s25, %s28
      %p34 = scmp.eq.s32.totalorder %s15, 0
      %p35 = por %p33, %p34
      %p36 = scmp.ne.s32.totalorder %s25, %s28
      %p37 = scmp.eq.s32.totalorder %s20, 1
      %p38 = por %p36, %p37
      %p39 = scmp.ne.s32.totalorder %s28, %s29
      %p40 = scmp.eq.s32.totalorder %s20, 0
      %p41 = por %p39, %p40
      %p42 = scmp.ne.s32.totalorder %s28, %s29
      %p43 = scmp.eq.s32.totalorder %s21, 1
      %p44 = por %p42, %p43
      %p46 = scmp.ne.s32.totalorder %s29, %s45
      %p47 = scmp.eq.s32.totalorder %s21, 0
      %p48 = por %p46, %p47
      %s50 = sadd.s32 %s49, 1
      %p53 = scmp.eq.s32.totalorder %s15, 1
      %p54 = scmp.ne.s32.totalorder %s49, %s51
      %p55 = scmp.eq.s32.totalorder %s15, 0
      %p56 = por %p54, %p55
      %p57 = scmp.ne.s32.totalorder %s49, %s51
      %p58 = scmp.eq.s32.totalorder %s20, 1
      %p59 = por %p57, %p58
      %p60 = scmp.ne.s32.totalorder %s51, %s52
      %p61 = scmp.eq.s32.totalorder %s20, 0
      %p62 = por %p60, %p61
      %p63 = scmp.ne.s32.totalorder %s51, %s52
      %p64 = scmp.eq.s32.totalorder %s21, 1
      %p65 = por %p63, %p64
      %p67 = scmp.ne.s32.totalorder %s52, %s66
      %p68 = scmp.eq.s32.totalorder %s21, 0
      %p69 = por %p67, %p68
      %s71 = sadd.s32 %s70, 1
      %p74 = scmp.eq.s32.totalorder %s15, 1
      %p75 = scmp.ne.s32.totalorder %s70, %s72
      %p76 = scmp.eq.s32.totalorder %s15, 0
      %p77 = por %p75, %p76
      %p78 = scmp.ne.s32.totalorder %s70, %s72
      %p79 = scmp.eq.s32.totalorder %s20, 1
      %p80 = por %p78, %p79
      %p81 = scmp.ne.s32.totalorder %s72, %s73
      %p82 = scmp.eq.s32.totalorder %s20, 0
      %p83 = por %p81, %p82
      %p84 = scmp.ne.s32.totalorder %s72, %s73
      %p85 = scmp.eq.s32.totalorder %s21, 1
      %p86 = por %p84, %p85
      %p88 = scmp.ne.s32.totalorder %s73, %s87
      %p89 = scmp.eq.s32.totalorder %s21, 0
      %p90 = por %p88, %p89
      %s92 = sadd.s32 %s91, 1
      %p95 = scmp.eq.s32.totalorder %s15, 1
      %p96 = scmp.ne.s32.totalorder %s91, %s93
      %p97 = scmp.eq.s32.totalorder %s15, 0
      %p98 = por %p96, %p97
      %p99 = scmp.ne.s32.totalorder %s91, %s93
      %p100 = scmp.eq.s32.totalorder %s20, 1
      %p101 = por %p99, %p100
      %p102 = scmp.ne.s32.totalorder %s93, %s94
      %p103 = scmp.eq.s32.totalorder %s20, 0
      %p104 = por %p102, %p103
      %p105 = scmp.ne.s32.totalorder %s93, %s94
      %p106 = scmp.eq.s32.totalorder %s21, 1
      %p107 = por %p105, %p106
      %p109 = scmp.ne.s32.totalorder %s94, %s108
      %p110 = scmp.eq.s32.totalorder %s21, 0
      %p111 = por %p109, %p110
      %s113 = sadd.s32 %s112, 1
      %p116 = scmp.eq.s32.totalorder %s15, 1
      %p117 = scmp.ne.s32.totalorder %s112, %s114
      %p118 = scmp.eq.s32.totalorder %s15, 0
      %p119 = por %p117, %p118
      %p120 = scmp.ne.s32.totalorder %s112, %s114
      %p121 = scmp.eq.s32.totalorder %s20, 1
      %p122 = por %p120, %p121
      %p123 = scmp.ne.s32.totalorder %s114, %s115
      %p124 = scmp.eq.s32.totalorder %s20, 0
      %p125 = por %p123, %p124
      %p126 = scmp.ne.s32.totalorder %s114, %s115
      %p127 = scmp.eq.s32.totalorder %s21, 1
      %p128 = por %p126, %p127
      %p130 = scmp.ne.s32.totalorder %s115, %s129
      %p131 = scmp.eq.s32.totalorder %s21, 0
      %p132 = por %p130, %p131
      %s134 = sadd.s32 %s133, 1
      %p137 = scmp.eq.s32.totalorder %s15, 1
      %p138 = scmp.ne.s32.totalorder %s133, %s135
      %p139 = scmp.eq.s32.totalorder %s15, 0
      %p140 = por %p138, %p139
      %p141 = scmp.ne.s32.totalorder %s133, %s135
      %p142 = scmp.eq.s32.totalorder %s20, 1
      %p143 = por %p141, %p142
      %p144 = scmp.ne.s32.totalorder %s135, %s136
      %p145 = scmp.eq.s32.totalorder %s20, 0
      %p146 = por %p144, %p145
      %p147 = scmp.ne.s32.totalorder %s135, %s136
      %p148 = scmp.eq.s32.totalorder %s21, 1
      %p149 = por %p147, %p148
      %p151 = scmp.ne.s32.totalorder %s136, %s150
      %p152 = scmp.eq.s32.totalorder %s21, 0
      %p153 = por %p151, %p152
      %s154 = ssub.s32 %s15, %s22
      %p155 = scmp.eq.s32.totalorder %s154, 0
      %s157 = sadd.s32 %s156, 1
      %s158 = scalar_select %p155, %s156, %s157
      %p161 = pneg %p155
      %p162 = scmp.eq.s32.totalorder %s15, 1
      %p163 = por %p161, %p162
      %p164 = scmp.ne.s32.totalorder %s156, %s159
      %p165 = scmp.eq.s32.totalorder %s15, 0
      %p166 = por %p164, %p165
      %p167 = scmp.ne.s32.totalorder %s156, %s159
      %p168 = scmp.eq.s32.totalorder %s20, 1
      %p169 = por %p167, %p168
      %p170 = scmp.ne.s32.totalorder %s159, %s160
      %p171 = scmp.eq.s32.totalorder %s20, 0
      %p172 = por %p170, %p171
      %p173 = scmp.ne.s32.totalorder %s159, %s160
      %p174 = scmp.eq.s32.totalorder %s21, 1
      %p175 = por %p173, %p174
      %p177 = scmp.ne.s32.totalorder %s160, %s176
      %p178 = scmp.eq.s32.totalorder %s21, 0
      %p179 = por %p177, %p178
      %p180 = scmp.le.s32.totalorder 1, %s15
      %p181 = scmp.lt.s32.totalorder %s15, 3
      %p182 = pnand %p180, %p181
      %p183 = pneg %p182
      // Predicated region
      $region9: #{tpu_custom_call.1} parent=5 // pred_check
        _
      $region10: #{tpu_custom_call.1} parent=5 // pred_check_branch
        %185 = sbr.rel (%p182) target = $region12
      $region11: #{tpu_custom_call.1} parent=5 // pred_region
        %s186 = ssub.s32 %s15, 1
        // Predicated region
        $region13: #{tpu_custom_call.1} parent=11 // pred_check
          %p187 = pneg %p62
        $region14: #{tpu_custom_call.1} parent=11 // pred_check_branch
          %189 = sbr.rel (%p187) target = $region16
        $region15: #{tpu_custom_call.1} parent=11 // pred_region
          _
        $region16: #{tpu_custom_call.1} parent=11 // pred_fallthru
          _
        // Predicated region
        $region17: #{tpu_custom_call.1} parent=11 // pred_check
          %p190 = pneg %p83
        $region18: #{tpu_custom_call.1} parent=11 // pred_check_branch
          %192 = sbr.rel (%p190) target = $region20
        $region19: #{tpu_custom_call.1} parent=11 // pred_region
          _
        $region20: #{tpu_custom_call.1} parent=11 // pred_fallthru
          _
        // Predicated region
        $region21: #{tpu_custom_call.1} parent=11 // pred_check
          %p193 = pneg %p104
        $region22: #{tpu_custom_call.1} parent=11 // pred_check_branch
          %195 = sbr.rel (%p193) target = $region24
        $region23: #{tpu_custom_call.1} parent=11 // pred_region
          _
        $region24: #{tpu_custom_call.1} parent=11 // pred_fallthru
          _
        // Predicated region
        $region25: #{tpu_custom_call.1} parent=11 // pred_check
          %p196 = pneg %p125
        $region26: #{tpu_custom_call.1} parent=11 // pred_check_branch
          %198 = sbr.rel (%p196) target = $region28
        $region27: #{tpu_custom_call.1} parent=11 // pred_region
          _
        $region28: #{tpu_custom_call.1} parent=11 // pred_fallthru
          _
        // Predicated region
        $region29: #{tpu_custom_call.1} parent=11 // pred_check
          %p199 = pneg %p146
        $region30: #{tpu_custom_call.1} parent=11 // pred_check_branch
          %201 = sbr.rel (%p199) target = $region32
        $region31: #{tpu_custom_call.1} parent=11 // pred_region
          _
        $region32: #{tpu_custom_call.1} parent=11 // pred_fallthru
          _
      $region12: #{tpu_custom_call.1} parent=5 // pred_fallthru
        _
      %p202 = scmp.lt.s32.totalorder %s15, 2
      // Predicated region
      $region33: #{tpu_custom_call.1} parent=5 // pred_check
        %p203 = pneg %p202
      $region34: #{tpu_custom_call.1} parent=5 // pred_check_branch
        %205 = sbr.rel (%p203) target = $region36
      $region35: #{tpu_custom_call.1} parent=5 // pred_region
        // Predicated region
        $region37: #{tpu_custom_call.1} parent=35 // pred_check
          %p206 = pneg %p35
        $region38: #{tpu_custom_call.1} parent=35 // pred_check_branch
          %208 = sbr.rel (%p206) target = $region40
        $region39: #{tpu_custom_call.1} parent=35 // pred_region
          %s209 = sand.u32 %s25, 1
          %s210 = sand.u32 %s25, 1
          %s211 = smul.addr %s210, 48
          %s212 = scalar_lea.vmem [#allocation3], %s211
          %s213 = smul.addr %s15, 3
          %s214 = smul.addr %s213, 4
          %s215 = scalar_lea.vmem %s0, %s214
          // Predicated region
          $region41: #{tpu_custom_call.1} parent=39 // pred_check
            _
          $region42: #{tpu_custom_call.1} parent=39 // pred_check_branch
            %217 = sbr.rel (0) target = $region44
          $region43: #{tpu_custom_call.1} parent=39 // pred_region
            // Predicated region
            $region45: #{tpu_custom_call.1} parent=43 // pred_check
              _
            $region46: #{tpu_custom_call.1} parent=43 // pred_check_branch
              %219 = sbr.rel (0) target = $region48
            $region47: #{tpu_custom_call.1} parent=43 // pred_region
              %s220 = scalar_lea.vmem %s215, 8
              %s221 = scalar_lea.vmem %s212, 8 [#allocation3]
              loop: start=0, step=1, limit=1
              $region49: #{tpu_custom_call.1} parent=47 // loop_pre_header
                _
              $region50: #{tpu_custom_call.1} parent=47 // loop_header
                %s223 = sphi 0, %s227
                %p224 = scmp.ge.s32.totalorder %s223, 1
                %s228 = sphi %s215, %s215
                %s229 = sphi %s212, %s212
              $region51: #{tpu_custom_call.1} parent=47 // loop_header_branch
                %226 = sbr.rel (%p224) target = $region55
              $region52: #{tpu_custom_call.1} parent=47 // loop_body
                %v230 = vld [vmem:[%s228] sm:$0xff]
                %231 = vst [vmem:[%s229] sm:$0xff] %v230
                %v232 = vld [vmem:[%s228 + $0x18] sm:$0xff]
                %233 = vst [vmem:[%s229 + $0xc] sm:$0xff] %v232
                %v234 = vld [vmem:[%s228 + $0x30] sm:$0xff]
                %235 = vst [vmem:[%s229 + $0x18] sm:$0xff] %v234
                %v236 = vld [vmem:[%s228 + $0x48] sm:$0xff]
                %237 = vst [vmem:[%s229 + $0x24] sm:$0xff] %v236
              $region53: #{tpu_custom_call.1} parent=47 // loop_footer
                %s227 = sadd.s32 1, %s223
              $region54: #{tpu_custom_call.1} parent=47 // loop_footer_branch
                %222 = sbr.rel target = $region50
              $region55: #{tpu_custom_call.1} parent=47 // loop_exit
                _
              %s239 = ssub.s32 16, 1
              loop: start=0, step=1, limit=1
              $region56: #{tpu_custom_call.1} parent=47 // loop_pre_header
                _
              $region57: #{tpu_custom_call.1} parent=47 // loop_header
                %s241 = sphi 0, %s245
                %p242 = scmp.ge.s32.totalorder %s241, 1
                %s246 = sphi %s220, %s220
                %s247 = sphi %s221, %s221
              $region58: #{tpu_custom_call.1} parent=47 // loop_header_branch
                %244 = sbr.rel (%p242) target = $region62
              $region59: #{tpu_custom_call.1} parent=47 // loop_body
                %v248 = vld [vmem:[%s246] sm:%s239]
                %249 = vst [vmem:[%s247] sm:%s239] %v248
                %v250 = vld [vmem:[%s246 + $0x18] sm:%s239]
                %251 = vst [vmem:[%s247 + $0xc] sm:%s239] %v250
                %v252 = vld [vmem:[%s246 + $0x30] sm:%s239]
                %253 = vst [vmem:[%s247 + $0x18] sm:%s239] %v252
                %v254 = vld [vmem:[%s246 + $0x48] sm:%s239]
                %255 = vst [vmem:[%s247 + $0x24] sm:%s239] %v254
              $region60: #{tpu_custom_call.1} parent=47 // loop_footer
                %s245 = sadd.s32 1, %s241
              $region61: #{tpu_custom_call.1} parent=47 // loop_footer_branch
                %240 = sbr.rel target = $region57
              $region62: #{tpu_custom_call.1} parent=47 // loop_exit
                _
            $region48: #{tpu_custom_call.1} parent=43 // pred_fallthru
              _
          $region44: #{tpu_custom_call.1} parent=39 // pred_fallthru
            _
          %256 = vnop
        $region40: #{tpu_custom_call.1} parent=35 // pred_fallthru
          _
      $region36: #{tpu_custom_call.1} parent=5 // pred_fallthru
        _
      %p257 = scmp.le.s32.totalorder 1, %s15
      %p258 = scmp.lt.s32.totalorder %s15, 3
      %p259 = pnand %p257, %p258
      %p260 = pneg %p259
      // Predicated region
      $region63: #{tpu_custom_call.1} parent=5 // pred_check
        _
      $region64: #{tpu_custom_call.1} parent=5 // pred_check_branch
        %262 = sbr.rel (%p259) target = $region66
      $region65: #{tpu_custom_call.1} parent=5 // pred_region
        %s263 = ssub.s32 %s15, 1
        %s264 = sand.u32 %s28, 1
        %s265 = sand.u32 %s28, 1
        %s266 = smul.addr %s265, 48
        %s267 = scalar_lea.vmem [#allocation3], %s266
        // Predicated region
        $region67: #{tpu_custom_call.1} parent=65 // pred_check
          %p268 = pneg %p41
        $region68: #{tpu_custom_call.1} parent=65 // pred_check_branch
          %270 = sbr.rel (%p268) target = $region70
        $region69: #{tpu_custom_call.1} parent=65 // pred_region
          _
        $region70: #{tpu_custom_call.1} parent=65 // pred_fallthru
          _
        %s271 = sand.u32 %s28, 1
        %s272 = sand.u32 %s28, 1
        %s273 = smul.addr %s272, 48
        %s274 = scalar_lea.vmem [#allocation3], %s273
        %p275 = pneg %p41
        %p276 = pneg %p38
        %p277 = pneg %p62
        %p278 = pneg %p59
        %p279 = pneg %p83
        %p280 = pneg %p80
        %p281 = pneg %p104
        %p282 = pneg %p101
        %p283 = pneg %p125
        %p284 = pneg %p122
        %p285 = pneg %p146
        %p286 = pneg %p143
        %p287 = pneg %p172
        %p288 = pneg %p169
        %s289 = sand.u32 %s159, 1
        %s290 = scalar_lea.sflag [#allocation5], %s289
        %s291 = sand.u32 %s159, 1
        %s292 = smul.addr %s291, 48
        %s293 = scalar_lea.vmem [#allocation4], %s292
        %295 = vst [vmem:[#allocation2] sm:$0xff] 0.0
        %296 = vst [vmem:[#allocation2 + $0x8] sm:$0xff] 0.0
        %vm297 = vcmask 867328
        %298 = vst.msk [vmem:[#allocation2 + $0x10] sm:$0xff] %vm297, 0.0
        %v299 = vld [vmem:[%s1] sm:$0xff]
        %v300 = vld [vmem:[%s1 + $0x8] sm:$0xff]
        %v301 = vld [vmem:[%s1 + $0x10] sm:$0xff]
        %v302 = vld [vmem:[%s1 + $0x18] sm:$0xff]
        %v303 = vld [vmem:[%s1 + $0x20] sm:$0xff]
        %v304 = vld [vmem:[%s1 + $0x28] sm:$0xff]
        %v305 = vld [vmem:[%s1 + $0x30] sm:$0xff]
        %v306 = vld [vmem:[%s1 + $0x38] sm:$0xff]
        %v307 = vld [vmem:[%s1 + $0x40] sm:$0xff]
        %v308 = vpack.c.bf16 %v299, %v299
        %v309 = vpack.c.bf16 %v300, %v300
        %v310 = vpack.c.bf16 %v301, %v301
        %v311 = vpack.c.bf16 %v302, %v302
        %v312 = vpack.c.bf16 %v303, %v303
        %v313 = vpack.c.bf16 %v304, %v304
        %v314 = vpack.c.bf16 %v305, %v305
        %v315 = vpack.c.bf16 %v306, %v306
        %v316 = vpack.c.bf16 %v307, %v307
        %v317 = vld [vmem:[%s3] sm:$0xf]
        %v318 = vld [vmem:[%s3 + $0x4] sm:$0xf]
        %v319 = vld [vmem:[%s3 + $0x8] sm:$0xf]
        %v320 = vld [vmem:[%s3 + $0xc] sm:$0xf]
        %v321 = vld [vmem:[%s3 + $0x10] sm:$0xf]
        %v322 = vld [vmem:[%s3 + $0x14] sm:$0xf]
        %v323 = vld [vmem:[%s3 + $0x18] sm:$0xf]
        %v324 = vld [vmem:[%s3 + $0x1c] sm:$0xf]
        %v325 = vld [vmem:[%s3 + $0x20] sm:$0xf]
        %v326 = vpack.c.bf16 %v317, %v317
        %v327 = vpack.c.bf16 %v318, %v318
        %v328 = vpack.c.bf16 %v319, %v319
        %v329 = vpack.c.bf16 %v320, %v320
        %v330 = vpack.c.bf16 %v321, %v321
        %v331 = vpack.c.bf16 %v322, %v322
        %v332 = vpack.c.bf16 %v323, %v323
        %v333 = vpack.c.bf16 %v324, %v324
        %v334 = vpack.c.bf16 %v325, %v325
        %v335 = vld [vmem:[%s2] sm:$0xff]
        %v336 = vld [vmem:[%s4] sm:$0xf]
        %v337 = vld [vmem:[%s5] sm:$0x7]
        %v338 = vld [vmem:[%s267] sm:$0xff]
        %v339 = vld [vmem:[%s267 + $0x8] sm:$0xf]
        %v341 = vcombine.high %v338, %v338
        %v343 = vpack.c.bf16 %v338, %v338
        %v344 = vpack.c.bf16 %v341, %v341
        %v345 = vpack.c.bf16 %v339, %v339
        %349 = vrot.lane.b32.xlu0 %v343, 127
        %v350 = vpop.permute.xlu0 %349
        %351 = vrot.lane.b32.xlu0 %v344, 127
        %v352 = vpop.permute.xlu0 %351
        %353 = vrot.lane.b32.xlu0 %v345, 127
        %v354 = vpop.permute.xlu0 %353
        %vm355 = vcmask 1039360
        %v356 = vsel %vm355, %v350, %v352
        %v357 = vsel %vm355, %v352, %v354
        %vm358 = vcmask 31744
        %v360 = vsel %vm358, %v309, 0
        %vm362 = vcmask 1041408
        %v364 = vsel %vm362, %v356, 0
        %v367 = vsel %vm362, %v357, 0
        %v370 = vsel %vm362, %v354, 0
        %372 = vmatprep.subr.bf16.mxu0 0
        %373 = vmatpush1.bf16.msra.mxu0 0
        %374 = vmatprep.subr.bf16.mxu0 0
        %375 = vmatpush1.bf16.msra.mxu0 0
        %376 = vmatprep.subr.bf16.mxu0 0
        %377 = vmatpush1.bf16.msra.mxu0 0
        %378 = vmatprep.subr.bf16.mxu0 0
        %379 = vmatpush1.bf16.msra.mxu0 0
        %380 = vmatprep.subr.bf16.mxu0 0
        %381 = vmatpush1.bf16.msra.mxu0 0
        %382 = vmatprep.subr.bf16.mxu0 0
        %383 = vmatpush1.bf16.msra.mxu0 0
        %384 = vmatprep.subr.bf16.mxu0 0
        %385 = vmatpush1.bf16.msra.mxu0 0
        %386 = vmatprep.subr.bf16.mxu0 %v367
        %387 = vmatpush1.bf16.msra.mxu0 %v364
        %388 = vmatprep.subr.bf16.mxu0 0
        %389 = vmatpush2.bf16.msra.mxu0 0
        %390 = vmatprep.subr.bf16.mxu0 0
        %391 = vmatpush2.bf16.msra.mxu0 0
        %392 = vmatprep.subr.bf16.mxu0 0
        %393 = vmatpush2.bf16.msra.mxu0 0
        %394 = vmatprep.subr.bf16.mxu0 0
        %395 = vmatpush2.bf16.msra.mxu0 0
        %396 = vmatprep.subr.bf16.mxu0 0
        %397 = vmatpush2.bf16.msra.mxu0 0
        %398 = vmatprep.subr.bf16.mxu0 0
        %399 = vmatpush2.bf16.msra.mxu0 0
        %400 = vmatprep.subr.bf16.mxu0 0
        %401 = vmatpush2.bf16.msra.mxu0 0
        %402 = vmatprep.subr.bf16.mxu0 0
        %403 = vmatpush2.bf16.msra.mxu0 0
        %404 = vmatprep.mubr.bf16.mxu0 0
        %405 = vmatmul.mubr.bf16.gmra.mxu0 %v360
        %v406 = vpop.f32.mrf.mxu0
        %v407 = vadd.f32 0.0, %v406
        %v408 = vpop.f32.mrf.mxu0
        %v409 = vadd.f32 0.0, %v408
        %v410 = vpop.f32.mrf.mxu0
        %v411 = vpop.f32.mrf.mxu0
        %412 = vdwg.mxu0
        %413 = vmatprep.subr.bf16.mxu0 0
        %414 = vmatpush1.bf16.msra.mxu0 0
        %415 = vmatprep.subr.bf16.mxu0 0
        %416 = vmatpush1.bf16.msra.mxu0 0
        %417 = vmatprep.subr.bf16.mxu0 0
        %418 = vmatpush1.bf16.msra.mxu0 0
        %419 = vmatprep.subr.bf16.mxu0 0
        %420 = vmatpush1.bf16.msra.mxu0 0
        %421 = vmatprep.subr.bf16.mxu0 0
        %422 = vmatpush1.bf16.msra.mxu0 0
        %423 = vmatprep.subr.bf16.mxu0 0
        %424 = vmatpush1.bf16.msra.mxu0 0
        %425 = vmatprep.subr.bf16.mxu0 0
        %426 = vmatpush1.bf16.msra.mxu0 0
        %427 = vmatprep.subr.bf16.mxu0 0
        %428 = vmatpush1.bf16.msra.mxu0 %v370
        %429 = vmatprep.subr.bf16.mxu0 0
        %430 = vmatpush2.bf16.msra.mxu0 0
        %431 = vmatprep.subr.bf16.mxu0 0
        %432 = vmatpush2.bf16.msra.mxu0 0
        %433 = vmatprep.subr.bf16.mxu0 0
        %434 = vmatpush2.bf16.msra.mxu0 0
        %435 = vmatprep.subr.bf16.mxu0 0
        %436 = vmatpush2.bf16.msra.mxu0 0
        %437 = vmatprep.subr.bf16.mxu0 0
        %438 = vmatpush2.bf16.msra.mxu0 0
        %439 = vmatprep.subr.bf16.mxu0 0
        %440 = vmatpush2.bf16.msra.mxu0 0
        %441 = vmatprep.subr.bf16.mxu0 0
        %442 = vmatpush2.bf16.msra.mxu0 0
        %443 = vmatprep.subr.bf16.mxu0 0
        %444 = vmatpush2.bf16.msra.mxu0 0
        %445 = vmatprep.mubr.bf16.mxu0 0
        %446 = vmatmul.mubr.bf16.gmra.mxu0 %v360
        %v447 = vpop.f32.mrf.mxu0
        %v448 = vadd.f32 0.0, %v447
        %v449 = vpop.f32.mrf.mxu0
        %v450 = vpop.f32.mrf.mxu0
        %v451 = vpop.f32.mrf.mxu0
        %452 = vdwg.mxu0
        %v454 = vsel %vm358, %v308, 0
        %v457 = vsel %vm362, %v343, 0
        %v460 = vsel %vm362, %v344, 0
        %v463 = vsel %vm362, %v345, 0
        %465 = vmatprep.subr.bf16.mxu0 0
        %466 = vmatpush1.bf16.msra.mxu0 0
        %467 = vmatprep.subr.bf16.mxu0 0
        %468 = vmatpush1.bf16.msra.mxu0 0
        %469 = vmatprep.subr.bf16.mxu0 0
        %470 = vmatpush1.bf16.msra.mxu0 0
        %471 = vmatprep.subr.bf16.mxu0 0
        %472 = vmatpush1.bf16.msra.mxu0 0
        %473 = vmatprep.subr.bf16.mxu0 0
        %474 = vmatpush1.bf16.msra.mxu0 0
        %475 = vmatprep.subr.bf16.mxu0 0
        %476 = vmatpush1.bf16.msra.mxu0 0
        %477 = vmatprep.subr.bf16.mxu0 0
        %478 = vmatpush1.bf16.msra.mxu0 0
        %479 = vmatprep.subr.bf16.mxu0 %v460
        %480 = vmatpush1.bf16.msra.mxu0 %v457
        %481 = vmatprep.subr.bf16.mxu0 0
        %482 = vmatpush2.bf16.msra.mxu0 0
        %483 = vmatprep.subr.bf16.mxu0 0
        %484 = vmatpush2.bf16.msra.mxu0 0
        %485 = vmatprep.subr.bf16.mxu0 0
        %486 = vmatpush2.bf16.msra.mxu0 0
        %487 = vmatprep.subr.bf16.mxu0 0
        %488 = vmatpush2.bf16.msra.mxu0 0
        %489 = vmatprep.subr.bf16.mxu0 0
        %490 = vmatpush2.bf16.msra.mxu0 0
        %491 = vmatprep.subr.bf16.mxu0 0
        %492 = vmatpush2.bf16.msra.mxu0 0
        %493 = vmatprep.subr.bf16.mxu0 0
        %494 = vmatpush2.bf16.msra.mxu0 0
        %495 = vmatprep.subr.bf16.mxu0 0
        %496 = vmatpush2.bf16.msra.mxu0 0
        %497 = vmatprep.mubr.bf16.mxu0 0
        %498 = vmatmul.mubr.bf16.gmra.mxu0 %v454
        %v499 = vpop.f32.mrf.mxu0
        %v500 = vadd.f32 %v407, %v499
        %v501 = vpop.f32.mrf.mxu0
        %v502 = vadd.f32 %v409, %v501
        %v503 = vpop.f32.mrf.mxu0
        %v504 = vpop.f32.mrf.mxu0
        %505 = vdwg.mxu0
        %506 = vmatprep.subr.bf16.mxu0 0
        %507 = vmatpush1.bf16.msra.mxu0 0
        %508 = vmatprep.subr.bf16.mxu0 0
        %509 = vmatpush1.bf16.msra.mxu0 0
        %510 = vmatprep.subr.bf16.mxu0 0
        %511 = vmatpush1.bf16.msra.mxu0 0
        %512 = vmatprep.subr.bf16.mxu0 0
        %513 = vmatpush1.bf16.msra.mxu0 0
        %514 = vmatprep.subr.bf16.mxu0 0
        %515 = vmatpush1.bf16.msra.mxu0 0
        %516 = vmatprep.subr.bf16.mxu0 0
        %517 = vmatpush1.bf16.msra.mxu0 0
        %518 = vmatprep.subr.bf16.mxu0 0
        %519 = vmatpush1.bf16.msra.mxu0 0
        %520 = vmatprep.subr.bf16.mxu0 0
        %521 = vmatpush1.bf16.msra.mxu0 %v463
        %522 = vmatprep.subr.bf16.mxu0 0
        %523 = vmatpush2.bf16.msra.mxu0 0
        %524 = vmatprep.subr.bf16.mxu0 0
        %525 = vmatpush2.bf16.msra.mxu0 0
        %526 = vmatprep.subr.bf16.mxu0 0
        %527 = vmatpush2.bf16.msra.mxu0 0
        %528 = vmatprep.subr.bf16.mxu0 0
        %529 = vmatpush2.bf16.msra.mxu0 0
        %530 = vmatprep.subr.bf16.mxu0 0
        %531 = vmatpush2.bf16.msra.mxu0 0
        %532 = vmatprep.subr.bf16.mxu0 0
        %533 = vmatpush2.bf16.msra.mxu0 0
        %534 = vmatprep.subr.bf16.mxu0 0
        %535 = vmatpush2.bf16.msra.mxu0 0
        %536 = vmatprep.subr.bf16.mxu0 0
        %537 = vmatpush2.bf16.msra.mxu0 0
        %538 = vmatprep.mubr.bf16.mxu0 0
        %539 = vmatmul.mubr.bf16.gmra.mxu0 %v454
        %v540 = vpop.f32.mrf.mxu0
        %v541 = vadd.f32 %v448, %v540
        %v542 = vpop.f32.mrf.mxu0
        %v543 = vpop.f32.mrf.mxu0
        %v544 = vpop.f32.mrf.mxu0
        %545 = vdwg.mxu0
        %546 = vrot.lane.b32.xlu0 %v343, 126
        %v547 = vpop.permute.xlu0 %546
        %548 = vrot.lane.b32.xlu0 %v344, 126
        %v549 = vpop.permute.xlu0 %548
        %550 = vrot.lane.b32.xlu0 %v345, 126
        %v551 = vpop.permute.xlu0 %550
        %vm552 = vcmask 1031168
        %v553 = vsel %vm552, %v547, %v549
        %v554 = vsel %vm552, %v549, %v551
        %v556 = vsel %vm358, %v310, 0
        %v559 = vsel %vm362, %v553, 0
        %v562 = vsel %vm362, %v554, 0
        %v565 = vsel %vm362, %v551, 0
        %567 = vmatprep.subr.bf16.mxu0 0
        %568 = vmatpush1.bf16.msra.mxu0 0
        %569 = vmatprep.subr.bf16.mxu0 0
        %570 = vmatpush1.bf16.msra.mxu0 0
        %571 = vmatprep.subr.bf16.mxu0 0
        %572 = vmatpush1.bf16.msra.mxu0 0
        %573 = vmatprep.subr.bf16.mxu0 0
        %574 = vmatpush1.bf16.msra.mxu0 0
        %575 = vmatprep.subr.bf16.mxu0 0
        %576 = vmatpush1.bf16.msra.mxu0 0
        %577 = vmatprep.subr.bf16.mxu0 0
        %578 = vmatpush1.bf16.msra.mxu0 0
        %579 = vmatprep.subr.bf16.mxu0 0
        %580 = vmatpush1.bf16.msra.mxu0 0
        %581 = vmatprep.subr.bf16.mxu0 %v562
        %582 = vmatpush1.bf16.msra.mxu0 %v559
        %583 = vmatprep.subr.bf16.mxu0 0
        %584 = vmatpush2.bf16.msra.mxu0 0
        %585 = vmatprep.subr.bf16.mxu0 0
        %586 = vmatpush2.bf16.msra.mxu0 0
        %587 = vmatprep.subr.bf16.mxu0 0
        %588 = vmatpush2.bf16.msra.mxu0 0
        %589 = vmatprep.subr.bf16.mxu0 0
        %590 = vmatpush2.bf16.msra.mxu0 0
        %591 = vmatprep.subr.bf16.mxu0 0
        %592 = vmatpush2.bf16.msra.mxu0 0
        %593 = vmatprep.subr.bf16.mxu0 0
        %594 = vmatpush2.bf16.msra.mxu0 0
        %595 = vmatprep.subr.bf16.mxu0 0
        %596 = vmatpush2.bf16.msra.mxu0 0
        %597 = vmatprep.subr.bf16.mxu0 0
        %598 = vmatpush2.bf16.msra.mxu0 0
        %599 = vmatprep.mubr.bf16.mxu0 0
        %600 = vmatmul.mubr.bf16.gmra.mxu0 %v556
        %v601 = vpop.f32.mrf.mxu0
        %v602 = vadd.f32 0.0, %v601
        %v603 = vpop.f32.mrf.mxu0
        %v604 = vadd.f32 0.0, %v603
        %v605 = vpop.f32.mrf.mxu0
        %v606 = vpop.f32.mrf.mxu0
        %607 = vdwg.mxu0
        %608 = vmatprep.subr.bf16.mxu0 0
        %609 = vmatpush1.bf16.msra.mxu0 0
        %610 = vmatprep.subr.bf16.mxu0 0
        %611 = vmatpush1.bf16.msra.mxu0 0
        %612 = vmatprep.subr.bf16.mxu0 0
        %613 = vmatpush1.bf16.msra.mxu0 0
        %614 = vmatprep.subr.bf16.mxu0 0
        %615 = vmatpush1.bf16.msra.mxu0 0
        %616 = vmatprep.subr.bf16.mxu0 0
        %617 = vmatpush1.bf16.msra.mxu0 0
        %618 = vmatprep.subr.bf16.mxu0 0
        %619 = vmatpush1.bf16.msra.mxu0 0
        %620 = vmatprep.subr.bf16.mxu0 0
        %621 = vmatpush1.bf16.msra.mxu0 0
        %622 = vmatprep.subr.bf16.mxu0 0
        %623 = vmatpush1.bf16.msra.mxu0 %v565
        %624 = vmatprep.subr.bf16.mxu0 0
        %625 = vmatpush2.bf16.msra.mxu0 0
        %626 = vmatprep.subr.bf16.mxu0 0
        %627 = vmatpush2.bf16.msra.mxu0 0
        %628 = vmatprep.subr.bf16.mxu0 0
        %629 = vmatpush2.bf16.msra.mxu0 0
        %630 = vmatprep.subr.bf16.mxu0 0
        %631 = vmatpush2.bf16.msra.mxu0 0
        %632 = vmatprep.subr.bf16.mxu0 0
        %633 = vmatpush2.bf16.msra.mxu0 0
        %634 = vmatprep.subr.bf16.mxu0 0
        %635 = vmatpush2.bf16.msra.mxu0 0
        %636 = vmatprep.subr.bf16.mxu0 0
        %637 = vmatpush2.bf16.msra.mxu0 0
        %638 = vmatprep.subr.bf16.mxu0 0
        %639 = vmatpush2.bf16.msra.mxu0 0
        %640 = vmatprep.mubr.bf16.mxu0 0
        %641 = vmatmul.mubr.bf16.gmra.mxu0 %v556
        %v642 = vpop.f32.mrf.mxu0
        %v643 = vadd.f32 0.0, %v642
        %v644 = vpop.f32.mrf.mxu0
        %v645 = vpop.f32.mrf.mxu0
        %v646 = vpop.f32.mrf.mxu0
        %647 = vdwg.mxu0
        %v648 = vadd.f32 %v500, %v602
        %v649 = vadd.f32 %v502, %v604
        %v650 = vadd.f32 %v541, %v643
        %651 = vrot.lane.b32.xlu0 %v343, 110
        %v652 = vpop.permute.xlu0 %651
        %653 = vrot.lane.b32.xlu0 %v344, 110
        %v654 = vpop.permute.xlu0 %653
        %655 = vrot.lane.b32.xlu0 %v345, 110
        %v656 = vpop.permute.xlu0 %655
        %vm657 = vcmask 900096
        %v658 = vsel %vm657, %v652, %v654
        %v659 = vsel %vm657, %v654, %v656
        %v661 = vsel %vm358, %v311, 0
        %v664 = vsel %vm362, %v658, 0
        %v667 = vsel %vm362, %v659, 0
        %v670 = vsel %vm362, %v656, 0
        %672 = vmatprep.subr.bf16.mxu0 0
        %673 = vmatpush1.bf16.msra.mxu0 0
        %674 = vmatprep.subr.bf16.mxu0 0
        %675 = vmatpush1.bf16.msra.mxu0 0
        %676 = vmatprep.subr.bf16.mxu0 0
        %677 = vmatpush1.bf16.msra.mxu0 0
        %678 = vmatprep.subr.bf16.mxu0 0
        %679 = vmatpush1.bf16.msra.mxu0 0
        %680 = vmatprep.subr.bf16.mxu0 0
        %681 = vmatpush1.bf16.msra.mxu0 0
        %682 = vmatprep.subr.bf16.mxu0 0
        %683 = vmatpush1.bf16.msra.mxu0 0
        %684 = vmatprep.subr.bf16.mxu0 0
        %685 = vmatpush1.bf16.msra.mxu0 0
        %686 = vmatprep.subr.bf16.mxu0 %v667
        %687 = vmatpush1.bf16.msra.mxu0 %v664
        %688 = vmatprep.subr.bf16.mxu0 0
        %689 = vmatpush2.bf16.msra.mxu0 0
        %690 = vmatprep.subr.bf16.mxu0 0
        %691 = vmatpush2.bf16.msra.mxu0 0
        %692 = vmatprep.subr.bf16.mxu0 0
        %693 = vmatpush2.bf16.msra.mxu0 0
        %694 = vmatprep.subr.bf16.mxu0 0
        %695 = vmatpush2.bf16.msra.mxu0 0
        %696 = vmatprep.subr.bf16.mxu0 0
        %697 = vmatpush2.bf16.msra.mxu0 0
        %698 = vmatprep.subr.bf16.mxu0 0
        %699 = vmatpush2.bf16.msra.mxu0 0
        %700 = vmatprep.subr.bf16.mxu0 0
        %701 = vmatpush2.bf16.msra.mxu0 0
        %702 = vmatprep.subr.bf16.mxu0 0
        %703 = vmatpush2.bf16.msra.mxu0 0
        %704 = vmatprep.mubr.bf16.mxu0 0
        %705 = vmatmul.mubr.bf16.gmra.mxu0 %v661
        %v706 = vpop.f32.mrf.mxu0
        %v707 = vadd.f32 0.0, %v706
        %v708 = vpop.f32.mrf.mxu0
        %v709 = vadd.f32 0.0, %v708
        %v710 = vpop.f32.mrf.mxu0
        %v711 = vpop.f32.mrf.mxu0
        %712 = vdwg.mxu0
        %713 = vmatprep.subr.bf16.mxu0 0
        %714 = vmatpush1.bf16.msra.mxu0 0
        %715 = vmatprep.subr.bf16.mxu0 0
        %716 = vmatpush1.bf16.msra.mxu0 0
        %717 = vmatprep.subr.bf16.mxu0 0
        %718 = vmatpush1.bf16.msra.mxu0 0
        %719 = vmatprep.subr.bf16.mxu0 0
        %720 = vmatpush1.bf16.msra.mxu0 0
        %721 = vmatprep.subr.bf16.mxu0 0
        %722 = vmatpush1.bf16.msra.mxu0 0
        %723 = vmatprep.subr.bf16.mxu0 0
        %724 = vmatpush1.bf16.msra.mxu0 0
        %725 = vmatprep.subr.bf16.mxu0 0
        %726 = vmatpush1.bf16.msra.mxu0 0
        %727 = vmatprep.subr.bf16.mxu0 0
        %728 = vmatpush1.bf16.msra.mxu0 %v670
        %729 = vmatprep.subr.bf16.mxu0 0
        %730 = vmatpush2.bf16.msra.mxu0 0
        %731 = vmatprep.subr.bf16.mxu0 0
        %732 = vmatpush2.bf16.msra.mxu0 0
        %733 = vmatprep.subr.bf16.mxu0 0
        %734 = vmatpush2.bf16.msra.mxu0 0
        %735 = vmatprep.subr.bf16.mxu0 0
        %736 = vmatpush2.bf16.msra.mxu0 0
        %737 = vmatprep.subr.bf16.mxu0 0
        %738 = vmatpush2.bf16.msra.mxu0 0
        %739 = vmatprep.subr.bf16.mxu0 0
        %740 = vmatpush2.bf16.msra.mxu0 0
        %741 = vmatprep.subr.bf16.mxu0 0
        %742 = vmatpush2.bf16.msra.mxu0 0
        %743 = vmatprep.subr.bf16.mxu0 0
        %744 = vmatpush2.bf16.msra.mxu0 0
        %745 = vmatprep.mubr.bf16.mxu0 0
        %746 = vmatmul.mubr.bf16.gmra.mxu0 %v661
        %v747 = vpop.f32.mrf.mxu0
        %v748 = vadd.f32 0.0, %v747
        %v749 = vpop.f32.mrf.mxu0
        %v750 = vpop.f32.mrf.mxu0
        %v751 = vpop.f32.mrf.mxu0
        %752 = vdwg.mxu0
        %v753 = vadd.f32 %v648, %v707
        %v754 = vadd.f32 %v649, %v709
        %v755 = vadd.f32 %v650, %v748
        %756 = vrot.lane.b32.xlu0 %v343, 109
        %v757 = vpop.permute.xlu0 %756
        %758 = vrot.lane.b32.xlu0 %v344, 109
        %v759 = vpop.permute.xlu0 %758
        %760 = vrot.lane.b32.xlu0 %v345, 109
        %v761 = vpop.permute.xlu0 %760
        %vm762 = vcmask 891904
        %v763 = vsel %vm762, %v757, %v759
        %v764 = vsel %vm762, %v759, %v761
        %v766 = vsel %vm358, %v312, 0
        %v769 = vsel %vm362, %v763, 0
        %v772 = vsel %vm362, %v764, 0
        %v775 = vsel %vm362, %v761, 0
        %777 = vmatprep.subr.bf16.mxu0 0
        %778 = vmatpush1.bf16.msra.mxu0 0
        %779 = vmatprep.subr.bf16.mxu0 0
        %780 = vmatpush1.bf16.msra.mxu0 0
        %781 = vmatprep.subr.bf16.mxu0 0
        %782 = vmatpush1.bf16.msra.mxu0 0
        %783 = vmatprep.subr.bf16.mxu0 0
        %784 = vmatpush1.bf16.msra.mxu0 0
        %785 = vmatprep.subr.bf16.mxu0 0
        %786 = vmatpush1.bf16.msra.mxu0 0
        %787 = vmatprep.subr.bf16.mxu0 0
        %788 = vmatpush1.bf16.msra.mxu0 0
        %789 = vmatprep.subr.bf16.mxu0 0
        %790 = vmatpush1.bf16.msra.mxu0 0
        %791 = vmatprep.subr.bf16.mxu0 %v772
        %792 = vmatpush1.bf16.msra.mxu0 %v769
        %793 = vmatprep.subr.bf16.mxu0 0
        %794 = vmatpush2.bf16.msra.mxu0 0
        %795 = vmatprep.subr.bf16.mxu0 0
        %796 = vmatpush2.bf16.msra.mxu0 0
        %797 = vmatprep.subr.bf16.mxu0 0
        %798 = vmatpush2.bf16.msra.mxu0 0
        %799 = vmatprep.subr.bf16.mxu0 0
        %800 = vmatpush2.bf16.msra.mxu0 0
        %801 = vmatprep.subr.bf16.mxu0 0
        %802 = vmatpush2.bf16.msra.mxu0 0
        %803 = vmatprep.subr.bf16.mxu0 0
        %804 = vmatpush2.bf16.msra.mxu0 0
        %805 = vmatprep.subr.bf16.mxu0 0
        %806 = vmatpush2.bf16.msra.mxu0 0
        %807 = vmatprep.subr.bf16.mxu0 0
        %808 = vmatpush2.bf16.msra.mxu0 0
        %809 = vmatprep.mubr.bf16.mxu0 0
        %810 = vmatmul.mubr.bf16.gmra.mxu0 %v766
        %v811 = vpop.f32.mrf.mxu0
        %v812 = vadd.f32 0.0, %v811
        %v813 = vpop.f32.mrf.mxu0
        %v814 = vadd.f32 0.0, %v813
        %v815 = vpop.f32.mrf.mxu0
        %v816 = vpop.f32.mrf.mxu0
        %817 = vdwg.mxu0
        %818 = vmatprep.subr.bf16.mxu0 0
        %819 = vmatpush1.bf16.msra.mxu0 0
        %820 = vmatprep.subr.bf16.mxu0 0
        %821 = vmatpush1.bf16.msra.mxu0 0
        %822 = vmatprep.subr.bf16.mxu0 0
        %823 = vmatpush1.bf16.msra.mxu0 0
        %824 = vmatprep.subr.bf16.mxu0 0
        %825 = vmatpush1.bf16.msra.mxu0 0
        %826 = vmatprep.subr.bf16.mxu0 0
        %827 = vmatpush1.bf16.msra.mxu0 0
        %828 = vmatprep.subr.bf16.mxu0 0
        %829 = vmatpush1.bf16.msra.mxu0 0
        %830 = vmatprep.subr.bf16.mxu0 0
        %831 = vmatpush1.bf16.msra.mxu0 0
        %832 = vmatprep.subr.bf16.mxu0 0
        %833 = vmatpush1.bf16.msra.mxu0 %v775
        %834 = vmatprep.subr.bf16.mxu0 0
        %835 = vmatpush2.bf16.msra.mxu0 0
        %836 = vmatprep.subr.bf16.mxu0 0
        %837 = vmatpush2.bf16.msra.mxu0 0
        %838 = vmatprep.subr.bf16.mxu0 0
        %839 = vmatpush2.bf16.msra.mxu0 0
        %840 = vmatprep.subr.bf16.mxu0 0
        %841 = vmatpush2.bf16.msra.mxu0 0
        %842 = vmatprep.subr.bf16.mxu0 0
        %843 = vmatpush2.bf16.msra.mxu0 0
        %844 = vmatprep.subr.bf16.mxu0 0
        %845 = vmatpush2.bf16.msra.mxu0 0
        %846 = vmatprep.subr.bf16.mxu0 0
        %847 = vmatpush2.bf16.msra.mxu0 0
        %848 = vmatprep.subr.bf16.mxu0 0
        %849 = vmatpush2.bf16.msra.mxu0 0
        %850 = vmatprep.mubr.bf16.mxu0 0
        %851 = vmatmul.mubr.bf16.gmra.mxu0 %v766
        %v852 = vpop.f32.mrf.mxu0
        %v853 = vadd.f32 0.0, %v852
        %v854 = vpop.f32.mrf.mxu0
        %v855 = vpop.f32.mrf.mxu0
        %v856 = vpop.f32.mrf.mxu0
        %857 = vdwg.mxu0
        %v858 = vadd.f32 %v753, %v812
        %v859 = vadd.f32 %v754, %v814
        %v860 = vadd.f32 %v755, %v853
        %861 = vrot.lane.b32.xlu0 %v343, 108
        %v862 = vpop.permute.xlu0 %861
        %863 = vrot.lane.b32.xlu0 %v344, 108
        %v864 = vpop.permute.xlu0 %863
        %865 = vrot.lane.b32.xlu0 %v345, 108
        %v866 = vpop.permute.xlu0 %865
        %vm867 = vcmask 883712
        %v868 = vsel %vm867, %v862, %v864
        %v869 = vsel %vm867, %v864, %v866
        %v871 = vsel %vm358, %v313, 0
        %v874 = vsel %vm362, %v868, 0
        %v877 = vsel %vm362, %v869, 0
        %v880 = vsel %vm362, %v866, 0
        %882 = vmatprep.subr.bf16.mxu0 0
        %883 = vmatpush1.bf16.msra.mxu0 0
        %884 = vmatprep.subr.bf16.mxu0 0
        %885 = vmatpush1.bf16.msra.mxu0 0
        %886 = vmatprep.subr.bf16.mxu0 0
        %887 = vmatpush1.bf16.msra.mxu0 0
        %888 = vmatprep.subr.bf16.mxu0 0
        %889 = vmatpush1.bf16.msra.mxu0 0
        %890 = vmatprep.subr.bf16.mxu0 0
        %891 = vmatpush1.bf16.msra.mxu0 0
        %892 = vmatprep.subr.bf16.mxu0 0
        %893 = vmatpush1.bf16.msra.mxu0 0
        %894 = vmatprep.subr.bf16.mxu0 0
        %895 = vmatpush1.bf16.msra.mxu0 0
        %896 = vmatprep.subr.bf16.mxu0 %v877
        %897 = vmatpush1.bf16.msra.mxu0 %v874
        %898 = vmatprep.subr.bf16.mxu0 0
        %899 = vmatpush2.bf16.msra.mxu0 0
        %900 = vmatprep.subr.bf16.mxu0 0
        %901 = vmatpush2.bf16.msra.mxu0 0
        %902 = vmatprep.subr.bf16.mxu0 0
        %903 = vmatpush2.bf16.msra.mxu0 0
        %904 = vmatprep.subr.bf16.mxu0 0
        %905 = vmatpush2.bf16.msra.mxu0 0
        %906 = vmatprep.subr.bf16.mxu0 0
        %907 = vmatpush2.bf16.msra.mxu0 0
        %908 = vmatprep.subr.bf16.mxu0 0
        %909 = vmatpush2.bf16.msra.mxu0 0
        %910 = vmatprep.subr.bf16.mxu0 0
        %911 = vmatpush2.bf16.msra.mxu0 0
        %912 = vmatprep.subr.bf16.mxu0 0
        %913 = vmatpush2.bf16.msra.mxu0 0
        %914 = vmatprep.mubr.bf16.mxu0 0
        %915 = vmatmul.mubr.bf16.gmra.mxu0 %v871
        %v916 = vpop.f32.mrf.mxu0
        %v917 = vadd.f32 0.0, %v916
        %v918 = vpop.f32.mrf.mxu0
        %v919 = vadd.f32 0.0, %v918
        %v920 = vpop.f32.mrf.mxu0
        %v921 = vpop.f32.mrf.mxu0
        %922 = vdwg.mxu0
        %923 = vmatprep.subr.bf16.mxu0 0
        %924 = vmatpush1.bf16.msra.mxu0 0
        %925 = vmatprep.subr.bf16.mxu0 0
        %926 = vmatpush1.bf16.msra.mxu0 0
        %927 = vmatprep.subr.bf16.mxu0 0
        %928 = vmatpush1.bf16.msra.mxu0 0
        %929 = vmatprep.subr.bf16.mxu0 0
        %930 = vmatpush1.bf16.msra.mxu0 0
        %931 = vmatprep.subr.bf16.mxu0 0
        %932 = vmatpush1.bf16.msra.mxu0 0
        %933 = vmatprep.subr.bf16.mxu0 0
        %934 = vmatpush1.bf16.msra.mxu0 0
        %935 = vmatprep.subr.bf16.mxu0 0
        %936 = vmatpush1.bf16.msra.mxu0 0
        %937 = vmatprep.subr.bf16.mxu0 0
        %938 = vmatpush1.bf16.msra.mxu0 %v880
        %939 = vmatprep.subr.bf16.mxu0 0
        %940 = vmatpush2.bf16.msra.mxu0 0
        %941 = vmatprep.subr.bf16.mxu0 0
        %942 = vmatpush2.bf16.msra.mxu0 0
        %943 = vmatprep.subr.bf16.mxu0 0
        %944 = vmatpush2.bf16.msra.mxu0 0
        %945 = vmatprep.subr.bf16.mxu0 0
        %946 = vmatpush2.bf16.msra.mxu0 0
        %947 = vmatprep.subr.bf16.mxu0 0
        %948 = vmatpush2.bf16.msra.mxu0 0
        %949 = vmatprep.subr.bf16.mxu0 0
        %950 = vmatpush2.bf16.msra.mxu0 0
        %951 = vmatprep.subr.bf16.mxu0 0
        %952 = vmatpush2.bf16.msra.mxu0 0
        %953 = vmatprep.subr.bf16.mxu0 0
        %954 = vmatpush2.bf16.msra.mxu0 0
        %955 = vmatprep.mubr.bf16.mxu0 0
        %956 = vmatmul.mubr.bf16.gmra.mxu0 %v871
        %v957 = vpop.f32.mrf.mxu0
        %v958 = vadd.f32 0.0, %v957
        %v959 = vpop.f32.mrf.mxu0
        %v960 = vpop.f32.mrf.mxu0
        %v961 = vpop.f32.mrf.mxu0
        %962 = vdwg.mxu0
        %v963 = vadd.f32 %v858, %v917
        %v964 = vadd.f32 %v859, %v919
        %v965 = vadd.f32 %v860, %v958
        %966 = vrot.lane.b32.xlu0 %v343, 92
        %v967 = vpop.permute.xlu0 %966
        %968 = vrot.lane.b32.xlu0 %v344, 92
        %v969 = vpop.permute.xlu0 %968
        %970 = vrot.lane.b32.xlu0 %v345, 92
        %v971 = vpop.permute.xlu0 %970
        %vm972 = vcmask 752640
        %v973 = vsel %vm972, %v967, %v969
        %v974 = vsel %vm972, %v969, %v971
        %v976 = vsel %vm358, %v314, 0
        %v979 = vsel %vm362, %v973, 0
        %v982 = vsel %vm362, %v974, 0
        %v985 = vsel %vm362, %v971, 0
        %987 = vmatprep.subr.bf16.mxu0 0
        %988 = vmatpush1.bf16.msra.mxu0 0
        %989 = vmatprep.subr.bf16.mxu0 0
        %990 = vmatpush1.bf16.msra.mxu0 0
        %991 = vmatprep.subr.bf16.mxu0 0
        %992 = vmatpush1.bf16.msra.mxu0 0
        %993 = vmatprep.subr.bf16.mxu0 0
        %994 = vmatpush1.bf16.msra.mxu0 0
        %995 = vmatprep.subr.bf16.mxu0 0
        %996 = vmatpush1.bf16.msra.mxu0 0
        %997 = vmatprep.subr.bf16.mxu0 0
        %998 = vmatpush1.bf16.msra.mxu0 0
        %999 = vmatprep.subr.bf16.mxu0 0
        %1000 = vmatpush1.bf16.msra.mxu0 0
        %1001 = vmatprep.subr.bf16.mxu0 %v982
        %1002 = vmatpush1.bf16.msra.mxu0 %v979
        %1003 = vmatprep.subr.bf16.mxu0 0
        %1004 = vmatpush2.bf16.msra.mxu0 0
        %1005 = vmatprep.subr.bf16.mxu0 0
        %1006 = vmatpush2.bf16.msra.mxu0 0
        %1007 = vmatprep.subr.bf16.mxu0 0
        %1008 = vmatpush2.bf16.msra.mxu0 0
        %1009 = vmatprep.subr.bf16.mxu0 0
        %1010 = vmatpush2.bf16.msra.mxu0 0
        %1011 = vmatprep.subr.bf16.mxu0 0
        %1012 = vmatpush2.bf16.msra.mxu0 0
        %1013 = vmatprep.subr.bf16.mxu0 0
        %1014 = vmatpush2.bf16.msra.mxu0 0
        %1015 = vmatprep.subr.bf16.mxu0 0
        %1016 = vmatpush2.bf16.msra.mxu0 0
        %1017 = vmatprep.subr.bf16.mxu0 0
        %1018 = vmatpush2.bf16.msra.mxu0 0
        %1019 = vmatprep.mubr.bf16.mxu0 0
        %1020 = vmatmul.mubr.bf16.gmra.mxu0 %v976
        %v1021 = vpop.f32.mrf.mxu0
        %v1022 = vadd.f32 0.0, %v1021
        %v1023 = vpop.f32.mrf.mxu0
        %v1024 = vadd.f32 0.0, %v1023
        %v1025 = vpop.f32.mrf.mxu0
        %v1026 = vpop.f32.mrf.mxu0
        %1027 = vdwg.mxu0
        %1028 = vmatprep.subr.bf16.mxu0 0
        %1029 = vmatpush1.bf16.msra.mxu0 0
        %1030 = vmatprep.subr.bf16.mxu0 0
        %1031 = vmatpush1.bf16.msra.mxu0 0
        %1032 = vmatprep.subr.bf16.mxu0 0
        %1033 = vmatpush1.bf16.msra.mxu0 0
        %1034 = vmatprep.subr.bf16.mxu0 0
        %1035 = vmatpush1.bf16.msra.mxu0 0
        %1036 = vmatprep.subr.bf16.mxu0 0
        %1037 = vmatpush1.bf16.msra.mxu0 0
        %1038 = vmatprep.subr.bf16.mxu0 0
        %1039 = vmatpush1.bf16.msra.mxu0 0
        %1040 = vmatprep.subr.bf16.mxu0 0
        %1041 = vmatpush1.bf16.msra.mxu0 0
        %1042 = vmatprep.subr.bf16.mxu0 0
        %1043 = vmatpush1.bf16.msra.mxu0 %v985
        %1044 = vmatprep.subr.bf16.mxu0 0
        %1045 = vmatpush2.bf16.msra.mxu0 0
        %1046 = vmatprep.subr.bf16.mxu0 0
        %1047 = vmatpush2.bf16.msra.mxu0 0
        %1048 = vmatprep.subr.bf16.mxu0 0
        %1049 = vmatpush2.bf16.msra.mxu0 0
        %1050 = vmatprep.subr.bf16.mxu0 0
        %1051 = vmatpush2.bf16.msra.mxu0 0
        %1052 = vmatprep.subr.bf16.mxu0 0
        %1053 = vmatpush2.bf16.msra.mxu0 0
        %1054 = vmatprep.subr.bf16.mxu0 0
        %1055 = vmatpush2.bf16.msra.mxu0 0
        %1056 = vmatprep.subr.bf16.mxu0 0
        %1057 = vmatpush2.bf16.msra.mxu0 0
        %1058 = vmatprep.subr.bf16.mxu0 0
        %1059 = vmatpush2.bf16.msra.mxu0 0
        %1060 = vmatprep.mubr.bf16.mxu0 0
        %1061 = vmatmul.mubr.bf16.gmra.mxu0 %v976
        %v1062 = vpop.f32.mrf.mxu0
        %v1063 = vadd.f32 0.0, %v1062
        %v1064 = vpop.f32.mrf.mxu0
        %v1065 = vpop.f32.mrf.mxu0
        %v1066 = vpop.f32.mrf.mxu0
        %1067 = vdwg.mxu0
        %v1068 = vadd.f32 %v963, %v1022
        %v1069 = vadd.f32 %v964, %v1024
        %v1070 = vadd.f32 %v965, %v1063
        %1071 = vrot.lane.b32.xlu0 %v343, 91
        %v1072 = vpop.permute.xlu0 %1071
        %1073 = vrot.lane.b32.xlu0 %v344, 91
        %v1074 = vpop.permute.xlu0 %1073
        %1075 = vrot.lane.b32.xlu0 %v345, 91
        %v1076 = vpop.permute.xlu0 %1075
        %vm1077 = vcmask 744448
        %v1078 = vsel %vm1077, %v1072, %v1074
        %v1079 = vsel %vm1077, %v1074, %v1076
        %v1081 = vsel %vm358, %v315, 0
        %v1084 = vsel %vm362, %v1078, 0
        %v1087 = vsel %vm362, %v1079, 0
        %v1090 = vsel %vm362, %v1076, 0
        %1092 = vmatprep.subr.bf16.mxu0 0
        %1093 = vmatpush1.bf16.msra.mxu0 0
        %1094 = vmatprep.subr.bf16.mxu0 0
        %1095 = vmatpush1.bf16.msra.mxu0 0
        %1096 = vmatprep.subr.bf16.mxu0 0
        %1097 = vmatpush1.bf16.msra.mxu0 0
        %1098 = vmatprep.subr.bf16.mxu0 0
        %1099 = vmatpush1.bf16.msra.mxu0 0
        %1100 = vmatprep.subr.bf16.mxu0 0
        %1101 = vmatpush1.bf16.msra.mxu0 0
        %1102 = vmatprep.subr.bf16.mxu0 0
        %1103 = vmatpush1.bf16.msra.mxu0 0
        %1104 = vmatprep.subr.bf16.mxu0 0
        %1105 = vmatpush1.bf16.msra.mxu0 0
        %1106 = vmatprep.subr.bf16.mxu0 %v1087
        %1107 = vmatpush1.bf16.msra.mxu0 %v1084
        %1108 = vmatprep.subr.bf16.mxu0 0
        %1109 = vmatpush2.bf16.msra.mxu0 0
        %1110 = vmatprep.subr.bf16.mxu0 0
        %1111 = vmatpush2.bf16.msra.mxu0 0
        %1112 = vmatprep.subr.bf16.mxu0 0
        %1113 = vmatpush2.bf16.msra.mxu0 0
        %1114 = vmatprep.subr.bf16.mxu0 0
        %1115 = vmatpush2.bf16.msra.mxu0 0
        %1116 = vmatprep.subr.bf16.mxu0 0
        %1117 = vmatpush2.bf16.msra.mxu0 0
        %1118 = vmatprep.subr.bf16.mxu0 0
        %1119 = vmatpush2.bf16.msra.mxu0 0
        %1120 = vmatprep.subr.bf16.mxu0 0
        %1121 = vmatpush2.bf16.msra.mxu0 0
        %1122 = vmatprep.subr.bf16.mxu0 0
        %1123 = vmatpush2.bf16.msra.mxu0 0
        %1124 = vmatprep.mubr.bf16.mxu0 0
        %1125 = vmatmul.mubr.bf16.gmra.mxu0 %v1081
        %v1126 = vpop.f32.mrf.mxu0
        %v1127 = vadd.f32 0.0, %v1126
        %v1128 = vpop.f32.mrf.mxu0
        %v1129 = vadd.f32 0.0, %v1128
        %v1130 = vpop.f32.mrf.mxu0
        %v1131 = vpop.f32.mrf.mxu0
        %1132 = vdwg.mxu0
        %1133 = vmatprep.subr.bf16.mxu0 0
        %1134 = vmatpush1.bf16.msra.mxu0 0
        %1135 = vmatprep.subr.bf16.mxu0 0
        %1136 = vmatpush1.bf16.msra.mxu0 0
        %1137 = vmatprep.subr.bf16.mxu0 0
        %1138 = vmatpush1.bf16.msra.mxu0 0
        %1139 = vmatprep.subr.bf16.mxu0 0
        %1140 = vmatpush1.bf16.msra.mxu0 0
        %1141 = vmatprep.subr.bf16.mxu0 0
        %1142 = vmatpush1.bf16.msra.mxu0 0
        %1143 = vmatprep.subr.bf16.mxu0 0
        %1144 = vmatpush1.bf16.msra.mxu0 0
        %1145 = vmatprep.subr.bf16.mxu0 0
        %1146 = vmatpush1.bf16.msra.mxu0 0
        %1147 = vmatprep.subr.bf16.mxu0 0
        %1148 = vmatpush1.bf16.msra.mxu0 %v1090
        %1149 = vmatprep.subr.bf16.mxu0 0
        %1150 = vmatpush2.bf16.msra.mxu0 0
        %1151 = vmatprep.subr.bf16.mxu0 0
        %1152 = vmatpush2.bf16.msra.mxu0 0
        %1153 = vmatprep.subr.bf16.mxu0 0
        %1154 = vmatpush2.bf16.msra.mxu0 0
        %1155 = vmatprep.subr.bf16.mxu0 0
        %1156 = vmatpush2.bf16.msra.mxu0 0
        %1157 = vmatprep.subr.bf16.mxu0 0
        %1158 = vmatpush2.bf16.msra.mxu0 0
        %1159 = vmatprep.subr.bf16.mxu0 0
        %1160 = vmatpush2.bf16.msra.mxu0 0
        %1161 = vmatprep.subr.bf16.mxu0 0
        %1162 = vmatpush2.bf16.msra.mxu0 0
        %1163 = vmatprep.subr.bf16.mxu0 0
        %1164 = vmatpush2.bf16.msra.mxu0 0
        %1165 = vmatprep.mubr.bf16.mxu0 0
        %1166 = vmatmul.mubr.bf16.gmra.mxu0 %v1081
        %v1167 = vpop.f32.mrf.mxu0
        %v1168 = vadd.f32 0.0, %v1167
        %v1169 = vpop.f32.mrf.mxu0
        %v1170 = vpop.f32.mrf.mxu0
        %v1171 = vpop.f32.mrf.mxu0
        %1172 = vdwg.mxu0
        %v1173 = vadd.f32 %v1068, %v1127
        %v1174 = vadd.f32 %v1069, %v1129
        %v1175 = vadd.f32 %v1070, %v1168
        %1176 = vrot.lane.b32.xlu0 %v343, 90
        %v1177 = vpop.permute.xlu0 %1176
        %1178 = vrot.lane.b32.xlu0 %v344, 90
        %v1179 = vpop.permute.xlu0 %1178
        %1180 = vrot.lane.b32.xlu0 %v345, 90
        %v1181 = vpop.permute.xlu0 %1180
        %vm1182 = vcmask 736256
        %v1183 = vsel %vm1182, %v1177, %v1179
        %v1184 = vsel %vm1182, %v1179, %v1181
        %v1186 = vsel %vm358, %v316, 0
        %v1189 = vsel %vm362, %v1183, 0
        %v1192 = vsel %vm362, %v1184, 0
        %v1195 = vsel %vm362, %v1181, 0
        %1197 = vmatprep.subr.bf16.mxu0 0
        %1198 = vmatpush1.bf16.msra.mxu0 0
        %1199 = vmatprep.subr.bf16.mxu0 0
        %1200 = vmatpush1.bf16.msra.mxu0 0
        %1201 = vmatprep.subr.bf16.mxu0 0
        %1202 = vmatpush1.bf16.msra.mxu0 0
        %1203 = vmatprep.subr.bf16.mxu0 0
        %1204 = vmatpush1.bf16.msra.mxu0 0
        %1205 = vmatprep.subr.bf16.mxu0 0
        %1206 = vmatpush1.bf16.msra.mxu0 0
        %1207 = vmatprep.subr.bf16.mxu0 0
        %1208 = vmatpush1.bf16.msra.mxu0 0
        %1209 = vmatprep.subr.bf16.mxu0 0
        %1210 = vmatpush1.bf16.msra.mxu0 0
        %1211 = vmatprep.subr.bf16.mxu0 %v1192
        %1212 = vmatpush1.bf16.msra.mxu0 %v1189
        %1213 = vmatprep.subr.bf16.mxu0 0
        %1214 = vmatpush2.bf16.msra.mxu0 0
        %1215 = vmatprep.subr.bf16.mxu0 0
        %1216 = vmatpush2.bf16.msra.mxu0 0
        %1217 = vmatprep.subr.bf16.mxu0 0
        %1218 = vmatpush2.bf16.msra.mxu0 0
        %1219 = vmatprep.subr.bf16.mxu0 0
        %1220 = vmatpush2.bf16.msra.mxu0 0
        %1221 = vmatprep.subr.bf16.mxu0 0
        %1222 = vmatpush2.bf16.msra.mxu0 0
        %1223 = vmatprep.subr.bf16.mxu0 0
        %1224 = vmatpush2.bf16.msra.mxu0 0
        %1225 = vmatprep.subr.bf16.mxu0 0
        %1226 = vmatpush2.bf16.msra.mxu0 0
        %1227 = vmatprep.subr.bf16.mxu0 0
        %1228 = vmatpush2.bf16.msra.mxu0 0
        %1229 = vmatprep.mubr.bf16.mxu0 0
        %1230 = vmatmul.mubr.bf16.gmra.mxu0 %v1186
        %v1231 = vpop.f32.mrf.mxu0
        %v1232 = vadd.f32 0.0, %v1231
        %v1233 = vpop.f32.mrf.mxu0
        %v1234 = vadd.f32 0.0, %v1233
        %v1235 = vpop.f32.mrf.mxu0
        %v1236 = vpop.f32.mrf.mxu0
        %1237 = vdwg.mxu0
        %1238 = vmatprep.subr.bf16.mxu0 0
        %1239 = vmatpush1.bf16.msra.mxu0 0
        %1240 = vmatprep.subr.bf16.mxu0 0
        %1241 = vmatpush1.bf16.msra.mxu0 0
        %1242 = vmatprep.subr.bf16.mxu0 0
        %1243 = vmatpush1.bf16.msra.mxu0 0
        %1244 = vmatprep.subr.bf16.mxu0 0
        %1245 = vmatpush1.bf16.msra.mxu0 0
        %1246 = vmatprep.subr.bf16.mxu0 0
        %1247 = vmatpush1.bf16.msra.mxu0 0
        %1248 = vmatprep.subr.bf16.mxu0 0
        %1249 = vmatpush1.bf16.msra.mxu0 0
        %1250 = vmatprep.subr.bf16.mxu0 0
        %1251 = vmatpush1.bf16.msra.mxu0 0
        %1252 = vmatprep.subr.bf16.mxu0 0
        %1253 = vmatpush1.bf16.msra.mxu0 %v1195
        %1254 = vmatprep.subr.bf16.mxu0 0
        %1255 = vmatpush2.bf16.msra.mxu0 0
        %1256 = vmatprep.subr.bf16.mxu0 0
        %1257 = vmatpush2.bf16.msra.mxu0 0
        %1258 = vmatprep.subr.bf16.mxu0 0
        %1259 = vmatpush2.bf16.msra.mxu0 0
        %1260 = vmatprep.subr.bf16.mxu0 0
        %1261 = vmatpush2.bf16.msra.mxu0 0
        %1262 = vmatprep.subr.bf16.mxu0 0
        %1263 = vmatpush2.bf16.msra.mxu0 0
        %1264 = vmatprep.subr.bf16.mxu0 0
        %1265 = vmatpush2.bf16.msra.mxu0 0
        %1266 = vmatprep.subr.bf16.mxu0 0
        %1267 = vmatpush2.bf16.msra.mxu0 0
        %1268 = vmatprep.subr.bf16.mxu0 0
        %1269 = vmatpush2.bf16.msra.mxu0 0
        %1270 = vmatprep.mubr.bf16.mxu0 0
        %1271 = vmatmul.mubr.bf16.gmra.mxu0 %v1186
        %v1272 = vpop.f32.mrf.mxu0
        %v1273 = vadd.f32 0.0, %v1272
        %v1274 = vpop.f32.mrf.mxu0
        %v1275 = vpop.f32.mrf.mxu0
        %v1276 = vpop.f32.mrf.mxu0
        %1277 = vdwg.mxu0
        %v1278 = vadd.f32 %v1173, %v1232
        %v1279 = vadd.f32 %v1174, %v1234
        %v1280 = vadd.f32 %v1175, %v1273
        %1282 = vset.pattern.permute.xlu0 0
        %1283 = vperm.xlu0 %1282, %v335
        %v1284 = vpop.permute.xlu0 %1283
        %v1286 = vadd.f32 %v1278, %v1284
        %v1287 = vadd.f32 %v1279, %v1284
        %v1288 = vadd.f32 %v1280, %v1284
        %v1289 = vmul.f32 %v1286, 0.5
        %v1290 = vmul.f32 %v1287, 0.5
        %v1291 = vmul.f32 %v1288, 0.5
        %v1292 = vadd.f32 %v1289, 0.0
        %v1293 = vadd.f32 %v1290, 0.0
        %v1294 = vadd.f32 %v1291, 0.0
        %vm1295 = vcmp.ge.f32.partialorder %v1292, 1.0
        %vm1296 = vcmp.ge.f32.partialorder %v1293, 1.0
        %vm1297 = vcmp.ge.f32.partialorder %v1294, 1.0
        %v1298 = vsel %vm1295, 1, 0
        %v1299 = vsel %vm1296, 1, 0
        %v1300 = vsel %vm1297, 1, 0
        %v1301 = vcvt.s32.f32 %v1298
        %v1302 = vcvt.s32.f32 %v1299
        %v1303 = vcvt.s32.f32 %v1300
        %v1304 = vsub.f32 1.0, %v1301
        %v1305 = vsub.f32 1.0, %v1302
        %v1306 = vsub.f32 1.0, %v1303
        %v1307 = vmul.f32 %v1292, %v1304
        %v1308 = vmul.f32 %v1293, %v1305
        %v1309 = vmul.f32 %v1294, %v1306
        %v1311 = vlaneseq
        %v1312 = vshrl.u32 %v1311, 7
        %v1313 = vsub.s32 0, %v1312
        %v1314 = vrot.slane %v337, %v1313
        %v1315 = vlaneseq
        %v1316 = vshrl.u32 %v1315, 7
        %v1317 = vsub.s32 1, %v1316
        %v1318 = vrot.slane %v337, %v1317
        %v1319 = vlaneseq
        %v1320 = vshrl.u32 %v1319, 7
        %v1321 = vsub.s32 2, %v1320
        %v1322 = vrot.slane %v337, %v1321
        %v1326 = vmul.f32 %v1301, %v1314
        %v1327 = vmul.f32 %v1302, %v1318
        %v1328 = vmul.f32 %v1303, %v1322
        %1332 = vrot.lane.b32.xlu0 %v1326, 19
        %v1333 = vpop.permute.xlu0 %1332
        %1334 = vrot.lane.b32.xlu0 %v1327, 19
        %v1335 = vpop.permute.xlu0 %1334
        %1336 = vrot.lane.b32.xlu0 %v1328, 19
        %v1337 = vpop.permute.xlu0 %1336
        %vm1338 = vcmask 154624
        %v1339 = vsel %vm1338, %v1333, %v1335
        %v1340 = vsel %vm1338, %v1335, %v1337
        %vm1344 = vcmask 1047704
        %1345 = vst.msk [vmem:[#allocation2] sm:$0xff] %vm1344, %v1333
        %1346 = vst [vmem:[#allocation2 + $0x8] sm:$0xff] %v1339
        %vm1347 = vcmask 711680
        %1348 = vst.msk [vmem:[#allocation2 + $0x10] sm:$0xff] %vm1347, %v1340
        %v1349 = vld [vmem:[#allocation2] sm:$0xff]
        %v1350 = vld [vmem:[#allocation2 + $0x8] sm:$0xff]
        %v1351 = vld [vmem:[#allocation2 + $0x10] sm:$0xff]
        %v1352 = vpack.c.bf16 %v1349, %v1349
        %v1353 = vpack.c.bf16 %v1350, %v1350
        %v1354 = vpack.c.bf16 %v1351, %v1351
        %1358 = vrot.lane.b32.xlu0 %v1352, 127
        %v1359 = vpop.permute.xlu0 %1358
        %1360 = vrot.lane.b32.xlu0 %v1353, 127
        %v1361 = vpop.permute.xlu0 %1360
        %1362 = vrot.lane.b32.xlu0 %v1354, 127
        %v1363 = vpop.permute.xlu0 %1362
        %v1364 = vsel %vm355, %v1359, %v1361
        %v1365 = vsel %vm355, %v1361, %v1363
        %vm1366 = vcmask 64512
        %v1368 = vsel %vm1366, %v327, 0
        %vm1370 = vcmask 1043456
        %v1372 = vsel %vm1370, %v1364, 0
        %v1375 = vsel %vm1370, %v1365, 0
        %v1378 = vsel %vm1370, %v1363, 0
        %1380 = vmatprep.subr.bf16.mxu0 0
        %1381 = vmatpush1.bf16.msra.mxu0 0
        %1382 = vmatprep.subr.bf16.mxu0 0
        %1383 = vmatpush1.bf16.msra.mxu0 0
        %1384 = vmatprep.subr.bf16.mxu0 0
        %1385 = vmatpush1.bf16.msra.mxu0 0
        %1386 = vmatprep.subr.bf16.mxu0 0
        %1387 = vmatpush1.bf16.msra.mxu0 0
        %1388 = vmatprep.subr.bf16.mxu0 0
        %1389 = vmatpush1.bf16.msra.mxu0 0
        %1390 = vmatprep.subr.bf16.mxu0 0
        %1391 = vmatpush1.bf16.msra.mxu0 0
        %1392 = vmatprep.subr.bf16.mxu0 0
        %1393 = vmatpush1.bf16.msra.mxu0 0
        %1394 = vmatprep.subr.bf16.mxu0 %v1375
        %1395 = vmatpush1.bf16.msra.mxu0 %v1372
        %1396 = vmatprep.subr.bf16.mxu0 0
        %1397 = vmatpush2.bf16.msra.mxu0 0
        %1398 = vmatprep.subr.bf16.mxu0 0
        %1399 = vmatpush2.bf16.msra.mxu0 0
        %1400 = vmatprep.subr.bf16.mxu0 0
        %1401 = vmatpush2.bf16.msra.mxu0 0
        %1402 = vmatprep.subr.bf16.mxu0 0
        %1403 = vmatpush2.bf16.msra.mxu0 0
        %1404 = vmatprep.subr.bf16.mxu0 0
        %1405 = vmatpush2.bf16.msra.mxu0 0
        %1406 = vmatprep.subr.bf16.mxu0 0
        %1407 = vmatpush2.bf16.msra.mxu0 0
        %1408 = vmatprep.subr.bf16.mxu0 0
        %1409 = vmatpush2.bf16.msra.mxu0 0
        %1410 = vmatprep.subr.bf16.mxu0 0
        %1411 = vmatpush2.bf16.msra.mxu0 0
        %1412 = vmatprep.mubr.bf16.mxu0 0
        %1413 = vmatmul.mubr.bf16.gmra.mxu0 %v1368
        %v1414 = vpop.f32.mrf.mxu0
        %v1415 = vadd.f32 0.0, %v1414
        %v1416 = vpop.f32.mrf.mxu0
        %v1417 = vadd.f32 0.0, %v1416
        %v1418 = vpop.f32.mrf.mxu0
        %v1419 = vpop.f32.mrf.mxu0
        %1420 = vdwg.mxu0
        %1421 = vmatprep.subr.bf16.mxu0 0
        %1422 = vmatpush1.bf16.msra.mxu0 0
        %1423 = vmatprep.subr.bf16.mxu0 0
        %1424 = vmatpush1.bf16.msra.mxu0 0
        %1425 = vmatprep.subr.bf16.mxu0 0
        %1426 = vmatpush1.bf16.msra.mxu0 0
        %1427 = vmatprep.subr.bf16.mxu0 0
        %1428 = vmatpush1.bf16.msra.mxu0 0
        %1429 = vmatprep.subr.bf16.mxu0 0
        %1430 = vmatpush1.bf16.msra.mxu0 0
        %1431 = vmatprep.subr.bf16.mxu0 0
        %1432 = vmatpush1.bf16.msra.mxu0 0
        %1433 = vmatprep.subr.bf16.mxu0 0
        %1434 = vmatpush1.bf16.msra.mxu0 0
        %1435 = vmatprep.subr.bf16.mxu0 0
        %1436 = vmatpush1.bf16.msra.mxu0 %v1378
        %1437 = vmatprep.subr.bf16.mxu0 0
        %1438 = vmatpush2.bf16.msra.mxu0 0
        %1439 = vmatprep.subr.bf16.mxu0 0
        %1440 = vmatpush2.bf16.msra.mxu0 0
        %1441 = vmatprep.subr.bf16.mxu0 0
        %1442 = vmatpush2.bf16.msra.mxu0 0
        %1443 = vmatprep.subr.bf16.mxu0 0
        %1444 = vmatpush2.bf16.msra.mxu0 0
        %1445 = vmatprep.subr.bf16.mxu0 0
        %1446 = vmatpush2.bf16.msra.mxu0 0
        %1447 = vmatprep.subr.bf16.mxu0 0
        %1448 = vmatpush2.bf16.msra.mxu0 0
        %1449 = vmatprep.subr.bf16.mxu0 0
        %1450 = vmatpush2.bf16.msra.mxu0 0
        %1451 = vmatprep.subr.bf16.mxu0 0
        %1452 = vmatpush2.bf16.msra.mxu0 0
        %1453 = vmatprep.mubr.bf16.mxu0 0
        %1454 = vmatmul.mubr.bf16.gmra.mxu0 %v1368
        %v1455 = vpop.f32.mrf.mxu0
        %v1456 = vadd.f32 0.0, %v1455
        %v1457 = vpop.f32.mrf.mxu0
        %v1458 = vpop.f32.mrf.mxu0
        %v1459 = vpop.f32.mrf.mxu0
        %1460 = vdwg.mxu0
        %v1462 = vsel %vm1366, %v326, 0
        %v1465 = vsel %vm1370, %v1352, 0
        %v1468 = vsel %vm1370, %v1353, 0
        %v1471 = vsel %vm1370, %v1354, 0
        %1473 = vmatprep.subr.bf16.mxu0 0
        %1474 = vmatpush1.bf16.msra.mxu0 0
        %1475 = vmatprep.subr.bf16.mxu0 0
        %1476 = vmatpush1.bf16.msra.mxu0 0
        %1477 = vmatprep.subr.bf16.mxu0 0
        %1478 = vmatpush1.bf16.msra.mxu0 0
        %1479 = vmatprep.subr.bf16.mxu0 0
        %1480 = vmatpush1.bf16.msra.mxu0 0
        %1481 = vmatprep.subr.bf16.mxu0 0
        %1482 = vmatpush1.bf16.msra.mxu0 0
        %1483 = vmatprep.subr.bf16.mxu0 0
        %1484 = vmatpush1.bf16.msra.mxu0 0
        %1485 = vmatprep.subr.bf16.mxu0 0
        %1486 = vmatpush1.bf16.msra.mxu0 0
        %1487 = vmatprep.subr.bf16.mxu0 %v1468
        %1488 = vmatpush1.bf16.msra.mxu0 %v1465
        %1489 = vmatprep.subr.bf16.mxu0 0
        %1490 = vmatpush2.bf16.msra.mxu0 0
        %1491 = vmatprep.subr.bf16.mxu0 0
        %1492 = vmatpush2.bf16.msra.mxu0 0
        %1493 = vmatprep.subr.bf16.mxu0 0
        %1494 = vmatpush2.bf16.msra.mxu0 0
        %1495 = vmatprep.subr.bf16.mxu0 0
        %1496 = vmatpush2.bf16.msra.mxu0 0
        %1497 = vmatprep.subr.bf16.mxu0 0
        %1498 = vmatpush2.bf16.msra.mxu0 0
        %1499 = vmatprep.subr.bf16.mxu0 0
        %1500 = vmatpush2.bf16.msra.mxu0 0
        %1501 = vmatprep.subr.bf16.mxu0 0
        %1502 = vmatpush2.bf16.msra.mxu0 0
        %1503 = vmatprep.subr.bf16.mxu0 0
        %1504 = vmatpush2.bf16.msra.mxu0 0
        %1505 = vmatprep.mubr.bf16.mxu0 0
        %1506 = vmatmul.mubr.bf16.gmra.mxu0 %v1462
        %v1507 = vpop.f32.mrf.mxu0
        %v1508 = vadd.f32 %v1415, %v1507
        %v1509 = vpop.f32.mrf.mxu0
        %v1510 = vadd.f32 %v1417, %v1509
        %v1511 = vpop.f32.mrf.mxu0
        %v1512 = vpop.f32.mrf.mxu0
        %1513 = vdwg.mxu0
        %1514 = vmatprep.subr.bf16.mxu0 0
        %1515 = vmatpush1.bf16.msra.mxu0 0
        %1516 = vmatprep.subr.bf16.mxu0 0
        %1517 = vmatpush1.bf16.msra.mxu0 0
        %1518 = vmatprep.subr.bf16.mxu0 0
        %1519 = vmatpush1.bf16.msra.mxu0 0
        %1520 = vmatprep.subr.bf16.mxu0 0
        %1521 = vmatpush1.bf16.msra.mxu0 0
        %1522 = vmatprep.subr.bf16.mxu0 0
        %1523 = vmatpush1.bf16.msra.mxu0 0
        %1524 = vmatprep.subr.bf16.mxu0 0
        %1525 = vmatpush1.bf16.msra.mxu0 0
        %1526 = vmatprep.subr.bf16.mxu0 0
        %1527 = vmatpush1.bf16.msra.mxu0 0
        %1528 = vmatprep.subr.bf16.mxu0 0
        %1529 = vmatpush1.bf16.msra.mxu0 %v1471
        %1530 = vmatprep.subr.bf16.mxu0 0
        %1531 = vmatpush2.bf16.msra.mxu0 0
        %1532 = vmatprep.subr.bf16.mxu0 0
        %1533 = vmatpush2.bf16.msra.mxu0 0
        %1534 = vmatprep.subr.bf16.mxu0 0
        %1535 = vmatpush2.bf16.msra.mxu0 0
        %1536 = vmatprep.subr.bf16.mxu0 0
        %1537 = vmatpush2.bf16.msra.mxu0 0
        %1538 = vmatprep.subr.bf16.mxu0 0
        %1539 = vmatpush2.bf16.msra.mxu0 0
        %1540 = vmatprep.subr.bf16.mxu0 0
        %1541 = vmatpush2.bf16.msra.mxu0 0
        %1542 = vmatprep.subr.bf16.mxu0 0
        %1543 = vmatpush2.bf16.msra.mxu0 0
        %1544 = vmatprep.subr.bf16.mxu0 0
        %1545 = vmatpush2.bf16.msra.mxu0 0
        %1546 = vmatprep.mubr.bf16.mxu0 0
        %1547 = vmatmul.mubr.bf16.gmra.mxu0 %v1462
        %v1548 = vpop.f32.mrf.mxu0
        %v1549 = vadd.f32 %v1456, %v1548
        %v1550 = vpop.f32.mrf.mxu0
        %v1551 = vpop.f32.mrf.mxu0
        %v1552 = vpop.f32.mrf.mxu0
        %1553 = vdwg.mxu0
        %1554 = vrot.lane.b32.xlu0 %v1352, 126
        %v1555 = vpop.permute.xlu0 %1554
        %1556 = vrot.lane.b32.xlu0 %v1353, 126
        %v1557 = vpop.permute.xlu0 %1556
        %1558 = vrot.lane.b32.xlu0 %v1354, 126
        %v1559 = vpop.permute.xlu0 %1558
        %v1560 = vsel %vm552, %v1555, %v1557
        %v1561 = vsel %vm552, %v1557, %v1559
        %v1563 = vsel %vm1366, %v328, 0
        %v1566 = vsel %vm1370, %v1560, 0
        %v1569 = vsel %vm1370, %v1561, 0
        %v1572 = vsel %vm1370, %v1559, 0
        %1574 = vmatprep.subr.bf16.mxu0 0
        %1575 = vmatpush1.bf16.msra.mxu0 0
        %1576 = vmatprep.subr.bf16.mxu0 0
        %1577 = vmatpush1.bf16.msra.mxu0 0
        %1578 = vmatprep.subr.bf16.mxu0 0
        %1579 = vmatpush1.bf16.msra.mxu0 0
        %1580 = vmatprep.subr.bf16.mxu0 0
        %1581 = vmatpush1.bf16.msra.mxu0 0
        %1582 = vmatprep.subr.bf16.mxu0 0
        %1583 = vmatpush1.bf16.msra.mxu0 0
        %1584 = vmatprep.subr.bf16.mxu0 0
        %1585 = vmatpush1.bf16.msra.mxu0 0
        %1586 = vmatprep.subr.bf16.mxu0 0
        %1587 = vmatpush1.bf16.msra.mxu0 0
        %1588 = vmatprep.subr.bf16.mxu0 %v1569
        %1589 = vmatpush1.bf16.msra.mxu0 %v1566
        %1590 = vmatprep.subr.bf16.mxu0 0
        %1591 = vmatpush2.bf16.msra.mxu0 0
        %1592 = vmatprep.subr.bf16.mxu0 0
        %1593 = vmatpush2.bf16.msra.mxu0 0
        %1594 = vmatprep.subr.bf16.mxu0 0
        %1595 = vmatpush2.bf16.msra.mxu0 0
        %1596 = vmatprep.subr.bf16.mxu0 0
        %1597 = vmatpush2.bf16.msra.mxu0 0
        %1598 = vmatprep.subr.bf16.mxu0 0
        %1599 = vmatpush2.bf16.msra.mxu0 0
        %1600 = vmatprep.subr.bf16.mxu0 0
        %1601 = vmatpush2.bf16.msra.mxu0 0
        %1602 = vmatprep.subr.bf16.mxu0 0
        %1603 = vmatpush2.bf16.msra.mxu0 0
        %1604 = vmatprep.subr.bf16.mxu0 0
        %1605 = vmatpush2.bf16.msra.mxu0 0
        %1606 = vmatprep.mubr.bf16.mxu0 0
        %1607 = vmatmul.mubr.bf16.gmra.mxu0 %v1563
        %v1608 = vpop.f32.mrf.mxu0
        %v1609 = vadd.f32 0.0, %v1608
        %v1610 = vpop.f32.mrf.mxu0
        %v1611 = vadd.f32 0.0, %v1610
        %v1612 = vpop.f32.mrf.mxu0
        %v1613 = vpop.f32.mrf.mxu0
        %1614 = vdwg.mxu0
        %1615 = vmatprep.subr.bf16.mxu0 0
        %1616 = vmatpush1.bf16.msra.mxu0 0
        %1617 = vmatprep.subr.bf16.mxu0 0
        %1618 = vmatpush1.bf16.msra.mxu0 0
        %1619 = vmatprep.subr.bf16.mxu0 0
        %1620 = vmatpush1.bf16.msra.mxu0 0
        %1621 = vmatprep.subr.bf16.mxu0 0
        %1622 = vmatpush1.bf16.msra.mxu0 0
        %1623 = vmatprep.subr.bf16.mxu0 0
        %1624 = vmatpush1.bf16.msra.mxu0 0
        %1625 = vmatprep.subr.bf16.mxu0 0
        %1626 = vmatpush1.bf16.msra.mxu0 0
        %1627 = vmatprep.subr.bf16.mxu0 0
        %1628 = vmatpush1.bf16.msra.mxu0 0
        %1629 = vmatprep.subr.bf16.mxu0 0
        %1630 = vmatpush1.bf16.msra.mxu0 %v1572
        %1631 = vmatprep.subr.bf16.mxu0 0
        %1632 = vmatpush2.bf16.msra.mxu0 0
        %1633 = vmatprep.subr.bf16.mxu0 0
        %1634 = vmatpush2.bf16.msra.mxu0 0
        %1635 = vmatprep.subr.bf16.mxu0 0
        %1636 = vmatpush2.bf16.msra.mxu0 0
        %1637 = vmatprep.subr.bf16.mxu0 0
        %1638 = vmatpush2.bf16.msra.mxu0 0
        %1639 = vmatprep.subr.bf16.mxu0 0
        %1640 = vmatpush2.bf16.msra.mxu0 0
        %1641 = vmatprep.subr.bf16.mxu0 0
        %1642 = vmatpush2.bf16.msra.mxu0 0
        %1643 = vmatprep.subr.bf16.mxu0 0
        %1644 = vmatpush2.bf16.msra.mxu0 0
        %1645 = vmatprep.subr.bf16.mxu0 0
        %1646 = vmatpush2.bf16.msra.mxu0 0
        %1647 = vmatprep.mubr.bf16.mxu0 0
        %1648 = vmatmul.mubr.bf16.gmra.mxu0 %v1563
        %v1649 = vpop.f32.mrf.mxu0
        %v1650 = vadd.f32 0.0, %v1649
        %v1651 = vpop.f32.mrf.mxu0
        %v1652 = vpop.f32.mrf.mxu0
        %v1653 = vpop.f32.mrf.mxu0
        %1654 = vdwg.mxu0
        %v1655 = vadd.f32 %v1508, %v1609
        %v1656 = vadd.f32 %v1510, %v1611
        %v1657 = vadd.f32 %v1549, %v1650
        %1658 = vrot.lane.b32.xlu0 %v1352, 110
        %v1659 = vpop.permute.xlu0 %1658
        %1660 = vrot.lane.b32.xlu0 %v1353, 110
        %v1661 = vpop.permute.xlu0 %1660
        %1662 = vrot.lane.b32.xlu0 %v1354, 110
        %v1663 = vpop.permute.xlu0 %1662
        %v1664 = vsel %vm657, %v1659, %v1661
        %v1665 = vsel %vm657, %v1661, %v1663
        %v1667 = vsel %vm1366, %v329, 0
        %v1670 = vsel %vm1370, %v1664, 0
        %v1673 = vsel %vm1370, %v1665, 0
        %v1676 = vsel %vm1370, %v1663, 0
        %1678 = vmatprep.subr.bf16.mxu0 0
        %1679 = vmatpush1.bf16.msra.mxu0 0
        %1680 = vmatprep.subr.bf16.mxu0 0
        %1681 = vmatpush1.bf16.msra.mxu0 0
        %1682 = vmatprep.subr.bf16.mxu0 0
        %1683 = vmatpush1.bf16.msra.mxu0 0
        %1684 = vmatprep.subr.bf16.mxu0 0
        %1685 = vmatpush1.bf16.msra.mxu0 0
        %1686 = vmatprep.subr.bf16.mxu0 0
        %1687 = vmatpush1.bf16.msra.mxu0 0
        %1688 = vmatprep.subr.bf16.mxu0 0
        %1689 = vmatpush1.bf16.msra.mxu0 0
        %1690 = vmatprep.subr.bf16.mxu0 0
        %1691 = vmatpush1.bf16.msra.mxu0 0
        %1692 = vmatprep.subr.bf16.mxu0 %v1673
        %1693 = vmatpush1.bf16.msra.mxu0 %v1670
        %1694 = vmatprep.subr.bf16.mxu0 0
        %1695 = vmatpush2.bf16.msra.mxu0 0
        %1696 = vmatprep.subr.bf16.mxu0 0
        %1697 = vmatpush2.bf16.msra.mxu0 0
        %1698 = vmatprep.subr.bf16.mxu0 0
        %1699 = vmatpush2.bf16.msra.mxu0 0
        %1700 = vmatprep.subr.bf16.mxu0 0
        %1701 = vmatpush2.bf16.msra.mxu0 0
        %1702 = vmatprep.subr.bf16.mxu0 0
        %1703 = vmatpush2.bf16.msra.mxu0 0
        %1704 = vmatprep.subr.bf16.mxu0 0
        %1705 = vmatpush2.bf16.msra.mxu0 0
        %1706 = vmatprep.subr.bf16.mxu0 0
        %1707 = vmatpush2.bf16.msra.mxu0 0
        %1708 = vmatprep.subr.bf16.mxu0 0
        %1709 = vmatpush2.bf16.msra.mxu0 0
        %1710 = vmatprep.mubr.bf16.mxu0 0
        %1711 = vmatmul.mubr.bf16.gmra.mxu0 %v1667
        %v1712 = vpop.f32.mrf.mxu0
        %v1713 = vadd.f32 0.0, %v1712
        %v1714 = vpop.f32.mrf.mxu0
        %v1715 = vadd.f32 0.0, %v1714
        %v1716 = vpop.f32.mrf.mxu0
        %v1717 = vpop.f32.mrf.mxu0
        %1718 = vdwg.mxu0
        %1719 = vmatprep.subr.bf16.mxu0 0
        %1720 = vmatpush1.bf16.msra.mxu0 0
        %1721 = vmatprep.subr.bf16.mxu0 0
        %1722 = vmatpush1.bf16.msra.mxu0 0
        %1723 = vmatprep.subr.bf16.mxu0 0
        %1724 = vmatpush1.bf16.msra.mxu0 0
        %1725 = vmatprep.subr.bf16.mxu0 0
        %1726 = vmatpush1.bf16.msra.mxu0 0
        %1727 = vmatprep.subr.bf16.mxu0 0
        %1728 = vmatpush1.bf16.msra.mxu0 0
        %1729 = vmatprep.subr.bf16.mxu0 0
        %1730 = vmatpush1.bf16.msra.mxu0 0
        %1731 = vmatprep.subr.bf16.mxu0 0
        %1732 = vmatpush1.bf16.msra.mxu0 0
        %1733 = vmatprep.subr.bf16.mxu0 0
        %1734 = vmatpush1.bf16.msra.mxu0 %v1676
        %1735 = vmatprep.subr.bf16.mxu0 0
        %1736 = vmatpush2.bf16.msra.mxu0 0
        %1737 = vmatprep.subr.bf16.mxu0 0
        %1738 = vmatpush2.bf16.msra.mxu0 0
        %1739 = vmatprep.subr.bf16.mxu0 0
        %1740 = vmatpush2.bf16.msra.mxu0 0
        %1741 = vmatprep.subr.bf16.mxu0 0
        %1742 = vmatpush2.bf16.msra.mxu0 0
        %1743 = vmatprep.subr.bf16.mxu0 0
        %1744 = vmatpush2.bf16.msra.mxu0 0
        %1745 = vmatprep.subr.bf16.mxu0 0
        %1746 = vmatpush2.bf16.msra.mxu0 0
        %1747 = vmatprep.subr.bf16.mxu0 0
        %1748 = vmatpush2.bf16.msra.mxu0 0
        %1749 = vmatprep.subr.bf16.mxu0 0
        %1750 = vmatpush2.bf16.msra.mxu0 0
        %1751 = vmatprep.mubr.bf16.mxu0 0
        %1752 = vmatmul.mubr.bf16.gmra.mxu0 %v1667
        %v1753 = vpop.f32.mrf.mxu0
        %v1754 = vadd.f32 0.0, %v1753
        %v1755 = vpop.f32.mrf.mxu0
        %v1756 = vpop.f32.mrf.mxu0
        %v1757 = vpop.f32.mrf.mxu0
        %1758 = vdwg.mxu0
        %v1759 = vadd.f32 %v1655, %v1713
        %v1760 = vadd.f32 %v1656, %v1715
        %v1761 = vadd.f32 %v1657, %v1754
        %1762 = vrot.lane.b32.xlu0 %v1352, 109
        %v1763 = vpop.permute.xlu0 %1762
        %1764 = vrot.lane.b32.xlu0 %v1353, 109
        %v1765 = vpop.permute.xlu0 %1764
        %1766 = vrot.lane.b32.xlu0 %v1354, 109
        %v1767 = vpop.permute.xlu0 %1766
        %v1768 = vsel %vm762, %v1763, %v1765
        %v1769 = vsel %vm762, %v1765, %v1767
        %v1771 = vsel %vm1366, %v330, 0
        %v1774 = vsel %vm1370, %v1768, 0
        %v1777 = vsel %vm1370, %v1769, 0
        %v1780 = vsel %vm1370, %v1767, 0
        %1782 = vmatprep.subr.bf16.mxu0 0
        %1783 = vmatpush1.bf16.msra.mxu0 0
        %1784 = vmatprep.subr.bf16.mxu0 0
        %1785 = vmatpush1.bf16.msra.mxu0 0
        %1786 = vmatprep.subr.bf16.mxu0 0
        %1787 = vmatpush1.bf16.msra.mxu0 0
        %1788 = vmatprep.subr.bf16.mxu0 0
        %1789 = vmatpush1.bf16.msra.mxu0 0
        %1790 = vmatprep.subr.bf16.mxu0 0
        %1791 = vmatpush1.bf16.msra.mxu0 0
        %1792 = vmatprep.subr.bf16.mxu0 0
        %1793 = vmatpush1.bf16.msra.mxu0 0
        %1794 = vmatprep.subr.bf16.mxu0 0
        %1795 = vmatpush1.bf16.msra.mxu0 0
        %1796 = vmatprep.subr.bf16.mxu0 %v1777
        %1797 = vmatpush1.bf16.msra.mxu0 %v1774
        %1798 = vmatprep.subr.bf16.mxu0 0
        %1799 = vmatpush2.bf16.msra.mxu0 0
        %1800 = vmatprep.subr.bf16.mxu0 0
        %1801 = vmatpush2.bf16.msra.mxu0 0
        %1802 = vmatprep.subr.bf16.mxu0 0
        %1803 = vmatpush2.bf16.msra.mxu0 0
        %1804 = vmatprep.subr.bf16.mxu0 0
        %1805 = vmatpush2.bf16.msra.mxu0 0
        %1806 = vmatprep.subr.bf16.mxu0 0
        %1807 = vmatpush2.bf16.msra.mxu0 0
        %1808 = vmatprep.subr.bf16.mxu0 0
        %1809 = vmatpush2.bf16.msra.mxu0 0
        %1810 = vmatprep.subr.bf16.mxu0 0
        %1811 = vmatpush2.bf16.msra.mxu0 0
        %1812 = vmatprep.subr.bf16.mxu0 0
        %1813 = vmatpush2.bf16.msra.mxu0 0
        %1814 = vmatprep.mubr.bf16.mxu0 0
        %1815 = vmatmul.mubr.bf16.gmra.mxu0 %v1771
        %v1816 = vpop.f32.mrf.mxu0
        %v1817 = vadd.f32 0.0, %v1816
        %v1818 = vpop.f32.mrf.mxu0
        %v1819 = vadd.f32 0.0, %v1818
        %v1820 = vpop.f32.mrf.mxu0
        %v1821 = vpop.f32.mrf.mxu0
        %1822 = vdwg.mxu0
        %1823 = vmatprep.subr.bf16.mxu0 0
        %1824 = vmatpush1.bf16.msra.mxu0 0
        %1825 = vmatprep.subr.bf16.mxu0 0
        %1826 = vmatpush1.bf16.msra.mxu0 0
        %1827 = vmatprep.subr.bf16.mxu0 0
        %1828 = vmatpush1.bf16.msra.mxu0 0
        %1829 = vmatprep.subr.bf16.mxu0 0
        %1830 = vmatpush1.bf16.msra.mxu0 0
        %1831 = vmatprep.subr.bf16.mxu0 0
        %1832 = vmatpush1.bf16.msra.mxu0 0
        %1833 = vmatprep.subr.bf16.mxu0 0
        %1834 = vmatpush1.bf16.msra.mxu0 0
        %1835 = vmatprep.subr.bf16.mxu0 0
        %1836 = vmatpush1.bf16.msra.mxu0 0
        %1837 = vmatprep.subr.bf16.mxu0 0
        %1838 = vmatpush1.bf16.msra.mxu0 %v1780
        %1839 = vmatprep.subr.bf16.mxu0 0
        %1840 = vmatpush2.bf16.msra.mxu0 0
        %1841 = vmatprep.subr.bf16.mxu0 0
        %1842 = vmatpush2.bf16.msra.mxu0 0
        %1843 = vmatprep.subr.bf16.mxu0 0
        %1844 = vmatpush2.bf16.msra.mxu0 0
        %1845 = vmatprep.subr.bf16.mxu0 0
        %1846 = vmatpush2.bf16.msra.mxu0 0
        %1847 = vmatprep.subr.bf16.mxu0 0
        %1848 = vmatpush2.bf16.msra.mxu0 0
        %1849 = vmatprep.subr.bf16.mxu0 0
        %1850 = vmatpush2.bf16.msra.mxu0 0
        %1851 = vmatprep.subr.bf16.mxu0 0
        %1852 = vmatpush2.bf16.msra.mxu0 0
        %1853 = vmatprep.subr.bf16.mxu0 0
        %1854 = vmatpush2.bf16.msra.mxu0 0
        %1855 = vmatprep.mubr.bf16.mxu0 0
        %1856 = vmatmul.mubr.bf16.gmra.mxu0 %v1771
        %v1857 = vpop.f32.mrf.mxu0
        %v1858 = vadd.f32 0.0, %v1857
        %v1859 = vpop.f32.mrf.mxu0
        %v1860 = vpop.f32.mrf.mxu0
        %v1861 = vpop.f32.mrf.mxu0
        %1862 = vdwg.mxu0
        %v1863 = vadd.f32 %v1759, %v1817
        %v1864 = vadd.f32 %v1760, %v1819
        %v1865 = vadd.f32 %v1761, %v1858
        %1866 = vrot.lane.b32.xlu0 %v1352, 108
        %v1867 = vpop.permute.xlu0 %1866
        %1868 = vrot.lane.b32.xlu0 %v1353, 108
        %v1869 = vpop.permute.xlu0 %1868
        %1870 = vrot.lane.b32.xlu0 %v1354, 108
        %v1871 = vpop.permute.xlu0 %1870
        %v1872 = vsel %vm867, %v1867, %v1869
        %v1873 = vsel %vm867, %v1869, %v1871
        %v1875 = vsel %vm1366, %v331, 0
        %v1878 = vsel %vm1370, %v1872, 0
        %v1881 = vsel %vm1370, %v1873, 0
        %v1884 = vsel %vm1370, %v1871, 0
        %1886 = vmatprep.subr.bf16.mxu0 0
        %1887 = vmatpush1.bf16.msra.mxu0 0
        %1888 = vmatprep.subr.bf16.mxu0 0
        %1889 = vmatpush1.bf16.msra.mxu0 0
        %1890 = vmatprep.subr.bf16.mxu0 0
        %1891 = vmatpush1.bf16.msra.mxu0 0
        %1892 = vmatprep.subr.bf16.mxu0 0
        %1893 = vmatpush1.bf16.msra.mxu0 0
        %1894 = vmatprep.subr.bf16.mxu0 0
        %1895 = vmatpush1.bf16.msra.mxu0 0
        %1896 = vmatprep.subr.bf16.mxu0 0
        %1897 = vmatpush1.bf16.msra.mxu0 0
        %1898 = vmatprep.subr.bf16.mxu0 0
        %1899 = vmatpush1.bf16.msra.mxu0 0
        %1900 = vmatprep.subr.bf16.mxu0 %v1881
        %1901 = vmatpush1.bf16.msra.mxu0 %v1878
        %1902 = vmatprep.subr.bf16.mxu0 0
        %1903 = vmatpush2.bf16.msra.mxu0 0
        %1904 = vmatprep.subr.bf16.mxu0 0
        %1905 = vmatpush2.bf16.msra.mxu0 0
        %1906 = vmatprep.subr.bf16.mxu0 0
        %1907 = vmatpush2.bf16.msra.mxu0 0
        %1908 = vmatprep.subr.bf16.mxu0 0
        %1909 = vmatpush2.bf16.msra.mxu0 0
        %1910 = vmatprep.subr.bf16.mxu0 0
        %1911 = vmatpush2.bf16.msra.mxu0 0
        %1912 = vmatprep.subr.bf16.mxu0 0
        %1913 = vmatpush2.bf16.msra.mxu0 0
        %1914 = vmatprep.subr.bf16.mxu0 0
        %1915 = vmatpush2.bf16.msra.mxu0 0
        %1916 = vmatprep.subr.bf16.mxu0 0
        %1917 = vmatpush2.bf16.msra.mxu0 0
        %1918 = vmatprep.mubr.bf16.mxu0 0
        %1919 = vmatmul.mubr.bf16.gmra.mxu0 %v1875
        %v1920 = vpop.f32.mrf.mxu0
        %v1921 = vadd.f32 0.0, %v1920
        %v1922 = vpop.f32.mrf.mxu0
        %v1923 = vadd.f32 0.0, %v1922
        %v1924 = vpop.f32.mrf.mxu0
        %v1925 = vpop.f32.mrf.mxu0
        %1926 = vdwg.mxu0
        %1927 = vmatprep.subr.bf16.mxu0 0
        %1928 = vmatpush1.bf16.msra.mxu0 0
        %1929 = vmatprep.subr.bf16.mxu0 0
        %1930 = vmatpush1.bf16.msra.mxu0 0
        %1931 = vmatprep.subr.bf16.mxu0 0
        %1932 = vmatpush1.bf16.msra.mxu0 0
        %1933 = vmatprep.subr.bf16.mxu0 0
        %1934 = vmatpush1.bf16.msra.mxu0 0
        %1935 = vmatprep.subr.bf16.mxu0 0
        %1936 = vmatpush1.bf16.msra.mxu0 0
        %1937 = vmatprep.subr.bf16.mxu0 0
        %1938 = vmatpush1.bf16.msra.mxu0 0
        %1939 = vmatprep.subr.bf16.mxu0 0
        %1940 = vmatpush1.bf16.msra.mxu0 0
        %1941 = vmatprep.subr.bf16.mxu0 0
        %1942 = vmatpush1.bf16.msra.mxu0 %v1884
        %1943 = vmatprep.subr.bf16.mxu0 0
        %1944 = vmatpush2.bf16.msra.mxu0 0
        %1945 = vmatprep.subr.bf16.mxu0 0
        %1946 = vmatpush2.bf16.msra.mxu0 0
        %1947 = vmatprep.subr.bf16.mxu0 0
        %1948 = vmatpush2.bf16.msra.mxu0 0
        %1949 = vmatprep.subr.bf16.mxu0 0
        %1950 = vmatpush2.bf16.msra.mxu0 0
        %1951 = vmatprep.subr.bf16.mxu0 0
        %1952 = vmatpush2.bf16.msra.mxu0 0
        %1953 = vmatprep.subr.bf16.mxu0 0
        %1954 = vmatpush2.bf16.msra.mxu0 0
        %1955 = vmatprep.subr.bf16.mxu0 0
        %1956 = vmatpush2.bf16.msra.mxu0 0
        %1957 = vmatprep.subr.bf16.mxu0 0
        %1958 = vmatpush2.bf16.msra.mxu0 0
        %1959 = vmatprep.mubr.bf16.mxu0 0
        %1960 = vmatmul.mubr.bf16.gmra.mxu0 %v1875
        %v1961 = vpop.f32.mrf.mxu0
        %v1962 = vadd.f32 0.0, %v1961
        %v1963 = vpop.f32.mrf.mxu0
        %v1964 = vpop.f32.mrf.mxu0
        %v1965 = vpop.f32.mrf.mxu0
        %1966 = vdwg.mxu0
        %v1967 = vadd.f32 %v1863, %v1921
        %v1968 = vadd.f32 %v1864, %v1923
        %v1969 = vadd.f32 %v1865, %v1962
        %1970 = vrot.lane.b32.xlu0 %v1352, 92
        %v1971 = vpop.permute.xlu0 %1970
        %1972 = vrot.lane.b32.xlu0 %v1353, 92
        %v1973 = vpop.permute.xlu0 %1972
        %1974 = vrot.lane.b32.xlu0 %v1354, 92
        %v1975 = vpop.permute.xlu0 %1974
        %v1976 = vsel %vm972, %v1971, %v1973
        %v1977 = vsel %vm972, %v1973, %v1975
        %v1979 = vsel %vm1366, %v332, 0
        %v1982 = vsel %vm1370, %v1976, 0
        %v1985 = vsel %vm1370, %v1977, 0
        %v1988 = vsel %vm1370, %v1975, 0
        %1990 = vmatprep.subr.bf16.mxu0 0
        %1991 = vmatpush1.bf16.msra.mxu0 0
        %1992 = vmatprep.subr.bf16.mxu0 0
        %1993 = vmatpush1.bf16.msra.mxu0 0
        %1994 = vmatprep.subr.bf16.mxu0 0
        %1995 = vmatpush1.bf16.msra.mxu0 0
        %1996 = vmatprep.subr.bf16.mxu0 0
        %1997 = vmatpush1.bf16.msra.mxu0 0
        %1998 = vmatprep.subr.bf16.mxu0 0
        %1999 = vmatpush1.bf16.msra.mxu0 0
        %2000 = vmatprep.subr.bf16.mxu0 0
        %2001 = vmatpush1.bf16.msra.mxu0 0
        %2002 = vmatprep.subr.bf16.mxu0 0
        %2003 = vmatpush1.bf16.msra.mxu0 0
        %2004 = vmatprep.subr.bf16.mxu0 %v1985
        %2005 = vmatpush1.bf16.msra.mxu0 %v1982
        %2006 = vmatprep.subr.bf16.mxu0 0
        %2007 = vmatpush2.bf16.msra.mxu0 0
        %2008 = vmatprep.subr.bf16.mxu0 0
        %2009 = vmatpush2.bf16.msra.mxu0 0
        %2010 = vmatprep.subr.bf16.mxu0 0
        %2011 = vmatpush2.bf16.msra.mxu0 0
        %2012 = vmatprep.subr.bf16.mxu0 0
        %2013 = vmatpush2.bf16.msra.mxu0 0
        %2014 = vmatprep.subr.bf16.mxu0 0
        %2015 = vmatpush2.bf16.msra.mxu0 0
        %2016 = vmatprep.subr.bf16.mxu0 0
        %2017 = vmatpush2.bf16.msra.mxu0 0
        %2018 = vmatprep.subr.bf16.mxu0 0
        %2019 = vmatpush2.bf16.msra.mxu0 0
        %2020 = vmatprep.subr.bf16.mxu0 0
        %2021 = vmatpush2.bf16.msra.mxu0 0
        %2022 = vmatprep.mubr.bf16.mxu0 0
        %2023 = vmatmul.mubr.bf16.gmra.mxu0 %v1979
        %v2024 = vpop.f32.mrf.mxu0
        %v2025 = vadd.f32 0.0, %v2024
        %v2026 = vpop.f32.mrf.mxu0
        %v2027 = vadd.f32 0.0, %v2026
        %v2028 = vpop.f32.mrf.mxu0
        %v2029 = vpop.f32.mrf.mxu0
        %2030 = vdwg.mxu0
        %2031 = vmatprep.subr.bf16.mxu0 0
        %2032 = vmatpush1.bf16.msra.mxu0 0
        %2033 = vmatprep.subr.bf16.mxu0 0
        %2034 = vmatpush1.bf16.msra.mxu0 0
        %2035 = vmatprep.subr.bf16.mxu0 0
        %2036 = vmatpush1.bf16.msra.mxu0 0
        %2037 = vmatprep.subr.bf16.mxu0 0
        %2038 = vmatpush1.bf16.msra.mxu0 0
        %2039 = vmatprep.subr.bf16.mxu0 0
        %2040 = vmatpush1.bf16.msra.mxu0 0
        %2041 = vmatprep.subr.bf16.mxu0 0
        %2042 = vmatpush1.bf16.msra.mxu0 0
        %2043 = vmatprep.subr.bf16.mxu0 0
        %2044 = vmatpush1.bf16.msra.mxu0 0
        %2045 = vmatprep.subr.bf16.mxu0 0
        %2046 = vmatpush1.bf16.msra.mxu0 %v1988
        %2047 = vmatprep.subr.bf16.mxu0 0
        %2048 = vmatpush2.bf16.msra.mxu0 0
        %2049 = vmatprep.subr.bf16.mxu0 0
        %2050 = vmatpush2.bf16.msra.mxu0 0
        %2051 = vmatprep.subr.bf16.mxu0 0
        %2052 = vmatpush2.bf16.msra.mxu0 0
        %2053 = vmatprep.subr.bf16.mxu0 0
        %2054 = vmatpush2.bf16.msra.mxu0 0
        %2055 = vmatprep.subr.bf16.mxu0 0
        %2056 = vmatpush2.bf16.msra.mxu0 0
        %2057 = vmatprep.subr.bf16.mxu0 0
        %2058 = vmatpush2.bf16.msra.mxu0 0
        %2059 = vmatprep.subr.bf16.mxu0 0
        %2060 = vmatpush2.bf16.msra.mxu0 0
        %2061 = vmatprep.subr.bf16.mxu0 0
        %2062 = vmatpush2.bf16.msra.mxu0 0
        %2063 = vmatprep.mubr.bf16.mxu0 0
        %2064 = vmatmul.mubr.bf16.gmra.mxu0 %v1979
        %v2065 = vpop.f32.mrf.mxu0
        %v2066 = vadd.f32 0.0, %v2065
        %v2067 = vpop.f32.mrf.mxu0
        %v2068 = vpop.f32.mrf.mxu0
        %v2069 = vpop.f32.mrf.mxu0
        %2070 = vdwg.mxu0
        %v2071 = vadd.f32 %v1967, %v2025
        %v2072 = vadd.f32 %v1968, %v2027
        %v2073 = vadd.f32 %v1969, %v2066
        %2074 = vrot.lane.b32.xlu0 %v1352, 91
        %v2075 = vpop.permute.xlu0 %2074
        %2076 = vrot.lane.b32.xlu0 %v1353, 91
        %v2077 = vpop.permute.xlu0 %2076
        %2078 = vrot.lane.b32.xlu0 %v1354, 91
        %v2079 = vpop.permute.xlu0 %2078
        %v2080 = vsel %vm1077, %v2075, %v2077
        %v2081 = vsel %vm1077, %v2077, %v2079
        %v2083 = vsel %vm1366, %v333, 0
        %v2086 = vsel %vm1370, %v2080, 0
        %v2089 = vsel %vm1370, %v2081, 0
        %v2092 = vsel %vm1370, %v2079, 0
        %2094 = vmatprep.subr.bf16.mxu0 0
        %2095 = vmatpush1.bf16.msra.mxu0 0
        %2096 = vmatprep.subr.bf16.mxu0 0
        %2097 = vmatpush1.bf16.msra.mxu0 0
        %2098 = vmatprep.subr.bf16.mxu0 0
        %2099 = vmatpush1.bf16.msra.mxu0 0
        %2100 = vmatprep.subr.bf16.mxu0 0
        %2101 = vmatpush1.bf16.msra.mxu0 0
        %2102 = vmatprep.subr.bf16.mxu0 0
        %2103 = vmatpush1.bf16.msra.mxu0 0
        %2104 = vmatprep.subr.bf16.mxu0 0
        %2105 = vmatpush1.bf16.msra.mxu0 0
        %2106 = vmatprep.subr.bf16.mxu0 0
        %2107 = vmatpush1.bf16.msra.mxu0 0
        %2108 = vmatprep.subr.bf16.mxu0 %v2089
        %2109 = vmatpush1.bf16.msra.mxu0 %v2086
        %2110 = vmatprep.subr.bf16.mxu0 0
        %2111 = vmatpush2.bf16.msra.mxu0 0
        %2112 = vmatprep.subr.bf16.mxu0 0
        %2113 = vmatpush2.bf16.msra.mxu0 0
        %2114 = vmatprep.subr.bf16.mxu0 0
        %2115 = vmatpush2.bf16.msra.mxu0 0
        %2116 = vmatprep.subr.bf16.mxu0 0
        %2117 = vmatpush2.bf16.msra.mxu0 0
        %2118 = vmatprep.subr.bf16.mxu0 0
        %2119 = vmatpush2.bf16.msra.mxu0 0
        %2120 = vmatprep.subr.bf16.mxu0 0
        %2121 = vmatpush2.bf16.msra.mxu0 0
        %2122 = vmatprep.subr.bf16.mxu0 0
        %2123 = vmatpush2.bf16.msra.mxu0 0
        %2124 = vmatprep.subr.bf16.mxu0 0
        %2125 = vmatpush2.bf16.msra.mxu0 0
        %2126 = vmatprep.mubr.bf16.mxu0 0
        %2127 = vmatmul.mubr.bf16.gmra.mxu0 %v2083
        %v2128 = vpop.f32.mrf.mxu0
        %v2129 = vadd.f32 0.0, %v2128
        %v2130 = vpop.f32.mrf.mxu0
        %v2131 = vadd.f32 0.0, %v2130
        %v2132 = vpop.f32.mrf.mxu0
        %v2133 = vpop.f32.mrf.mxu0
        %2134 = vdwg.mxu0
        %2135 = vmatprep.subr.bf16.mxu0 0
        %2136 = vmatpush1.bf16.msra.mxu0 0
        %2137 = vmatprep.subr.bf16.mxu0 0
        %2138 = vmatpush1.bf16.msra.mxu0 0
        %2139 = vmatprep.subr.bf16.mxu0 0
        %2140 = vmatpush1.bf16.msra.mxu0 0
        %2141 = vmatprep.subr.bf16.mxu0 0
        %2142 = vmatpush1.bf16.msra.mxu0 0
        %2143 = vmatprep.subr.bf16.mxu0 0
        %2144 = vmatpush1.bf16.msra.mxu0 0
        %2145 = vmatprep.subr.bf16.mxu0 0
        %2146 = vmatpush1.bf16.msra.mxu0 0
        %2147 = vmatprep.subr.bf16.mxu0 0
        %2148 = vmatpush1.bf16.msra.mxu0 0
        %2149 = vmatprep.subr.bf16.mxu0 0
        %2150 = vmatpush1.bf16.msra.mxu0 %v2092
        %2151 = vmatprep.subr.bf16.mxu0 0
        %2152 = vmatpush2.bf16.msra.mxu0 0
        %2153 = vmatprep.subr.bf16.mxu0 0
        %2154 = vmatpush2.bf16.msra.mxu0 0
        %2155 = vmatprep.subr.bf16.mxu0 0
        %2156 = vmatpush2.bf16.msra.mxu0 0
        %2157 = vmatprep.subr.bf16.mxu0 0
        %2158 = vmatpush2.bf16.msra.mxu0 0
        %2159 = vmatprep.subr.bf16.mxu0 0
        %2160 = vmatpush2.bf16.msra.mxu0 0
        %2161 = vmatprep.subr.bf16.mxu0 0
        %2162 = vmatpush2.bf16.msra.mxu0 0
        %2163 = vmatprep.subr.bf16.mxu0 0
        %2164 = vmatpush2.bf16.msra.mxu0 0
        %2165 = vmatprep.subr.bf16.mxu0 0
        %2166 = vmatpush2.bf16.msra.mxu0 0
        %2167 = vmatprep.mubr.bf16.mxu0 0
        %2168 = vmatmul.mubr.bf16.gmra.mxu0 %v2083
        %v2169 = vpop.f32.mrf.mxu0
        %v2170 = vadd.f32 0.0, %v2169
        %v2171 = vpop.f32.mrf.mxu0
        %v2172 = vpop.f32.mrf.mxu0
        %v2173 = vpop.f32.mrf.mxu0
        %2174 = vdwg.mxu0
        %v2175 = vadd.f32 %v2071, %v2129
        %v2176 = vadd.f32 %v2072, %v2131
        %v2177 = vadd.f32 %v2073, %v2170
        %2178 = vrot.lane.b32.xlu0 %v1352, 90
        %v2179 = vpop.permute.xlu0 %2178
        %2180 = vrot.lane.b32.xlu0 %v1353, 90
        %v2181 = vpop.permute.xlu0 %2180
        %2182 = vrot.lane.b32.xlu0 %v1354, 90
        %v2183 = vpop.permute.xlu0 %2182
        %v2184 = vsel %vm1182, %v2179, %v2181
        %v2185 = vsel %vm1182, %v2181, %v2183
        %v2187 = vsel %vm1366, %v334, 0
        %v2190 = vsel %vm1370, %v2184, 0
        %v2193 = vsel %vm1370, %v2185, 0
        %v2196 = vsel %vm1370, %v2183, 0
        %2198 = vmatprep.subr.bf16.mxu0 0
        %2199 = vmatpush1.bf16.msra.mxu0 0
        %2200 = vmatprep.subr.bf16.mxu0 0
        %2201 = vmatpush1.bf16.msra.mxu0 0
        %2202 = vmatprep.subr.bf16.mxu0 0
        %2203 = vmatpush1.bf16.msra.mxu0 0
        %2204 = vmatprep.subr.bf16.mxu0 0
        %2205 = vmatpush1.bf16.msra.mxu0 0
        %2206 = vmatprep.subr.bf16.mxu0 0
        %2207 = vmatpush1.bf16.msra.mxu0 0
        %2208 = vmatprep.subr.bf16.mxu0 0
        %2209 = vmatpush1.bf16.msra.mxu0 0
        %2210 = vmatprep.subr.bf16.mxu0 0
        %2211 = vmatpush1.bf16.msra.mxu0 0
        %2212 = vmatprep.subr.bf16.mxu0 %v2193
        %2213 = vmatpush1.bf16.msra.mxu0 %v2190
        %2214 = vmatprep.subr.bf16.mxu0 0
        %2215 = vmatpush2.bf16.msra.mxu0 0
        %2216 = vmatprep.subr.bf16.mxu0 0
        %2217 = vmatpush2.bf16.msra.mxu0 0
        %2218 = vmatprep.subr.bf16.mxu0 0
        %2219 = vmatpush2.bf16.msra.mxu0 0
        %2220 = vmatprep.subr.bf16.mxu0 0
        %2221 = vmatpush2.bf16.msra.mxu0 0
        %2222 = vmatprep.subr.bf16.mxu0 0
        %2223 = vmatpush2.bf16.msra.mxu0 0
        %2224 = vmatprep.subr.bf16.mxu0 0
        %2225 = vmatpush2.bf16.msra.mxu0 0
        %2226 = vmatprep.subr.bf16.mxu0 0
        %2227 = vmatpush2.bf16.msra.mxu0 0
        %2228 = vmatprep.subr.bf16.mxu0 0
        %2229 = vmatpush2.bf16.msra.mxu0 0
        %2230 = vmatprep.mubr.bf16.mxu0 0
        %2231 = vmatmul.mubr.bf16.gmra.mxu0 %v2187
        %v2232 = vpop.f32.mrf.mxu0
        %v2233 = vadd.f32 0.0, %v2232
        %v2234 = vpop.f32.mrf.mxu0
        %v2235 = vadd.f32 0.0, %v2234
        %v2236 = vpop.f32.mrf.mxu0
        %v2237 = vpop.f32.mrf.mxu0
        %2238 = vdwg.mxu0
        %2239 = vmatprep.subr.bf16.mxu0 0
        %2240 = vmatpush1.bf16.msra.mxu0 0
        %2241 = vmatprep.subr.bf16.mxu0 0
        %2242 = vmatpush1.bf16.msra.mxu0 0
        %2243 = vmatprep.subr.bf16.mxu0 0
        %2244 = vmatpush1.bf16.msra.mxu0 0
        %2245 = vmatprep.subr.bf16.mxu0 0
        %2246 = vmatpush1.bf16.msra.mxu0 0
        %2247 = vmatprep.subr.bf16.mxu0 0
        %2248 = vmatpush1.bf16.msra.mxu0 0
        %2249 = vmatprep.subr.bf16.mxu0 0
        %2250 = vmatpush1.bf16.msra.mxu0 0
        %2251 = vmatprep.subr.bf16.mxu0 0
        %2252 = vmatpush1.bf16.msra.mxu0 0
        %2253 = vmatprep.subr.bf16.mxu0 0
        %2254 = vmatpush1.bf16.msra.mxu0 %v2196
        %2255 = vmatprep.subr.bf16.mxu0 0
        %2256 = vmatpush2.bf16.msra.mxu0 0
        %2257 = vmatprep.subr.bf16.mxu0 0
        %2258 = vmatpush2.bf16.msra.mxu0 0
        %2259 = vmatprep.subr.bf16.mxu0 0
        %2260 = vmatpush2.bf16.msra.mxu0 0
        %2261 = vmatprep.subr.bf16.mxu0 0
        %2262 = vmatpush2.bf16.msra.mxu0 0
        %2263 = vmatprep.subr.bf16.mxu0 0
        %2264 = vmatpush2.bf16.msra.mxu0 0
        %2265 = vmatprep.subr.bf16.mxu0 0
        %2266 = vmatpush2.bf16.msra.mxu0 0
        %2267 = vmatprep.subr.bf16.mxu0 0
        %2268 = vmatpush2.bf16.msra.mxu0 0
        %2269 = vmatprep.subr.bf16.mxu0 0
        %2270 = vmatpush2.bf16.msra.mxu0 0
        %2271 = vmatprep.mubr.bf16.mxu0 0
        %2272 = vmatmul.mubr.bf16.gmra.mxu0 %v2187
        %v2273 = vpop.f32.mrf.mxu0
        %v2274 = vadd.f32 0.0, %v2273
        %v2275 = vpop.f32.mrf.mxu0
        %v2276 = vpop.f32.mrf.mxu0
        %v2277 = vpop.f32.mrf.mxu0
        %2278 = vdwg.mxu0
        %v2279 = vadd.f32 %v2175, %v2233
        %v2280 = vadd.f32 %v2176, %v2235
        %v2281 = vadd.f32 %v2177, %v2274
        %2283 = vset.pattern.permute.xlu0 0
        %2284 = vperm.xlu0 %2283, %v336
        %v2285 = vpop.permute.xlu0 %2284
        %v2287 = vadd.f32 %v2279, %v2285
        %v2288 = vadd.f32 %v2280, %v2285
        %v2289 = vadd.f32 %v2281, %v2285
        %v2293 = vcombine.low %v2287, %v2288
        %2294 = vrot.lane.b32.xlu0 %v2293, 19
        %v2295 = vpop.permute.xlu0 %2294
        %2296 = vrot.lane.b32.xlu0 %v2289, 19
        %v2297 = vpop.permute.xlu0 %2296
        %v2298 = vrot.slane %v2295, 4
        %v2299 = vsel %vm1338, %v2298, %v2295
        %v2300 = vsel %vm1338, %v2298, %v2297
        %v2303 = vadd.f32 %v338, %v2299
        %v2304 = vadd.f32 %v339, %v2300
        %v2305 = vmul.f32 %v2303, 0.5
        %v2306 = vmul.f32 %v2304, 0.5
        %v2307 = vadd.f32 %v2305, 0.0
        %v2308 = vadd.f32 %v2306, 0.0
        %vm2309 = vcmp.ge.f32.partialorder %v2307, 1.0
        %vm2310 = vcmp.ge.f32.partialorder %v2308, 1.0
        %v2311 = vsel %vm2309, 1, 0
        %v2312 = vsel %vm2310, 1, 0
        %v2313 = vcvt.s32.f32 %v2311
        %v2314 = vcvt.s32.f32 %v2312
        %v2315 = vsub.f32 1.0, %v2313
        %v2316 = vsub.f32 1.0, %v2314
        %v2317 = vmul.f32 %v2307, %v2315
        %v2318 = vmul.f32 %v2308, %v2316
        %2321 = vrot.lane.b32.xlu0 %v2313, 109
        %v2322 = vpop.permute.xlu0 %2321
        %2323 = vrot.lane.b32.xlu0 %v2314, 109
        %v2324 = vpop.permute.xlu0 %2323
        %v2325 = vrot.slane %v2322, 4
        %v2326 = vrot.slane %v2324, 4
        %v2327 = vsel %vm1370, %v2325, %v2326
        %vm2328 = vcmask 891904
        %v2329 = vsel %vm2328, %v2322, %v2327
        %2332 = vst [vmem:[%s293] sm:$0xff] %v2329
        %vm2333 = vcmask 551936
        %2334 = vst.msk [vmem:[%s293 + $0x8] sm:$0xf] %vm2333, %v2324
        %s2335 = scalar_lea.vmem %s267, 12 [#allocation3]
        %v2336 = vld [vmem:[%s2335] sm:$0xff]
        %v2337 = vld [vmem:[%s2335 + $0x8] sm:$0xf]
        %v2339 = vcombine.high %v2336, %v2336
        %v2341 = vpack.c.bf16 %v2336, %v2336
        %v2342 = vpack.c.bf16 %v2339, %v2339
        %v2343 = vpack.c.bf16 %v2337, %v2337
        %2347 = vrot.lane.b32.xlu0 %v2341, 127
        %v2348 = vpop.permute.xlu0 %2347
        %2349 = vrot.lane.b32.xlu0 %v2342, 127
        %v2350 = vpop.permute.xlu0 %2349
        %2351 = vrot.lane.b32.xlu0 %v2343, 127
        %v2352 = vpop.permute.xlu0 %2351
        %v2353 = vsel %vm355, %v2348, %v2350
        %v2354 = vsel %vm355, %v2350, %v2352
        %v2356 = vsel %vm362, %v2353, 0
        %v2359 = vsel %vm362, %v2354, 0
        %v2362 = vsel %vm362, %v2352, 0
        %2364 = vmatprep.subr.bf16.mxu0 0
        %2365 = vmatpush1.bf16.msra.mxu0 0
        %2366 = vmatprep.subr.bf16.mxu0 0
        %2367 = vmatpush1.bf16.msra.mxu0 0
        %2368 = vmatprep.subr.bf16.mxu0 0
        %2369 = vmatpush1.bf16.msra.mxu0 0
        %2370 = vmatprep.subr.bf16.mxu0 0
        %2371 = vmatpush1.bf16.msra.mxu0 0
        %2372 = vmatprep.subr.bf16.mxu0 0
        %2373 = vmatpush1.bf16.msra.mxu0 0
        %2374 = vmatprep.subr.bf16.mxu0 0
        %2375 = vmatpush1.bf16.msra.mxu0 0
        %2376 = vmatprep.subr.bf16.mxu0 0
        %2377 = vmatpush1.bf16.msra.mxu0 0
        %2378 = vmatprep.subr.bf16.mxu0 %v2359
        %2379 = vmatpush1.bf16.msra.mxu0 %v2356
        %2380 = vmatprep.subr.bf16.mxu0 0
        %2381 = vmatpush2.bf16.msra.mxu0 0
        %2382 = vmatprep.subr.bf16.mxu0 0
        %2383 = vmatpush2.bf16.msra.mxu0 0
        %2384 = vmatprep.subr.bf16.mxu0 0
        %2385 = vmatpush2.bf16.msra.mxu0 0
        %2386 = vmatprep.subr.bf16.mxu0 0
        %2387 = vmatpush2.bf16.msra.mxu0 0
        %2388 = vmatprep.subr.bf16.mxu0 0
        %2389 = vmatpush2.bf16.msra.mxu0 0
        %2390 = vmatprep.subr.bf16.mxu0 0
        %2391 = vmatpush2.bf16.msra.mxu0 0
        %2392 = vmatprep.subr.bf16.mxu0 0
        %2393 = vmatpush2.bf16.msra.mxu0 0
        %2394 = vmatprep.subr.bf16.mxu0 0
        %2395 = vmatpush2.bf16.msra.mxu0 0
        %2396 = vmatprep.mubr.bf16.mxu0 0
        %2397 = vmatmul.mubr.bf16.gmra.mxu0 %v360
        %v2398 = vpop.f32.mrf.mxu0
        %v2399 = vadd.f32 0.0, %v2398
        %v2400 = vpop.f32.mrf.mxu0
        %v2401 = vadd.f32 0.0, %v2400
        %v2402 = vpop.f32.mrf.mxu0
        %v2403 = vpop.f32.mrf.mxu0
        %2404 = vdwg.mxu0
        %2405 = vmatprep.subr.bf16.mxu0 0
        %2406 = vmatpush1.bf16.msra.mxu0 0
        %2407 = vmatprep.subr.bf16.mxu0 0
        %2408 = vmatpush1.bf16.msra.mxu0 0
        %2409 = vmatprep.subr.bf16.mxu0 0
        %2410 = vmatpush1.bf16.msra.mxu0 0
        %2411 = vmatprep.subr.bf16.mxu0 0
        %2412 = vmatpush1.bf16.msra.mxu0 0
        %2413 = vmatprep.subr.bf16.mxu0 0
        %2414 = vmatpush1.bf16.msra.mxu0 0
        %2415 = vmatprep.subr.bf16.mxu0 0
        %2416 = vmatpush1.bf16.msra.mxu0 0
        %2417 = vmatprep.subr.bf16.mxu0 0
        %2418 = vmatpush1.bf16.msra.mxu0 0
        %2419 = vmatprep.subr.bf16.mxu0 0
        %2420 = vmatpush1.bf16.msra.mxu0 %v2362
        %2421 = vmatprep.subr.bf16.mxu0 0
        %2422 = vmatpush2.bf16.msra.mxu0 0
        %2423 = vmatprep.subr.bf16.mxu0 0
        %2424 = vmatpush2.bf16.msra.mxu0 0
        %2425 = vmatprep.subr.bf16.mxu0 0
        %2426 = vmatpush2.bf16.msra.mxu0 0
        %2427 = vmatprep.subr.bf16.mxu0 0
        %2428 = vmatpush2.bf16.msra.mxu0 0
        %2429 = vmatprep.subr.bf16.mxu0 0
        %2430 = vmatpush2.bf16.msra.mxu0 0
        %2431 = vmatprep.subr.bf16.mxu0 0
        %2432 = vmatpush2.bf16.msra.mxu0 0
        %2433 = vmatprep.subr.bf16.mxu0 0
        %2434 = vmatpush2.bf16.msra.mxu0 0
        %2435 = vmatprep.subr.bf16.mxu0 0
        %2436 = vmatpush2.bf16.msra.mxu0 0
        %2437 = vmatprep.mubr.bf16.mxu0 0
        %2438 = vmatmul.mubr.bf16.gmra.mxu0 %v360
        %v2439 = vpop.f32.mrf.mxu0
        %v2440 = vadd.f32 0.0, %v2439
        %v2441 = vpop.f32.mrf.mxu0
        %v2442 = vpop.f32.mrf.mxu0
        %v2443 = vpop.f32.mrf.mxu0
        %2444 = vdwg.mxu0
        %v2446 = vsel %vm362, %v2341, 0
        %v2449 = vsel %vm362, %v2342, 0
        %v2452 = vsel %vm362, %v2343, 0
        %2454 = vmatprep.subr.bf16.mxu0 0
        %2455 = vmatpush1.bf16.msra.mxu0 0
        %2456 = vmatprep.subr.bf16.mxu0 0
        %2457 = vmatpush1.bf16.msra.mxu0 0
        %2458 = vmatprep.subr.bf16.mxu0 0
        %2459 = vmatpush1.bf16.msra.mxu0 0
        %2460 = vmatprep.subr.bf16.mxu0 0
        %2461 = vmatpush1.bf16.msra.mxu0 0
        %2462 = vmatprep.subr.bf16.mxu0 0
        %2463 = vmatpush1.bf16.msra.mxu0 0
        %2464 = vmatprep.subr.bf16.mxu0 0
        %2465 = vmatpush1.bf16.msra.mxu0 0
        %2466 = vmatprep.subr.bf16.mxu0 0
        %2467 = vmatpush1.bf16.msra.mxu0 0
        %2468 = vmatprep.subr.bf16.mxu0 %v2449
        %2469 = vmatpush1.bf16.msra.mxu0 %v2446
        %2470 = vmatprep.subr.bf16.mxu0 0
        %2471 = vmatpush2.bf16.msra.mxu0 0
        %2472 = vmatprep.subr.bf16.mxu0 0
        %2473 = vmatpush2.bf16.msra.mxu0 0
        %2474 = vmatprep.subr.bf16.mxu0 0
        %2475 = vmatpush2.bf16.msra.mxu0 0
        %2476 = vmatprep.subr.bf16.mxu0 0
        %2477 = vmatpush2.bf16.msra.mxu0 0
        %2478 = vmatprep.subr.bf16.mxu0 0
        %2479 = vmatpush2.bf16.msra.mxu0 0
        %2480 = vmatprep.subr.bf16.mxu0 0
        %2481 = vmatpush2.bf16.msra.mxu0 0
        %2482 = vmatprep.subr.bf16.mxu0 0
        %2483 = vmatpush2.bf16.msra.mxu0 0
        %2484 = vmatprep.subr.bf16.mxu0 0
        %2485 = vmatpush2.bf16.msra.mxu0 0
        %2486 = vmatprep.mubr.bf16.mxu0 0
        %2487 = vmatmul.mubr.bf16.gmra.mxu0 %v454
        %v2488 = vpop.f32.mrf.mxu0
        %v2489 = vadd.f32 %v2399, %v2488
        %v2490 = vpop.f32.mrf.mxu0
        %v2491 = vadd.f32 %v2401, %v2490
        %v2492 = vpop.f32.mrf.mxu0
        %v2493 = vpop.f32.mrf.mxu0
        %2494 = vdwg.mxu0
        %2495 = vmatprep.subr.bf16.mxu0 0
        %2496 = vmatpush1.bf16.msra.mxu0 0
        %2497 = vmatprep.subr.bf16.mxu0 0
        %2498 = vmatpush1.bf16.msra.mxu0 0
        %2499 = vmatprep.subr.bf16.mxu0 0
        %2500 = vmatpush1.bf16.msra.mxu0 0
        %2501 = vmatprep.subr.bf16.mxu0 0
        %2502 = vmatpush1.bf16.msra.mxu0 0
        %2503 = vmatprep.subr.bf16.mxu0 0
        %2504 = vmatpush1.bf16.msra.mxu0 0
        %2505 = vmatprep.subr.bf16.mxu0 0
        %2506 = vmatpush1.bf16.msra.mxu0 0
        %2507 = vmatprep.subr.bf16.mxu0 0
        %2508 = vmatpush1.bf16.msra.mxu0 0
        %2509 = vmatprep.subr.bf16.mxu0 0
        %2510 = vmatpush1.bf16.msra.mxu0 %v2452
        %2511 = vmatprep.subr.bf16.mxu0 0
        %2512 = vmatpush2.bf16.msra.mxu0 0
        %2513 = vmatprep.subr.bf16.mxu0 0
        %2514 = vmatpush2.bf16.msra.mxu0 0
        %2515 = vmatprep.subr.bf16.mxu0 0
        %2516 = vmatpush2.bf16.msra.mxu0 0
        %2517 = vmatprep.subr.bf16.mxu0 0
        %2518 = vmatpush2.bf16.msra.mxu0 0
        %2519 = vmatprep.subr.bf16.mxu0 0
        %2520 = vmatpush2.bf16.msra.mxu0 0
        %2521 = vmatprep.subr.bf16.mxu0 0
        %2522 = vmatpush2.bf16.msra.mxu0 0
        %2523 = vmatprep.subr.bf16.mxu0 0
        %2524 = vmatpush2.bf16.msra.mxu0 0
        %2525 = vmatprep.subr.bf16.mxu0 0
        %2526 = vmatpush2.bf16.msra.mxu0 0
        %2527 = vmatprep.mubr.bf16.mxu0 0
        %2528 = vmatmul.mubr.bf16.gmra.mxu0 %v454
        %v2529 = vpop.f32.mrf.mxu0
        %v2530 = vadd.f32 %v2440, %v2529
        %v2531 = vpop.f32.mrf.mxu0
        %v2532 = vpop.f32.mrf.mxu0
        %v2533 = vpop.f32.mrf.mxu0
        %2534 = vdwg.mxu0
        %2535 = vrot.lane.b32.xlu0 %v2341, 126
        %v2536 = vpop.permute.xlu0 %2535
        %2537 = vrot.lane.b32.xlu0 %v2342, 126
        %v2538 = vpop.permute.xlu0 %2537
        %2539 = vrot.lane.b32.xlu0 %v2343, 126
        %v2540 = vpop.permute.xlu0 %2539
        %v2541 = vsel %vm552, %v2536, %v2538
        %v2542 = vsel %vm552, %v2538, %v2540
        %v2544 = vsel %vm362, %v2541, 0
        %v2547 = vsel %vm362, %v2542, 0
        %v2550 = vsel %vm362, %v2540, 0
        %2552 = vmatprep.subr.bf16.mxu0 0
        %2553 = vmatpush1.bf16.msra.mxu0 0
        %2554 = vmatprep.subr.bf16.mxu0 0
        %2555 = vmatpush1.bf16.msra.mxu0 0
        %2556 = vmatprep.subr.bf16.mxu0 0
        %2557 = vmatpush1.bf16.msra.mxu0 0
        %2558 = vmatprep.subr.bf16.mxu0 0
        %2559 = vmatpush1.bf16.msra.mxu0 0
        %2560 = vmatprep.subr.bf16.mxu0 0
        %2561 = vmatpush1.bf16.msra.mxu0 0
        %2562 = vmatprep.subr.bf16.mxu0 0
        %2563 = vmatpush1.bf16.msra.mxu0 0
        %2564 = vmatprep.subr.bf16.mxu0 0
        %2565 = vmatpush1.bf16.msra.mxu0 0
        %2566 = vmatprep.subr.bf16.mxu0 %v2547
        %2567 = vmatpush1.bf16.msra.mxu0 %v2544
        %2568 = vmatprep.subr.bf16.mxu0 0
        %2569 = vmatpush2.bf16.msra.mxu0 0
        %2570 = vmatprep.subr.bf16.mxu0 0
        %2571 = vmatpush2.bf16.msra.mxu0 0
        %2572 = vmatprep.subr.bf16.mxu0 0
        %2573 = vmatpush2.bf16.msra.mxu0 0
        %2574 = vmatprep.subr.bf16.mxu0 0
        %2575 = vmatpush2.bf16.msra.mxu0 0
        %2576 = vmatprep.subr.bf16.mxu0 0
        %2577 = vmatpush2.bf16.msra.mxu0 0
        %2578 = vmatprep.subr.bf16.mxu0 0
        %2579 = vmatpush2.bf16.msra.mxu0 0
        %2580 = vmatprep.subr.bf16.mxu0 0
        %2581 = vmatpush2.bf16.msra.mxu0 0
        %2582 = vmatprep.subr.bf16.mxu0 0
        %2583 = vmatpush2.bf16.msra.mxu0 0
        %2584 = vmatprep.mubr.bf16.mxu0 0
        %2585 = vmatmul.mubr.bf16.gmra.mxu0 %v556
        %v2586 = vpop.f32.mrf.mxu0
        %v2587 = vadd.f32 0.0, %v2586
        %v2588 = vpop.f32.mrf.mxu0
        %v2589 = vadd.f32 0.0, %v2588
        %v2590 = vpop.f32.mrf.mxu0
        %v2591 = vpop.f32.mrf.mxu0
        %2592 = vdwg.mxu0
        %2593 = vmatprep.subr.bf16.mxu0 0
        %2594 = vmatpush1.bf16.msra.mxu0 0
        %2595 = vmatprep.subr.bf16.mxu0 0
        %2596 = vmatpush1.bf16.msra.mxu0 0
        %2597 = vmatprep.subr.bf16.mxu0 0
        %2598 = vmatpush1.bf16.msra.mxu0 0
        %2599 = vmatprep.subr.bf16.mxu0 0
        %2600 = vmatpush1.bf16.msra.mxu0 0
        %2601 = vmatprep.subr.bf16.mxu0 0
        %2602 = vmatpush1.bf16.msra.mxu0 0
        %2603 = vmatprep.subr.bf16.mxu0 0
        %2604 = vmatpush1.bf16.msra.mxu0 0
        %2605 = vmatprep.subr.bf16.mxu0 0
        %2606 = vmatpush1.bf16.msra.mxu0 0
        %2607 = vmatprep.subr.bf16.mxu0 0
        %2608 = vmatpush1.bf16.msra.mxu0 %v2550
        %2609 = vmatprep.subr.bf16.mxu0 0
        %2610 = vmatpush2.bf16.msra.mxu0 0
        %2611 = vmatprep.subr.bf16.mxu0 0
        %2612 = vmatpush2.bf16.msra.mxu0 0
        %2613 = vmatprep.subr.bf16.mxu0 0
        %2614 = vmatpush2.bf16.msra.mxu0 0
        %2615 = vmatprep.subr.bf16.mxu0 0
        %2616 = vmatpush2.bf16.msra.mxu0 0
        %2617 = vmatprep.subr.bf16.mxu0 0
        %2618 = vmatpush2.bf16.msra.mxu0 0
        %2619 = vmatprep.subr.bf16.mxu0 0
        %2620 = vmatpush2.bf16.msra.mxu0 0
        %2621 = vmatprep.subr.bf16.mxu0 0
        %2622 = vmatpush2.bf16.msra.mxu0 0
        %2623 = vmatprep.subr.bf16.mxu0 0
        %2624 = vmatpush2.bf16.msra.mxu0 0
        %2625 = vmatprep.mubr.bf16.mxu0 0
        %2626 = vmatmul.mubr.bf16.gmra.mxu0 %v556
        %v2627 = vpop.f32.mrf.mxu0
        %v2628 = vadd.f32 0.0, %v2627
        %v2629 = vpop.f32.mrf.mxu0
        %v2630 = vpop.f32.mrf.mxu0
        %v2631 = vpop.f32.mrf.mxu0
        %2632 = vdwg.mxu0
        %v2633 = vadd.f32 %v2489, %v2587
        %v2634 = vadd.f32 %v2491, %v2589
        %v2635 = vadd.f32 %v2530, %v2628
        %2636 = vrot.lane.b32.xlu0 %v2341, 110
        %v2637 = vpop.permute.xlu0 %2636
        %2638 = vrot.lane.b32.xlu0 %v2342, 110
        %v2639 = vpop.permute.xlu0 %2638
        %2640 = vrot.lane.b32.xlu0 %v2343, 110
        %v2641 = vpop.permute.xlu0 %2640
        %v2642 = vsel %vm657, %v2637, %v2639
        %v2643 = vsel %vm657, %v2639, %v2641
        %v2645 = vsel %vm362, %v2642, 0
        %v2648 = vsel %vm362, %v2643, 0
        %v2651 = vsel %vm362, %v2641, 0
        %2653 = vmatprep.subr.bf16.mxu0 0
        %2654 = vmatpush1.bf16.msra.mxu0 0
        %2655 = vmatprep.subr.bf16.mxu0 0
        %2656 = vmatpush1.bf16.msra.mxu0 0
        %2657 = vmatprep.subr.bf16.mxu0 0
        %2658 = vmatpush1.bf16.msra.mxu0 0
        %2659 = vmatprep.subr.bf16.mxu0 0
        %2660 = vmatpush1.bf16.msra.mxu0 0
        %2661 = vmatprep.subr.bf16.mxu0 0
        %2662 = vmatpush1.bf16.msra.mxu0 0
        %2663 = vmatprep.subr.bf16.mxu0 0
        %2664 = vmatpush1.bf16.msra.mxu0 0
        %2665 = vmatprep.subr.bf16.mxu0 0
        %2666 = vmatpush1.bf16.msra.mxu0 0
        %2667 = vmatprep.subr.bf16.mxu0 %v2648
        %2668 = vmatpush1.bf16.msra.mxu0 %v2645
        %2669 = vmatprep.subr.bf16.mxu0 0
        %2670 = vmatpush2.bf16.msra.mxu0 0
        %2671 = vmatprep.subr.bf16.mxu0 0
        %2672 = vmatpush2.bf16.msra.mxu0 0
        %2673 = vmatprep.subr.bf16.mxu0 0
        %2674 = vmatpush2.bf16.msra.mxu0 0
        %2675 = vmatprep.subr.bf16.mxu0 0
        %2676 = vmatpush2.bf16.msra.mxu0 0
        %2677 = vmatprep.subr.bf16.mxu0 0
        %2678 = vmatpush2.bf16.msra.mxu0 0
        %2679 = vmatprep.subr.bf16.mxu0 0
        %2680 = vmatpush2.bf16.msra.mxu0 0
        %2681 = vmatprep.subr.bf16.mxu0 0
        %2682 = vmatpush2.bf16.msra.mxu0 0
        %2683 = vmatprep.subr.bf16.mxu0 0
        %2684 = vmatpush2.bf16.msra.mxu0 0
        %2685 = vmatprep.mubr.bf16.mxu0 0
        %2686 = vmatmul.mubr.bf16.gmra.mxu0 %v661
        %v2687 = vpop.f32.mrf.mxu0
        %v2688 = vadd.f32 0.0, %v2687
        %v2689 = vpop.f32.mrf.mxu0
        %v2690 = vadd.f32 0.0, %v2689
        %v2691 = vpop.f32.mrf.mxu0
        %v2692 = vpop.f32.mrf.mxu0
        %2693 = vdwg.mxu0
        %2694 = vmatprep.subr.bf16.mxu0 0
        %2695 = vmatpush1.bf16.msra.mxu0 0
        %2696 = vmatprep.subr.bf16.mxu0 0
        %2697 = vmatpush1.bf16.msra.mxu0 0
        %2698 = vmatprep.subr.bf16.mxu0 0
        %2699 = vmatpush1.bf16.msra.mxu0 0
        %2700 = vmatprep.subr.bf16.mxu0 0
        %2701 = vmatpush1.bf16.msra.mxu0 0
        %2702 = vmatprep.subr.bf16.mxu0 0
        %2703 = vmatpush1.bf16.msra.mxu0 0
        %2704 = vmatprep.subr.bf16.mxu0 0
        %2705 = vmatpush1.bf16.msra.mxu0 0
        %2706 = vmatprep.subr.bf16.mxu0 0
        %2707 = vmatpush1.bf16.msra.mxu0 0
        %2708 = vmatprep.subr.bf16.mxu0 0
        %2709 = vmatpush1.bf16.msra.mxu0 %v2651
        %2710 = vmatprep.subr.bf16.mxu0 0
        %2711 = vmatpush2.bf16.msra.mxu0 0
        %2712 = vmatprep.subr.bf16.mxu0 0
        %2713 = vmatpush2.bf16.msra.mxu0 0
        %2714 = vmatprep.subr.bf16.mxu0 0
        %2715 = vmatpush2.bf16.msra.mxu0 0
        %2716 = vmatprep.subr.bf16.mxu0 0
        %2717 = vmatpush2.bf16.msra.mxu0 0
        %2718 = vmatprep.subr.bf16.mxu0 0
        %2719 = vmatpush2.bf16.msra.mxu0 0
        %2720 = vmatprep.subr.bf16.mxu0 0
        %2721 = vmatpush2.bf16.msra.mxu0 0
        %2722 = vmatprep.subr.bf16.mxu0 0
        %2723 = vmatpush2.bf16.msra.mxu0 0
        %2724 = vmatprep.subr.bf16.mxu0 0
        %2725 = vmatpush2.bf16.msra.mxu0 0
        %2726 = vmatprep.mubr.bf16.mxu0 0
        %2727 = vmatmul.mubr.bf16.gmra.mxu0 %v661
        %v2728 = vpop.f32.mrf.mxu0
        %v2729 = vadd.f32 0.0, %v2728
        %v2730 = vpop.f32.mrf.mxu0
        %v2731 = vpop.f32.mrf.mxu0
        %v2732 = vpop.f32.mrf.mxu0
        %2733 = vdwg.mxu0
        %v2734 = vadd.f32 %v2633, %v2688
        %v2735 = vadd.f32 %v2634, %v2690
        %v2736 = vadd.f32 %v2635, %v2729
        %2737 = vrot.lane.b32.xlu0 %v2341, 109
        %v2738 = vpop.permute.xlu0 %2737
        %2739 = vrot.lane.b32.xlu0 %v2342, 109
        %v2740 = vpop.permute.xlu0 %2739
        %2741 = vrot.lane.b32.xlu0 %v2343, 109
        %v2742 = vpop.permute.xlu0 %2741
        %v2743 = vsel %vm762, %v2738, %v2740
        %v2744 = vsel %vm762, %v2740, %v2742
        %v2746 = vsel %vm362, %v2743, 0
        %v2749 = vsel %vm362, %v2744, 0
        %v2752 = vsel %vm362, %v2742, 0
        %2754 = vmatprep.subr.bf16.mxu0 0
        %2755 = vmatpush1.bf16.msra.mxu0 0
        %2756 = vmatprep.subr.bf16.mxu0 0
        %2757 = vmatpush1.bf16.msra.mxu0 0
        %2758 = vmatprep.subr.bf16.mxu0 0
        %2759 = vmatpush1.bf16.msra.mxu0 0
        %2760 = vmatprep.subr.bf16.mxu0 0
        %2761 = vmatpush1.bf16.msra.mxu0 0
        %2762 = vmatprep.subr.bf16.mxu0 0
        %2763 = vmatpush1.bf16.msra.mxu0 0
        %2764 = vmatprep.subr.bf16.mxu0 0
        %2765 = vmatpush1.bf16.msra.mxu0 0
        %2766 = vmatprep.subr.bf16.mxu0 0
        %2767 = vmatpush1.bf16.msra.mxu0 0
        %2768 = vmatprep.subr.bf16.mxu0 %v2749
        %2769 = vmatpush1.bf16.msra.mxu0 %v2746
        %2770 = vmatprep.subr.bf16.mxu0 0
        %2771 = vmatpush2.bf16.msra.mxu0 0
        %2772 = vmatprep.subr.bf16.mxu0 0
        %2773 = vmatpush2.bf16.msra.mxu0 0
        %2774 = vmatprep.subr.bf16.mxu0 0
        %2775 = vmatpush2.bf16.msra.mxu0 0
        %2776 = vmatprep.subr.bf16.mxu0 0
        %2777 = vmatpush2.bf16.msra.mxu0 0
        %2778 = vmatprep.subr.bf16.mxu0 0
        %2779 = vmatpush2.bf16.msra.mxu0 0
        %2780 = vmatprep.subr.bf16.mxu0 0
        %2781 = vmatpush2.bf16.msra.mxu0 0
        %2782 = vmatprep.subr.bf16.mxu0 0
        %2783 = vmatpush2.bf16.msra.mxu0 0
        %2784 = vmatprep.subr.bf16.mxu0 0
        %2785 = vmatpush2.bf16.msra.mxu0 0
        %2786 = vmatprep.mubr.bf16.mxu0 0
        %2787 = vmatmul.mubr.bf16.gmra.mxu0 %v766
        %v2788 = vpop.f32.mrf.mxu0
        %v2789 = vadd.f32 0.0, %v2788
        %v2790 = vpop.f32.mrf.mxu0
        %v2791 = vadd.f32 0.0, %v2790
        %v2792 = vpop.f32.mrf.mxu0
        %v2793 = vpop.f32.mrf.mxu0
        %2794 = vdwg.mxu0
        %2795 = vmatprep.subr.bf16.mxu0 0
        %2796 = vmatpush1.bf16.msra.mxu0 0
        %2797 = vmatprep.subr.bf16.mxu0 0
        %2798 = vmatpush1.bf16.msra.mxu0 0
        %2799 = vmatprep.subr.bf16.mxu0 0
        %2800 = vmatpush1.bf16.msra.mxu0 0
        %2801 = vmatprep.subr.bf16.mxu0 0
        %2802 = vmatpush1.bf16.msra.mxu0 0
        %2803 = vmatprep.subr.bf16.mxu0 0
        %2804 = vmatpush1.bf16.msra.mxu0 0
        %2805 = vmatprep.subr.bf16.mxu0 0
        %2806 = vmatpush1.bf16.msra.mxu0 0
        %2807 = vmatprep.subr.bf16.mxu0 0
        %2808 = vmatpush1.bf16.msra.mxu0 0
        %2809 = vmatprep.subr.bf16.mxu0 0
        %2810 = vmatpush1.bf16.msra.mxu0 %v2752
        %2811 = vmatprep.subr.bf16.mxu0 0
        %2812 = vmatpush2.bf16.msra.mxu0 0
        %2813 = vmatprep.subr.bf16.mxu0 0
        %2814 = vmatpush2.bf16.msra.mxu0 0
        %2815 = vmatprep.subr.bf16.mxu0 0
        %2816 = vmatpush2.bf16.msra.mxu0 0
        %2817 = vmatprep.subr.bf16.mxu0 0
        %2818 = vmatpush2.bf16.msra.mxu0 0
        %2819 = vmatprep.subr.bf16.mxu0 0
        %2820 = vmatpush2.bf16.msra.mxu0 0
        %2821 = vmatprep.subr.bf16.mxu0 0
        %2822 = vmatpush2.bf16.msra.mxu0 0
        %2823 = vmatprep.subr.bf16.mxu0 0
        %2824 = vmatpush2.bf16.msra.mxu0 0
        %2825 = vmatprep.subr.bf16.mxu0 0
        %2826 = vmatpush2.bf16.msra.mxu0 0
        %2827 = vmatprep.mubr.bf16.mxu0 0
        %2828 = vmatmul.mubr.bf16.gmra.mxu0 %v766
        %v2829 = vpop.f32.mrf.mxu0
        %v2830 = vadd.f32 0.0, %v2829
        %v2831 = vpop.f32.mrf.mxu0
        %v2832 = vpop.f32.mrf.mxu0
        %v2833 = vpop.f32.mrf.mxu0
        %2834 = vdwg.mxu0
        %v2835 = vadd.f32 %v2734, %v2789
        %v2836 = vadd.f32 %v2735, %v2791
        %v2837 = vadd.f32 %v2736, %v2830
        %2838 = vrot.lane.b32.xlu0 %v2341, 108
        %v2839 = vpop.permute.xlu0 %2838
        %2840 = vrot.lane.b32.xlu0 %v2342, 108
        %v2841 = vpop.permute.xlu0 %2840
        %2842 = vrot.lane.b32.xlu0 %v2343, 108
        %v2843 = vpop.permute.xlu0 %2842
        %v2844 = vsel %vm867, %v2839, %v2841
        %v2845 = vsel %vm867, %v2841, %v2843
        %v2847 = vsel %vm362, %v2844, 0
        %v2850 = vsel %vm362, %v2845, 0
        %v2853 = vsel %vm362, %v2843, 0
        %2855 = vmatprep.subr.bf16.mxu0 0
        %2856 = vmatpush1.bf16.msra.mxu0 0
        %2857 = vmatprep.subr.bf16.mxu0 0
        %2858 = vmatpush1.bf16.msra.mxu0 0
        %2859 = vmatprep.subr.bf16.mxu0 0
        %2860 = vmatpush1.bf16.msra.mxu0 0
        %2861 = vmatprep.subr.bf16.mxu0 0
        %2862 = vmatpush1.bf16.msra.mxu0 0
        %2863 = vmatprep.subr.bf16.mxu0 0
        %2864 = vmatpush1.bf16.msra.mxu0 0
        %2865 = vmatprep.subr.bf16.mxu0 0
        %2866 = vmatpush1.bf16.msra.mxu0 0
        %2867 = vmatprep.subr.bf16.mxu0 0
        %2868 = vmatpush1.bf16.msra.mxu0 0
        %2869 = vmatprep.subr.bf16.mxu0 %v2850
        %2870 = vmatpush1.bf16.msra.mxu0 %v2847
        %2871 = vmatprep.subr.bf16.mxu0 0
        %2872 = vmatpush2.bf16.msra.mxu0 0
        %2873 = vmatprep.subr.bf16.mxu0 0
        %2874 = vmatpush2.bf16.msra.mxu0 0
        %2875 = vmatprep.subr.bf16.mxu0 0
        %2876 = vmatpush2.bf16.msra.mxu0 0
        %2877 = vmatprep.subr.bf16.mxu0 0
        %2878 = vmatpush2.bf16.msra.mxu0 0
        %2879 = vmatprep.subr.bf16.mxu0 0
        %2880 = vmatpush2.bf16.msra.mxu0 0
        %2881 = vmatprep.subr.bf16.mxu0 0
        %2882 = vmatpush2.bf16.msra.mxu0 0
        %2883 = vmatprep.subr.bf16.mxu0 0
        %2884 = vmatpush2.bf16.msra.mxu0 0
        %2885 = vmatprep.subr.bf16.mxu0 0
        %2886 = vmatpush2.bf16.msra.mxu0 0
        %2887 = vmatprep.mubr.bf16.mxu0 0
        %2888 = vmatmul.mubr.bf16.gmra.mxu0 %v871
        %v2889 = vpop.f32.mrf.mxu0
        %v2890 = vadd.f32 0.0, %v2889
        %v2891 = vpop.f32.mrf.mxu0
        %v2892 = vadd.f32 0.0, %v2891
        %v2893 = vpop.f32.mrf.mxu0
        %v2894 = vpop.f32.mrf.mxu0
        %2895 = vdwg.mxu0
        %2896 = vmatprep.subr.bf16.mxu0 0
        %2897 = vmatpush1.bf16.msra.mxu0 0
        %2898 = vmatprep.subr.bf16.mxu0 0
        %2899 = vmatpush1.bf16.msra.mxu0 0
        %2900 = vmatprep.subr.bf16.mxu0 0
        %2901 = vmatpush1.bf16.msra.mxu0 0
        %2902 = vmatprep.subr.bf16.mxu0 0
        %2903 = vmatpush1.bf16.msra.mxu0 0
        %2904 = vmatprep.subr.bf16.mxu0 0
        %2905 = vmatpush1.bf16.msra.mxu0 0
        %2906 = vmatprep.subr.bf16.mxu0 0
        %2907 = vmatpush1.bf16.msra.mxu0 0
        %2908 = vmatprep.subr.bf16.mxu0 0
        %2909 = vmatpush1.bf16.msra.mxu0 0
        %2910 = vmatprep.subr.bf16.mxu0 0
        %2911 = vmatpush1.bf16.msra.mxu0 %v2853
        %2912 = vmatprep.subr.bf16.mxu0 0
        %2913 = vmatpush2.bf16.msra.mxu0 0
        %2914 = vmatprep.subr.bf16.mxu0 0
        %2915 = vmatpush2.bf16.msra.mxu0 0
        %2916 = vmatprep.subr.bf16.mxu0 0
        %2917 = vmatpush2.bf16.msra.mxu0 0
        %2918 = vmatprep.subr.bf16.mxu0 0
        %2919 = vmatpush2.bf16.msra.mxu0 0
        %2920 = vmatprep.subr.bf16.mxu0 0
        %2921 = vmatpush2.bf16.msra.mxu0 0
        %2922 = vmatprep.subr.bf16.mxu0 0
        %2923 = vmatpush2.bf16.msra.mxu0 0
        %2924 = vmatprep.subr.bf16.mxu0 0
        %2925 = vmatpush2.bf16.msra.mxu0 0
        %2926 = vmatprep.subr.bf16.mxu0 0
        %2927 = vmatpush2.bf16.msra.mxu0 0
        %2928 = vmatprep.mubr.bf16.mxu0 0
        %2929 = vmatmul.mubr.bf16.gmra.mxu0 %v871
        %v2930 = vpop.f32.mrf.mxu0
        %v2931 = vadd.f32 0.0, %v2930
        %v2932 = vpop.f32.mrf.mxu0
        %v2933 = vpop.f32.mrf.mxu0
        %v2934 = vpop.f32.mrf.mxu0
        %2935 = vdwg.mxu0
        %v2936 = vadd.f32 %v2835, %v2890
        %v2937 = vadd.f32 %v2836, %v2892
        %v2938 = vadd.f32 %v2837, %v2931
        %2939 = vrot.lane.b32.xlu0 %v2341, 92
        %v2940 = vpop.permute.xlu0 %2939
        %2941 = vrot.lane.b32.xlu0 %v2342, 92
        %v2942 = vpop.permute.xlu0 %2941
        %2943 = vrot.lane.b32.xlu0 %v2343, 92
        %v2944 = vpop.permute.xlu0 %2943
        %v2945 = vsel %vm972, %v2940, %v2942
        %v2946 = vsel %vm972, %v2942, %v2944
        %v2948 = vsel %vm362, %v2945, 0
        %v2951 = vsel %vm362, %v2946, 0
        %v2954 = vsel %vm362, %v2944, 0
        %2956 = vmatprep.subr.bf16.mxu0 0
        %2957 = vmatpush1.bf16.msra.mxu0 0
        %2958 = vmatprep.subr.bf16.mxu0 0
        %2959 = vmatpush1.bf16.msra.mxu0 0
        %2960 = vmatprep.subr.bf16.mxu0 0
        %2961 = vmatpush1.bf16.msra.mxu0 0
        %2962 = vmatprep.subr.bf16.mxu0 0
        %2963 = vmatpush1.bf16.msra.mxu0 0
        %2964 = vmatprep.subr.bf16.mxu0 0
        %2965 = vmatpush1.bf16.msra.mxu0 0
        %2966 = vmatprep.subr.bf16.mxu0 0
        %2967 = vmatpush1.bf16.msra.mxu0 0
        %2968 = vmatprep.subr.bf16.mxu0 0
        %2969 = vmatpush1.bf16.msra.mxu0 0
        %2970 = vmatprep.subr.bf16.mxu0 %v2951
        %2971 = vmatpush1.bf16.msra.mxu0 %v2948
        %2972 = vmatprep.subr.bf16.mxu0 0
        %2973 = vmatpush2.bf16.msra.mxu0 0
        %2974 = vmatprep.subr.bf16.mxu0 0
        %2975 = vmatpush2.bf16.msra.mxu0 0
        %2976 = vmatprep.subr.bf16.mxu0 0
        %2977 = vmatpush2.bf16.msra.mxu0 0
        %2978 = vmatprep.subr.bf16.mxu0 0
        %2979 = vmatpush2.bf16.msra.mxu0 0
        %2980 = vmatprep.subr.bf16.mxu0 0
        %2981 = vmatpush2.bf16.msra.mxu0 0
        %2982 = vmatprep.subr.bf16.mxu0 0
        %2983 = vmatpush2.bf16.msra.mxu0 0
        %2984 = vmatprep.subr.bf16.mxu0 0
        %2985 = vmatpush2.bf16.msra.mxu0 0
        %2986 = vmatprep.subr.bf16.mxu0 0
        %2987 = vmatpush2.bf16.msra.mxu0 0
        %2988 = vmatprep.mubr.bf16.mxu0 0
        %2989 = vmatmul.mubr.bf16.gmra.mxu0 %v976
        %v2990 = vpop.f32.mrf.mxu0
        %v2991 = vadd.f32 0.0, %v2990
        %v2992 = vpop.f32.mrf.mxu0
        %v2993 = vadd.f32 0.0, %v2992
        %v2994 = vpop.f32.mrf.mxu0
        %v2995 = vpop.f32.mrf.mxu0
        %2996 = vdwg.mxu0
        %2997 = vmatprep.subr.bf16.mxu0 0
        %2998 = vmatpush1.bf16.msra.mxu0 0
        %2999 = vmatprep.subr.bf16.mxu0 0
        %3000 = vmatpush1.bf16.msra.mxu0 0
        %3001 = vmatprep.subr.bf16.mxu0 0
        %3002 = vmatpush1.bf16.msra.mxu0 0
        %3003 = vmatprep.subr.bf16.mxu0 0
        %3004 = vmatpush1.bf16.msra.mxu0 0
        %3005 = vmatprep.subr.bf16.mxu0 0
        %3006 = vmatpush1.bf16.msra.mxu0 0
        %3007 = vmatprep.subr.bf16.mxu0 0
        %3008 = vmatpush1.bf16.msra.mxu0 0
        %3009 = vmatprep.subr.bf16.mxu0 0
        %3010 = vmatpush1.bf16.msra.mxu0 0
        %3011 = vmatprep.subr.bf16.mxu0 0
        %3012 = vmatpush1.bf16.msra.mxu0 %v2954
        %3013 = vmatprep.subr.bf16.mxu0 0
        %3014 = vmatpush2.bf16.msra.mxu0 0
        %3015 = vmatprep.subr.bf16.mxu0 0
        %3016 = vmatpush2.bf16.msra.mxu0 0
        %3017 = vmatprep.subr.bf16.mxu0 0
        %3018 = vmatpush2.bf16.msra.mxu0 0
        %3019 = vmatprep.subr.bf16.mxu0 0
        %3020 = vmatpush2.bf16.msra.mxu0 0
        %3021 = vmatprep.subr.bf16.mxu0 0
        %3022 = vmatpush2.bf16.msra.mxu0 0
        %3023 = vmatprep.subr.bf16.mxu0 0
        %3024 = vmatpush2.bf16.msra.mxu0 0
        %3025 = vmatprep.subr.bf16.mxu0 0
        %3026 = vmatpush2.bf16.msra.mxu0 0
        %3027 = vmatprep.subr.bf16.mxu0 0
        %3028 = vmatpush2.bf16.msra.mxu0 0
        %3029 = vmatprep.mubr.bf16.mxu0 0
        %3030 = vmatmul.mubr.bf16.gmra.mxu0 %v976
        %v3031 = vpop.f32.mrf.mxu0
        %v3032 = vadd.f32 0.0, %v3031
        %v3033 = vpop.f32.mrf.mxu0
        %v3034 = vpop.f32.mrf.mxu0
        %v3035 = vpop.f32.mrf.mxu0
        %3036 = vdwg.mxu0
        %v3037 = vadd.f32 %v2936, %v2991
        %v3038 = vadd.f32 %v2937, %v2993
        %v3039 = vadd.f32 %v2938, %v3032
        %3040 = vrot.lane.b32.xlu0 %v2341, 91
        %v3041 = vpop.permute.xlu0 %3040
        %3042 = vrot.lane.b32.xlu0 %v2342, 91
        %v3043 = vpop.permute.xlu0 %3042
        %3044 = vrot.lane.b32.xlu0 %v2343, 91
        %v3045 = vpop.permute.xlu0 %3044
        %v3046 = vsel %vm1077, %v3041, %v3043
        %v3047 = vsel %vm1077, %v3043, %v3045
        %v3049 = vsel %vm362, %v3046, 0
        %v3052 = vsel %vm362, %v3047, 0
        %v3055 = vsel %vm362, %v3045, 0
        %3057 = vmatprep.subr.bf16.mxu0 0
        %3058 = vmatpush1.bf16.msra.mxu0 0
        %3059 = vmatprep.subr.bf16.mxu0 0
        %3060 = vmatpush1.bf16.msra.mxu0 0
        %3061 = vmatprep.subr.bf16.mxu0 0
        %3062 = vmatpush1.bf16.msra.mxu0 0
        %3063 = vmatprep.subr.bf16.mxu0 0
        %3064 = vmatpush1.bf16.msra.mxu0 0
        %3065 = vmatprep.subr.bf16.mxu0 0
        %3066 = vmatpush1.bf16.msra.mxu0 0
        %3067 = vmatprep.subr.bf16.mxu0 0
        %3068 = vmatpush1.bf16.msra.mxu0 0
        %3069 = vmatprep.subr.bf16.mxu0 0
        %3070 = vmatpush1.bf16.msra.mxu0 0
        %3071 = vmatprep.subr.bf16.mxu0 %v3052
        %3072 = vmatpush1.bf16.msra.mxu0 %v3049
        %3073 = vmatprep.subr.bf16.mxu0 0
        %3074 = vmatpush2.bf16.msra.mxu0 0
        %3075 = vmatprep.subr.bf16.mxu0 0
        %3076 = vmatpush2.bf16.msra.mxu0 0
        %3077 = vmatprep.subr.bf16.mxu0 0
        %3078 = vmatpush2.bf16.msra.mxu0 0
        %3079 = vmatprep.subr.bf16.mxu0 0
        %3080 = vmatpush2.bf16.msra.mxu0 0
        %3081 = vmatprep.subr.bf16.mxu0 0
        %3082 = vmatpush2.bf16.msra.mxu0 0
        %3083 = vmatprep.subr.bf16.mxu0 0
        %3084 = vmatpush2.bf16.msra.mxu0 0
        %3085 = vmatprep.subr.bf16.mxu0 0
        %3086 = vmatpush2.bf16.msra.mxu0 0
        %3087 = vmatprep.subr.bf16.mxu0 0
        %3088 = vmatpush2.bf16.msra.mxu0 0
        %3089 = vmatprep.mubr.bf16.mxu0 0
        %3090 = vmatmul.mubr.bf16.gmra.mxu0 %v1081
        %v3091 = vpop.f32.mrf.mxu0
        %v3092 = vadd.f32 0.0, %v3091
        %v3093 = vpop.f32.mrf.mxu0
        %v3094 = vadd.f32 0.0, %v3093
        %v3095 = vpop.f32.mrf.mxu0
        %v3096 = vpop.f32.mrf.mxu0
        %3097 = vdwg.mxu0
        %3098 = vmatprep.subr.bf16.mxu0 0
        %3099 = vmatpush1.bf16.msra.mxu0 0
        %3100 = vmatprep.subr.bf16.mxu0 0
        %3101 = vmatpush1.bf16.msra.mxu0 0
        %3102 = vmatprep.subr.bf16.mxu0 0
        %3103 = vmatpush1.bf16.msra.mxu0 0
        %3104 = vmatprep.subr.bf16.mxu0 0
        %3105 = vmatpush1.bf16.msra.mxu0 0
        %3106 = vmatprep.subr.bf16.mxu0 0
        %3107 = vmatpush1.bf16.msra.mxu0 0
        %3108 = vmatprep.subr.bf16.mxu0 0
        %3109 = vmatpush1.bf16.msra.mxu0 0
        %3110 = vmatprep.subr.bf16.mxu0 0
        %3111 = vmatpush1.bf16.msra.mxu0 0
        %3112 = vmatprep.subr.bf16.mxu0 0
        %3113 = vmatpush1.bf16.msra.mxu0 %v3055
        %3114 = vmatprep.subr.bf16.mxu0 0
        %3115 = vmatpush2.bf16.msra.mxu0 0
        %3116 = vmatprep.subr.bf16.mxu0 0
        %3117 = vmatpush2.bf16.msra.mxu0 0
        %3118 = vmatprep.subr.bf16.mxu0 0
        %3119 = vmatpush2.bf16.msra.mxu0 0
        %3120 = vmatprep.subr.bf16.mxu0 0
        %3121 = vmatpush2.bf16.msra.mxu0 0
        %3122 = vmatprep.subr.bf16.mxu0 0
        %3123 = vmatpush2.bf16.msra.mxu0 0
        %3124 = vmatprep.subr.bf16.mxu0 0
        %3125 = vmatpush2.bf16.msra.mxu0 0
        %3126 = vmatprep.subr.bf16.mxu0 0
        %3127 = vmatpush2.bf16.msra.mxu0 0
        %3128 = vmatprep.subr.bf16.mxu0 0
        %3129 = vmatpush2.bf16.msra.mxu0 0
        %3130 = vmatprep.mubr.bf16.mxu0 0
        %3131 = vmatmul.mubr.bf16.gmra.mxu0 %v1081
        %v3132 = vpop.f32.mrf.mxu0
        %v3133 = vadd.f32 0.0, %v3132
        %v3134 = vpop.f32.mrf.mxu0
        %v3135 = vpop.f32.mrf.mxu0
        %v3136 = vpop.f32.mrf.mxu0
        %3137 = vdwg.mxu0
        %v3138 = vadd.f32 %v3037, %v3092
        %v3139 = vadd.f32 %v3038, %v3094
        %v3140 = vadd.f32 %v3039, %v3133
        %3141 = vrot.lane.b32.xlu0 %v2341, 90
        %v3142 = vpop.permute.xlu0 %3141
        %3143 = vrot.lane.b32.xlu0 %v2342, 90
        %v3144 = vpop.permute.xlu0 %3143
        %3145 = vrot.lane.b32.xlu0 %v2343, 90
        %v3146 = vpop.permute.xlu0 %3145
        %v3147 = vsel %vm1182, %v3142, %v3144
        %v3148 = vsel %vm1182, %v3144, %v3146
        %v3150 = vsel %vm362, %v3147, 0
        %v3153 = vsel %vm362, %v3148, 0
        %v3156 = vsel %vm362, %v3146, 0
        %3158 = vmatprep.subr.bf16.mxu0 0
        %3159 = vmatpush1.bf16.msra.mxu0 0
        %3160 = vmatprep.subr.bf16.mxu0 0
        %3161 = vmatpush1.bf16.msra.mxu0 0
        %3162 = vmatprep.subr.bf16.mxu0 0
        %3163 = vmatpush1.bf16.msra.mxu0 0
        %3164 = vmatprep.subr.bf16.mxu0 0
        %3165 = vmatpush1.bf16.msra.mxu0 0
        %3166 = vmatprep.subr.bf16.mxu0 0
        %3167 = vmatpush1.bf16.msra.mxu0 0
        %3168 = vmatprep.subr.bf16.mxu0 0
        %3169 = vmatpush1.bf16.msra.mxu0 0
        %3170 = vmatprep.subr.bf16.mxu0 0
        %3171 = vmatpush1.bf16.msra.mxu0 0
        %3172 = vmatprep.subr.bf16.mxu0 %v3153
        %3173 = vmatpush1.bf16.msra.mxu0 %v3150
        %3174 = vmatprep.subr.bf16.mxu0 0
        %3175 = vmatpush2.bf16.msra.mxu0 0
        %3176 = vmatprep.subr.bf16.mxu0 0
        %3177 = vmatpush2.bf16.msra.mxu0 0
        %3178 = vmatprep.subr.bf16.mxu0 0
        %3179 = vmatpush2.bf16.msra.mxu0 0
        %3180 = vmatprep.subr.bf16.mxu0 0
        %3181 = vmatpush2.bf16.msra.mxu0 0
        %3182 = vmatprep.subr.bf16.mxu0 0
        %3183 = vmatpush2.bf16.msra.mxu0 0
        %3184 = vmatprep.subr.bf16.mxu0 0
        %3185 = vmatpush2.bf16.msra.mxu0 0
        %3186 = vmatprep.subr.bf16.mxu0 0
        %3187 = vmatpush2.bf16.msra.mxu0 0
        %3188 = vmatprep.subr.bf16.mxu0 0
        %3189 = vmatpush2.bf16.msra.mxu0 0
        %3190 = vmatprep.mubr.bf16.mxu0 0
        %3191 = vmatmul.mubr.bf16.gmra.mxu0 %v1186
        %v3192 = vpop.f32.mrf.mxu0
        %v3193 = vadd.f32 0.0, %v3192
        %v3194 = vpop.f32.mrf.mxu0
        %v3195 = vadd.f32 0.0, %v3194
        %v3196 = vpop.f32.mrf.mxu0
        %v3197 = vpop.f32.mrf.mxu0
        %3198 = vdwg.mxu0
        %3199 = vmatprep.subr.bf16.mxu0 0
        %3200 = vmatpush1.bf16.msra.mxu0 0
        %3201 = vmatprep.subr.bf16.mxu0 0
        %3202 = vmatpush1.bf16.msra.mxu0 0
        %3203 = vmatprep.subr.bf16.mxu0 0
        %3204 = vmatpush1.bf16.msra.mxu0 0
        %3205 = vmatprep.subr.bf16.mxu0 0
        %3206 = vmatpush1.bf16.msra.mxu0 0
        %3207 = vmatprep.subr.bf16.mxu0 0
        %3208 = vmatpush1.bf16.msra.mxu0 0
        %3209 = vmatprep.subr.bf16.mxu0 0
        %3210 = vmatpush1.bf16.msra.mxu0 0
        %3211 = vmatprep.subr.bf16.mxu0 0
        %3212 = vmatpush1.bf16.msra.mxu0 0
        %3213 = vmatprep.subr.bf16.mxu0 0
        %3214 = vmatpush1.bf16.msra.mxu0 %v3156
        %3215 = vmatprep.subr.bf16.mxu0 0
        %3216 = vmatpush2.bf16.msra.mxu0 0
        %3217 = vmatprep.subr.bf16.mxu0 0
        %3218 = vmatpush2.bf16.msra.mxu0 0
        %3219 = vmatprep.subr.bf16.mxu0 0
        %3220 = vmatpush2.bf16.msra.mxu0 0
        %3221 = vmatprep.subr.bf16.mxu0 0
        %3222 = vmatpush2.bf16.msra.mxu0 0
        %3223 = vmatprep.subr.bf16.mxu0 0
        %3224 = vmatpush2.bf16.msra.mxu0 0
        %3225 = vmatprep.subr.bf16.mxu0 0
        %3226 = vmatpush2.bf16.msra.mxu0 0
        %3227 = vmatprep.subr.bf16.mxu0 0
        %3228 = vmatpush2.bf16.msra.mxu0 0
        %3229 = vmatprep.subr.bf16.mxu0 0
        %3230 = vmatpush2.bf16.msra.mxu0 0
        %3231 = vmatprep.mubr.bf16.mxu0 0
        %3232 = vmatmul.mubr.bf16.gmra.mxu0 %v1186
        %v3233 = vpop.f32.mrf.mxu0
        %v3234 = vadd.f32 0.0, %v3233
        %v3235 = vpop.f32.mrf.mxu0
        %v3236 = vpop.f32.mrf.mxu0
        %v3237 = vpop.f32.mrf.mxu0
        %3238 = vdwg.mxu0
        %v3239 = vadd.f32 %v3138, %v3193
        %v3240 = vadd.f32 %v3139, %v3195
        %v3241 = vadd.f32 %v3140, %v3234
        %v3242 = vadd.f32 %v3239, %v1284
        %v3243 = vadd.f32 %v3240, %v1284
        %v3244 = vadd.f32 %v3241, %v1284
        %v3245 = vsub.f32 %v3242, %v1307
        %v3246 = vsub.f32 %v3243, %v1308
        %v3247 = vsub.f32 %v3244, %v1309
        %v3248 = vmul.f32 %v3245, 0.5
        %v3249 = vmul.f32 %v3246, 0.5
        %v3250 = vmul.f32 %v3247, 0.5
        %v3251 = vadd.f32 %v1307, %v3248
        %v3252 = vadd.f32 %v1308, %v3249
        %v3253 = vadd.f32 %v1309, %v3250
        %vm3254 = vcmp.ge.f32.partialorder %v3251, 1.0
        %vm3255 = vcmp.ge.f32.partialorder %v3252, 1.0
        %vm3256 = vcmp.ge.f32.partialorder %v3253, 1.0
        %v3257 = vsel %vm3254, 1, 0
        %v3258 = vsel %vm3255, 1, 0
        %v3259 = vsel %vm3256, 1, 0
        %v3260 = vcvt.s32.f32 %v3257
        %v3261 = vcvt.s32.f32 %v3258
        %v3262 = vcvt.s32.f32 %v3259
        %v3263 = vsub.f32 1.0, %v3260
        %v3264 = vsub.f32 1.0, %v3261
        %v3265 = vsub.f32 1.0, %v3262
        %v3266 = vmul.f32 %v3251, %v3263
        %v3267 = vmul.f32 %v3252, %v3264
        %v3268 = vmul.f32 %v3253, %v3265
        %v3269 = vmul.f32 %v3260, %v1314
        %v3270 = vmul.f32 %v3261, %v1318
        %v3271 = vmul.f32 %v3262, %v1322
        %3275 = vrot.lane.b32.xlu0 %v3269, 19
        %v3276 = vpop.permute.xlu0 %3275
        %3277 = vrot.lane.b32.xlu0 %v3270, 19
        %v3278 = vpop.permute.xlu0 %3277
        %3279 = vrot.lane.b32.xlu0 %v3271, 19
        %v3280 = vpop.permute.xlu0 %3279
        %v3281 = vsel %vm1338, %v3276, %v3278
        %v3282 = vsel %vm1338, %v3278, %v3280
        %3286 = vst.msk [vmem:[#allocation2] sm:$0xff] %vm1344, %v3276
        %3287 = vst [vmem:[#allocation2 + $0x8] sm:$0xff] %v3281
        %3288 = vst.msk [vmem:[#allocation2 + $0x10] sm:$0xff] %vm1347, %v3282
        %v3289 = vld [vmem:[#allocation2] sm:$0xff]
        %v3290 = vld [vmem:[#allocation2 + $0x8] sm:$0xff]
        %v3291 = vld [vmem:[#allocation2 + $0x10] sm:$0xff]
        %v3292 = vpack.c.bf16 %v3289, %v3289
        %v3293 = vpack.c.bf16 %v3290, %v3290
        %v3294 = vpack.c.bf16 %v3291, %v3291
        %3298 = vrot.lane.b32.xlu0 %v3292, 127
        %v3299 = vpop.permute.xlu0 %3298
        %3300 = vrot.lane.b32.xlu0 %v3293, 127
        %v3301 = vpop.permute.xlu0 %3300
        %3302 = vrot.lane.b32.xlu0 %v3294, 127
        %v3303 = vpop.permute.xlu0 %3302
        %v3304 = vsel %vm355, %v3299, %v3301
        %v3305 = vsel %vm355, %v3301, %v3303
        %v3307 = vsel %vm1370, %v3304, 0
        %v3310 = vsel %vm1370, %v3305, 0
        %v3313 = vsel %vm1370, %v3303, 0
        %3315 = vmatprep.subr.bf16.mxu0 0
        %3316 = vmatpush1.bf16.msra.mxu0 0
        %3317 = vmatprep.subr.bf16.mxu0 0
        %3318 = vmatpush1.bf16.msra.mxu0 0
        %3319 = vmatprep.subr.bf16.mxu0 0
        %3320 = vmatpush1.bf16.msra.mxu0 0
        %3321 = vmatprep.subr.bf16.mxu0 0
        %3322 = vmatpush1.bf16.msra.mxu0 0
        %3323 = vmatprep.subr.bf16.mxu0 0
        %3324 = vmatpush1.bf16.msra.mxu0 0
        %3325 = vmatprep.subr.bf16.mxu0 0
        %3326 = vmatpush1.bf16.msra.mxu0 0
        %3327 = vmatprep.subr.bf16.mxu0 0
        %3328 = vmatpush1.bf16.msra.mxu0 0
        %3329 = vmatprep.subr.bf16.mxu0 %v3310
        %3330 = vmatpush1.bf16.msra.mxu0 %v3307
        %3331 = vmatprep.subr.bf16.mxu0 0
        %3332 = vmatpush2.bf16.msra.mxu0 0
        %3333 = vmatprep.subr.bf16.mxu0 0
        %3334 = vmatpush2.bf16.msra.mxu0 0
        %3335 = vmatprep.subr.bf16.mxu0 0
        %3336 = vmatpush2.bf16.msra.mxu0 0
        %3337 = vmatprep.subr.bf16.mxu0 0
        %3338 = vmatpush2.bf16.msra.mxu0 0
        %3339 = vmatprep.subr.bf16.mxu0 0
        %3340 = vmatpush2.bf16.msra.mxu0 0
        %3341 = vmatprep.subr.bf16.mxu0 0
        %3342 = vmatpush2.bf16.msra.mxu0 0
        %3343 = vmatprep.subr.bf16.mxu0 0
        %3344 = vmatpush2.bf16.msra.mxu0 0
        %3345 = vmatprep.subr.bf16.mxu0 0
        %3346 = vmatpush2.bf16.msra.mxu0 0
        %3347 = vmatprep.mubr.bf16.mxu0 0
        %3348 = vmatmul.mubr.bf16.gmra.mxu0 %v1368
        %v3349 = vpop.f32.mrf.mxu0
        %v3350 = vadd.f32 0.0, %v3349
        %v3351 = vpop.f32.mrf.mxu0
        %v3352 = vadd.f32 0.0, %v3351
        %v3353 = vpop.f32.mrf.mxu0
        %v3354 = vpop.f32.mrf.mxu0
        %3355 = vdwg.mxu0
        %3356 = vmatprep.subr.bf16.mxu0 0
        %3357 = vmatpush1.bf16.msra.mxu0 0
        %3358 = vmatprep.subr.bf16.mxu0 0
        %3359 = vmatpush1.bf16.msra.mxu0 0
        %3360 = vmatprep.subr.bf16.mxu0 0
        %3361 = vmatpush1.bf16.msra.mxu0 0
        %3362 = vmatprep.subr.bf16.mxu0 0
        %3363 = vmatpush1.bf16.msra.mxu0 0
        %3364 = vmatprep.subr.bf16.mxu0 0
        %3365 = vmatpush1.bf16.msra.mxu0 0
        %3366 = vmatprep.subr.bf16.mxu0 0
        %3367 = vmatpush1.bf16.msra.mxu0 0
        %3368 = vmatprep.subr.bf16.mxu0 0
        %3369 = vmatpush1.bf16.msra.mxu0 0
        %3370 = vmatprep.subr.bf16.mxu0 0
        %3371 = vmatpush1.bf16.msra.mxu0 %v3313
        %3372 = vmatprep.subr.bf16.mxu0 0
        %3373 = vmatpush2.bf16.msra.mxu0 0
        %3374 = vmatprep.subr.bf16.mxu0 0
        %3375 = vmatpush2.bf16.msra.mxu0 0
        %3376 = vmatprep.subr.bf16.mxu0 0
        %3377 = vmatpush2.bf16.msra.mxu0 0
        %3378 = vmatprep.subr.bf16.mxu0 0
        %3379 = vmatpush2.bf16.msra.mxu0 0
        %3380 = vmatprep.subr.bf16.mxu0 0
        %3381 = vmatpush2.bf16.msra.mxu0 0
        %3382 = vmatprep.subr.bf16.mxu0 0
        %3383 = vmatpush2.bf16.msra.mxu0 0
        %3384 = vmatprep.subr.bf16.mxu0 0
        %3385 = vmatpush2.bf16.msra.mxu0 0
        %3386 = vmatprep.subr.bf16.mxu0 0
        %3387 = vmatpush2.bf16.msra.mxu0 0
        %3388 = vmatprep.mubr.bf16.mxu0 0
        %3389 = vmatmul.mubr.bf16.gmra.mxu0 %v1368
        %v3390 = vpop.f32.mrf.mxu0
        %v3391 = vadd.f32 0.0, %v3390
        %v3392 = vpop.f32.mrf.mxu0
        %v3393 = vpop.f32.mrf.mxu0
        %v3394 = vpop.f32.mrf.mxu0
        %3395 = vdwg.mxu0
        %v3397 = vsel %vm1370, %v3292, 0
        %v3400 = vsel %vm1370, %v3293, 0
        %v3403 = vsel %vm1370, %v3294, 0
        %3405 = vmatprep.subr.bf16.mxu0 0
        %3406 = vmatpush1.bf16.msra.mxu0 0
        %3407 = vmatprep.subr.bf16.mxu0 0
        %3408 = vmatpush1.bf16.msra.mxu0 0
        %3409 = vmatprep.subr.bf16.mxu0 0
        %3410 = vmatpush1.bf16.msra.mxu0 0
        %3411 = vmatprep.subr.bf16.mxu0 0
        %3412 = vmatpush1.bf16.msra.mxu0 0
        %3413 = vmatprep.subr.bf16.mxu0 0
        %3414 = vmatpush1.bf16.msra.mxu0 0
        %3415 = vmatprep.subr.bf16.mxu0 0
        %3416 = vmatpush1.bf16.msra.mxu0 0
        %3417 = vmatprep.subr.bf16.mxu0 0
        %3418 = vmatpush1.bf16.msra.mxu0 0
        %3419 = vmatprep.subr.bf16.mxu0 %v3400
        %3420 = vmatpush1.bf16.msra.mxu0 %v3397
        %3421 = vmatprep.subr.bf16.mxu0 0
        %3422 = vmatpush2.bf16.msra.mxu0 0
        %3423 = vmatprep.subr.bf16.mxu0 0
        %3424 = vmatpush2.bf16.msra.mxu0 0
        %3425 = vmatprep.subr.bf16.mxu0 0
        %3426 = vmatpush2.bf16.msra.mxu0 0
        %3427 = vmatprep.subr.bf16.mxu0 0
        %3428 = vmatpush2.bf16.msra.mxu0 0
        %3429 = vmatprep.subr.bf16.mxu0 0
        %3430 = vmatpush2.bf16.msra.mxu0 0
        %3431 = vmatprep.subr.bf16.mxu0 0
        %3432 = vmatpush2.bf16.msra.mxu0 0
        %3433 = vmatprep.subr.bf16.mxu0 0
        %3434 = vmatpush2.bf16.msra.mxu0 0
        %3435 = vmatprep.subr.bf16.mxu0 0
        %3436 = vmatpush2.bf16.msra.mxu0 0
        %3437 = vmatprep.mubr.bf16.mxu0 0
        %3438 = vmatmul.mubr.bf16.gmra.mxu0 %v1462
        %v3439 = vpop.f32.mrf.mxu0
        %v3440 = vadd.f32 %v3350, %v3439
        %v3441 = vpop.f32.mrf.mxu0
        %v3442 = vadd.f32 %v3352, %v3441
        %v3443 = vpop.f32.mrf.mxu0
        %v3444 = vpop.f32.mrf.mxu0
        %3445 = vdwg.mxu0
        %3446 = vmatprep.subr.bf16.mxu0 0
        %3447 = vmatpush1.bf16.msra.mxu0 0
        %3448 = vmatprep.subr.bf16.mxu0 0
        %3449 = vmatpush1.bf16.msra.mxu0 0
        %3450 = vmatprep.subr.bf16.mxu0 0
        %3451 = vmatpush1.bf16.msra.mxu0 0
        %3452 = vmatprep.subr.bf16.mxu0 0
        %3453 = vmatpush1.bf16.msra.mxu0 0
        %3454 = vmatprep.subr.bf16.mxu0 0
        %3455 = vmatpush1.bf16.msra.mxu0 0
        %3456 = vmatprep.subr.bf16.mxu0 0
        %3457 = vmatpush1.bf16.msra.mxu0 0
        %3458 = vmatprep.subr.bf16.mxu0 0
        %3459 = vmatpush1.bf16.msra.mxu0 0
        %3460 = vmatprep.subr.bf16.mxu0 0
        %3461 = vmatpush1.bf16.msra.mxu0 %v3403
        %3462 = vmatprep.subr.bf16.mxu0 0
        %3463 = vmatpush2.bf16.msra.mxu0 0
        %3464 = vmatprep.subr.bf16.mxu0 0
        %3465 = vmatpush2.bf16.msra.mxu0 0
        %3466 = vmatprep.subr.bf16.mxu0 0
        %3467 = vmatpush2.bf16.msra.mxu0 0
        %3468 = vmatprep.subr.bf16.mxu0 0
        %3469 = vmatpush2.bf16.msra.mxu0 0
        %3470 = vmatprep.subr.bf16.mxu0 0
        %3471 = vmatpush2.bf16.msra.mxu0 0
        %3472 = vmatprep.subr.bf16.mxu0 0
        %3473 = vmatpush2.bf16.msra.mxu0 0
        %3474 = vmatprep.subr.bf16.mxu0 0
        %3475 = vmatpush2.bf16.msra.mxu0 0
        %3476 = vmatprep.subr.bf16.mxu0 0
        %3477 = vmatpush2.bf16.msra.mxu0 0
        %3478 = vmatprep.mubr.bf16.mxu0 0
        %3479 = vmatmul.mubr.bf16.gmra.mxu0 %v1462
        %v3480 = vpop.f32.mrf.mxu0
        %v3481 = vadd.f32 %v3391, %v3480
        %v3482 = vpop.f32.mrf.mxu0
        %v3483 = vpop.f32.mrf.mxu0
        %v3484 = vpop.f32.mrf.mxu0
        %3485 = vdwg.mxu0
        %3486 = vrot.lane.b32.xlu0 %v3292, 126
        %v3487 = vpop.permute.xlu0 %3486
        %3488 = vrot.lane.b32.xlu0 %v3293, 126
        %v3489 = vpop.permute.xlu0 %3488
        %3490 = vrot.lane.b32.xlu0 %v3294, 126
        %v3491 = vpop.permute.xlu0 %3490
        %v3492 = vsel %vm552, %v3487, %v3489
        %v3493 = vsel %vm552, %v3489, %v3491
        %v3495 = vsel %vm1370, %v3492, 0
        %v3498 = vsel %vm1370, %v3493, 0
        %v3501 = vsel %vm1370, %v3491, 0
        %3503 = vmatprep.subr.bf16.mxu0 0
        %3504 = vmatpush1.bf16.msra.mxu0 0
        %3505 = vmatprep.subr.bf16.mxu0 0
        %3506 = vmatpush1.bf16.msra.mxu0 0
        %3507 = vmatprep.subr.bf16.mxu0 0
        %3508 = vmatpush1.bf16.msra.mxu0 0
        %3509 = vmatprep.subr.bf16.mxu0 0
        %3510 = vmatpush1.bf16.msra.mxu0 0
        %3511 = vmatprep.subr.bf16.mxu0 0
        %3512 = vmatpush1.bf16.msra.mxu0 0
        %3513 = vmatprep.subr.bf16.mxu0 0
        %3514 = vmatpush1.bf16.msra.mxu0 0
        %3515 = vmatprep.subr.bf16.mxu0 0
        %3516 = vmatpush1.bf16.msra.mxu0 0
        %3517 = vmatprep.subr.bf16.mxu0 %v3498
        %3518 = vmatpush1.bf16.msra.mxu0 %v3495
        %3519 = vmatprep.subr.bf16.mxu0 0
        %3520 = vmatpush2.bf16.msra.mxu0 0
        %3521 = vmatprep.subr.bf16.mxu0 0
        %3522 = vmatpush2.bf16.msra.mxu0 0
        %3523 = vmatprep.subr.bf16.mxu0 0
        %3524 = vmatpush2.bf16.msra.mxu0 0
        %3525 = vmatprep.subr.bf16.mxu0 0
        %3526 = vmatpush2.bf16.msra.mxu0 0
        %3527 = vmatprep.subr.bf16.mxu0 0
        %3528 = vmatpush2.bf16.msra.mxu0 0
        %3529 = vmatprep.subr.bf16.mxu0 0
        %3530 = vmatpush2.bf16.msra.mxu0 0
        %3531 = vmatprep.subr.bf16.mxu0 0
        %3532 = vmatpush2.bf16.msra.mxu0 0
        %3533 = vmatprep.subr.bf16.mxu0 0
        %3534 = vmatpush2.bf16.msra.mxu0 0
        %3535 = vmatprep.mubr.bf16.mxu0 0
        %3536 = vmatmul.mubr.bf16.gmra.mxu0 %v1563
        %v3537 = vpop.f32.mrf.mxu0
        %v3538 = vadd.f32 0.0, %v3537
        %v3539 = vpop.f32.mrf.mxu0
        %v3540 = vadd.f32 0.0, %v3539
        %v3541 = vpop.f32.mrf.mxu0
        %v3542 = vpop.f32.mrf.mxu0
        %3543 = vdwg.mxu0
        %3544 = vmatprep.subr.bf16.mxu0 0
        %3545 = vmatpush1.bf16.msra.mxu0 0
        %3546 = vmatprep.subr.bf16.mxu0 0
        %3547 = vmatpush1.bf16.msra.mxu0 0
        %3548 = vmatprep.subr.bf16.mxu0 0
        %3549 = vmatpush1.bf16.msra.mxu0 0
        %3550 = vmatprep.subr.bf16.mxu0 0
        %3551 = vmatpush1.bf16.msra.mxu0 0
        %3552 = vmatprep.subr.bf16.mxu0 0
        %3553 = vmatpush1.bf16.msra.mxu0 0
        %3554 = vmatprep.subr.bf16.mxu0 0
        %3555 = vmatpush1.bf16.msra.mxu0 0
        %3556 = vmatprep.subr.bf16.mxu0 0
        %3557 = vmatpush1.bf16.msra.mxu0 0
        %3558 = vmatprep.subr.bf16.mxu0 0
        %3559 = vmatpush1.bf16.msra.mxu0 %v3501
        %3560 = vmatprep.subr.bf16.mxu0 0
        %3561 = vmatpush2.bf16.msra.mxu0 0
        %3562 = vmatprep.subr.bf16.mxu0 0
        %3563 = vmatpush2.bf16.msra.mxu0 0
        %3564 = vmatprep.subr.bf16.mxu0 0
        %3565 = vmatpush2.bf16.msra.mxu0 0
        %3566 = vmatprep.subr.bf16.mxu0 0
        %3567 = vmatpush2.bf16.msra.mxu0 0
        %3568 = vmatprep.subr.bf16.mxu0 0
        %3569 = vmatpush2.bf16.msra.mxu0 0
        %3570 = vmatprep.subr.bf16.mxu0 0
        %3571 = vmatpush2.bf16.msra.mxu0 0
        %3572 = vmatprep.subr.bf16.mxu0 0
        %3573 = vmatpush2.bf16.msra.mxu0 0
        %3574 = vmatprep.subr.bf16.mxu0 0
        %3575 = vmatpush2.bf16.msra.mxu0 0
        %3576 = vmatprep.mubr.bf16.mxu0 0
        %3577 = vmatmul.mubr.bf16.gmra.mxu0 %v1563
        %v3578 = vpop.f32.mrf.mxu0
        %v3579 = vadd.f32 0.0, %v3578
        %v3580 = vpop.f32.mrf.mxu0
        %v3581 = vpop.f32.mrf.mxu0
        %v3582 = vpop.f32.mrf.mxu0
        %3583 = vdwg.mxu0
        %v3584 = vadd.f32 %v3440, %v3538
        %v3585 = vadd.f32 %v3442, %v3540
        %v3586 = vadd.f32 %v3481, %v3579
        %3587 = vrot.lane.b32.xlu0 %v3292, 110
        %v3588 = vpop.permute.xlu0 %3587
        %3589 = vrot.lane.b32.xlu0 %v3293, 110
        %v3590 = vpop.permute.xlu0 %3589
        %3591 = vrot.lane.b32.xlu0 %v3294, 110
        %v3592 = vpop.permute.xlu0 %3591
        %v3593 = vsel %vm657, %v3588, %v3590
        %v3594 = vsel %vm657, %v3590, %v3592
        %v3596 = vsel %vm1370, %v3593, 0
        %v3599 = vsel %vm1370, %v3594, 0
        %v3602 = vsel %vm1370, %v3592, 0
        %3604 = vmatprep.subr.bf16.mxu0 0
        %3605 = vmatpush1.bf16.msra.mxu0 0
        %3606 = vmatprep.subr.bf16.mxu0 0
        %3607 = vmatpush1.bf16.msra.mxu0 0
        %3608 = vmatprep.subr.bf16.mxu0 0
        %3609 = vmatpush1.bf16.msra.mxu0 0
        %3610 = vmatprep.subr.bf16.mxu0 0
        %3611 = vmatpush1.bf16.msra.mxu0 0
        %3612 = vmatprep.subr.bf16.mxu0 0
        %3613 = vmatpush1.bf16.msra.mxu0 0
        %3614 = vmatprep.subr.bf16.mxu0 0
        %3615 = vmatpush1.bf16.msra.mxu0 0
        %3616 = vmatprep.subr.bf16.mxu0 0
        %3617 = vmatpush1.bf16.msra.mxu0 0
        %3618 = vmatprep.subr.bf16.mxu0 %v3599
        %3619 = vmatpush1.bf16.msra.mxu0 %v3596
        %3620 = vmatprep.subr.bf16.mxu0 0
        %3621 = vmatpush2.bf16.msra.mxu0 0
        %3622 = vmatprep.subr.bf16.mxu0 0
        %3623 = vmatpush2.bf16.msra.mxu0 0
        %3624 = vmatprep.subr.bf16.mxu0 0
        %3625 = vmatpush2.bf16.msra.mxu0 0
        %3626 = vmatprep.subr.bf16.mxu0 0
        %3627 = vmatpush2.bf16.msra.mxu0 0
        %3628 = vmatprep.subr.bf16.mxu0 0
        %3629 = vmatpush2.bf16.msra.mxu0 0
        %3630 = vmatprep.subr.bf16.mxu0 0
        %3631 = vmatpush2.bf16.msra.mxu0 0
        %3632 = vmatprep.subr.bf16.mxu0 0
        %3633 = vmatpush2.bf16.msra.mxu0 0
        %3634 = vmatprep.subr.bf16.mxu0 0
        %3635 = vmatpush2.bf16.msra.mxu0 0
        %3636 = vmatprep.mubr.bf16.mxu0 0
        %3637 = vmatmul.mubr.bf16.gmra.mxu0 %v1667
        %v3638 = vpop.f32.mrf.mxu0
        %v3639 = vadd.f32 0.0, %v3638
        %v3640 = vpop.f32.mrf.mxu0
        %v3641 = vadd.f32 0.0, %v3640
        %v3642 = vpop.f32.mrf.mxu0
        %v3643 = vpop.f32.mrf.mxu0
        %3644 = vdwg.mxu0
        %3645 = vmatprep.subr.bf16.mxu0 0
        %3646 = vmatpush1.bf16.msra.mxu0 0
        %3647 = vmatprep.subr.bf16.mxu0 0
        %3648 = vmatpush1.bf16.msra.mxu0 0
        %3649 = vmatprep.subr.bf16.mxu0 0
        %3650 = vmatpush1.bf16.msra.mxu0 0
        %3651 = vmatprep.subr.bf16.mxu0 0
        %3652 = vmatpush1.bf16.msra.mxu0 0
        %3653 = vmatprep.subr.bf16.mxu0 0
        %3654 = vmatpush1.bf16.msra.mxu0 0
        %3655 = vmatprep.subr.bf16.mxu0 0
        %3656 = vmatpush1.bf16.msra.mxu0 0
        %3657 = vmatprep.subr.bf16.mxu0 0
        %3658 = vmatpush1.bf16.msra.mxu0 0
        %3659 = vmatprep.subr.bf16.mxu0 0
        %3660 = vmatpush1.bf16.msra.mxu0 %v3602
        %3661 = vmatprep.subr.bf16.mxu0 0
        %3662 = vmatpush2.bf16.msra.mxu0 0
        %3663 = vmatprep.subr.bf16.mxu0 0
        %3664 = vmatpush2.bf16.msra.mxu0 0
        %3665 = vmatprep.subr.bf16.mxu0 0
        %3666 = vmatpush2.bf16.msra.mxu0 0
        %3667 = vmatprep.subr.bf16.mxu0 0
        %3668 = vmatpush2.bf16.msra.mxu0 0
        %3669 = vmatprep.subr.bf16.mxu0 0
        %3670 = vmatpush2.bf16.msra.mxu0 0
        %3671 = vmatprep.subr.bf16.mxu0 0
        %3672 = vmatpush2.bf16.msra.mxu0 0
        %3673 = vmatprep.subr.bf16.mxu0 0
        %3674 = vmatpush2.bf16.msra.mxu0 0
        %3675 = vmatprep.subr.bf16.mxu0 0
        %3676 = vmatpush2.bf16.msra.mxu0 0
        %3677 = vmatprep.mubr.bf16.mxu0 0
        %3678 = vmatmul.mubr.bf16.gmra.mxu0 %v1667
        %v3679 = vpop.f32.mrf.mxu0
        %v3680 = vadd.f32 0.0, %v3679
        %v3681 = vpop.f32.mrf.mxu0
        %v3682 = vpop.f32.mrf.mxu0
        %v3683 = vpop.f32.mrf.mxu0
        %3684 = vdwg.mxu0
        %v3685 = vadd.f32 %v3584, %v3639
        %v3686 = vadd.f32 %v3585, %v3641
        %v3687 = vadd.f32 %v3586, %v3680
        %3688 = vrot.lane.b32.xlu0 %v3292, 109
        %v3689 = vpop.permute.xlu0 %3688
        %3690 = vrot.lane.b32.xlu0 %v3293, 109
        %v3691 = vpop.permute.xlu0 %3690
        %3692 = vrot.lane.b32.xlu0 %v3294, 109
        %v3693 = vpop.permute.xlu0 %3692
        %v3694 = vsel %vm762, %v3689, %v3691
        %v3695 = vsel %vm762, %v3691, %v3693
        %v3697 = vsel %vm1370, %v3694, 0
        %v3700 = vsel %vm1370, %v3695, 0
        %v3703 = vsel %vm1370, %v3693, 0
        %3705 = vmatprep.subr.bf16.mxu0 0
        %3706 = vmatpush1.bf16.msra.mxu0 0
        %3707 = vmatprep.subr.bf16.mxu0 0
        %3708 = vmatpush1.bf16.msra.mxu0 0
        %3709 = vmatprep.subr.bf16.mxu0 0
        %3710 = vmatpush1.bf16.msra.mxu0 0
        %3711 = vmatprep.subr.bf16.mxu0 0
        %3712 = vmatpush1.bf16.msra.mxu0 0
        %3713 = vmatprep.subr.bf16.mxu0 0
        %3714 = vmatpush1.bf16.msra.mxu0 0
        %3715 = vmatprep.subr.bf16.mxu0 0
        %3716 = vmatpush1.bf16.msra.mxu0 0
        %3717 = vmatprep.subr.bf16.mxu0 0
        %3718 = vmatpush1.bf16.msra.mxu0 0
        %3719 = vmatprep.subr.bf16.mxu0 %v3700
        %3720 = vmatpush1.bf16.msra.mxu0 %v3697
        %3721 = vmatprep.subr.bf16.mxu0 0
        %3722 = vmatpush2.bf16.msra.mxu0 0
        %3723 = vmatprep.subr.bf16.mxu0 0
        %3724 = vmatpush2.bf16.msra.mxu0 0
        %3725 = vmatprep.subr.bf16.mxu0 0
        %3726 = vmatpush2.bf16.msra.mxu0 0
        %3727 = vmatprep.subr.bf16.mxu0 0
        %3728 = vmatpush2.bf16.msra.mxu0 0
        %3729 = vmatprep.subr.bf16.mxu0 0
        %3730 = vmatpush2.bf16.msra.mxu0 0
        %3731 = vmatprep.subr.bf16.mxu0 0
        %3732 = vmatpush2.bf16.msra.mxu0 0
        %3733 = vmatprep.subr.bf16.mxu0 0
        %3734 = vmatpush2.bf16.msra.mxu0 0
        %3735 = vmatprep.subr.bf16.mxu0 0
        %3736 = vmatpush2.bf16.msra.mxu0 0
        %3737 = vmatprep.mubr.bf16.mxu0 0
        %3738 = vmatmul.mubr.bf16.gmra.mxu0 %v1771
        %v3739 = vpop.f32.mrf.mxu0
        %v3740 = vadd.f32 0.0, %v3739
        %v3741 = vpop.f32.mrf.mxu0
        %v3742 = vadd.f32 0.0, %v3741
        %v3743 = vpop.f32.mrf.mxu0
        %v3744 = vpop.f32.mrf.mxu0
        %3745 = vdwg.mxu0
        %3746 = vmatprep.subr.bf16.mxu0 0
        %3747 = vmatpush1.bf16.msra.mxu0 0
        %3748 = vmatprep.subr.bf16.mxu0 0
        %3749 = vmatpush1.bf16.msra.mxu0 0
        %3750 = vmatprep.subr.bf16.mxu0 0
        %3751 = vmatpush1.bf16.msra.mxu0 0
        %3752 = vmatprep.subr.bf16.mxu0 0
        %3753 = vmatpush1.bf16.msra.mxu0 0
        %3754 = vmatprep.subr.bf16.mxu0 0
        %3755 = vmatpush1.bf16.msra.mxu0 0
        %3756 = vmatprep.subr.bf16.mxu0 0
        %3757 = vmatpush1.bf16.msra.mxu0 0
        %3758 = vmatprep.subr.bf16.mxu0 0
        %3759 = vmatpush1.bf16.msra.mxu0 0
        %3760 = vmatprep.subr.bf16.mxu0 0
        %3761 = vmatpush1.bf16.msra.mxu0 %v3703
        %3762 = vmatprep.subr.bf16.mxu0 0
        %3763 = vmatpush2.bf16.msra.mxu0 0
        %3764 = vmatprep.subr.bf16.mxu0 0
        %3765 = vmatpush2.bf16.msra.mxu0 0
        %3766 = vmatprep.subr.bf16.mxu0 0
        %3767 = vmatpush2.bf16.msra.mxu0 0
        %3768 = vmatprep.subr.bf16.mxu0 0
        %3769 = vmatpush2.bf16.msra.mxu0 0
        %3770 = vmatprep.subr.bf16.mxu0 0
        %3771 = vmatpush2.bf16.msra.mxu0 0
        %3772 = vmatprep.subr.bf16.mxu0 0
        %3773 = vmatpush2.bf16.msra.mxu0 0
        %3774 = vmatprep.subr.bf16.mxu0 0
        %3775 = vmatpush2.bf16.msra.mxu0 0
        %3776 = vmatprep.subr.bf16.mxu0 0
        %3777 = vmatpush2.bf16.msra.mxu0 0
        %3778 = vmatprep.mubr.bf16.mxu0 0
        %3779 = vmatmul.mubr.bf16.gmra.mxu0 %v1771
        %v3780 = vpop.f32.mrf.mxu0
        %v3781 = vadd.f32 0.0, %v3780
        %v3782 = vpop.f32.mrf.mxu0
        %v3783 = vpop.f32.mrf.mxu0
        %v3784 = vpop.f32.mrf.mxu0
        %3785 = vdwg.mxu0
        %v3786 = vadd.f32 %v3685, %v3740
        %v3787 = vadd.f32 %v3686, %v3742
        %v3788 = vadd.f32 %v3687, %v3781
        %3789 = vrot.lane.b32.xlu0 %v3292, 108
        %v3790 = vpop.permute.xlu0 %3789
        %3791 = vrot.lane.b32.xlu0 %v3293, 108
        %v3792 = vpop.permute.xlu0 %3791
        %3793 = vrot.lane.b32.xlu0 %v3294, 108
        %v3794 = vpop.permute.xlu0 %3793
        %v3795 = vsel %vm867, %v3790, %v3792
        %v3796 = vsel %vm867, %v3792, %v3794
        %v3798 = vsel %vm1370, %v3795, 0
        %v3801 = vsel %vm1370, %v3796, 0
        %v3804 = vsel %vm1370, %v3794, 0
        %3806 = vmatprep.subr.bf16.mxu0 0
        %3807 = vmatpush1.bf16.msra.mxu0 0
        %3808 = vmatprep.subr.bf16.mxu0 0
        %3809 = vmatpush1.bf16.msra.mxu0 0
        %3810 = vmatprep.subr.bf16.mxu0 0
        %3811 = vmatpush1.bf16.msra.mxu0 0
        %3812 = vmatprep.subr.bf16.mxu0 0
        %3813 = vmatpush1.bf16.msra.mxu0 0
        %3814 = vmatprep.subr.bf16.mxu0 0
        %3815 = vmatpush1.bf16.msra.mxu0 0
        %3816 = vmatprep.subr.bf16.mxu0 0
        %3817 = vmatpush1.bf16.msra.mxu0 0
        %3818 = vmatprep.subr.bf16.mxu0 0
        %3819 = vmatpush1.bf16.msra.mxu0 0
        %3820 = vmatprep.subr.bf16.mxu0 %v3801
        %3821 = vmatpush1.bf16.msra.mxu0 %v3798
        %3822 = vmatprep.subr.bf16.mxu0 0
        %3823 = vmatpush2.bf16.msra.mxu0 0
        %3824 = vmatprep.subr.bf16.mxu0 0
        %3825 = vmatpush2.bf16.msra.mxu0 0
        %3826 = vmatprep.subr.bf16.mxu0 0
        %3827 = vmatpush2.bf16.msra.mxu0 0
        %3828 = vmatprep.subr.bf16.mxu0 0
        %3829 = vmatpush2.bf16.msra.mxu0 0
        %3830 = vmatprep.subr.bf16.mxu0 0
        %3831 = vmatpush2.bf16.msra.mxu0 0
        %3832 = vmatprep.subr.bf16.mxu0 0
        %3833 = vmatpush2.bf16.msra.mxu0 0
        %3834 = vmatprep.subr.bf16.mxu0 0
        %3835 = vmatpush2.bf16.msra.mxu0 0
        %3836 = vmatprep.subr.bf16.mxu0 0
        %3837 = vmatpush2.bf16.msra.mxu0 0
        %3838 = vmatprep.mubr.bf16.mxu0 0
        %3839 = vmatmul.mubr.bf16.gmra.mxu0 %v1875
        %v3840 = vpop.f32.mrf.mxu0
        %v3841 = vadd.f32 0.0, %v3840
        %v3842 = vpop.f32.mrf.mxu0
        %v3843 = vadd.f32 0.0, %v3842
        %v3844 = vpop.f32.mrf.mxu0
        %v3845 = vpop.f32.mrf.mxu0
        %3846 = vdwg.mxu0
        %3847 = vmatprep.subr.bf16.mxu0 0
        %3848 = vmatpush1.bf16.msra.mxu0 0
        %3849 = vmatprep.subr.bf16.mxu0 0
        %3850 = vmatpush1.bf16.msra.mxu0 0
        %3851 = vmatprep.subr.bf16.mxu0 0
        %3852 = vmatpush1.bf16.msra.mxu0 0
        %3853 = vmatprep.subr.bf16.mxu0 0
        %3854 = vmatpush1.bf16.msra.mxu0 0
        %3855 = vmatprep.subr.bf16.mxu0 0
        %3856 = vmatpush1.bf16.msra.mxu0 0
        %3857 = vmatprep.subr.bf16.mxu0 0
        %3858 = vmatpush1.bf16.msra.mxu0 0
        %3859 = vmatprep.subr.bf16.mxu0 0
        %3860 = vmatpush1.bf16.msra.mxu0 0
        %3861 = vmatprep.subr.bf16.mxu0 0
        %3862 = vmatpush1.bf16.msra.mxu0 %v3804
        %3863 = vmatprep.subr.bf16.mxu0 0
        %3864 = vmatpush2.bf16.msra.mxu0 0
        %3865 = vmatprep.subr.bf16.mxu0 0
        %3866 = vmatpush2.bf16.msra.mxu0 0
        %3867 = vmatprep.subr.bf16.mxu0 0
        %3868 = vmatpush2.bf16.msra.mxu0 0
        %3869 = vmatprep.subr.bf16.mxu0 0
        %3870 = vmatpush2.bf16.msra.mxu0 0
        %3871 = vmatprep.subr.bf16.mxu0 0
        %3872 = vmatpush2.bf16.msra.mxu0 0
        %3873 = vmatprep.subr.bf16.mxu0 0
        %3874 = vmatpush2.bf16.msra.mxu0 0
        %3875 = vmatprep.subr.bf16.mxu0 0
        %3876 = vmatpush2.bf16.msra.mxu0 0
        %3877 = vmatprep.subr.bf16.mxu0 0
        %3878 = vmatpush2.bf16.msra.mxu0 0
        %3879 = vmatprep.mubr.bf16.mxu0 0
        %3880 = vmatmul.mubr.bf16.gmra.mxu0 %v1875
        %v3881 = vpop.f32.mrf.mxu0
        %v3882 = vadd.f32 0.0, %v3881
        %v3883 = vpop.f32.mrf.mxu0
        %v3884 = vpop.f32.mrf.mxu0
        %v3885 = vpop.f32.mrf.mxu0
        %3886 = vdwg.mxu0
        %v3887 = vadd.f32 %v3786, %v3841
        %v3888 = vadd.f32 %v3787, %v3843
        %v3889 = vadd.f32 %v3788, %v3882
        %3890 = vrot.lane.b32.xlu0 %v3292, 92
        %v3891 = vpop.permute.xlu0 %3890
        %3892 = vrot.lane.b32.xlu0 %v3293, 92
        %v3893 = vpop.permute.xlu0 %3892
        %3894 = vrot.lane.b32.xlu0 %v3294, 92
        %v3895 = vpop.permute.xlu0 %3894
        %v3896 = vsel %vm972, %v3891, %v3893
        %v3897 = vsel %vm972, %v3893, %v3895
        %v3899 = vsel %vm1370, %v3896, 0
        %v3902 = vsel %vm1370, %v3897, 0
        %v3905 = vsel %vm1370, %v3895, 0
        %3907 = vmatprep.subr.bf16.mxu0 0
        %3908 = vmatpush1.bf16.msra.mxu0 0
        %3909 = vmatprep.subr.bf16.mxu0 0
        %3910 = vmatpush1.bf16.msra.mxu0 0
        %3911 = vmatprep.subr.bf16.mxu0 0
        %3912 = vmatpush1.bf16.msra.mxu0 0
        %3913 = vmatprep.subr.bf16.mxu0 0
        %3914 = vmatpush1.bf16.msra.mxu0 0
        %3915 = vmatprep.subr.bf16.mxu0 0
        %3916 = vmatpush1.bf16.msra.mxu0 0
        %3917 = vmatprep.subr.bf16.mxu0 0
        %3918 = vmatpush1.bf16.msra.mxu0 0
        %3919 = vmatprep.subr.bf16.mxu0 0
        %3920 = vmatpush1.bf16.msra.mxu0 0
        %3921 = vmatprep.subr.bf16.mxu0 %v3902
        %3922 = vmatpush1.bf16.msra.mxu0 %v3899
        %3923 = vmatprep.subr.bf16.mxu0 0
        %3924 = vmatpush2.bf16.msra.mxu0 0
        %3925 = vmatprep.subr.bf16.mxu0 0
        %3926 = vmatpush2.bf16.msra.mxu0 0
        %3927 = vmatprep.subr.bf16.mxu0 0
        %3928 = vmatpush2.bf16.msra.mxu0 0
        %3929 = vmatprep.subr.bf16.mxu0 0
        %3930 = vmatpush2.bf16.msra.mxu0 0
        %3931 = vmatprep.subr.bf16.mxu0 0
        %3932 = vmatpush2.bf16.msra.mxu0 0
        %3933 = vmatprep.subr.bf16.mxu0 0
        %3934 = vmatpush2.bf16.msra.mxu0 0
        %3935 = vmatprep.subr.bf16.mxu0 0
        %3936 = vmatpush2.bf16.msra.mxu0 0
        %3937 = vmatprep.subr.bf16.mxu0 0
        %3938 = vmatpush2.bf16.msra.mxu0 0
        %3939 = vmatprep.mubr.bf16.mxu0 0
        %3940 = vmatmul.mubr.bf16.gmra.mxu0 %v1979
        %v3941 = vpop.f32.mrf.mxu0
        %v3942 = vadd.f32 0.0, %v3941
        %v3943 = vpop.f32.mrf.mxu0
        %v3944 = vadd.f32 0.0, %v3943
        %v3945 = vpop.f32.mrf.mxu0
        %v3946 = vpop.f32.mrf.mxu0
        %3947 = vdwg.mxu0
        %3948 = vmatprep.subr.bf16.mxu0 0
        %3949 = vmatpush1.bf16.msra.mxu0 0
        %3950 = vmatprep.subr.bf16.mxu0 0
        %3951 = vmatpush1.bf16.msra.mxu0 0
        %3952 = vmatprep.subr.bf16.mxu0 0
        %3953 = vmatpush1.bf16.msra.mxu0 0
        %3954 = vmatprep.subr.bf16.mxu0 0
        %3955 = vmatpush1.bf16.msra.mxu0 0
        %3956 = vmatprep.subr.bf16.mxu0 0
        %3957 = vmatpush1.bf16.msra.mxu0 0
        %3958 = vmatprep.subr.bf16.mxu0 0
        %3959 = vmatpush1.bf16.msra.mxu0 0
        %3960 = vmatprep.subr.bf16.mxu0 0
        %3961 = vmatpush1.bf16.msra.mxu0 0
        %3962 = vmatprep.subr.bf16.mxu0 0
        %3963 = vmatpush1.bf16.msra.mxu0 %v3905
        %3964 = vmatprep.subr.bf16.mxu0 0
        %3965 = vmatpush2.bf16.msra.mxu0 0
        %3966 = vmatprep.subr.bf16.mxu0 0
        %3967 = vmatpush2.bf16.msra.mxu0 0
        %3968 = vmatprep.subr.bf16.mxu0 0
        %3969 = vmatpush2.bf16.msra.mxu0 0
        %3970 = vmatprep.subr.bf16.mxu0 0
        %3971 = vmatpush2.bf16.msra.mxu0 0
        %3972 = vmatprep.subr.bf16.mxu0 0
        %3973 = vmatpush2.bf16.msra.mxu0 0
        %3974 = vmatprep.subr.bf16.mxu0 0
        %3975 = vmatpush2.bf16.msra.mxu0 0
        %3976 = vmatprep.subr.bf16.mxu0 0
        %3977 = vmatpush2.bf16.msra.mxu0 0
        %3978 = vmatprep.subr.bf16.mxu0 0
        %3979 = vmatpush2.bf16.msra.mxu0 0
        %3980 = vmatprep.mubr.bf16.mxu0 0
        %3981 = vmatmul.mubr.bf16.gmra.mxu0 %v1979
        %v3982 = vpop.f32.mrf.mxu0
        %v3983 = vadd.f32 0.0, %v3982
        %v3984 = vpop.f32.mrf.mxu0
        %v3985 = vpop.f32.mrf.mxu0
        %v3986 = vpop.f32.mrf.mxu0
        %3987 = vdwg.mxu0
        %v3988 = vadd.f32 %v3887, %v3942
        %v3989 = vadd.f32 %v3888, %v3944
        %v3990 = vadd.f32 %v3889, %v3983
        %3991 = vrot.lane.b32.xlu0 %v3292, 91
        %v3992 = vpop.permute.xlu0 %3991
        %3993 = vrot.lane.b32.xlu0 %v3293, 91
        %v3994 = vpop.permute.xlu0 %3993
        %3995 = vrot.lane.b32.xlu0 %v3294, 91
        %v3996 = vpop.permute.xlu0 %3995
        %v3997 = vsel %vm1077, %v3992, %v3994
        %v3998 = vsel %vm1077, %v3994, %v3996
        %v4000 = vsel %vm1370, %v3997, 0
        %v4003 = vsel %vm1370, %v3998, 0
        %v4006 = vsel %vm1370, %v3996, 0
        %4008 = vmatprep.subr.bf16.mxu0 0
        %4009 = vmatpush1.bf16.msra.mxu0 0
        %4010 = vmatprep.subr.bf16.mxu0 0
        %4011 = vmatpush1.bf16.msra.mxu0 0
        %4012 = vmatprep.subr.bf16.mxu0 0
        %4013 = vmatpush1.bf16.msra.mxu0 0
        %4014 = vmatprep.subr.bf16.mxu0 0
        %4015 = vmatpush1.bf16.msra.mxu0 0
        %4016 = vmatprep.subr.bf16.mxu0 0
        %4017 = vmatpush1.bf16.msra.mxu0 0
        %4018 = vmatprep.subr.bf16.mxu0 0
        %4019 = vmatpush1.bf16.msra.mxu0 0
        %4020 = vmatprep.subr.bf16.mxu0 0
        %4021 = vmatpush1.bf16.msra.mxu0 0
        %4022 = vmatprep.subr.bf16.mxu0 %v4003
        %4023 = vmatpush1.bf16.msra.mxu0 %v4000
        %4024 = vmatprep.subr.bf16.mxu0 0
        %4025 = vmatpush2.bf16.msra.mxu0 0
        %4026 = vmatprep.subr.bf16.mxu0 0
        %4027 = vmatpush2.bf16.msra.mxu0 0
        %4028 = vmatprep.subr.bf16.mxu0 0
        %4029 = vmatpush2.bf16.msra.mxu0 0
        %4030 = vmatprep.subr.bf16.mxu0 0
        %4031 = vmatpush2.bf16.msra.mxu0 0
        %4032 = vmatprep.subr.bf16.mxu0 0
        %4033 = vmatpush2.bf16.msra.mxu0 0
        %4034 = vmatprep.subr.bf16.mxu0 0
        %4035 = vmatpush2.bf16.msra.mxu0 0
        %4036 = vmatprep.subr.bf16.mxu0 0
        %4037 = vmatpush2.bf16.msra.mxu0 0
        %4038 = vmatprep.subr.bf16.mxu0 0
        %4039 = vmatpush2.bf16.msra.mxu0 0
        %4040 = vmatprep.mubr.bf16.mxu0 0
        %4041 = vmatmul.mubr.bf16.gmra.mxu0 %v2083
        %v4042 = vpop.f32.mrf.mxu0
        %v4043 = vadd.f32 0.0, %v4042
        %v4044 = vpop.f32.mrf.mxu0
        %v4045 = vadd.f32 0.0, %v4044
        %v4046 = vpop.f32.mrf.mxu0
        %v4047 = vpop.f32.mrf.mxu0
        %4048 = vdwg.mxu0
        %4049 = vmatprep.subr.bf16.mxu0 0
        %4050 = vmatpush1.bf16.msra.mxu0 0
        %4051 = vmatprep.subr.bf16.mxu0 0
        %4052 = vmatpush1.bf16.msra.mxu0 0
        %4053 = vmatprep.subr.bf16.mxu0 0
        %4054 = vmatpush1.bf16.msra.mxu0 0
        %4055 = vmatprep.subr.bf16.mxu0 0
        %4056 = vmatpush1.bf16.msra.mxu0 0
        %4057 = vmatprep.subr.bf16.mxu0 0
        %4058 = vmatpush1.bf16.msra.mxu0 0
        %4059 = vmatprep.subr.bf16.mxu0 0
        %4060 = vmatpush1.bf16.msra.mxu0 0
        %4061 = vmatprep.subr.bf16.mxu0 0
        %4062 = vmatpush1.bf16.msra.mxu0 0
        %4063 = vmatprep.subr.bf16.mxu0 0
        %4064 = vmatpush1.bf16.msra.mxu0 %v4006
        %4065 = vmatprep.subr.bf16.mxu0 0
        %4066 = vmatpush2.bf16.msra.mxu0 0
        %4067 = vmatprep.subr.bf16.mxu0 0
        %4068 = vmatpush2.bf16.msra.mxu0 0
        %4069 = vmatprep.subr.bf16.mxu0 0
        %4070 = vmatpush2.bf16.msra.mxu0 0
        %4071 = vmatprep.subr.bf16.mxu0 0
        %4072 = vmatpush2.bf16.msra.mxu0 0
        %4073 = vmatprep.subr.bf16.mxu0 0
        %4074 = vmatpush2.bf16.msra.mxu0 0
        %4075 = vmatprep.subr.bf16.mxu0 0
        %4076 = vmatpush2.bf16.msra.mxu0 0
        %4077 = vmatprep.subr.bf16.mxu0 0
        %4078 = vmatpush2.bf16.msra.mxu0 0
        %4079 = vmatprep.subr.bf16.mxu0 0
        %4080 = vmatpush2.bf16.msra.mxu0 0
        %4081 = vmatprep.mubr.bf16.mxu0 0
        %4082 = vmatmul.mubr.bf16.gmra.mxu0 %v2083
        %v4083 = vpop.f32.mrf.mxu0
        %v4084 = vadd.f32 0.0, %v4083
        %v4085 = vpop.f32.mrf.mxu0
        %v4086 = vpop.f32.mrf.mxu0
        %v4087 = vpop.f32.mrf.mxu0
        %4088 = vdwg.mxu0
        %v4089 = vadd.f32 %v3988, %v4043
        %v4090 = vadd.f32 %v3989, %v4045
        %v4091 = vadd.f32 %v3990, %v4084
        %4092 = vrot.lane.b32.xlu0 %v3292, 90
        %v4093 = vpop.permute.xlu0 %4092
        %4094 = vrot.lane.b32.xlu0 %v3293, 90
        %v4095 = vpop.permute.xlu0 %4094
        %4096 = vrot.lane.b32.xlu0 %v3294, 90
        %v4097 = vpop.permute.xlu0 %4096
        %v4098 = vsel %vm1182, %v4093, %v4095
        %v4099 = vsel %vm1182, %v4095, %v4097
        %v4101 = vsel %vm1370, %v4098, 0
        %v4104 = vsel %vm1370, %v4099, 0
        %v4107 = vsel %vm1370, %v4097, 0
        %4109 = vmatprep.subr.bf16.mxu0 0
        %4110 = vmatpush1.bf16.msra.mxu0 0
        %4111 = vmatprep.subr.bf16.mxu0 0
        %4112 = vmatpush1.bf16.msra.mxu0 0
        %4113 = vmatprep.subr.bf16.mxu0 0
        %4114 = vmatpush1.bf16.msra.mxu0 0
        %4115 = vmatprep.subr.bf16.mxu0 0
        %4116 = vmatpush1.bf16.msra.mxu0 0
        %4117 = vmatprep.subr.bf16.mxu0 0
        %4118 = vmatpush1.bf16.msra.mxu0 0
        %4119 = vmatprep.subr.bf16.mxu0 0
        %4120 = vmatpush1.bf16.msra.mxu0 0
        %4121 = vmatprep.subr.bf16.mxu0 0
        %4122 = vmatpush1.bf16.msra.mxu0 0
        %4123 = vmatprep.subr.bf16.mxu0 %v4104
        %4124 = vmatpush1.bf16.msra.mxu0 %v4101
        %4125 = vmatprep.subr.bf16.mxu0 0
        %4126 = vmatpush2.bf16.msra.mxu0 0
        %4127 = vmatprep.subr.bf16.mxu0 0
        %4128 = vmatpush2.bf16.msra.mxu0 0
        %4129 = vmatprep.subr.bf16.mxu0 0
        %4130 = vmatpush2.bf16.msra.mxu0 0
        %4131 = vmatprep.subr.bf16.mxu0 0
        %4132 = vmatpush2.bf16.msra.mxu0 0
        %4133 = vmatprep.subr.bf16.mxu0 0
        %4134 = vmatpush2.bf16.msra.mxu0 0
        %4135 = vmatprep.subr.bf16.mxu0 0
        %4136 = vmatpush2.bf16.msra.mxu0 0
        %4137 = vmatprep.subr.bf16.mxu0 0
        %4138 = vmatpush2.bf16.msra.mxu0 0
        %4139 = vmatprep.subr.bf16.mxu0 0
        %4140 = vmatpush2.bf16.msra.mxu0 0
        %4141 = vmatprep.mubr.bf16.mxu0 0
        %4142 = vmatmul.mubr.bf16.gmra.mxu0 %v2187
        %v4143 = vpop.f32.mrf.mxu0
        %v4144 = vadd.f32 0.0, %v4143
        %v4145 = vpop.f32.mrf.mxu0
        %v4146 = vadd.f32 0.0, %v4145
        %v4147 = vpop.f32.mrf.mxu0
        %v4148 = vpop.f32.mrf.mxu0
        %4149 = vdwg.mxu0
        %4150 = vmatprep.subr.bf16.mxu0 0
        %4151 = vmatpush1.bf16.msra.mxu0 0
        %4152 = vmatprep.subr.bf16.mxu0 0
        %4153 = vmatpush1.bf16.msra.mxu0 0
        %4154 = vmatprep.subr.bf16.mxu0 0
        %4155 = vmatpush1.bf16.msra.mxu0 0
        %4156 = vmatprep.subr.bf16.mxu0 0
        %4157 = vmatpush1.bf16.msra.mxu0 0
        %4158 = vmatprep.subr.bf16.mxu0 0
        %4159 = vmatpush1.bf16.msra.mxu0 0
        %4160 = vmatprep.subr.bf16.mxu0 0
        %4161 = vmatpush1.bf16.msra.mxu0 0
        %4162 = vmatprep.subr.bf16.mxu0 0
        %4163 = vmatpush1.bf16.msra.mxu0 0
        %4164 = vmatprep.subr.bf16.mxu0 0
        %4165 = vmatpush1.bf16.msra.mxu0 %v4107
        %4166 = vmatprep.subr.bf16.mxu0 0
        %4167 = vmatpush2.bf16.msra.mxu0 0
        %4168 = vmatprep.subr.bf16.mxu0 0
        %4169 = vmatpush2.bf16.msra.mxu0 0
        %4170 = vmatprep.subr.bf16.mxu0 0
        %4171 = vmatpush2.bf16.msra.mxu0 0
        %4172 = vmatprep.subr.bf16.mxu0 0
        %4173 = vmatpush2.bf16.msra.mxu0 0
        %4174 = vmatprep.subr.bf16.mxu0 0
        %4175 = vmatpush2.bf16.msra.mxu0 0
        %4176 = vmatprep.subr.bf16.mxu0 0
        %4177 = vmatpush2.bf16.msra.mxu0 0
        %4178 = vmatprep.subr.bf16.mxu0 0
        %4179 = vmatpush2.bf16.msra.mxu0 0
        %4180 = vmatprep.subr.bf16.mxu0 0
        %4181 = vmatpush2.bf16.msra.mxu0 0
        %4182 = vmatprep.mubr.bf16.mxu0 0
        %4183 = vmatmul.mubr.bf16.gmra.mxu0 %v2187
        %v4184 = vpop.f32.mrf.mxu0
        %v4185 = vadd.f32 0.0, %v4184
        %v4186 = vpop.f32.mrf.mxu0
        %v4187 = vpop.f32.mrf.mxu0
        %v4188 = vpop.f32.mrf.mxu0
        %4189 = vdwg.mxu0
        %v4190 = vadd.f32 %v4089, %v4144
        %v4191 = vadd.f32 %v4090, %v4146
        %v4192 = vadd.f32 %v4091, %v4185
        %v4193 = vadd.f32 %v4190, %v2285
        %v4194 = vadd.f32 %v4191, %v2285
        %v4195 = vadd.f32 %v4192, %v2285
        %v4199 = vcombine.low %v4193, %v4194
        %4200 = vrot.lane.b32.xlu0 %v4199, 19
        %v4201 = vpop.permute.xlu0 %4200
        %4202 = vrot.lane.b32.xlu0 %v4195, 19
        %v4203 = vpop.permute.xlu0 %4202
        %v4204 = vrot.slane %v4201, 4
        %v4205 = vsel %vm1338, %v4204, %v4201
        %v4206 = vsel %vm1338, %v4204, %v4203
        %v4209 = vadd.f32 %v2336, %v4205
        %v4210 = vadd.f32 %v2337, %v4206
        %v4211 = vsub.f32 %v4209, %v2317
        %v4212 = vsub.f32 %v4210, %v2318
        %v4213 = vmul.f32 %v4211, 0.5
        %v4214 = vmul.f32 %v4212, 0.5
        %v4215 = vadd.f32 %v2317, %v4213
        %v4216 = vadd.f32 %v2318, %v4214
        %vm4217 = vcmp.ge.f32.partialorder %v4215, 1.0
        %vm4218 = vcmp.ge.f32.partialorder %v4216, 1.0
        %v4219 = vsel %vm4217, 1, 0
        %v4220 = vsel %vm4218, 1, 0
        %v4221 = vcvt.s32.f32 %v4219
        %v4222 = vcvt.s32.f32 %v4220
        %v4223 = vsub.f32 1.0, %v4221
        %v4224 = vsub.f32 1.0, %v4222
        %v4225 = vmul.f32 %v4215, %v4223
        %v4226 = vmul.f32 %v4216, %v4224
        %4229 = vrot.lane.b32.xlu0 %v4221, 109
        %v4230 = vpop.permute.xlu0 %4229
        %4231 = vrot.lane.b32.xlu0 %v4222, 109
        %v4232 = vpop.permute.xlu0 %4231
        %v4233 = vrot.slane %v4230, 4
        %v4234 = vrot.slane %v4232, 4
        %v4235 = vsel %vm1370, %v4233, %v4234
        %v4236 = vsel %vm2328, %v4230, %v4235
        %s4239 = scalar_lea.vmem %s293, 12 [#allocation4]
        %4240 = vst [vmem:[%s4239] sm:$0xff] %v4236
        %4241 = vst.msk [vmem:[%s4239 + $0x8] sm:$0xf] %vm2333, %v4232
        %s4242 = scalar_lea.vmem %s267, 24 [#allocation3]
        %v4243 = vld [vmem:[%s4242] sm:$0xff]
        %v4244 = vld [vmem:[%s4242 + $0x8] sm:$0xf]
        %v4246 = vcombine.high %v4243, %v4243
        %v4248 = vpack.c.bf16 %v4243, %v4243
        %v4249 = vpack.c.bf16 %v4246, %v4246
        %v4250 = vpack.c.bf16 %v4244, %v4244
        %4254 = vrot.lane.b32.xlu0 %v4248, 127
        %v4255 = vpop.permute.xlu0 %4254
        %4256 = vrot.lane.b32.xlu0 %v4249, 127
        %v4257 = vpop.permute.xlu0 %4256
        %4258 = vrot.lane.b32.xlu0 %v4250, 127
        %v4259 = vpop.permute.xlu0 %4258
        %v4260 = vsel %vm355, %v4255, %v4257
        %v4261 = vsel %vm355, %v4257, %v4259
        %v4263 = vsel %vm362, %v4260, 0
        %v4266 = vsel %vm362, %v4261, 0
        %v4269 = vsel %vm362, %v4259, 0
        %4271 = vmatprep.subr.bf16.mxu0 0
        %4272 = vmatpush1.bf16.msra.mxu0 0
        %4273 = vmatprep.subr.bf16.mxu0 0
        %4274 = vmatpush1.bf16.msra.mxu0 0
        %4275 = vmatprep.subr.bf16.mxu0 0
        %4276 = vmatpush1.bf16.msra.mxu0 0
        %4277 = vmatprep.subr.bf16.mxu0 0
        %4278 = vmatpush1.bf16.msra.mxu0 0
        %4279 = vmatprep.subr.bf16.mxu0 0
        %4280 = vmatpush1.bf16.msra.mxu0 0
        %4281 = vmatprep.subr.bf16.mxu0 0
        %4282 = vmatpush1.bf16.msra.mxu0 0
        %4283 = vmatprep.subr.bf16.mxu0 0
        %4284 = vmatpush1.bf16.msra.mxu0 0
        %4285 = vmatprep.subr.bf16.mxu0 %v4266
        %4286 = vmatpush1.bf16.msra.mxu0 %v4263
        %4287 = vmatprep.subr.bf16.mxu0 0
        %4288 = vmatpush2.bf16.msra.mxu0 0
        %4289 = vmatprep.subr.bf16.mxu0 0
        %4290 = vmatpush2.bf16.msra.mxu0 0
        %4291 = vmatprep.subr.bf16.mxu0 0
        %4292 = vmatpush2.bf16.msra.mxu0 0
        %4293 = vmatprep.subr.bf16.mxu0 0
        %4294 = vmatpush2.bf16.msra.mxu0 0
        %4295 = vmatprep.subr.bf16.mxu0 0
        %4296 = vmatpush2.bf16.msra.mxu0 0
        %4297 = vmatprep.subr.bf16.mxu0 0
        %4298 = vmatpush2.bf16.msra.mxu0 0
        %4299 = vmatprep.subr.bf16.mxu0 0
        %4300 = vmatpush2.bf16.msra.mxu0 0
        %4301 = vmatprep.subr.bf16.mxu0 0
        %4302 = vmatpush2.bf16.msra.mxu0 0
        %4303 = vmatprep.mubr.bf16.mxu0 0
        %4304 = vmatmul.mubr.bf16.gmra.mxu0 %v360
        %v4305 = vpop.f32.mrf.mxu0
        %v4306 = vadd.f32 0.0, %v4305
        %v4307 = vpop.f32.mrf.mxu0
        %v4308 = vadd.f32 0.0, %v4307
        %v4309 = vpop.f32.mrf.mxu0
        %v4310 = vpop.f32.mrf.mxu0
        %4311 = vdwg.mxu0
        %4312 = vmatprep.subr.bf16.mxu0 0
        %4313 = vmatpush1.bf16.msra.mxu0 0
        %4314 = vmatprep.subr.bf16.mxu0 0
        %4315 = vmatpush1.bf16.msra.mxu0 0
        %4316 = vmatprep.subr.bf16.mxu0 0
        %4317 = vmatpush1.bf16.msra.mxu0 0
        %4318 = vmatprep.subr.bf16.mxu0 0
        %4319 = vmatpush1.bf16.msra.mxu0 0
        %4320 = vmatprep.subr.bf16.mxu0 0
        %4321 = vmatpush1.bf16.msra.mxu0 0
        %4322 = vmatprep.subr.bf16.mxu0 0
        %4323 = vmatpush1.bf16.msra.mxu0 0
        %4324 = vmatprep.subr.bf16.mxu0 0
        %4325 = vmatpush1.bf16.msra.mxu0 0
        %4326 = vmatprep.subr.bf16.mxu0 0
        %4327 = vmatpush1.bf16.msra.mxu0 %v4269
        %4328 = vmatprep.subr.bf16.mxu0 0
        %4329 = vmatpush2.bf16.msra.mxu0 0
        %4330 = vmatprep.subr.bf16.mxu0 0
        %4331 = vmatpush2.bf16.msra.mxu0 0
        %4332 = vmatprep.subr.bf16.mxu0 0
        %4333 = vmatpush2.bf16.msra.mxu0 0
        %4334 = vmatprep.subr.bf16.mxu0 0
        %4335 = vmatpush2.bf16.msra.mxu0 0
        %4336 = vmatprep.subr.bf16.mxu0 0
        %4337 = vmatpush2.bf16.msra.mxu0 0
        %4338 = vmatprep.subr.bf16.mxu0 0
        %4339 = vmatpush2.bf16.msra.mxu0 0
        %4340 = vmatprep.subr.bf16.mxu0 0
        %4341 = vmatpush2.bf16.msra.mxu0 0
        %4342 = vmatprep.subr.bf16.mxu0 0
        %4343 = vmatpush2.bf16.msra.mxu0 0
        %4344 = vmatprep.mubr.bf16.mxu0 0
        %4345 = vmatmul.mubr.bf16.gmra.mxu0 %v360
        %v4346 = vpop.f32.mrf.mxu0
        %v4347 = vadd.f32 0.0, %v4346
        %v4348 = vpop.f32.mrf.mxu0
        %v4349 = vpop.f32.mrf.mxu0
        %v4350 = vpop.f32.mrf.mxu0
        %4351 = vdwg.mxu0
        %v4353 = vsel %vm362, %v4248, 0
        %v4356 = vsel %vm362, %v4249, 0
        %v4359 = vsel %vm362, %v4250, 0
        %4361 = vmatprep.subr.bf16.mxu0 0
        %4362 = vmatpush1.bf16.msra.mxu0 0
        %4363 = vmatprep.subr.bf16.mxu0 0
        %4364 = vmatpush1.bf16.msra.mxu0 0
        %4365 = vmatprep.subr.bf16.mxu0 0
        %4366 = vmatpush1.bf16.msra.mxu0 0
        %4367 = vmatprep.subr.bf16.mxu0 0
        %4368 = vmatpush1.bf16.msra.mxu0 0
        %4369 = vmatprep.subr.bf16.mxu0 0
        %4370 = vmatpush1.bf16.msra.mxu0 0
        %4371 = vmatprep.subr.bf16.mxu0 0
        %4372 = vmatpush1.bf16.msra.mxu0 0
        %4373 = vmatprep.subr.bf16.mxu0 0
        %4374 = vmatpush1.bf16.msra.mxu0 0
        %4375 = vmatprep.subr.bf16.mxu0 %v4356
        %4376 = vmatpush1.bf16.msra.mxu0 %v4353
        %4377 = vmatprep.subr.bf16.mxu0 0
        %4378 = vmatpush2.bf16.msra.mxu0 0
        %4379 = vmatprep.subr.bf16.mxu0 0
        %4380 = vmatpush2.bf16.msra.mxu0 0
        %4381 = vmatprep.subr.bf16.mxu0 0
        %4382 = vmatpush2.bf16.msra.mxu0 0
        %4383 = vmatprep.subr.bf16.mxu0 0
        %4384 = vmatpush2.bf16.msra.mxu0 0
        %4385 = vmatprep.subr.bf16.mxu0 0
        %4386 = vmatpush2.bf16.msra.mxu0 0
        %4387 = vmatprep.subr.bf16.mxu0 0
        %4388 = vmatpush2.bf16.msra.mxu0 0
        %4389 = vmatprep.subr.bf16.mxu0 0
        %4390 = vmatpush2.bf16.msra.mxu0 0
        %4391 = vmatprep.subr.bf16.mxu0 0
        %4392 = vmatpush2.bf16.msra.mxu0 0
        %4393 = vmatprep.mubr.bf16.mxu0 0
        %4394 = vmatmul.mubr.bf16.gmra.mxu0 %v454
        %v4395 = vpop.f32.mrf.mxu0
        %v4396 = vadd.f32 %v4306, %v4395
        %v4397 = vpop.f32.mrf.mxu0
        %v4398 = vadd.f32 %v4308, %v4397
        %v4399 = vpop.f32.mrf.mxu0
        %v4400 = vpop.f32.mrf.mxu0
        %4401 = vdwg.mxu0
        %4402 = vmatprep.subr.bf16.mxu0 0
        %4403 = vmatpush1.bf16.msra.mxu0 0
        %4404 = vmatprep.subr.bf16.mxu0 0
        %4405 = vmatpush1.bf16.msra.mxu0 0
        %4406 = vmatprep.subr.bf16.mxu0 0
        %4407 = vmatpush1.bf16.msra.mxu0 0
        %4408 = vmatprep.subr.bf16.mxu0 0
        %4409 = vmatpush1.bf16.msra.mxu0 0
        %4410 = vmatprep.subr.bf16.mxu0 0
        %4411 = vmatpush1.bf16.msra.mxu0 0
        %4412 = vmatprep.subr.bf16.mxu0 0
        %4413 = vmatpush1.bf16.msra.mxu0 0
        %4414 = vmatprep.subr.bf16.mxu0 0
        %4415 = vmatpush1.bf16.msra.mxu0 0
        %4416 = vmatprep.subr.bf16.mxu0 0
        %4417 = vmatpush1.bf16.msra.mxu0 %v4359
        %4418 = vmatprep.subr.bf16.mxu0 0
        %4419 = vmatpush2.bf16.msra.mxu0 0
        %4420 = vmatprep.subr.bf16.mxu0 0
        %4421 = vmatpush2.bf16.msra.mxu0 0
        %4422 = vmatprep.subr.bf16.mxu0 0
        %4423 = vmatpush2.bf16.msra.mxu0 0
        %4424 = vmatprep.subr.bf16.mxu0 0
        %4425 = vmatpush2.bf16.msra.mxu0 0
        %4426 = vmatprep.subr.bf16.mxu0 0
        %4427 = vmatpush2.bf16.msra.mxu0 0
        %4428 = vmatprep.subr.bf16.mxu0 0
        %4429 = vmatpush2.bf16.msra.mxu0 0
        %4430 = vmatprep.subr.bf16.mxu0 0
        %4431 = vmatpush2.bf16.msra.mxu0 0
        %4432 = vmatprep.subr.bf16.mxu0 0
        %4433 = vmatpush2.bf16.msra.mxu0 0
        %4434 = vmatprep.mubr.bf16.mxu0 0
        %4435 = vmatmul.mubr.bf16.gmra.mxu0 %v454
        %v4436 = vpop.f32.mrf.mxu0
        %v4437 = vadd.f32 %v4347, %v4436
        %v4438 = vpop.f32.mrf.mxu0
        %v4439 = vpop.f32.mrf.mxu0
        %v4440 = vpop.f32.mrf.mxu0
        %4441 = vdwg.mxu0
        %4442 = vrot.lane.b32.xlu0 %v4248, 126
        %v4443 = vpop.permute.xlu0 %4442
        %4444 = vrot.lane.b32.xlu0 %v4249, 126
        %v4445 = vpop.permute.xlu0 %4444
        %4446 = vrot.lane.b32.xlu0 %v4250, 126
        %v4447 = vpop.permute.xlu0 %4446
        %v4448 = vsel %vm552, %v4443, %v4445
        %v4449 = vsel %vm552, %v4445, %v4447
        %v4451 = vsel %vm362, %v4448, 0
        %v4454 = vsel %vm362, %v4449, 0
        %v4457 = vsel %vm362, %v4447, 0
        %4459 = vmatprep.subr.bf16.mxu0 0
        %4460 = vmatpush1.bf16.msra.mxu0 0
        %4461 = vmatprep.subr.bf16.mxu0 0
        %4462 = vmatpush1.bf16.msra.mxu0 0
        %4463 = vmatprep.subr.bf16.mxu0 0
        %4464 = vmatpush1.bf16.msra.mxu0 0
        %4465 = vmatprep.subr.bf16.mxu0 0
        %4466 = vmatpush1.bf16.msra.mxu0 0
        %4467 = vmatprep.subr.bf16.mxu0 0
        %4468 = vmatpush1.bf16.msra.mxu0 0
        %4469 = vmatprep.subr.bf16.mxu0 0
        %4470 = vmatpush1.bf16.msra.mxu0 0
        %4471 = vmatprep.subr.bf16.mxu0 0
        %4472 = vmatpush1.bf16.msra.mxu0 0
        %4473 = vmatprep.subr.bf16.mxu0 %v4454
        %4474 = vmatpush1.bf16.msra.mxu0 %v4451
        %4475 = vmatprep.subr.bf16.mxu0 0
        %4476 = vmatpush2.bf16.msra.mxu0 0
        %4477 = vmatprep.subr.bf16.mxu0 0
        %4478 = vmatpush2.bf16.msra.mxu0 0
        %4479 = vmatprep.subr.bf16.mxu0 0
        %4480 = vmatpush2.bf16.msra.mxu0 0
        %4481 = vmatprep.subr.bf16.mxu0 0
        %4482 = vmatpush2.bf16.msra.mxu0 0
        %4483 = vmatprep.subr.bf16.mxu0 0
        %4484 = vmatpush2.bf16.msra.mxu0 0
        %4485 = vmatprep.subr.bf16.mxu0 0
        %4486 = vmatpush2.bf16.msra.mxu0 0
        %4487 = vmatprep.subr.bf16.mxu0 0
        %4488 = vmatpush2.bf16.msra.mxu0 0
        %4489 = vmatprep.subr.bf16.mxu0 0
        %4490 = vmatpush2.bf16.msra.mxu0 0
        %4491 = vmatprep.mubr.bf16.mxu0 0
        %4492 = vmatmul.mubr.bf16.gmra.mxu0 %v556
        %v4493 = vpop.f32.mrf.mxu0
        %v4494 = vadd.f32 0.0, %v4493
        %v4495 = vpop.f32.mrf.mxu0
        %v4496 = vadd.f32 0.0, %v4495
        %v4497 = vpop.f32.mrf.mxu0
        %v4498 = vpop.f32.mrf.mxu0
        %4499 = vdwg.mxu0
        %4500 = vmatprep.subr.bf16.mxu0 0
        %4501 = vmatpush1.bf16.msra.mxu0 0
        %4502 = vmatprep.subr.bf16.mxu0 0
        %4503 = vmatpush1.bf16.msra.mxu0 0
        %4504 = vmatprep.subr.bf16.mxu0 0
        %4505 = vmatpush1.bf16.msra.mxu0 0
        %4506 = vmatprep.subr.bf16.mxu0 0
        %4507 = vmatpush1.bf16.msra.mxu0 0
        %4508 = vmatprep.subr.bf16.mxu0 0
        %4509 = vmatpush1.bf16.msra.mxu0 0
        %4510 = vmatprep.subr.bf16.mxu0 0
        %4511 = vmatpush1.bf16.msra.mxu0 0
        %4512 = vmatprep.subr.bf16.mxu0 0
        %4513 = vmatpush1.bf16.msra.mxu0 0
        %4514 = vmatprep.subr.bf16.mxu0 0
        %4515 = vmatpush1.bf16.msra.mxu0 %v4457
        %4516 = vmatprep.subr.bf16.mxu0 0
        %4517 = vmatpush2.bf16.msra.mxu0 0
        %4518 = vmatprep.subr.bf16.mxu0 0
        %4519 = vmatpush2.bf16.msra.mxu0 0
        %4520 = vmatprep.subr.bf16.mxu0 0
        %4521 = vmatpush2.bf16.msra.mxu0 0
        %4522 = vmatprep.subr.bf16.mxu0 0
        %4523 = vmatpush2.bf16.msra.mxu0 0
        %4524 = vmatprep.subr.bf16.mxu0 0
        %4525 = vmatpush2.bf16.msra.mxu0 0
        %4526 = vmatprep.subr.bf16.mxu0 0
        %4527 = vmatpush2.bf16.msra.mxu0 0
        %4528 = vmatprep.subr.bf16.mxu0 0
        %4529 = vmatpush2.bf16.msra.mxu0 0
        %4530 = vmatprep.subr.bf16.mxu0 0
        %4531 = vmatpush2.bf16.msra.mxu0 0
        %4532 = vmatprep.mubr.bf16.mxu0 0
        %4533 = vmatmul.mubr.bf16.gmra.mxu0 %v556
        %v4534 = vpop.f32.mrf.mxu0
        %v4535 = vadd.f32 0.0, %v4534
        %v4536 = vpop.f32.mrf.mxu0
        %v4537 = vpop.f32.mrf.mxu0
        %v4538 = vpop.f32.mrf.mxu0
        %4539 = vdwg.mxu0
        %v4540 = vadd.f32 %v4396, %v4494
        %v4541 = vadd.f32 %v4398, %v4496
        %v4542 = vadd.f32 %v4437, %v4535
        %4543 = vrot.lane.b32.xlu0 %v4248, 110
        %v4544 = vpop.permute.xlu0 %4543
        %4545 = vrot.lane.b32.xlu0 %v4249, 110
        %v4546 = vpop.permute.xlu0 %4545
        %4547 = vrot.lane.b32.xlu0 %v4250, 110
        %v4548 = vpop.permute.xlu0 %4547
        %v4549 = vsel %vm657, %v4544, %v4546
        %v4550 = vsel %vm657, %v4546, %v4548
        %v4552 = vsel %vm362, %v4549, 0
        %v4555 = vsel %vm362, %v4550, 0
        %v4558 = vsel %vm362, %v4548, 0
        %4560 = vmatprep.subr.bf16.mxu0 0
        %4561 = vmatpush1.bf16.msra.mxu0 0
        %4562 = vmatprep.subr.bf16.mxu0 0
        %4563 = vmatpush1.bf16.msra.mxu0 0
        %4564 = vmatprep.subr.bf16.mxu0 0
        %4565 = vmatpush1.bf16.msra.mxu0 0
        %4566 = vmatprep.subr.bf16.mxu0 0
        %4567 = vmatpush1.bf16.msra.mxu0 0
        %4568 = vmatprep.subr.bf16.mxu0 0
        %4569 = vmatpush1.bf16.msra.mxu0 0
        %4570 = vmatprep.subr.bf16.mxu0 0
        %4571 = vmatpush1.bf16.msra.mxu0 0
        %4572 = vmatprep.subr.bf16.mxu0 0
        %4573 = vmatpush1.bf16.msra.mxu0 0
        %4574 = vmatprep.subr.bf16.mxu0 %v4555
        %4575 = vmatpush1.bf16.msra.mxu0 %v4552
        %4576 = vmatprep.subr.bf16.mxu0 0
        %4577 = vmatpush2.bf16.msra.mxu0 0
        %4578 = vmatprep.subr.bf16.mxu0 0
        %4579 = vmatpush2.bf16.msra.mxu0 0
        %4580 = vmatprep.subr.bf16.mxu0 0
        %4581 = vmatpush2.bf16.msra.mxu0 0
        %4582 = vmatprep.subr.bf16.mxu0 0
        %4583 = vmatpush2.bf16.msra.mxu0 0
        %4584 = vmatprep.subr.bf16.mxu0 0
        %4585 = vmatpush2.bf16.msra.mxu0 0
        %4586 = vmatprep.subr.bf16.mxu0 0
        %4587 = vmatpush2.bf16.msra.mxu0 0
        %4588 = vmatprep.subr.bf16.mxu0 0
        %4589 = vmatpush2.bf16.msra.mxu0 0
        %4590 = vmatprep.subr.bf16.mxu0 0
        %4591 = vmatpush2.bf16.msra.mxu0 0
        %4592 = vmatprep.mubr.bf16.mxu0 0
        %4593 = vmatmul.mubr.bf16.gmra.mxu0 %v661
        %v4594 = vpop.f32.mrf.mxu0
        %v4595 = vadd.f32 0.0, %v4594
        %v4596 = vpop.f32.mrf.mxu0
        %v4597 = vadd.f32 0.0, %v4596
        %v4598 = vpop.f32.mrf.mxu0
        %v4599 = vpop.f32.mrf.mxu0
        %4600 = vdwg.mxu0
        %4601 = vmatprep.subr.bf16.mxu0 0
        %4602 = vmatpush1.bf16.msra.mxu0 0
        %4603 = vmatprep.subr.bf16.mxu0 0
        %4604 = vmatpush1.bf16.msra.mxu0 0
        %4605 = vmatprep.subr.bf16.mxu0 0
        %4606 = vmatpush1.bf16.msra.mxu0 0
        %4607 = vmatprep.subr.bf16.mxu0 0
        %4608 = vmatpush1.bf16.msra.mxu0 0
        %4609 = vmatprep.subr.bf16.mxu0 0
        %4610 = vmatpush1.bf16.msra.mxu0 0
        %4611 = vmatprep.subr.bf16.mxu0 0
        %4612 = vmatpush1.bf16.msra.mxu0 0
        %4613 = vmatprep.subr.bf16.mxu0 0
        %4614 = vmatpush1.bf16.msra.mxu0 0
        %4615 = vmatprep.subr.bf16.mxu0 0
        %4616 = vmatpush1.bf16.msra.mxu0 %v4558
        %4617 = vmatprep.subr.bf16.mxu0 0
        %4618 = vmatpush2.bf16.msra.mxu0 0
        %4619 = vmatprep.subr.bf16.mxu0 0
        %4620 = vmatpush2.bf16.msra.mxu0 0
        %4621 = vmatprep.subr.bf16.mxu0 0
        %4622 = vmatpush2.bf16.msra.mxu0 0
        %4623 = vmatprep.subr.bf16.mxu0 0
        %4624 = vmatpush2.bf16.msra.mxu0 0
        %4625 = vmatprep.subr.bf16.mxu0 0
        %4626 = vmatpush2.bf16.msra.mxu0 0
        %4627 = vmatprep.subr.bf16.mxu0 0
        %4628 = vmatpush2.bf16.msra.mxu0 0
        %4629 = vmatprep.subr.bf16.mxu0 0
        %4630 = vmatpush2.bf16.msra.mxu0 0
        %4631 = vmatprep.subr.bf16.mxu0 0
        %4632 = vmatpush2.bf16.msra.mxu0 0
        %4633 = vmatprep.mubr.bf16.mxu0 0
        %4634 = vmatmul.mubr.bf16.gmra.mxu0 %v661
        %v4635 = vpop.f32.mrf.mxu0
        %v4636 = vadd.f32 0.0, %v4635
        %v4637 = vpop.f32.mrf.mxu0
        %v4638 = vpop.f32.mrf.mxu0
        %v4639 = vpop.f32.mrf.mxu0
        %4640 = vdwg.mxu0
        %v4641 = vadd.f32 %v4540, %v4595
        %v4642 = vadd.f32 %v4541, %v4597
        %v4643 = vadd.f32 %v4542, %v4636
        %4644 = vrot.lane.b32.xlu0 %v4248, 109
        %v4645 = vpop.permute.xlu0 %4644
        %4646 = vrot.lane.b32.xlu0 %v4249, 109
        %v4647 = vpop.permute.xlu0 %4646
        %4648 = vrot.lane.b32.xlu0 %v4250, 109
        %v4649 = vpop.permute.xlu0 %4648
        %v4650 = vsel %vm762, %v4645, %v4647
        %v4651 = vsel %vm762, %v4647, %v4649
        %v4653 = vsel %vm362, %v4650, 0
        %v4656 = vsel %vm362, %v4651, 0
        %v4659 = vsel %vm362, %v4649, 0
        %4661 = vmatprep.subr.bf16.mxu0 0
        %4662 = vmatpush1.bf16.msra.mxu0 0
        %4663 = vmatprep.subr.bf16.mxu0 0
        %4664 = vmatpush1.bf16.msra.mxu0 0
        %4665 = vmatprep.subr.bf16.mxu0 0
        %4666 = vmatpush1.bf16.msra.mxu0 0
        %4667 = vmatprep.subr.bf16.mxu0 0
        %4668 = vmatpush1.bf16.msra.mxu0 0
        %4669 = vmatprep.subr.bf16.mxu0 0
        %4670 = vmatpush1.bf16.msra.mxu0 0
        %4671 = vmatprep.subr.bf16.mxu0 0
        %4672 = vmatpush1.bf16.msra.mxu0 0
        %4673 = vmatprep.subr.bf16.mxu0 0
        %4674 = vmatpush1.bf16.msra.mxu0 0
        %4675 = vmatprep.subr.bf16.mxu0 %v4656
        %4676 = vmatpush1.bf16.msra.mxu0 %v4653
        %4677 = vmatprep.subr.bf16.mxu0 0
        %4678 = vmatpush2.bf16.msra.mxu0 0
        %4679 = vmatprep.subr.bf16.mxu0 0
        %4680 = vmatpush2.bf16.msra.mxu0 0
        %4681 = vmatprep.subr.bf16.mxu0 0
        %4682 = vmatpush2.bf16.msra.mxu0 0
        %4683 = vmatprep.subr.bf16.mxu0 0
        %4684 = vmatpush2.bf16.msra.mxu0 0
        %4685 = vmatprep.subr.bf16.mxu0 0
        %4686 = vmatpush2.bf16.msra.mxu0 0
        %4687 = vmatprep.subr.bf16.mxu0 0
        %4688 = vmatpush2.bf16.msra.mxu0 0
        %4689 = vmatprep.subr.bf16.mxu0 0
        %4690 = vmatpush2.bf16.msra.mxu0 0
        %4691 = vmatprep.subr.bf16.mxu0 0
        %4692 = vmatpush2.bf16.msra.mxu0 0
        %4693 = vmatprep.mubr.bf16.mxu0 0
        %4694 = vmatmul.mubr.bf16.gmra.mxu0 %v766
        %v4695 = vpop.f32.mrf.mxu0
        %v4696 = vadd.f32 0.0, %v4695
        %v4697 = vpop.f32.mrf.mxu0
        %v4698 = vadd.f32 0.0, %v4697
        %v4699 = vpop.f32.mrf.mxu0
        %v4700 = vpop.f32.mrf.mxu0
        %4701 = vdwg.mxu0
        %4702 = vmatprep.subr.bf16.mxu0 0
        %4703 = vmatpush1.bf16.msra.mxu0 0
        %4704 = vmatprep.subr.bf16.mxu0 0
        %4705 = vmatpush1.bf16.msra.mxu0 0
        %4706 = vmatprep.subr.bf16.mxu0 0
        %4707 = vmatpush1.bf16.msra.mxu0 0
        %4708 = vmatprep.subr.bf16.mxu0 0
        %4709 = vmatpush1.bf16.msra.mxu0 0
        %4710 = vmatprep.subr.bf16.mxu0 0
        %4711 = vmatpush1.bf16.msra.mxu0 0
        %4712 = vmatprep.subr.bf16.mxu0 0
        %4713 = vmatpush1.bf16.msra.mxu0 0
        %4714 = vmatprep.subr.bf16.mxu0 0
        %4715 = vmatpush1.bf16.msra.mxu0 0
        %4716 = vmatprep.subr.bf16.mxu0 0
        %4717 = vmatpush1.bf16.msra.mxu0 %v4659
        %4718 = vmatprep.subr.bf16.mxu0 0
        %4719 = vmatpush2.bf16.msra.mxu0 0
        %4720 = vmatprep.subr.bf16.mxu0 0
        %4721 = vmatpush2.bf16.msra.mxu0 0
        %4722 = vmatprep.subr.bf16.mxu0 0
        %4723 = vmatpush2.bf16.msra.mxu0 0
        %4724 = vmatprep.subr.bf16.mxu0 0
        %4725 = vmatpush2.bf16.msra.mxu0 0
        %4726 = vmatprep.subr.bf16.mxu0 0
        %4727 = vmatpush2.bf16.msra.mxu0 0
        %4728 = vmatprep.subr.bf16.mxu0 0
        %4729 = vmatpush2.bf16.msra.mxu0 0
        %4730 = vmatprep.subr.bf16.mxu0 0
        %4731 = vmatpush2.bf16.msra.mxu0 0
        %4732 = vmatprep.subr.bf16.mxu0 0
        %4733 = vmatpush2.bf16.msra.mxu0 0
        %4734 = vmatprep.mubr.bf16.mxu0 0
        %4735 = vmatmul.mubr.bf16.gmra.mxu0 %v766
        %v4736 = vpop.f32.mrf.mxu0
        %v4737 = vadd.f32 0.0, %v4736
        %v4738 = vpop.f32.mrf.mxu0
        %v4739 = vpop.f32.mrf.mxu0
        %v4740 = vpop.f32.mrf.mxu0
        %4741 = vdwg.mxu0
        %v4742 = vadd.f32 %v4641, %v4696
        %v4743 = vadd.f32 %v4642, %v4698
        %v4744 = vadd.f32 %v4643, %v4737
        %4745 = vrot.lane.b32.xlu0 %v4248, 108
        %v4746 = vpop.permute.xlu0 %4745
        %4747 = vrot.lane.b32.xlu0 %v4249, 108
        %v4748 = vpop.permute.xlu0 %4747
        %4749 = vrot.lane.b32.xlu0 %v4250, 108
        %v4750 = vpop.permute.xlu0 %4749
        %v4751 = vsel %vm867, %v4746, %v4748
        %v4752 = vsel %vm867, %v4748, %v4750
        %v4754 = vsel %vm362, %v4751, 0
        %v4757 = vsel %vm362, %v4752, 0
        %v4760 = vsel %vm362, %v4750, 0
        %4762 = vmatprep.subr.bf16.mxu0 0
        %4763 = vmatpush1.bf16.msra.mxu0 0
        %4764 = vmatprep.subr.bf16.mxu0 0
        %4765 = vmatpush1.bf16.msra.mxu0 0
        %4766 = vmatprep.subr.bf16.mxu0 0
        %4767 = vmatpush1.bf16.msra.mxu0 0
        %4768 = vmatprep.subr.bf16.mxu0 0
        %4769 = vmatpush1.bf16.msra.mxu0 0
        %4770 = vmatprep.subr.bf16.mxu0 0
        %4771 = vmatpush1.bf16.msra.mxu0 0
        %4772 = vmatprep.subr.bf16.mxu0 0
        %4773 = vmatpush1.bf16.msra.mxu0 0
        %4774 = vmatprep.subr.bf16.mxu0 0
        %4775 = vmatpush1.bf16.msra.mxu0 0
        %4776 = vmatprep.subr.bf16.mxu0 %v4757
        %4777 = vmatpush1.bf16.msra.mxu0 %v4754
        %4778 = vmatprep.subr.bf16.mxu0 0
        %4779 = vmatpush2.bf16.msra.mxu0 0
        %4780 = vmatprep.subr.bf16.mxu0 0
        %4781 = vmatpush2.bf16.msra.mxu0 0
        %4782 = vmatprep.subr.bf16.mxu0 0
        %4783 = vmatpush2.bf16.msra.mxu0 0
        %4784 = vmatprep.subr.bf16.mxu0 0
        %4785 = vmatpush2.bf16.msra.mxu0 0
        %4786 = vmatprep.subr.bf16.mxu0 0
        %4787 = vmatpush2.bf16.msra.mxu0 0
        %4788 = vmatprep.subr.bf16.mxu0 0
        %4789 = vmatpush2.bf16.msra.mxu0 0
        %4790 = vmatprep.subr.bf16.mxu0 0
        %4791 = vmatpush2.bf16.msra.mxu0 0
        %4792 = vmatprep.subr.bf16.mxu0 0
        %4793 = vmatpush2.bf16.msra.mxu0 0
        %4794 = vmatprep.mubr.bf16.mxu0 0
        %4795 = vmatmul.mubr.bf16.gmra.mxu0 %v871
        %v4796 = vpop.f32.mrf.mxu0
        %v4797 = vadd.f32 0.0, %v4796
        %v4798 = vpop.f32.mrf.mxu0
        %v4799 = vadd.f32 0.0, %v4798
        %v4800 = vpop.f32.mrf.mxu0
        %v4801 = vpop.f32.mrf.mxu0
        %4802 = vdwg.mxu0
        %4803 = vmatprep.subr.bf16.mxu0 0
        %4804 = vmatpush1.bf16.msra.mxu0 0
        %4805 = vmatprep.subr.bf16.mxu0 0
        %4806 = vmatpush1.bf16.msra.mxu0 0
        %4807 = vmatprep.subr.bf16.mxu0 0
        %4808 = vmatpush1.bf16.msra.mxu0 0
        %4809 = vmatprep.subr.bf16.mxu0 0
        %4810 = vmatpush1.bf16.msra.mxu0 0
        %4811 = vmatprep.subr.bf16.mxu0 0
        %4812 = vmatpush1.bf16.msra.mxu0 0
        %4813 = vmatprep.subr.bf16.mxu0 0
        %4814 = vmatpush1.bf16.msra.mxu0 0
        %4815 = vmatprep.subr.bf16.mxu0 0
        %4816 = vmatpush1.bf16.msra.mxu0 0
        %4817 = vmatprep.subr.bf16.mxu0 0
        %4818 = vmatpush1.bf16.msra.mxu0 %v4760
        %4819 = vmatprep.subr.bf16.mxu0 0
        %4820 = vmatpush2.bf16.msra.mxu0 0
        %4821 = vmatprep.subr.bf16.mxu0 0
        %4822 = vmatpush2.bf16.msra.mxu0 0
        %4823 = vmatprep.subr.bf16.mxu0 0
        %4824 = vmatpush2.bf16.msra.mxu0 0
        %4825 = vmatprep.subr.bf16.mxu0 0
        %4826 = vmatpush2.bf16.msra.mxu0 0
        %4827 = vmatprep.subr.bf16.mxu0 0
        %4828 = vmatpush2.bf16.msra.mxu0 0
        %4829 = vmatprep.subr.bf16.mxu0 0
        %4830 = vmatpush2.bf16.msra.mxu0 0
        %4831 = vmatprep.subr.bf16.mxu0 0
        %4832 = vmatpush2.bf16.msra.mxu0 0
        %4833 = vmatprep.subr.bf16.mxu0 0
        %4834 = vmatpush2.bf16.msra.mxu0 0
        %4835 = vmatprep.mubr.bf16.mxu0 0
        %4836 = vmatmul.mubr.bf16.gmra.mxu0 %v871
        %v4837 = vpop.f32.mrf.mxu0
        %v4838 = vadd.f32 0.0, %v4837
        %v4839 = vpop.f32.mrf.mxu0
        %v4840 = vpop.f32.mrf.mxu0
        %v4841 = vpop.f32.mrf.mxu0
        %4842 = vdwg.mxu0
        %v4843 = vadd.f32 %v4742, %v4797
        %v4844 = vadd.f32 %v4743, %v4799
        %v4845 = vadd.f32 %v4744, %v4838
        %4846 = vrot.lane.b32.xlu0 %v4248, 92
        %v4847 = vpop.permute.xlu0 %4846
        %4848 = vrot.lane.b32.xlu0 %v4249, 92
        %v4849 = vpop.permute.xlu0 %4848
        %4850 = vrot.lane.b32.xlu0 %v4250, 92
        %v4851 = vpop.permute.xlu0 %4850
        %v4852 = vsel %vm972, %v4847, %v4849
        %v4853 = vsel %vm972, %v4849, %v4851
        %v4855 = vsel %vm362, %v4852, 0
        %v4858 = vsel %vm362, %v4853, 0
        %v4861 = vsel %vm362, %v4851, 0
        %4863 = vmatprep.subr.bf16.mxu0 0
        %4864 = vmatpush1.bf16.msra.mxu0 0
        %4865 = vmatprep.subr.bf16.mxu0 0
        %4866 = vmatpush1.bf16.msra.mxu0 0
        %4867 = vmatprep.subr.bf16.mxu0 0
        %4868 = vmatpush1.bf16.msra.mxu0 0
        %4869 = vmatprep.subr.bf16.mxu0 0
        %4870 = vmatpush1.bf16.msra.mxu0 0
        %4871 = vmatprep.subr.bf16.mxu0 0
        %4872 = vmatpush1.bf16.msra.mxu0 0
        %4873 = vmatprep.subr.bf16.mxu0 0
        %4874 = vmatpush1.bf16.msra.mxu0 0
        %4875 = vmatprep.subr.bf16.mxu0 0
        %4876 = vmatpush1.bf16.msra.mxu0 0
        %4877 = vmatprep.subr.bf16.mxu0 %v4858
        %4878 = vmatpush1.bf16.msra.mxu0 %v4855
        %4879 = vmatprep.subr.bf16.mxu0 0
        %4880 = vmatpush2.bf16.msra.mxu0 0
        %4881 = vmatprep.subr.bf16.mxu0 0
        %4882 = vmatpush2.bf16.msra.mxu0 0
        %4883 = vmatprep.subr.bf16.mxu0 0
        %4884 = vmatpush2.bf16.msra.mxu0 0
        %4885 = vmatprep.subr.bf16.mxu0 0
        %4886 = vmatpush2.bf16.msra.mxu0 0
        %4887 = vmatprep.subr.bf16.mxu0 0
        %4888 = vmatpush2.bf16.msra.mxu0 0
        %4889 = vmatprep.subr.bf16.mxu0 0
        %4890 = vmatpush2.bf16.msra.mxu0 0
        %4891 = vmatprep.subr.bf16.mxu0 0
        %4892 = vmatpush2.bf16.msra.mxu0 0
        %4893 = vmatprep.subr.bf16.mxu0 0
        %4894 = vmatpush2.bf16.msra.mxu0 0
        %4895 = vmatprep.mubr.bf16.mxu0 0
        %4896 = vmatmul.mubr.bf16.gmra.mxu0 %v976
        %v4897 = vpop.f32.mrf.mxu0
        %v4898 = vadd.f32 0.0, %v4897
        %v4899 = vpop.f32.mrf.mxu0
        %v4900 = vadd.f32 0.0, %v4899
        %v4901 = vpop.f32.mrf.mxu0
        %v4902 = vpop.f32.mrf.mxu0
        %4903 = vdwg.mxu0
        %4904 = vmatprep.subr.bf16.mxu0 0
        %4905 = vmatpush1.bf16.msra.mxu0 0
        %4906 = vmatprep.subr.bf16.mxu0 0
        %4907 = vmatpush1.bf16.msra.mxu0 0
        %4908 = vmatprep.subr.bf16.mxu0 0
        %4909 = vmatpush1.bf16.msra.mxu0 0
        %4910 = vmatprep.subr.bf16.mxu0 0
        %4911 = vmatpush1.bf16.msra.mxu0 0
        %4912 = vmatprep.subr.bf16.mxu0 0
        %4913 = vmatpush1.bf16.msra.mxu0 0
        %4914 = vmatprep.subr.bf16.mxu0 0
        %4915 = vmatpush1.bf16.msra.mxu0 0
        %4916 = vmatprep.subr.bf16.mxu0 0
        %4917 = vmatpush1.bf16.msra.mxu0 0
        %4918 = vmatprep.subr.bf16.mxu0 0
        %4919 = vmatpush1.bf16.msra.mxu0 %v4861
        %4920 = vmatprep.subr.bf16.mxu0 0
        %4921 = vmatpush2.bf16.msra.mxu0 0
        %4922 = vmatprep.subr.bf16.mxu0 0
        %4923 = vmatpush2.bf16.msra.mxu0 0
        %4924 = vmatprep.subr.bf16.mxu0 0
        %4925 = vmatpush2.bf16.msra.mxu0 0
        %4926 = vmatprep.subr.bf16.mxu0 0
        %4927 = vmatpush2.bf16.msra.mxu0 0
        %4928 = vmatprep.subr.bf16.mxu0 0
        %4929 = vmatpush2.bf16.msra.mxu0 0
        %4930 = vmatprep.subr.bf16.mxu0 0
        %4931 = vmatpush2.bf16.msra.mxu0 0
        %4932 = vmatprep.subr.bf16.mxu0 0
        %4933 = vmatpush2.bf16.msra.mxu0 0
        %4934 = vmatprep.subr.bf16.mxu0 0
        %4935 = vmatpush2.bf16.msra.mxu0 0
        %4936 = vmatprep.mubr.bf16.mxu0 0
        %4937 = vmatmul.mubr.bf16.gmra.mxu0 %v976
        %v4938 = vpop.f32.mrf.mxu0
        %v4939 = vadd.f32 0.0, %v4938
        %v4940 = vpop.f32.mrf.mxu0
        %v4941 = vpop.f32.mrf.mxu0
        %v4942 = vpop.f32.mrf.mxu0
        %4943 = vdwg.mxu0
        %v4944 = vadd.f32 %v4843, %v4898
        %v4945 = vadd.f32 %v4844, %v4900
        %v4946 = vadd.f32 %v4845, %v4939
        %4947 = vrot.lane.b32.xlu0 %v4248, 91
        %v4948 = vpop.permute.xlu0 %4947
        %4949 = vrot.lane.b32.xlu0 %v4249, 91
        %v4950 = vpop.permute.xlu0 %4949
        %4951 = vrot.lane.b32.xlu0 %v4250, 91
        %v4952 = vpop.permute.xlu0 %4951
        %v4953 = vsel %vm1077, %v4948, %v4950
        %v4954 = vsel %vm1077, %v4950, %v4952
        %v4956 = vsel %vm362, %v4953, 0
        %v4959 = vsel %vm362, %v4954, 0
        %v4962 = vsel %vm362, %v4952, 0
        %4964 = vmatprep.subr.bf16.mxu0 0
        %4965 = vmatpush1.bf16.msra.mxu0 0
        %4966 = vmatprep.subr.bf16.mxu0 0
        %4967 = vmatpush1.bf16.msra.mxu0 0
        %4968 = vmatprep.subr.bf16.mxu0 0
        %4969 = vmatpush1.bf16.msra.mxu0 0
        %4970 = vmatprep.subr.bf16.mxu0 0
        %4971 = vmatpush1.bf16.msra.mxu0 0
        %4972 = vmatprep.subr.bf16.mxu0 0
        %4973 = vmatpush1.bf16.msra.mxu0 0
        %4974 = vmatprep.subr.bf16.mxu0 0
        %4975 = vmatpush1.bf16.msra.mxu0 0
        %4976 = vmatprep.subr.bf16.mxu0 0
        %4977 = vmatpush1.bf16.msra.mxu0 0
        %4978 = vmatprep.subr.bf16.mxu0 %v4959
        %4979 = vmatpush1.bf16.msra.mxu0 %v4956
        %4980 = vmatprep.subr.bf16.mxu0 0
        %4981 = vmatpush2.bf16.msra.mxu0 0
        %4982 = vmatprep.subr.bf16.mxu0 0
        %4983 = vmatpush2.bf16.msra.mxu0 0
        %4984 = vmatprep.subr.bf16.mxu0 0
        %4985 = vmatpush2.bf16.msra.mxu0 0
        %4986 = vmatprep.subr.bf16.mxu0 0
        %4987 = vmatpush2.bf16.msra.mxu0 0
        %4988 = vmatprep.subr.bf16.mxu0 0
        %4989 = vmatpush2.bf16.msra.mxu0 0
        %4990 = vmatprep.subr.bf16.mxu0 0
        %4991 = vmatpush2.bf16.msra.mxu0 0
        %4992 = vmatprep.subr.bf16.mxu0 0
        %4993 = vmatpush2.bf16.msra.mxu0 0
        %4994 = vmatprep.subr.bf16.mxu0 0
        %4995 = vmatpush2.bf16.msra.mxu0 0
        %4996 = vmatprep.mubr.bf16.mxu0 0
        %4997 = vmatmul.mubr.bf16.gmra.mxu0 %v1081
        %v4998 = vpop.f32.mrf.mxu0
        %v4999 = vadd.f32 0.0, %v4998
        %v5000 = vpop.f32.mrf.mxu0
        %v5001 = vadd.f32 0.0, %v5000
        %v5002 = vpop.f32.mrf.mxu0
        %v5003 = vpop.f32.mrf.mxu0
        %5004 = vdwg.mxu0
        %5005 = vmatprep.subr.bf16.mxu0 0
        %5006 = vmatpush1.bf16.msra.mxu0 0
        %5007 = vmatprep.subr.bf16.mxu0 0
        %5008 = vmatpush1.bf16.msra.mxu0 0
        %5009 = vmatprep.subr.bf16.mxu0 0
        %5010 = vmatpush1.bf16.msra.mxu0 0
        %5011 = vmatprep.subr.bf16.mxu0 0
        %5012 = vmatpush1.bf16.msra.mxu0 0
        %5013 = vmatprep.subr.bf16.mxu0 0
        %5014 = vmatpush1.bf16.msra.mxu0 0
        %5015 = vmatprep.subr.bf16.mxu0 0
        %5016 = vmatpush1.bf16.msra.mxu0 0
        %5017 = vmatprep.subr.bf16.mxu0 0
        %5018 = vmatpush1.bf16.msra.mxu0 0
        %5019 = vmatprep.subr.bf16.mxu0 0
        %5020 = vmatpush1.bf16.msra.mxu0 %v4962
        %5021 = vmatprep.subr.bf16.mxu0 0
        %5022 = vmatpush2.bf16.msra.mxu0 0
        %5023 = vmatprep.subr.bf16.mxu0 0
        %5024 = vmatpush2.bf16.msra.mxu0 0
        %5025 = vmatprep.subr.bf16.mxu0 0
        %5026 = vmatpush2.bf16.msra.mxu0 0
        %5027 = vmatprep.subr.bf16.mxu0 0
        %5028 = vmatpush2.bf16.msra.mxu0 0
        %5029 = vmatprep.subr.bf16.mxu0 0
        %5030 = vmatpush2.bf16.msra.mxu0 0
        %5031 = vmatprep.subr.bf16.mxu0 0
        %5032 = vmatpush2.bf16.msra.mxu0 0
        %5033 = vmatprep.subr.bf16.mxu0 0
        %5034 = vmatpush2.bf16.msra.mxu0 0
        %5035 = vmatprep.subr.bf16.mxu0 0
        %5036 = vmatpush2.bf16.msra.mxu0 0
        %5037 = vmatprep.mubr.bf16.mxu0 0
        %5038 = vmatmul.mubr.bf16.gmra.mxu0 %v1081
        %v5039 = vpop.f32.mrf.mxu0
        %v5040 = vadd.f32 0.0, %v5039
        %v5041 = vpop.f32.mrf.mxu0
        %v5042 = vpop.f32.mrf.mxu0
        %v5043 = vpop.f32.mrf.mxu0
        %5044 = vdwg.mxu0
        %v5045 = vadd.f32 %v4944, %v4999
        %v5046 = vadd.f32 %v4945, %v5001
        %v5047 = vadd.f32 %v4946, %v5040
        %5048 = vrot.lane.b32.xlu0 %v4248, 90
        %v5049 = vpop.permute.xlu0 %5048
        %5050 = vrot.lane.b32.xlu0 %v4249, 90
        %v5051 = vpop.permute.xlu0 %5050
        %5052 = vrot.lane.b32.xlu0 %v4250, 90
        %v5053 = vpop.permute.xlu0 %5052
        %v5054 = vsel %vm1182, %v5049, %v5051
        %v5055 = vsel %vm1182, %v5051, %v5053
        %v5057 = vsel %vm362, %v5054, 0
        %v5060 = vsel %vm362, %v5055, 0
        %v5063 = vsel %vm362, %v5053, 0
        %5065 = vmatprep.subr.bf16.mxu0 0
        %5066 = vmatpush1.bf16.msra.mxu0 0
        %5067 = vmatprep.subr.bf16.mxu0 0
        %5068 = vmatpush1.bf16.msra.mxu0 0
        %5069 = vmatprep.subr.bf16.mxu0 0
        %5070 = vmatpush1.bf16.msra.mxu0 0
        %5071 = vmatprep.subr.bf16.mxu0 0
        %5072 = vmatpush1.bf16.msra.mxu0 0
        %5073 = vmatprep.subr.bf16.mxu0 0
        %5074 = vmatpush1.bf16.msra.mxu0 0
        %5075 = vmatprep.subr.bf16.mxu0 0
        %5076 = vmatpush1.bf16.msra.mxu0 0
        %5077 = vmatprep.subr.bf16.mxu0 0
        %5078 = vmatpush1.bf16.msra.mxu0 0
        %5079 = vmatprep.subr.bf16.mxu0 %v5060
        %5080 = vmatpush1.bf16.msra.mxu0 %v5057
        %5081 = vmatprep.subr.bf16.mxu0 0
        %5082 = vmatpush2.bf16.msra.mxu0 0
        %5083 = vmatprep.subr.bf16.mxu0 0
        %5084 = vmatpush2.bf16.msra.mxu0 0
        %5085 = vmatprep.subr.bf16.mxu0 0
        %5086 = vmatpush2.bf16.msra.mxu0 0
        %5087 = vmatprep.subr.bf16.mxu0 0
        %5088 = vmatpush2.bf16.msra.mxu0 0
        %5089 = vmatprep.subr.bf16.mxu0 0
        %5090 = vmatpush2.bf16.msra.mxu0 0
        %5091 = vmatprep.subr.bf16.mxu0 0
        %5092 = vmatpush2.bf16.msra.mxu0 0
        %5093 = vmatprep.subr.bf16.mxu0 0
        %5094 = vmatpush2.bf16.msra.mxu0 0
        %5095 = vmatprep.subr.bf16.mxu0 0
        %5096 = vmatpush2.bf16.msra.mxu0 0
        %5097 = vmatprep.mubr.bf16.mxu0 0
        %5098 = vmatmul.mubr.bf16.gmra.mxu0 %v1186
        %v5099 = vpop.f32.mrf.mxu0
        %v5100 = vadd.f32 0.0, %v5099
        %v5101 = vpop.f32.mrf.mxu0
        %v5102 = vadd.f32 0.0, %v5101
        %v5103 = vpop.f32.mrf.mxu0
        %v5104 = vpop.f32.mrf.mxu0
        %5105 = vdwg.mxu0
        %5106 = vmatprep.subr.bf16.mxu0 0
        %5107 = vmatpush1.bf16.msra.mxu0 0
        %5108 = vmatprep.subr.bf16.mxu0 0
        %5109 = vmatpush1.bf16.msra.mxu0 0
        %5110 = vmatprep.subr.bf16.mxu0 0
        %5111 = vmatpush1.bf16.msra.mxu0 0
        %5112 = vmatprep.subr.bf16.mxu0 0
        %5113 = vmatpush1.bf16.msra.mxu0 0
        %5114 = vmatprep.subr.bf16.mxu0 0
        %5115 = vmatpush1.bf16.msra.mxu0 0
        %5116 = vmatprep.subr.bf16.mxu0 0
        %5117 = vmatpush1.bf16.msra.mxu0 0
        %5118 = vmatprep.subr.bf16.mxu0 0
        %5119 = vmatpush1.bf16.msra.mxu0 0
        %5120 = vmatprep.subr.bf16.mxu0 0
        %5121 = vmatpush1.bf16.msra.mxu0 %v5063
        %5122 = vmatprep.subr.bf16.mxu0 0
        %5123 = vmatpush2.bf16.msra.mxu0 0
        %5124 = vmatprep.subr.bf16.mxu0 0
        %5125 = vmatpush2.bf16.msra.mxu0 0
        %5126 = vmatprep.subr.bf16.mxu0 0
        %5127 = vmatpush2.bf16.msra.mxu0 0
        %5128 = vmatprep.subr.bf16.mxu0 0
        %5129 = vmatpush2.bf16.msra.mxu0 0
        %5130 = vmatprep.subr.bf16.mxu0 0
        %5131 = vmatpush2.bf16.msra.mxu0 0
        %5132 = vmatprep.subr.bf16.mxu0 0
        %5133 = vmatpush2.bf16.msra.mxu0 0
        %5134 = vmatprep.subr.bf16.mxu0 0
        %5135 = vmatpush2.bf16.msra.mxu0 0
        %5136 = vmatprep.subr.bf16.mxu0 0
        %5137 = vmatpush2.bf16.msra.mxu0 0
        %5138 = vmatprep.mubr.bf16.mxu0 0
        %5139 = vmatmul.mubr.bf16.gmra.mxu0 %v1186
        %v5140 = vpop.f32.mrf.mxu0
        %v5141 = vadd.f32 0.0, %v5140
        %v5142 = vpop.f32.mrf.mxu0
        %v5143 = vpop.f32.mrf.mxu0
        %v5144 = vpop.f32.mrf.mxu0
        %5145 = vdwg.mxu0
        %v5146 = vadd.f32 %v5045, %v5100
        %v5147 = vadd.f32 %v5046, %v5102
        %v5148 = vadd.f32 %v5047, %v5141
        %v5149 = vadd.f32 %v5146, %v1284
        %v5150 = vadd.f32 %v5147, %v1284
        %v5151 = vadd.f32 %v5148, %v1284
        %v5152 = vsub.f32 %v5149, %v3266
        %v5153 = vsub.f32 %v5150, %v3267
        %v5154 = vsub.f32 %v5151, %v3268
        %v5155 = vmul.f32 %v5152, 0.5
        %v5156 = vmul.f32 %v5153, 0.5
        %v5157 = vmul.f32 %v5154, 0.5
        %v5158 = vadd.f32 %v3266, %v5155
        %v5159 = vadd.f32 %v3267, %v5156
        %v5160 = vadd.f32 %v3268, %v5157
        %vm5161 = vcmp.ge.f32.partialorder %v5158, 1.0
        %vm5162 = vcmp.ge.f32.partialorder %v5159, 1.0
        %vm5163 = vcmp.ge.f32.partialorder %v5160, 1.0
        %v5164 = vsel %vm5161, 1, 0
        %v5165 = vsel %vm5162, 1, 0
        %v5166 = vsel %vm5163, 1, 0
        %v5167 = vcvt.s32.f32 %v5164
        %v5168 = vcvt.s32.f32 %v5165
        %v5169 = vcvt.s32.f32 %v5166
        %v5170 = vsub.f32 1.0, %v5167
        %v5171 = vsub.f32 1.0, %v5168
        %v5172 = vsub.f32 1.0, %v5169
        %v5173 = vmul.f32 %v5158, %v5170
        %v5174 = vmul.f32 %v5159, %v5171
        %v5175 = vmul.f32 %v5160, %v5172
        %v5176 = vmul.f32 %v5167, %v1314
        %v5177 = vmul.f32 %v5168, %v1318
        %v5178 = vmul.f32 %v5169, %v1322
        %5182 = vrot.lane.b32.xlu0 %v5176, 19
        %v5183 = vpop.permute.xlu0 %5182
        %5184 = vrot.lane.b32.xlu0 %v5177, 19
        %v5185 = vpop.permute.xlu0 %5184
        %5186 = vrot.lane.b32.xlu0 %v5178, 19
        %v5187 = vpop.permute.xlu0 %5186
        %v5188 = vsel %vm1338, %v5183, %v5185
        %v5189 = vsel %vm1338, %v5185, %v5187
        %5193 = vst.msk [vmem:[#allocation2] sm:$0xff] %vm1344, %v5183
        %5194 = vst [vmem:[#allocation2 + $0x8] sm:$0xff] %v5188
        %5195 = vst.msk [vmem:[#allocation2 + $0x10] sm:$0xff] %vm1347, %v5189
        %v5196 = vld [vmem:[#allocation2] sm:$0xff]
        %v5197 = vld [vmem:[#allocation2 + $0x8] sm:$0xff]
        %v5198 = vld [vmem:[#allocation2 + $0x10] sm:$0xff]
        %v5199 = vpack.c.bf16 %v5196, %v5196
        %v5200 = vpack.c.bf16 %v5197, %v5197
        %v5201 = vpack.c.bf16 %v5198, %v5198
        %5205 = vrot.lane.b32.xlu0 %v5199, 127
        %v5206 = vpop.permute.xlu0 %5205
        %5207 = vrot.lane.b32.xlu0 %v5200, 127
        %v5208 = vpop.permute.xlu0 %5207
        %5209 = vrot.lane.b32.xlu0 %v5201, 127
        %v5210 = vpop.permute.xlu0 %5209
        %v5211 = vsel %vm355, %v5206, %v5208
        %v5212 = vsel %vm355, %v5208, %v5210
        %v5214 = vsel %vm1370, %v5211, 0
        %v5217 = vsel %vm1370, %v5212, 0
        %v5220 = vsel %vm1370, %v5210, 0
        %5222 = vmatprep.subr.bf16.mxu0 0
        %5223 = vmatpush1.bf16.msra.mxu0 0
        %5224 = vmatprep.subr.bf16.mxu0 0
        %5225 = vmatpush1.bf16.msra.mxu0 0
        %5226 = vmatprep.subr.bf16.mxu0 0
        %5227 = vmatpush1.bf16.msra.mxu0 0
        %5228 = vmatprep.subr.bf16.mxu0 0
        %5229 = vmatpush1.bf16.msra.mxu0 0
        %5230 = vmatprep.subr.bf16.mxu0 0
        %5231 = vmatpush1.bf16.msra.mxu0 0
        %5232 = vmatprep.subr.bf16.mxu0 0
        %5233 = vmatpush1.bf16.msra.mxu0 0
        %5234 = vmatprep.subr.bf16.mxu0 0
        %5235 = vmatpush1.bf16.msra.mxu0 0
        %5236 = vmatprep.subr.bf16.mxu0 %v5217
        %5237 = vmatpush1.bf16.msra.mxu0 %v5214
        %5238 = vmatprep.subr.bf16.mxu0 0
        %5239 = vmatpush2.bf16.msra.mxu0 0
        %5240 = vmatprep.subr.bf16.mxu0 0
        %5241 = vmatpush2.bf16.msra.mxu0 0
        %5242 = vmatprep.subr.bf16.mxu0 0
        %5243 = vmatpush2.bf16.msra.mxu0 0
        %5244 = vmatprep.subr.bf16.mxu0 0
        %5245 = vmatpush2.bf16.msra.mxu0 0
        %5246 = vmatprep.subr.bf16.mxu0 0
        %5247 = vmatpush2.bf16.msra.mxu0 0
        %5248 = vmatprep.subr.bf16.mxu0 0
        %5249 = vmatpush2.bf16.msra.mxu0 0
        %5250 = vmatprep.subr.bf16.mxu0 0
        %5251 = vmatpush2.bf16.msra.mxu0 0
        %5252 = vmatprep.subr.bf16.mxu0 0
        %5253 = vmatpush2.bf16.msra.mxu0 0
        %5254 = vmatprep.mubr.bf16.mxu0 0
        %5255 = vmatmul.mubr.bf16.gmra.mxu0 %v1368
        %v5256 = vpop.f32.mrf.mxu0
        %v5257 = vadd.f32 0.0, %v5256
        %v5258 = vpop.f32.mrf.mxu0
        %v5259 = vadd.f32 0.0, %v5258
        %v5260 = vpop.f32.mrf.mxu0
        %v5261 = vpop.f32.mrf.mxu0
        %5262 = vdwg.mxu0
        %5263 = vmatprep.subr.bf16.mxu0 0
        %5264 = vmatpush1.bf16.msra.mxu0 0
        %5265 = vmatprep.subr.bf16.mxu0 0
        %5266 = vmatpush1.bf16.msra.mxu0 0
        %5267 = vmatprep.subr.bf16.mxu0 0
        %5268 = vmatpush1.bf16.msra.mxu0 0
        %5269 = vmatprep.subr.bf16.mxu0 0
        %5270 = vmatpush1.bf16.msra.mxu0 0
        %5271 = vmatprep.subr.bf16.mxu0 0
        %5272 = vmatpush1.bf16.msra.mxu0 0
        %5273 = vmatprep.subr.bf16.mxu0 0
        %5274 = vmatpush1.bf16.msra.mxu0 0
        %5275 = vmatprep.subr.bf16.mxu0 0
        %5276 = vmatpush1.bf16.msra.mxu0 0
        %5277 = vmatprep.subr.bf16.mxu0 0
        %5278 = vmatpush1.bf16.msra.mxu0 %v5220
        %5279 = vmatprep.subr.bf16.mxu0 0
        %5280 = vmatpush2.bf16.msra.mxu0 0
        %5281 = vmatprep.subr.bf16.mxu0 0
        %5282 = vmatpush2.bf16.msra.mxu0 0
        %5283 = vmatprep.subr.bf16.mxu0 0
        %5284 = vmatpush2.bf16.msra.mxu0 0
        %5285 = vmatprep.subr.bf16.mxu0 0
        %5286 = vmatpush2.bf16.msra.mxu0 0
        %5287 = vmatprep.subr.bf16.mxu0 0
        %5288 = vmatpush2.bf16.msra.mxu0 0
        %5289 = vmatprep.subr.bf16.mxu0 0
        %5290 = vmatpush2.bf16.msra.mxu0 0
        %5291 = vmatprep.subr.bf16.mxu0 0
        %5292 = vmatpush2.bf16.msra.mxu0 0
        %5293 = vmatprep.subr.bf16.mxu0 0
        %5294 = vmatpush2.bf16.msra.mxu0 0
        %5295 = vmatprep.mubr.bf16.mxu0 0
        %5296 = vmatmul.mubr.bf16.gmra.mxu0 %v1368
        %v5297 = vpop.f32.mrf.mxu0
        %v5298 = vadd.f32 0.0, %v5297
        %v5299 = vpop.f32.mrf.mxu0
        %v5300 = vpop.f32.mrf.mxu0
        %v5301 = vpop.f32.mrf.mxu0
        %5302 = vdwg.mxu0
        %v5304 = vsel %vm1370, %v5199, 0
        %v5307 = vsel %vm1370, %v5200, 0
        %v5310 = vsel %vm1370, %v5201, 0
        %5312 = vmatprep.subr.bf16.mxu0 0
        %5313 = vmatpush1.bf16.msra.mxu0 0
        %5314 = vmatprep.subr.bf16.mxu0 0
        %5315 = vmatpush1.bf16.msra.mxu0 0
        %5316 = vmatprep.subr.bf16.mxu0 0
        %5317 = vmatpush1.bf16.msra.mxu0 0
        %5318 = vmatprep.subr.bf16.mxu0 0
        %5319 = vmatpush1.bf16.msra.mxu0 0
        %5320 = vmatprep.subr.bf16.mxu0 0
        %5321 = vmatpush1.bf16.msra.mxu0 0
        %5322 = vmatprep.subr.bf16.mxu0 0
        %5323 = vmatpush1.bf16.msra.mxu0 0
        %5324 = vmatprep.subr.bf16.mxu0 0
        %5325 = vmatpush1.bf16.msra.mxu0 0
        %5326 = vmatprep.subr.bf16.mxu0 %v5307
        %5327 = vmatpush1.bf16.msra.mxu0 %v5304
        %5328 = vmatprep.subr.bf16.mxu0 0
        %5329 = vmatpush2.bf16.msra.mxu0 0
        %5330 = vmatprep.subr.bf16.mxu0 0
        %5331 = vmatpush2.bf16.msra.mxu0 0
        %5332 = vmatprep.subr.bf16.mxu0 0
        %5333 = vmatpush2.bf16.msra.mxu0 0
        %5334 = vmatprep.subr.bf16.mxu0 0
        %5335 = vmatpush2.bf16.msra.mxu0 0
        %5336 = vmatprep.subr.bf16.mxu0 0
        %5337 = vmatpush2.bf16.msra.mxu0 0
        %5338 = vmatprep.subr.bf16.mxu0 0
        %5339 = vmatpush2.bf16.msra.mxu0 0
        %5340 = vmatprep.subr.bf16.mxu0 0
        %5341 = vmatpush2.bf16.msra.mxu0 0
        %5342 = vmatprep.subr.bf16.mxu0 0
        %5343 = vmatpush2.bf16.msra.mxu0 0
        %5344 = vmatprep.mubr.bf16.mxu0 0
        %5345 = vmatmul.mubr.bf16.gmra.mxu0 %v1462
        %v5346 = vpop.f32.mrf.mxu0
        %v5347 = vadd.f32 %v5257, %v5346
        %v5348 = vpop.f32.mrf.mxu0
        %v5349 = vadd.f32 %v5259, %v5348
        %v5350 = vpop.f32.mrf.mxu0
        %v5351 = vpop.f32.mrf.mxu0
        %5352 = vdwg.mxu0
        %5353 = vmatprep.subr.bf16.mxu0 0
        %5354 = vmatpush1.bf16.msra.mxu0 0
        %5355 = vmatprep.subr.bf16.mxu0 0
        %5356 = vmatpush1.bf16.msra.mxu0 0
        %5357 = vmatprep.subr.bf16.mxu0 0
        %5358 = vmatpush1.bf16.msra.mxu0 0
        %5359 = vmatprep.subr.bf16.mxu0 0
        %5360 = vmatpush1.bf16.msra.mxu0 0
        %5361 = vmatprep.subr.bf16.mxu0 0
        %5362 = vmatpush1.bf16.msra.mxu0 0
        %5363 = vmatprep.subr.bf16.mxu0 0
        %5364 = vmatpush1.bf16.msra.mxu0 0
        %5365 = vmatprep.subr.bf16.mxu0 0
        %5366 = vmatpush1.bf16.msra.mxu0 0
        %5367 = vmatprep.subr.bf16.mxu0 0
        %5368 = vmatpush1.bf16.msra.mxu0 %v5310
        %5369 = vmatprep.subr.bf16.mxu0 0
        %5370 = vmatpush2.bf16.msra.mxu0 0
        %5371 = vmatprep.subr.bf16.mxu0 0
        %5372 = vmatpush2.bf16.msra.mxu0 0
        %5373 = vmatprep.subr.bf16.mxu0 0
        %5374 = vmatpush2.bf16.msra.mxu0 0
        %5375 = vmatprep.subr.bf16.mxu0 0
        %5376 = vmatpush2.bf16.msra.mxu0 0
        %5377 = vmatprep.subr.bf16.mxu0 0
        %5378 = vmatpush2.bf16.msra.mxu0 0
        %5379 = vmatprep.subr.bf16.mxu0 0
        %5380 = vmatpush2.bf16.msra.mxu0 0
        %5381 = vmatprep.subr.bf16.mxu0 0
        %5382 = vmatpush2.bf16.msra.mxu0 0
        %5383 = vmatprep.subr.bf16.mxu0 0
        %5384 = vmatpush2.bf16.msra.mxu0 0
        %5385 = vmatprep.mubr.bf16.mxu0 0
        %5386 = vmatmul.mubr.bf16.gmra.mxu0 %v1462
        %v5387 = vpop.f32.mrf.mxu0
        %v5388 = vadd.f32 %v5298, %v5387
        %v5389 = vpop.f32.mrf.mxu0
        %v5390 = vpop.f32.mrf.mxu0
        %v5391 = vpop.f32.mrf.mxu0
        %5392 = vdwg.mxu0
        %5393 = vrot.lane.b32.xlu0 %v5199, 126
        %v5394 = vpop.permute.xlu0 %5393
        %5395 = vrot.lane.b32.xlu0 %v5200, 126
        %v5396 = vpop.permute.xlu0 %5395
        %5397 = vrot.lane.b32.xlu0 %v5201, 126
        %v5398 = vpop.permute.xlu0 %5397
        %v5399 = vsel %vm552, %v5394, %v5396
        %v5400 = vsel %vm552, %v5396, %v5398
        %v5402 = vsel %vm1370, %v5399, 0
        %v5405 = vsel %vm1370, %v5400, 0
        %v5408 = vsel %vm1370, %v5398, 0
        %5410 = vmatprep.subr.bf16.mxu0 0
        %5411 = vmatpush1.bf16.msra.mxu0 0
        %5412 = vmatprep.subr.bf16.mxu0 0
        %5413 = vmatpush1.bf16.msra.mxu0 0
        %5414 = vmatprep.subr.bf16.mxu0 0
        %5415 = vmatpush1.bf16.msra.mxu0 0
        %5416 = vmatprep.subr.bf16.mxu0 0
        %5417 = vmatpush1.bf16.msra.mxu0 0
        %5418 = vmatprep.subr.bf16.mxu0 0
        %5419 = vmatpush1.bf16.msra.mxu0 0
        %5420 = vmatprep.subr.bf16.mxu0 0
        %5421 = vmatpush1.bf16.msra.mxu0 0
        %5422 = vmatprep.subr.bf16.mxu0 0
        %5423 = vmatpush1.bf16.msra.mxu0 0
        %5424 = vmatprep.subr.bf16.mxu0 %v5405
        %5425 = vmatpush1.bf16.msra.mxu0 %v5402
        %5426 = vmatprep.subr.bf16.mxu0 0
        %5427 = vmatpush2.bf16.msra.mxu0 0
        %5428 = vmatprep.subr.bf16.mxu0 0
        %5429 = vmatpush2.bf16.msra.mxu0 0
        %5430 = vmatprep.subr.bf16.mxu0 0
        %5431 = vmatpush2.bf16.msra.mxu0 0
        %5432 = vmatprep.subr.bf16.mxu0 0
        %5433 = vmatpush2.bf16.msra.mxu0 0
        %5434 = vmatprep.subr.bf16.mxu0 0
        %5435 = vmatpush2.bf16.msra.mxu0 0
        %5436 = vmatprep.subr.bf16.mxu0 0
        %5437 = vmatpush2.bf16.msra.mxu0 0
        %5438 = vmatprep.subr.bf16.mxu0 0
        %5439 = vmatpush2.bf16.msra.mxu0 0
        %5440 = vmatprep.subr.bf16.mxu0 0
        %5441 = vmatpush2.bf16.msra.mxu0 0
        %5442 = vmatprep.mubr.bf16.mxu0 0
        %5443 = vmatmul.mubr.bf16.gmra.mxu0 %v1563
        %v5444 = vpop.f32.mrf.mxu0
        %v5445 = vadd.f32 0.0, %v5444
        %v5446 = vpop.f32.mrf.mxu0
        %v5447 = vadd.f32 0.0, %v5446
        %v5448 = vpop.f32.mrf.mxu0
        %v5449 = vpop.f32.mrf.mxu0
        %5450 = vdwg.mxu0
        %5451 = vmatprep.subr.bf16.mxu0 0
        %5452 = vmatpush1.bf16.msra.mxu0 0
        %5453 = vmatprep.subr.bf16.mxu0 0
        %5454 = vmatpush1.bf16.msra.mxu0 0
        %5455 = vmatprep.subr.bf16.mxu0 0
        %5456 = vmatpush1.bf16.msra.mxu0 0
        %5457 = vmatprep.subr.bf16.mxu0 0
        %5458 = vmatpush1.bf16.msra.mxu0 0
        %5459 = vmatprep.subr.bf16.mxu0 0
        %5460 = vmatpush1.bf16.msra.mxu0 0
        %5461 = vmatprep.subr.bf16.mxu0 0
        %5462 = vmatpush1.bf16.msra.mxu0 0
        %5463 = vmatprep.subr.bf16.mxu0 0
        %5464 = vmatpush1.bf16.msra.mxu0 0
        %5465 = vmatprep.subr.bf16.mxu0 0
        %5466 = vmatpush1.bf16.msra.mxu0 %v5408
        %5467 = vmatprep.subr.bf16.mxu0 0
        %5468 = vmatpush2.bf16.msra.mxu0 0
        %5469 = vmatprep.subr.bf16.mxu0 0
        %5470 = vmatpush2.bf16.msra.mxu0 0
        %5471 = vmatprep.subr.bf16.mxu0 0
        %5472 = vmatpush2.bf16.msra.mxu0 0
        %5473 = vmatprep.subr.bf16.mxu0 0
        %5474 = vmatpush2.bf16.msra.mxu0 0
        %5475 = vmatprep.subr.bf16.mxu0 0
        %5476 = vmatpush2.bf16.msra.mxu0 0
        %5477 = vmatprep.subr.bf16.mxu0 0
        %5478 = vmatpush2.bf16.msra.mxu0 0
        %5479 = vmatprep.subr.bf16.mxu0 0
        %5480 = vmatpush2.bf16.msra.mxu0 0
        %5481 = vmatprep.subr.bf16.mxu0 0
        %5482 = vmatpush2.bf16.msra.mxu0 0
        %5483 = vmatprep.mubr.bf16.mxu0 0
        %5484 = vmatmul.mubr.bf16.gmra.mxu0 %v1563
        %v5485 = vpop.f32.mrf.mxu0
        %v5486 = vadd.f32 0.0, %v5485
        %v5487 = vpop.f32.mrf.mxu0
        %v5488 = vpop.f32.mrf.mxu0
        %v5489 = vpop.f32.mrf.mxu0
        %5490 = vdwg.mxu0
        %v5491 = vadd.f32 %v5347, %v5445
        %v5492 = vadd.f32 %v5349, %v5447
        %v5493 = vadd.f32 %v5388, %v5486
        %5494 = vrot.lane.b32.xlu0 %v5199, 110
        %v5495 = vpop.permute.xlu0 %5494
        %5496 = vrot.lane.b32.xlu0 %v5200, 110
        %v5497 = vpop.permute.xlu0 %5496
        %5498 = vrot.lane.b32.xlu0 %v5201, 110
        %v5499 = vpop.permute.xlu0 %5498
        %v5500 = vsel %vm657, %v5495, %v5497
        %v5501 = vsel %vm657, %v5497, %v5499
        %v5503 = vsel %vm1370, %v5500, 0
        %v5506 = vsel %vm1370, %v5501, 0
        %v5509 = vsel %vm1370, %v5499, 0
        %5511 = vmatprep.subr.bf16.mxu0 0
        %5512 = vmatpush1.bf16.msra.mxu0 0
        %5513 = vmatprep.subr.bf16.mxu0 0
        %5514 = vmatpush1.bf16.msra.mxu0 0
        %5515 = vmatprep.subr.bf16.mxu0 0
        %5516 = vmatpush1.bf16.msra.mxu0 0
        %5517 = vmatprep.subr.bf16.mxu0 0
        %5518 = vmatpush1.bf16.msra.mxu0 0
        %5519 = vmatprep.subr.bf16.mxu0 0
        %5520 = vmatpush1.bf16.msra.mxu0 0
        %5521 = vmatprep.subr.bf16.mxu0 0
        %5522 = vmatpush1.bf16.msra.mxu0 0
        %5523 = vmatprep.subr.bf16.mxu0 0
        %5524 = vmatpush1.bf16.msra.mxu0 0
        %5525 = vmatprep.subr.bf16.mxu0 %v5506
        %5526 = vmatpush1.bf16.msra.mxu0 %v5503
        %5527 = vmatprep.subr.bf16.mxu0 0
        %5528 = vmatpush2.bf16.msra.mxu0 0
        %5529 = vmatprep.subr.bf16.mxu0 0
        %5530 = vmatpush2.bf16.msra.mxu0 0
        %5531 = vmatprep.subr.bf16.mxu0 0
        %5532 = vmatpush2.bf16.msra.mxu0 0
        %5533 = vmatprep.subr.bf16.mxu0 0
        %5534 = vmatpush2.bf16.msra.mxu0 0
        %5535 = vmatprep.subr.bf16.mxu0 0
        %5536 = vmatpush2.bf16.msra.mxu0 0
        %5537 = vmatprep.subr.bf16.mxu0 0
        %5538 = vmatpush2.bf16.msra.mxu0 0
        %5539 = vmatprep.subr.bf16.mxu0 0
        %5540 = vmatpush2.bf16.msra.mxu0 0
        %5541 = vmatprep.subr.bf16.mxu0 0
        %5542 = vmatpush2.bf16.msra.mxu0 0
        %5543 = vmatprep.mubr.bf16.mxu0 0
        %5544 = vmatmul.mubr.bf16.gmra.mxu0 %v1667
        %v5545 = vpop.f32.mrf.mxu0
        %v5546 = vadd.f32 0.0, %v5545
        %v5547 = vpop.f32.mrf.mxu0
        %v5548 = vadd.f32 0.0, %v5547
        %v5549 = vpop.f32.mrf.mxu0
        %v5550 = vpop.f32.mrf.mxu0
        %5551 = vdwg.mxu0
        %5552 = vmatprep.subr.bf16.mxu0 0
        %5553 = vmatpush1.bf16.msra.mxu0 0
        %5554 = vmatprep.subr.bf16.mxu0 0
        %5555 = vmatpush1.bf16.msra.mxu0 0
        %5556 = vmatprep.subr.bf16.mxu0 0
        %5557 = vmatpush1.bf16.msra.mxu0 0
        %5558 = vmatprep.subr.bf16.mxu0 0
        %5559 = vmatpush1.bf16.msra.mxu0 0
        %5560 = vmatprep.subr.bf16.mxu0 0
        %5561 = vmatpush1.bf16.msra.mxu0 0
        %5562 = vmatprep.subr.bf16.mxu0 0
        %5563 = vmatpush1.bf16.msra.mxu0 0
        %5564 = vmatprep.subr.bf16.mxu0 0
        %5565 = vmatpush1.bf16.msra.mxu0 0
        %5566 = vmatprep.subr.bf16.mxu0 0
        %5567 = vmatpush1.bf16.msra.mxu0 %v5509
        %5568 = vmatprep.subr.bf16.mxu0 0
        %5569 = vmatpush2.bf16.msra.mxu0 0
        %5570 = vmatprep.subr.bf16.mxu0 0
        %5571 = vmatpush2.bf16.msra.mxu0 0
        %5572 = vmatprep.subr.bf16.mxu0 0
        %5573 = vmatpush2.bf16.msra.mxu0 0
        %5574 = vmatprep.subr.bf16.mxu0 0
        %5575 = vmatpush2.bf16.msra.mxu0 0
        %5576 = vmatprep.subr.bf16.mxu0 0
        %5577 = vmatpush2.bf16.msra.mxu0 0
        %5578 = vmatprep.subr.bf16.mxu0 0
        %5579 = vmatpush2.bf16.msra.mxu0 0
        %5580 = vmatprep.subr.bf16.mxu0 0
        %5581 = vmatpush2.bf16.msra.mxu0 0
        %5582 = vmatprep.subr.bf16.mxu0 0
        %5583 = vmatpush2.bf16.msra.mxu0 0
        %5584 = vmatprep.mubr.bf16.mxu0 0
        %5585 = vmatmul.mubr.bf16.gmra.mxu0 %v1667
        %v5586 = vpop.f32.mrf.mxu0
        %v5587 = vadd.f32 0.0, %v5586
        %v5588 = vpop.f32.mrf.mxu0
        %v5589 = vpop.f32.mrf.mxu0
        %v5590 = vpop.f32.mrf.mxu0
        %5591 = vdwg.mxu0
        %v5592 = vadd.f32 %v5491, %v5546
        %v5593 = vadd.f32 %v5492, %v5548
        %v5594 = vadd.f32 %v5493, %v5587
        %5595 = vrot.lane.b32.xlu0 %v5199, 109
        %v5596 = vpop.permute.xlu0 %5595
        %5597 = vrot.lane.b32.xlu0 %v5200, 109
        %v5598 = vpop.permute.xlu0 %5597
        %5599 = vrot.lane.b32.xlu0 %v5201, 109
        %v5600 = vpop.permute.xlu0 %5599
        %v5601 = vsel %vm762, %v5596, %v5598
        %v5602 = vsel %vm762, %v5598, %v5600
        %v5604 = vsel %vm1370, %v5601, 0
        %v5607 = vsel %vm1370, %v5602, 0
        %v5610 = vsel %vm1370, %v5600, 0
        %5612 = vmatprep.subr.bf16.mxu0 0
        %5613 = vmatpush1.bf16.msra.mxu0 0
        %5614 = vmatprep.subr.bf16.mxu0 0
        %5615 = vmatpush1.bf16.msra.mxu0 0
        %5616 = vmatprep.subr.bf16.mxu0 0
        %5617 = vmatpush1.bf16.msra.mxu0 0
        %5618 = vmatprep.subr.bf16.mxu0 0
        %5619 = vmatpush1.bf16.msra.mxu0 0
        %5620 = vmatprep.subr.bf16.mxu0 0
        %5621 = vmatpush1.bf16.msra.mxu0 0
        %5622 = vmatprep.subr.bf16.mxu0 0
        %5623 = vmatpush1.bf16.msra.mxu0 0
        %5624 = vmatprep.subr.bf16.mxu0 0
        %5625 = vmatpush1.bf16.msra.mxu0 0
        %5626 = vmatprep.subr.bf16.mxu0 %v5607
        %5627 = vmatpush1.bf16.msra.mxu0 %v5604
        %5628 = vmatprep.subr.bf16.mxu0 0
        %5629 = vmatpush2.bf16.msra.mxu0 0
        %5630 = vmatprep.subr.bf16.mxu0 0
        %5631 = vmatpush2.bf16.msra.mxu0 0
        %5632 = vmatprep.subr.bf16.mxu0 0
        %5633 = vmatpush2.bf16.msra.mxu0 0
        %5634 = vmatprep.subr.bf16.mxu0 0
        %5635 = vmatpush2.bf16.msra.mxu0 0
        %5636 = vmatprep.subr.bf16.mxu0 0
        %5637 = vmatpush2.bf16.msra.mxu0 0
        %5638 = vmatprep.subr.bf16.mxu0 0
        %5639 = vmatpush2.bf16.msra.mxu0 0
        %5640 = vmatprep.subr.bf16.mxu0 0
        %5641 = vmatpush2.bf16.msra.mxu0 0
        %5642 = vmatprep.subr.bf16.mxu0 0
        %5643 = vmatpush2.bf16.msra.mxu0 0
        %5644 = vmatprep.mubr.bf16.mxu0 0
        %5645 = vmatmul.mubr.bf16.gmra.mxu0 %v1771
        %v5646 = vpop.f32.mrf.mxu0
        %v5647 = vadd.f32 0.0, %v5646
        %v5648 = vpop.f32.mrf.mxu0
        %v5649 = vadd.f32 0.0, %v5648
        %v5650 = vpop.f32.mrf.mxu0
        %v5651 = vpop.f32.mrf.mxu0
        %5652 = vdwg.mxu0
        %5653 = vmatprep.subr.bf16.mxu0 0
        %5654 = vmatpush1.bf16.msra.mxu0 0
        %5655 = vmatprep.subr.bf16.mxu0 0
        %5656 = vmatpush1.bf16.msra.mxu0 0
        %5657 = vmatprep.subr.bf16.mxu0 0
        %5658 = vmatpush1.bf16.msra.mxu0 0
        %5659 = vmatprep.subr.bf16.mxu0 0
        %5660 = vmatpush1.bf16.msra.mxu0 0
        %5661 = vmatprep.subr.bf16.mxu0 0
        %5662 = vmatpush1.bf16.msra.mxu0 0
        %5663 = vmatprep.subr.bf16.mxu0 0
        %5664 = vmatpush1.bf16.msra.mxu0 0
        %5665 = vmatprep.subr.bf16.mxu0 0
        %5666 = vmatpush1.bf16.msra.mxu0 0
        %5667 = vmatprep.subr.bf16.mxu0 0
        %5668 = vmatpush1.bf16.msra.mxu0 %v5610
        %5669 = vmatprep.subr.bf16.mxu0 0
        %5670 = vmatpush2.bf16.msra.mxu0 0
        %5671 = vmatprep.subr.bf16.mxu0 0
        %5672 = vmatpush2.bf16.msra.mxu0 0
        %5673 = vmatprep.subr.bf16.mxu0 0
        %5674 = vmatpush2.bf16.msra.mxu0 0
        %5675 = vmatprep.subr.bf16.mxu0 0
        %5676 = vmatpush2.bf16.msra.mxu0 0
        %5677 = vmatprep.subr.bf16.mxu0 0
        %5678 = vmatpush2.bf16.msra.mxu0 0
        %5679 = vmatprep.subr.bf16.mxu0 0
        %5680 = vmatpush2.bf16.msra.mxu0 0
        %5681 = vmatprep.subr.bf16.mxu0 0
        %5682 = vmatpush2.bf16.msra.mxu0 0
        %5683 = vmatprep.subr.bf16.mxu0 0
        %5684 = vmatpush2.bf16.msra.mxu0 0
        %5685 = vmatprep.mubr.bf16.mxu0 0
        %5686 = vmatmul.mubr.bf16.gmra.mxu0 %v1771
        %v5687 = vpop.f32.mrf.mxu0
        %v5688 = vadd.f32 0.0, %v5687
        %v5689 = vpop.f32.mrf.mxu0
        %v5690 = vpop.f32.mrf.mxu0
        %v5691 = vpop.f32.mrf.mxu0
        %5692 = vdwg.mxu0
        %v5693 = vadd.f32 %v5592, %v5647
        %v5694 = vadd.f32 %v5593, %v5649
        %v5695 = vadd.f32 %v5594, %v5688
        %5696 = vrot.lane.b32.xlu0 %v5199, 108
        %v5697 = vpop.permute.xlu0 %5696
        %5698 = vrot.lane.b32.xlu0 %v5200, 108
        %v5699 = vpop.permute.xlu0 %5698
        %5700 = vrot.lane.b32.xlu0 %v5201, 108
        %v5701 = vpop.permute.xlu0 %5700
        %v5702 = vsel %vm867, %v5697, %v5699
        %v5703 = vsel %vm867, %v5699, %v5701
        %v5705 = vsel %vm1370, %v5702, 0
        %v5708 = vsel %vm1370, %v5703, 0
        %v5711 = vsel %vm1370, %v5701, 0
        %5713 = vmatprep.subr.bf16.mxu0 0
        %5714 = vmatpush1.bf16.msra.mxu0 0
        %5715 = vmatprep.subr.bf16.mxu0 0
        %5716 = vmatpush1.bf16.msra.mxu0 0
        %5717 = vmatprep.subr.bf16.mxu0 0
        %5718 = vmatpush1.bf16.msra.mxu0 0
        %5719 = vmatprep.subr.bf16.mxu0 0
        %5720 = vmatpush1.bf16.msra.mxu0 0
        %5721 = vmatprep.subr.bf16.mxu0 0
        %5722 = vmatpush1.bf16.msra.mxu0 0
        %5723 = vmatprep.subr.bf16.mxu0 0
        %5724 = vmatpush1.bf16.msra.mxu0 0
        %5725 = vmatprep.subr.bf16.mxu0 0
        %5726 = vmatpush1.bf16.msra.mxu0 0
        %5727 = vmatprep.subr.bf16.mxu0 %v5708
        %5728 = vmatpush1.bf16.msra.mxu0 %v5705
        %5729 = vmatprep.subr.bf16.mxu0 0
        %5730 = vmatpush2.bf16.msra.mxu0 0
        %5731 = vmatprep.subr.bf16.mxu0 0
        %5732 = vmatpush2.bf16.msra.mxu0 0
        %5733 = vmatprep.subr.bf16.mxu0 0
        %5734 = vmatpush2.bf16.msra.mxu0 0
        %5735 = vmatprep.subr.bf16.mxu0 0
        %5736 = vmatpush2.bf16.msra.mxu0 0
        %5737 = vmatprep.subr.bf16.mxu0 0
        %5738 = vmatpush2.bf16.msra.mxu0 0
        %5739 = vmatprep.subr.bf16.mxu0 0
        %5740 = vmatpush2.bf16.msra.mxu0 0
        %5741 = vmatprep.subr.bf16.mxu0 0
        %5742 = vmatpush2.bf16.msra.mxu0 0
        %5743 = vmatprep.subr.bf16.mxu0 0
        %5744 = vmatpush2.bf16.msra.mxu0 0
        %5745 = vmatprep.mubr.bf16.mxu0 0
        %5746 = vmatmul.mubr.bf16.gmra.mxu0 %v1875
        %v5747 = vpop.f32.mrf.mxu0
        %v5748 = vadd.f32 0.0, %v5747
        %v5749 = vpop.f32.mrf.mxu0
        %v5750 = vadd.f32 0.0, %v5749
        %v5751 = vpop.f32.mrf.mxu0
        %v5752 = vpop.f32.mrf.mxu0
        %5753 = vdwg.mxu0
        %5754 = vmatprep.subr.bf16.mxu0 0
        %5755 = vmatpush1.bf16.msra.mxu0 0
        %5756 = vmatprep.subr.bf16.mxu0 0
        %5757 = vmatpush1.bf16.msra.mxu0 0
        %5758 = vmatprep.subr.bf16.mxu0 0
        %5759 = vmatpush1.bf16.msra.mxu0 0
        %5760 = vmatprep.subr.bf16.mxu0 0
        %5761 = vmatpush1.bf16.msra.mxu0 0
        %5762 = vmatprep.subr.bf16.mxu0 0
        %5763 = vmatpush1.bf16.msra.mxu0 0
        %5764 = vmatprep.subr.bf16.mxu0 0
        %5765 = vmatpush1.bf16.msra.mxu0 0
        %5766 = vmatprep.subr.bf16.mxu0 0
        %5767 = vmatpush1.bf16.msra.mxu0 0
        %5768 = vmatprep.subr.bf16.mxu0 0
        %5769 = vmatpush1.bf16.msra.mxu0 %v5711
        %5770 = vmatprep.subr.bf16.mxu0 0
        %5771 = vmatpush2.bf16.msra.mxu0 0
        %5772 = vmatprep.subr.bf16.mxu0 0
        %5773 = vmatpush2.bf16.msra.mxu0 0
        %5774 = vmatprep.subr.bf16.mxu0 0
        %5775 = vmatpush2.bf16.msra.mxu0 0
        %5776 = vmatprep.subr.bf16.mxu0 0
        %5777 = vmatpush2.bf16.msra.mxu0 0
        %5778 = vmatprep.subr.bf16.mxu0 0
        %5779 = vmatpush2.bf16.msra.mxu0 0
        %5780 = vmatprep.subr.bf16.mxu0 0
        %5781 = vmatpush2.bf16.msra.mxu0 0
        %5782 = vmatprep.subr.bf16.mxu0 0
        %5783 = vmatpush2.bf16.msra.mxu0 0
        %5784 = vmatprep.subr.bf16.mxu0 0
        %5785 = vmatpush2.bf16.msra.mxu0 0
        %5786 = vmatprep.mubr.bf16.mxu0 0
        %5787 = vmatmul.mubr.bf16.gmra.mxu0 %v1875
        %v5788 = vpop.f32.mrf.mxu0
        %v5789 = vadd.f32 0.0, %v5788
        %v5790 = vpop.f32.mrf.mxu0
        %v5791 = vpop.f32.mrf.mxu0
        %v5792 = vpop.f32.mrf.mxu0
        %5793 = vdwg.mxu0
        %v5794 = vadd.f32 %v5693, %v5748
        %v5795 = vadd.f32 %v5694, %v5750
        %v5796 = vadd.f32 %v5695, %v5789
        %5797 = vrot.lane.b32.xlu0 %v5199, 92
        %v5798 = vpop.permute.xlu0 %5797
        %5799 = vrot.lane.b32.xlu0 %v5200, 92
        %v5800 = vpop.permute.xlu0 %5799
        %5801 = vrot.lane.b32.xlu0 %v5201, 92
        %v5802 = vpop.permute.xlu0 %5801
        %v5803 = vsel %vm972, %v5798, %v5800
        %v5804 = vsel %vm972, %v5800, %v5802
        %v5806 = vsel %vm1370, %v5803, 0
        %v5809 = vsel %vm1370, %v5804, 0
        %v5812 = vsel %vm1370, %v5802, 0
        %5814 = vmatprep.subr.bf16.mxu0 0
        %5815 = vmatpush1.bf16.msra.mxu0 0
        %5816 = vmatprep.subr.bf16.mxu0 0
        %5817 = vmatpush1.bf16.msra.mxu0 0
        %5818 = vmatprep.subr.bf16.mxu0 0
        %5819 = vmatpush1.bf16.msra.mxu0 0
        %5820 = vmatprep.subr.bf16.mxu0 0
        %5821 = vmatpush1.bf16.msra.mxu0 0
        %5822 = vmatprep.subr.bf16.mxu0 0
        %5823 = vmatpush1.bf16.msra.mxu0 0
        %5824 = vmatprep.subr.bf16.mxu0 0
        %5825 = vmatpush1.bf16.msra.mxu0 0
        %5826 = vmatprep.subr.bf16.mxu0 0
        %5827 = vmatpush1.bf16.msra.mxu0 0
        %5828 = vmatprep.subr.bf16.mxu0 %v5809
        %5829 = vmatpush1.bf16.msra.mxu0 %v5806
        %5830 = vmatprep.subr.bf16.mxu0 0
        %5831 = vmatpush2.bf16.msra.mxu0 0
        %5832 = vmatprep.subr.bf16.mxu0 0
        %5833 = vmatpush2.bf16.msra.mxu0 0
        %5834 = vmatprep.subr.bf16.mxu0 0
        %5835 = vmatpush2.bf16.msra.mxu0 0
        %5836 = vmatprep.subr.bf16.mxu0 0
        %5837 = vmatpush2.bf16.msra.mxu0 0
        %5838 = vmatprep.subr.bf16.mxu0 0
        %5839 = vmatpush2.bf16.msra.mxu0 0
        %5840 = vmatprep.subr.bf16.mxu0 0
        %5841 = vmatpush2.bf16.msra.mxu0 0
        %5842 = vmatprep.subr.bf16.mxu0 0
        %5843 = vmatpush2.bf16.msra.mxu0 0
        %5844 = vmatprep.subr.bf16.mxu0 0
        %5845 = vmatpush2.bf16.msra.mxu0 0
        %5846 = vmatprep.mubr.bf16.mxu0 0
        %5847 = vmatmul.mubr.bf16.gmra.mxu0 %v1979
        %v5848 = vpop.f32.mrf.mxu0
        %v5849 = vadd.f32 0.0, %v5848
        %v5850 = vpop.f32.mrf.mxu0
        %v5851 = vadd.f32 0.0, %v5850
        %v5852 = vpop.f32.mrf.mxu0
        %v5853 = vpop.f32.mrf.mxu0
        %5854 = vdwg.mxu0
        %5855 = vmatprep.subr.bf16.mxu0 0
        %5856 = vmatpush1.bf16.msra.mxu0 0
        %5857 = vmatprep.subr.bf16.mxu0 0
        %5858 = vmatpush1.bf16.msra.mxu0 0
        %5859 = vmatprep.subr.bf16.mxu0 0
        %5860 = vmatpush1.bf16.msra.mxu0 0
        %5861 = vmatprep.subr.bf16.mxu0 0
        %5862 = vmatpush1.bf16.msra.mxu0 0
        %5863 = vmatprep.subr.bf16.mxu0 0
        %5864 = vmatpush1.bf16.msra.mxu0 0
        %5865 = vmatprep.subr.bf16.mxu0 0
        %5866 = vmatpush1.bf16.msra.mxu0 0
        %5867 = vmatprep.subr.bf16.mxu0 0
        %5868 = vmatpush1.bf16.msra.mxu0 0
        %5869 = vmatprep.subr.bf16.mxu0 0
        %5870 = vmatpush1.bf16.msra.mxu0 %v5812
        %5871 = vmatprep.subr.bf16.mxu0 0
        %5872 = vmatpush2.bf16.msra.mxu0 0
        %5873 = vmatprep.subr.bf16.mxu0 0
        %5874 = vmatpush2.bf16.msra.mxu0 0
        %5875 = vmatprep.subr.bf16.mxu0 0
        %5876 = vmatpush2.bf16.msra.mxu0 0
        %5877 = vmatprep.subr.bf16.mxu0 0
        %5878 = vmatpush2.bf16.msra.mxu0 0
        %5879 = vmatprep.subr.bf16.mxu0 0
        %5880 = vmatpush2.bf16.msra.mxu0 0
        %5881 = vmatprep.subr.bf16.mxu0 0
        %5882 = vmatpush2.bf16.msra.mxu0 0
        %5883 = vmatprep.subr.bf16.mxu0 0
        %5884 = vmatpush2.bf16.msra.mxu0 0
        %5885 = vmatprep.subr.bf16.mxu0 0
        %5886 = vmatpush2.bf16.msra.mxu0 0
        %5887 = vmatprep.mubr.bf16.mxu0 0
        %5888 = vmatmul.mubr.bf16.gmra.mxu0 %v1979
        %v5889 = vpop.f32.mrf.mxu0
        %v5890 = vadd.f32 0.0, %v5889
        %v5891 = vpop.f32.mrf.mxu0
        %v5892 = vpop.f32.mrf.mxu0
        %v5893 = vpop.f32.mrf.mxu0
        %5894 = vdwg.mxu0
        %v5895 = vadd.f32 %v5794, %v5849
        %v5896 = vadd.f32 %v5795, %v5851
        %v5897 = vadd.f32 %v5796, %v5890
        %5898 = vrot.lane.b32.xlu0 %v5199, 91
        %v5899 = vpop.permute.xlu0 %5898
        %5900 = vrot.lane.b32.xlu0 %v5200, 91
        %v5901 = vpop.permute.xlu0 %5900
        %5902 = vrot.lane.b32.xlu0 %v5201, 91
        %v5903 = vpop.permute.xlu0 %5902
        %v5904 = vsel %vm1077, %v5899, %v5901
        %v5905 = vsel %vm1077, %v5901, %v5903
        %v5907 = vsel %vm1370, %v5904, 0
        %v5910 = vsel %vm1370, %v5905, 0
        %v5913 = vsel %vm1370, %v5903, 0
        %5915 = vmatprep.subr.bf16.mxu0 0
        %5916 = vmatpush1.bf16.msra.mxu0 0
        %5917 = vmatprep.subr.bf16.mxu0 0
        %5918 = vmatpush1.bf16.msra.mxu0 0
        %5919 = vmatprep.subr.bf16.mxu0 0
        %5920 = vmatpush1.bf16.msra.mxu0 0
        %5921 = vmatprep.subr.bf16.mxu0 0
        %5922 = vmatpush1.bf16.msra.mxu0 0
        %5923 = vmatprep.subr.bf16.mxu0 0
        %5924 = vmatpush1.bf16.msra.mxu0 0
        %5925 = vmatprep.subr.bf16.mxu0 0
        %5926 = vmatpush1.bf16.msra.mxu0 0
        %5927 = vmatprep.subr.bf16.mxu0 0
        %5928 = vmatpush1.bf16.msra.mxu0 0
        %5929 = vmatprep.subr.bf16.mxu0 %v5910
        %5930 = vmatpush1.bf16.msra.mxu0 %v5907
        %5931 = vmatprep.subr.bf16.mxu0 0
        %5932 = vmatpush2.bf16.msra.mxu0 0
        %5933 = vmatprep.subr.bf16.mxu0 0
        %5934 = vmatpush2.bf16.msra.mxu0 0
        %5935 = vmatprep.subr.bf16.mxu0 0
        %5936 = vmatpush2.bf16.msra.mxu0 0
        %5937 = vmatprep.subr.bf16.mxu0 0
        %5938 = vmatpush2.bf16.msra.mxu0 0
        %5939 = vmatprep.subr.bf16.mxu0 0
        %5940 = vmatpush2.bf16.msra.mxu0 0
        %5941 = vmatprep.subr.bf16.mxu0 0
        %5942 = vmatpush2.bf16.msra.mxu0 0
        %5943 = vmatprep.subr.bf16.mxu0 0
        %5944 = vmatpush2.bf16.msra.mxu0 0
        %5945 = vmatprep.subr.bf16.mxu0 0
        %5946 = vmatpush2.bf16.msra.mxu0 0
        %5947 = vmatprep.mubr.bf16.mxu0 0
        %5948 = vmatmul.mubr.bf16.gmra.mxu0 %v2083
        %v5949 = vpop.f32.mrf.mxu0
        %v5950 = vadd.f32 0.0, %v5949
        %v5951 = vpop.f32.mrf.mxu0
        %v5952 = vadd.f32 0.0, %v5951
        %v5953 = vpop.f32.mrf.mxu0
        %v5954 = vpop.f32.mrf.mxu0
        %5955 = vdwg.mxu0
        %5956 = vmatprep.subr.bf16.mxu0 0
        %5957 = vmatpush1.bf16.msra.mxu0 0
        %5958 = vmatprep.subr.bf16.mxu0 0
        %5959 = vmatpush1.bf16.msra.mxu0 0
        %5960 = vmatprep.subr.bf16.mxu0 0
        %5961 = vmatpush1.bf16.msra.mxu0 0
        %5962 = vmatprep.subr.bf16.mxu0 0
        %5963 = vmatpush1.bf16.msra.mxu0 0
        %5964 = vmatprep.subr.bf16.mxu0 0
        %5965 = vmatpush1.bf16.msra.mxu0 0
        %5966 = vmatprep.subr.bf16.mxu0 0
        %5967 = vmatpush1.bf16.msra.mxu0 0
        %5968 = vmatprep.subr.bf16.mxu0 0
        %5969 = vmatpush1.bf16.msra.mxu0 0
        %5970 = vmatprep.subr.bf16.mxu0 0
        %5971 = vmatpush1.bf16.msra.mxu0 %v5913
        %5972 = vmatprep.subr.bf16.mxu0 0
        %5973 = vmatpush2.bf16.msra.mxu0 0
        %5974 = vmatprep.subr.bf16.mxu0 0
        %5975 = vmatpush2.bf16.msra.mxu0 0
        %5976 = vmatprep.subr.bf16.mxu0 0
        %5977 = vmatpush2.bf16.msra.mxu0 0
        %5978 = vmatprep.subr.bf16.mxu0 0
        %5979 = vmatpush2.bf16.msra.mxu0 0
        %5980 = vmatprep.subr.bf16.mxu0 0
        %5981 = vmatpush2.bf16.msra.mxu0 0
        %5982 = vmatprep.subr.bf16.mxu0 0
        %5983 = vmatpush2.bf16.msra.mxu0 0
        %5984 = vmatprep.subr.bf16.mxu0 0
        %5985 = vmatpush2.bf16.msra.mxu0 0
        %5986 = vmatprep.subr.bf16.mxu0 0
        %5987 = vmatpush2.bf16.msra.mxu0 0
        %5988 = vmatprep.mubr.bf16.mxu0 0
        %5989 = vmatmul.mubr.bf16.gmra.mxu0 %v2083
        %v5990 = vpop.f32.mrf.mxu0
        %v5991 = vadd.f32 0.0, %v5990
        %v5992 = vpop.f32.mrf.mxu0
        %v5993 = vpop.f32.mrf.mxu0
        %v5994 = vpop.f32.mrf.mxu0
        %5995 = vdwg.mxu0
        %v5996 = vadd.f32 %v5895, %v5950
        %v5997 = vadd.f32 %v5896, %v5952
        %v5998 = vadd.f32 %v5897, %v5991
        %5999 = vrot.lane.b32.xlu0 %v5199, 90
        %v6000 = vpop.permute.xlu0 %5999
        %6001 = vrot.lane.b32.xlu0 %v5200, 90
        %v6002 = vpop.permute.xlu0 %6001
        %6003 = vrot.lane.b32.xlu0 %v5201, 90
        %v6004 = vpop.permute.xlu0 %6003
        %v6005 = vsel %vm1182, %v6000, %v6002
        %v6006 = vsel %vm1182, %v6002, %v6004
        %v6008 = vsel %vm1370, %v6005, 0
        %v6011 = vsel %vm1370, %v6006, 0
        %v6014 = vsel %vm1370, %v6004, 0
        %6016 = vmatprep.subr.bf16.mxu0 0
        %6017 = vmatpush1.bf16.msra.mxu0 0
        %6018 = vmatprep.subr.bf16.mxu0 0
        %6019 = vmatpush1.bf16.msra.mxu0 0
        %6020 = vmatprep.subr.bf16.mxu0 0
        %6021 = vmatpush1.bf16.msra.mxu0 0
        %6022 = vmatprep.subr.bf16.mxu0 0
        %6023 = vmatpush1.bf16.msra.mxu0 0
        %6024 = vmatprep.subr.bf16.mxu0 0
        %6025 = vmatpush1.bf16.msra.mxu0 0
        %6026 = vmatprep.subr.bf16.mxu0 0
        %6027 = vmatpush1.bf16.msra.mxu0 0
        %6028 = vmatprep.subr.bf16.mxu0 0
        %6029 = vmatpush1.bf16.msra.mxu0 0
        %6030 = vmatprep.subr.bf16.mxu0 %v6011
        %6031 = vmatpush1.bf16.msra.mxu0 %v6008
        %6032 = vmatprep.subr.bf16.mxu0 0
        %6033 = vmatpush2.bf16.msra.mxu0 0
        %6034 = vmatprep.subr.bf16.mxu0 0
        %6035 = vmatpush2.bf16.msra.mxu0 0
        %6036 = vmatprep.subr.bf16.mxu0 0
        %6037 = vmatpush2.bf16.msra.mxu0 0
        %6038 = vmatprep.subr.bf16.mxu0 0
        %6039 = vmatpush2.bf16.msra.mxu0 0
        %6040 = vmatprep.subr.bf16.mxu0 0
        %6041 = vmatpush2.bf16.msra.mxu0 0
        %6042 = vmatprep.subr.bf16.mxu0 0
        %6043 = vmatpush2.bf16.msra.mxu0 0
        %6044 = vmatprep.subr.bf16.mxu0 0
        %6045 = vmatpush2.bf16.msra.mxu0 0
        %6046 = vmatprep.subr.bf16.mxu0 0
        %6047 = vmatpush2.bf16.msra.mxu0 0
        %6048 = vmatprep.mubr.bf16.mxu0 0
        %6049 = vmatmul.mubr.bf16.gmra.mxu0 %v2187
        %v6050 = vpop.f32.mrf.mxu0
        %v6051 = vadd.f32 0.0, %v6050
        %v6052 = vpop.f32.mrf.mxu0
        %v6053 = vadd.f32 0.0, %v6052
        %v6054 = vpop.f32.mrf.mxu0
        %v6055 = vpop.f32.mrf.mxu0
        %6056 = vdwg.mxu0
        %6057 = vmatprep.subr.bf16.mxu0 0
        %6058 = vmatpush1.bf16.msra.mxu0 0
        %6059 = vmatprep.subr.bf16.mxu0 0
        %6060 = vmatpush1.bf16.msra.mxu0 0
        %6061 = vmatprep.subr.bf16.mxu0 0
        %6062 = vmatpush1.bf16.msra.mxu0 0
        %6063 = vmatprep.subr.bf16.mxu0 0
        %6064 = vmatpush1.bf16.msra.mxu0 0
        %6065 = vmatprep.subr.bf16.mxu0 0
        %6066 = vmatpush1.bf16.msra.mxu0 0
        %6067 = vmatprep.subr.bf16.mxu0 0
        %6068 = vmatpush1.bf16.msra.mxu0 0
        %6069 = vmatprep.subr.bf16.mxu0 0
        %6070 = vmatpush1.bf16.msra.mxu0 0
        %6071 = vmatprep.subr.bf16.mxu0 0
        %6072 = vmatpush1.bf16.msra.mxu0 %v6014
        %6073 = vmatprep.subr.bf16.mxu0 0
        %6074 = vmatpush2.bf16.msra.mxu0 0
        %6075 = vmatprep.subr.bf16.mxu0 0
        %6076 = vmatpush2.bf16.msra.mxu0 0
        %6077 = vmatprep.subr.bf16.mxu0 0
        %6078 = vmatpush2.bf16.msra.mxu0 0
        %6079 = vmatprep.subr.bf16.mxu0 0
        %6080 = vmatpush2.bf16.msra.mxu0 0
        %6081 = vmatprep.subr.bf16.mxu0 0
        %6082 = vmatpush2.bf16.msra.mxu0 0
        %6083 = vmatprep.subr.bf16.mxu0 0
        %6084 = vmatpush2.bf16.msra.mxu0 0
        %6085 = vmatprep.subr.bf16.mxu0 0
        %6086 = vmatpush2.bf16.msra.mxu0 0
        %6087 = vmatprep.subr.bf16.mxu0 0
        %6088 = vmatpush2.bf16.msra.mxu0 0
        %6089 = vmatprep.mubr.bf16.mxu0 0
        %6090 = vmatmul.mubr.bf16.gmra.mxu0 %v2187
        %v6091 = vpop.f32.mrf.mxu0
        %v6092 = vadd.f32 0.0, %v6091
        %v6093 = vpop.f32.mrf.mxu0
        %v6094 = vpop.f32.mrf.mxu0
        %v6095 = vpop.f32.mrf.mxu0
        %6096 = vdwg.mxu0
        %v6097 = vadd.f32 %v5996, %v6051
        %v6098 = vadd.f32 %v5997, %v6053
        %v6099 = vadd.f32 %v5998, %v6092
        %v6100 = vadd.f32 %v6097, %v2285
        %v6101 = vadd.f32 %v6098, %v2285
        %v6102 = vadd.f32 %v6099, %v2285
        %v6106 = vcombine.low %v6100, %v6101
        %6107 = vrot.lane.b32.xlu0 %v6106, 19
        %v6108 = vpop.permute.xlu0 %6107
        %6109 = vrot.lane.b32.xlu0 %v6102, 19
        %v6110 = vpop.permute.xlu0 %6109
        %v6111 = vrot.slane %v6108, 4
        %v6112 = vsel %vm1338, %v6111, %v6108
        %v6113 = vsel %vm1338, %v6111, %v6110
        %v6116 = vadd.f32 %v4243, %v6112
        %v6117 = vadd.f32 %v4244, %v6113
        %v6118 = vsub.f32 %v6116, %v4225
        %v6119 = vsub.f32 %v6117, %v4226
        %v6120 = vmul.f32 %v6118, 0.5
        %v6121 = vmul.f32 %v6119, 0.5
        %v6122 = vadd.f32 %v4225, %v6120
        %v6123 = vadd.f32 %v4226, %v6121
        %vm6124 = vcmp.ge.f32.partialorder %v6122, 1.0
        %vm6125 = vcmp.ge.f32.partialorder %v6123, 1.0
        %v6126 = vsel %vm6124, 1, 0
        %v6127 = vsel %vm6125, 1, 0
        %v6128 = vcvt.s32.f32 %v6126
        %v6129 = vcvt.s32.f32 %v6127
        %v6130 = vsub.f32 1.0, %v6128
        %v6131 = vsub.f32 1.0, %v6129
        %v6132 = vmul.f32 %v6122, %v6130
        %v6133 = vmul.f32 %v6123, %v6131
        %6136 = vrot.lane.b32.xlu0 %v6128, 109
        %v6137 = vpop.permute.xlu0 %6136
        %6138 = vrot.lane.b32.xlu0 %v6129, 109
        %v6139 = vpop.permute.xlu0 %6138
        %v6140 = vrot.slane %v6137, 4
        %v6141 = vrot.slane %v6139, 4
        %v6142 = vsel %vm1370, %v6140, %v6141
        %v6143 = vsel %vm2328, %v6137, %v6142
        %s6146 = scalar_lea.vmem %s293, 24 [#allocation4]
        %6147 = vst [vmem:[%s6146] sm:$0xff] %v6143
        %6148 = vst.msk [vmem:[%s6146 + $0x8] sm:$0xf] %vm2333, %v6139
        %s6149 = scalar_lea.vmem %s267, 36 [#allocation3]
        %v6150 = vld [vmem:[%s6149] sm:$0xff]
        %v6151 = vld [vmem:[%s6149 + $0x8] sm:$0xf]
        %v6153 = vcombine.high %v6150, %v6150
        %v6155 = vpack.c.bf16 %v6150, %v6150
        %v6156 = vpack.c.bf16 %v6153, %v6153
        %v6157 = vpack.c.bf16 %v6151, %v6151
        %6161 = vrot.lane.b32.xlu0 %v6155, 127
        %v6162 = vpop.permute.xlu0 %6161
        %6163 = vrot.lane.b32.xlu0 %v6156, 127
        %v6164 = vpop.permute.xlu0 %6163
        %6165 = vrot.lane.b32.xlu0 %v6157, 127
        %v6166 = vpop.permute.xlu0 %6165
        %v6167 = vsel %vm355, %v6162, %v6164
        %v6168 = vsel %vm355, %v6164, %v6166
        %v6170 = vsel %vm362, %v6167, 0
        %v6173 = vsel %vm362, %v6168, 0
        %v6176 = vsel %vm362, %v6166, 0
        %6178 = vmatprep.subr.bf16.mxu0 0
        %6179 = vmatpush1.bf16.msra.mxu0 0
        %6180 = vmatprep.subr.bf16.mxu0 0
        %6181 = vmatpush1.bf16.msra.mxu0 0
        %6182 = vmatprep.subr.bf16.mxu0 0
        %6183 = vmatpush1.bf16.msra.mxu0 0
        %6184 = vmatprep.subr.bf16.mxu0 0
        %6185 = vmatpush1.bf16.msra.mxu0 0
        %6186 = vmatprep.subr.bf16.mxu0 0
        %6187 = vmatpush1.bf16.msra.mxu0 0
        %6188 = vmatprep.subr.bf16.mxu0 0
        %6189 = vmatpush1.bf16.msra.mxu0 0
        %6190 = vmatprep.subr.bf16.mxu0 0
        %6191 = vmatpush1.bf16.msra.mxu0 0
        %6192 = vmatprep.subr.bf16.mxu0 %v6173
        %6193 = vmatpush1.bf16.msra.mxu0 %v6170
        %6194 = vmatprep.subr.bf16.mxu0 0
        %6195 = vmatpush2.bf16.msra.mxu0 0
        %6196 = vmatprep.subr.bf16.mxu0 0
        %6197 = vmatpush2.bf16.msra.mxu0 0
        %6198 = vmatprep.subr.bf16.mxu0 0
        %6199 = vmatpush2.bf16.msra.mxu0 0
        %6200 = vmatprep.subr.bf16.mxu0 0
        %6201 = vmatpush2.bf16.msra.mxu0 0
        %6202 = vmatprep.subr.bf16.mxu0 0
        %6203 = vmatpush2.bf16.msra.mxu0 0
        %6204 = vmatprep.subr.bf16.mxu0 0
        %6205 = vmatpush2.bf16.msra.mxu0 0
        %6206 = vmatprep.subr.bf16.mxu0 0
        %6207 = vmatpush2.bf16.msra.mxu0 0
        %6208 = vmatprep.subr.bf16.mxu0 0
        %6209 = vmatpush2.bf16.msra.mxu0 0
        %6210 = vmatprep.mubr.bf16.mxu0 0
        %6211 = vmatmul.mubr.bf16.gmra.mxu0 %v360
        %v6212 = vpop.f32.mrf.mxu0
        %v6213 = vadd.f32 0.0, %v6212
        %v6214 = vpop.f32.mrf.mxu0
        %v6215 = vadd.f32 0.0, %v6214
        %v6216 = vpop.f32.mrf.mxu0
        %v6217 = vpop.f32.mrf.mxu0
        %6218 = vdwg.mxu0
        %6219 = vmatprep.subr.bf16.mxu0 0
        %6220 = vmatpush1.bf16.msra.mxu0 0
        %6221 = vmatprep.subr.bf16.mxu0 0
        %6222 = vmatpush1.bf16.msra.mxu0 0
        %6223 = vmatprep.subr.bf16.mxu0 0
        %6224 = vmatpush1.bf16.msra.mxu0 0
        %6225 = vmatprep.subr.bf16.mxu0 0
        %6226 = vmatpush1.bf16.msra.mxu0 0
        %6227 = vmatprep.subr.bf16.mxu0 0
        %6228 = vmatpush1.bf16.msra.mxu0 0
        %6229 = vmatprep.subr.bf16.mxu0 0
        %6230 = vmatpush1.bf16.msra.mxu0 0
        %6231 = vmatprep.subr.bf16.mxu0 0
        %6232 = vmatpush1.bf16.msra.mxu0 0
        %6233 = vmatprep.subr.bf16.mxu0 0
        %6234 = vmatpush1.bf16.msra.mxu0 %v6176
        %6235 = vmatprep.subr.bf16.mxu0 0
        %6236 = vmatpush2.bf16.msra.mxu0 0
        %6237 = vmatprep.subr.bf16.mxu0 0
        %6238 = vmatpush2.bf16.msra.mxu0 0
        %6239 = vmatprep.subr.bf16.mxu0 0
        %6240 = vmatpush2.bf16.msra.mxu0 0
        %6241 = vmatprep.subr.bf16.mxu0 0
        %6242 = vmatpush2.bf16.msra.mxu0 0
        %6243 = vmatprep.subr.bf16.mxu0 0
        %6244 = vmatpush2.bf16.msra.mxu0 0
        %6245 = vmatprep.subr.bf16.mxu0 0
        %6246 = vmatpush2.bf16.msra.mxu0 0
        %6247 = vmatprep.subr.bf16.mxu0 0
        %6248 = vmatpush2.bf16.msra.mxu0 0
        %6249 = vmatprep.subr.bf16.mxu0 0
        %6250 = vmatpush2.bf16.msra.mxu0 0
        %6251 = vmatprep.mubr.bf16.mxu0 0
        %6252 = vmatmul.mubr.bf16.gmra.mxu0 %v360
        %v6253 = vpop.f32.mrf.mxu0
        %v6254 = vadd.f32 0.0, %v6253
        %v6255 = vpop.f32.mrf.mxu0
        %v6256 = vpop.f32.mrf.mxu0
        %v6257 = vpop.f32.mrf.mxu0
        %6258 = vdwg.mxu0
        %v6260 = vsel %vm362, %v6155, 0
        %v6263 = vsel %vm362, %v6156, 0
        %v6266 = vsel %vm362, %v6157, 0
        %6268 = vmatprep.subr.bf16.mxu0 0
        %6269 = vmatpush1.bf16.msra.mxu0 0
        %6270 = vmatprep.subr.bf16.mxu0 0
        %6271 = vmatpush1.bf16.msra.mxu0 0
        %6272 = vmatprep.subr.bf16.mxu0 0
        %6273 = vmatpush1.bf16.msra.mxu0 0
        %6274 = vmatprep.subr.bf16.mxu0 0
        %6275 = vmatpush1.bf16.msra.mxu0 0
        %6276 = vmatprep.subr.bf16.mxu0 0
        %6277 = vmatpush1.bf16.msra.mxu0 0
        %6278 = vmatprep.subr.bf16.mxu0 0
        %6279 = vmatpush1.bf16.msra.mxu0 0
        %6280 = vmatprep.subr.bf16.mxu0 0
        %6281 = vmatpush1.bf16.msra.mxu0 0
        %6282 = vmatprep.subr.bf16.mxu0 %v6263
        %6283 = vmatpush1.bf16.msra.mxu0 %v6260
        %6284 = vmatprep.subr.bf16.mxu0 0
        %6285 = vmatpush2.bf16.msra.mxu0 0
        %6286 = vmatprep.subr.bf16.mxu0 0
        %6287 = vmatpush2.bf16.msra.mxu0 0
        %6288 = vmatprep.subr.bf16.mxu0 0
        %6289 = vmatpush2.bf16.msra.mxu0 0
        %6290 = vmatprep.subr.bf16.mxu0 0
        %6291 = vmatpush2.bf16.msra.mxu0 0
        %6292 = vmatprep.subr.bf16.mxu0 0
        %6293 = vmatpush2.bf16.msra.mxu0 0
        %6294 = vmatprep.subr.bf16.mxu0 0
        %6295 = vmatpush2.bf16.msra.mxu0 0
        %6296 = vmatprep.subr.bf16.mxu0 0
        %6297 = vmatpush2.bf16.msra.mxu0 0
        %6298 = vmatprep.subr.bf16.mxu0 0
        %6299 = vmatpush2.bf16.msra.mxu0 0
        %6300 = vmatprep.mubr.bf16.mxu0 0
        %6301 = vmatmul.mubr.bf16.gmra.mxu0 %v454
        %v6302 = vpop.f32.mrf.mxu0
        %v6303 = vadd.f32 %v6213, %v6302
        %v6304 = vpop.f32.mrf.mxu0
        %v6305 = vadd.f32 %v6215, %v6304
        %v6306 = vpop.f32.mrf.mxu0
        %v6307 = vpop.f32.mrf.mxu0
        %6308 = vdwg.mxu0
        %6309 = vmatprep.subr.bf16.mxu0 0
        %6310 = vmatpush1.bf16.msra.mxu0 0
        %6311 = vmatprep.subr.bf16.mxu0 0
        %6312 = vmatpush1.bf16.msra.mxu0 0
        %6313 = vmatprep.subr.bf16.mxu0 0
        %6314 = vmatpush1.bf16.msra.mxu0 0
        %6315 = vmatprep.subr.bf16.mxu0 0
        %6316 = vmatpush1.bf16.msra.mxu0 0
        %6317 = vmatprep.subr.bf16.mxu0 0
        %6318 = vmatpush1.bf16.msra.mxu0 0
        %6319 = vmatprep.subr.bf16.mxu0 0
        %6320 = vmatpush1.bf16.msra.mxu0 0
        %6321 = vmatprep.subr.bf16.mxu0 0
        %6322 = vmatpush1.bf16.msra.mxu0 0
        %6323 = vmatprep.subr.bf16.mxu0 0
        %6324 = vmatpush1.bf16.msra.mxu0 %v6266
        %6325 = vmatprep.subr.bf16.mxu0 0
        %6326 = vmatpush2.bf16.msra.mxu0 0
        %6327 = vmatprep.subr.bf16.mxu0 0
        %6328 = vmatpush2.bf16.msra.mxu0 0
        %6329 = vmatprep.subr.bf16.mxu0 0
        %6330 = vmatpush2.bf16.msra.mxu0 0
        %6331 = vmatprep.subr.bf16.mxu0 0
        %6332 = vmatpush2.bf16.msra.mxu0 0
        %6333 = vmatprep.subr.bf16.mxu0 0
        %6334 = vmatpush2.bf16.msra.mxu0 0
        %6335 = vmatprep.subr.bf16.mxu0 0
        %6336 = vmatpush2.bf16.msra.mxu0 0
        %6337 = vmatprep.subr.bf16.mxu0 0
        %6338 = vmatpush2.bf16.msra.mxu0 0
        %6339 = vmatprep.subr.bf16.mxu0 0
        %6340 = vmatpush2.bf16.msra.mxu0 0
        %6341 = vmatprep.mubr.bf16.mxu0 0
        %6342 = vmatmul.mubr.bf16.gmra.mxu0 %v454
        %v6343 = vpop.f32.mrf.mxu0
        %v6344 = vadd.f32 %v6254, %v6343
        %v6345 = vpop.f32.mrf.mxu0
        %v6346 = vpop.f32.mrf.mxu0
        %v6347 = vpop.f32.mrf.mxu0
        %6348 = vdwg.mxu0
        %6349 = vrot.lane.b32.xlu0 %v6155, 126
        %v6350 = vpop.permute.xlu0 %6349
        %6351 = vrot.lane.b32.xlu0 %v6156, 126
        %v6352 = vpop.permute.xlu0 %6351
        %6353 = vrot.lane.b32.xlu0 %v6157, 126
        %v6354 = vpop.permute.xlu0 %6353
        %v6355 = vsel %vm552, %v6350, %v6352
        %v6356 = vsel %vm552, %v6352, %v6354
        %v6358 = vsel %vm362, %v6355, 0
        %v6361 = vsel %vm362, %v6356, 0
        %v6364 = vsel %vm362, %v6354, 0
        %6366 = vmatprep.subr.bf16.mxu0 0
        %6367 = vmatpush1.bf16.msra.mxu0 0
        %6368 = vmatprep.subr.bf16.mxu0 0
        %6369 = vmatpush1.bf16.msra.mxu0 0
        %6370 = vmatprep.subr.bf16.mxu0 0
        %6371 = vmatpush1.bf16.msra.mxu0 0
        %6372 = vmatprep.subr.bf16.mxu0 0
        %6373 = vmatpush1.bf16.msra.mxu0 0
        %6374 = vmatprep.subr.bf16.mxu0 0
        %6375 = vmatpush1.bf16.msra.mxu0 0
        %6376 = vmatprep.subr.bf16.mxu0 0
        %6377 = vmatpush1.bf16.msra.mxu0 0
        %6378 = vmatprep.subr.bf16.mxu0 0
        %6379 = vmatpush1.bf16.msra.mxu0 0
        %6380 = vmatprep.subr.bf16.mxu0 %v6361
        %6381 = vmatpush1.bf16.msra.mxu0 %v6358
        %6382 = vmatprep.subr.bf16.mxu0 0
        %6383 = vmatpush2.bf16.msra.mxu0 0
        %6384 = vmatprep.subr.bf16.mxu0 0
        %6385 = vmatpush2.bf16.msra.mxu0 0
        %6386 = vmatprep.subr.bf16.mxu0 0
        %6387 = vmatpush2.bf16.msra.mxu0 0
        %6388 = vmatprep.subr.bf16.mxu0 0
        %6389 = vmatpush2.bf16.msra.mxu0 0
        %6390 = vmatprep.subr.bf16.mxu0 0
        %6391 = vmatpush2.bf16.msra.mxu0 0
        %6392 = vmatprep.subr.bf16.mxu0 0
        %6393 = vmatpush2.bf16.msra.mxu0 0
        %6394 = vmatprep.subr.bf16.mxu0 0
        %6395 = vmatpush2.bf16.msra.mxu0 0
        %6396 = vmatprep.subr.bf16.mxu0 0
        %6397 = vmatpush2.bf16.msra.mxu0 0
        %6398 = vmatprep.mubr.bf16.mxu0 0
        %6399 = vmatmul.mubr.bf16.gmra.mxu0 %v556
        %v6400 = vpop.f32.mrf.mxu0
        %v6401 = vadd.f32 0.0, %v6400
        %v6402 = vpop.f32.mrf.mxu0
        %v6403 = vadd.f32 0.0, %v6402
        %v6404 = vpop.f32.mrf.mxu0
        %v6405 = vpop.f32.mrf.mxu0
        %6406 = vdwg.mxu0
        %6407 = vmatprep.subr.bf16.mxu0 0
        %6408 = vmatpush1.bf16.msra.mxu0 0
        %6409 = vmatprep.subr.bf16.mxu0 0
        %6410 = vmatpush1.bf16.msra.mxu0 0
        %6411 = vmatprep.subr.bf16.mxu0 0
        %6412 = vmatpush1.bf16.msra.mxu0 0
        %6413 = vmatprep.subr.bf16.mxu0 0
        %6414 = vmatpush1.bf16.msra.mxu0 0
        %6415 = vmatprep.subr.bf16.mxu0 0
        %6416 = vmatpush1.bf16.msra.mxu0 0
        %6417 = vmatprep.subr.bf16.mxu0 0
        %6418 = vmatpush1.bf16.msra.mxu0 0
        %6419 = vmatprep.subr.bf16.mxu0 0
        %6420 = vmatpush1.bf16.msra.mxu0 0
        %6421 = vmatprep.subr.bf16.mxu0 0
        %6422 = vmatpush1.bf16.msra.mxu0 %v6364
        %6423 = vmatprep.subr.bf16.mxu0 0
        %6424 = vmatpush2.bf16.msra.mxu0 0
        %6425 = vmatprep.subr.bf16.mxu0 0
        %6426 = vmatpush2.bf16.msra.mxu0 0
        %6427 = vmatprep.subr.bf16.mxu0 0
        %6428 = vmatpush2.bf16.msra.mxu0 0
        %6429 = vmatprep.subr.bf16.mxu0 0
        %6430 = vmatpush2.bf16.msra.mxu0 0
        %6431 = vmatprep.subr.bf16.mxu0 0
        %6432 = vmatpush2.bf16.msra.mxu0 0
        %6433 = vmatprep.subr.bf16.mxu0 0
        %6434 = vmatpush2.bf16.msra.mxu0 0
        %6435 = vmatprep.subr.bf16.mxu0 0
        %6436 = vmatpush2.bf16.msra.mxu0 0
        %6437 = vmatprep.subr.bf16.mxu0 0
        %6438 = vmatpush2.bf16.msra.mxu0 0
        %6439 = vmatprep.mubr.bf16.mxu0 0
        %6440 = vmatmul.mubr.bf16.gmra.mxu0 %v556
        %v6441 = vpop.f32.mrf.mxu0
        %v6442 = vadd.f32 0.0, %v6441
        %v6443 = vpop.f32.mrf.mxu0
        %v6444 = vpop.f32.mrf.mxu0
        %v6445 = vpop.f32.mrf.mxu0
        %6446 = vdwg.mxu0
        %v6447 = vadd.f32 %v6303, %v6401
        %v6448 = vadd.f32 %v6305, %v6403
        %v6449 = vadd.f32 %v6344, %v6442
        %6450 = vrot.lane.b32.xlu0 %v6155, 110
        %v6451 = vpop.permute.xlu0 %6450
        %6452 = vrot.lane.b32.xlu0 %v6156, 110
        %v6453 = vpop.permute.xlu0 %6452
        %6454 = vrot.lane.b32.xlu0 %v6157, 110
        %v6455 = vpop.permute.xlu0 %6454
        %v6456 = vsel %vm657, %v6451, %v6453
        %v6457 = vsel %vm657, %v6453, %v6455
        %v6459 = vsel %vm362, %v6456, 0
        %v6462 = vsel %vm362, %v6457, 0
        %v6465 = vsel %vm362, %v6455, 0
        %6467 = vmatprep.subr.bf16.mxu0 0
        %6468 = vmatpush1.bf16.msra.mxu0 0
        %6469 = vmatprep.subr.bf16.mxu0 0
        %6470 = vmatpush1.bf16.msra.mxu0 0
        %6471 = vmatprep.subr.bf16.mxu0 0
        %6472 = vmatpush1.bf16.msra.mxu0 0
        %6473 = vmatprep.subr.bf16.mxu0 0
        %6474 = vmatpush1.bf16.msra.mxu0 0
        %6475 = vmatprep.subr.bf16.mxu0 0
        %6476 = vmatpush1.bf16.msra.mxu0 0
        %6477 = vmatprep.subr.bf16.mxu0 0
        %6478 = vmatpush1.bf16.msra.mxu0 0
        %6479 = vmatprep.subr.bf16.mxu0 0
        %6480 = vmatpush1.bf16.msra.mxu0 0
        %6481 = vmatprep.subr.bf16.mxu0 %v6462
        %6482 = vmatpush1.bf16.msra.mxu0 %v6459
        %6483 = vmatprep.subr.bf16.mxu0 0
        %6484 = vmatpush2.bf16.msra.mxu0 0
        %6485 = vmatprep.subr.bf16.mxu0 0
        %6486 = vmatpush2.bf16.msra.mxu0 0
        %6487 = vmatprep.subr.bf16.mxu0 0
        %6488 = vmatpush2.bf16.msra.mxu0 0
        %6489 = vmatprep.subr.bf16.mxu0 0
        %6490 = vmatpush2.bf16.msra.mxu0 0
        %6491 = vmatprep.subr.bf16.mxu0 0
        %6492 = vmatpush2.bf16.msra.mxu0 0
        %6493 = vmatprep.subr.bf16.mxu0 0
        %6494 = vmatpush2.bf16.msra.mxu0 0
        %6495 = vmatprep.subr.bf16.mxu0 0
        %6496 = vmatpush2.bf16.msra.mxu0 0
        %6497 = vmatprep.subr.bf16.mxu0 0
        %6498 = vmatpush2.bf16.msra.mxu0 0
        %6499 = vmatprep.mubr.bf16.mxu0 0
        %6500 = vmatmul.mubr.bf16.gmra.mxu0 %v661
        %v6501 = vpop.f32.mrf.mxu0
        %v6502 = vadd.f32 0.0, %v6501
        %v6503 = vpop.f32.mrf.mxu0
        %v6504 = vadd.f32 0.0, %v6503
        %v6505 = vpop.f32.mrf.mxu0
        %v6506 = vpop.f32.mrf.mxu0
        %6507 = vdwg.mxu0
        %6508 = vmatprep.subr.bf16.mxu0 0
        %6509 = vmatpush1.bf16.msra.mxu0 0
        %6510 = vmatprep.subr.bf16.mxu0 0
        %6511 = vmatpush1.bf16.msra.mxu0 0
        %6512 = vmatprep.subr.bf16.mxu0 0
        %6513 = vmatpush1.bf16.msra.mxu0 0
        %6514 = vmatprep.subr.bf16.mxu0 0
        %6515 = vmatpush1.bf16.msra.mxu0 0
        %6516 = vmatprep.subr.bf16.mxu0 0
        %6517 = vmatpush1.bf16.msra.mxu0 0
        %6518 = vmatprep.subr.bf16.mxu0 0
        %6519 = vmatpush1.bf16.msra.mxu0 0
        %6520 = vmatprep.subr.bf16.mxu0 0
        %6521 = vmatpush1.bf16.msra.mxu0 0
        %6522 = vmatprep.subr.bf16.mxu0 0
        %6523 = vmatpush1.bf16.msra.mxu0 %v6465
        %6524 = vmatprep.subr.bf16.mxu0 0
        %6525 = vmatpush2.bf16.msra.mxu0 0
        %6526 = vmatprep.subr.bf16.mxu0 0
        %6527 = vmatpush2.bf16.msra.mxu0 0
        %6528 = vmatprep.subr.bf16.mxu0 0
        %6529 = vmatpush2.bf16.msra.mxu0 0
        %6530 = vmatprep.subr.bf16.mxu0 0
        %6531 = vmatpush2.bf16.msra.mxu0 0
        %6532 = vmatprep.subr.bf16.mxu0 0
        %6533 = vmatpush2.bf16.msra.mxu0 0
        %6534 = vmatprep.subr.bf16.mxu0 0
        %6535 = vmatpush2.bf16.msra.mxu0 0
        %6536 = vmatprep.subr.bf16.mxu0 0
        %6537 = vmatpush2.bf16.msra.mxu0 0
        %6538 = vmatprep.subr.bf16.mxu0 0
        %6539 = vmatpush2.bf16.msra.mxu0 0
        %6540 = vmatprep.mubr.bf16.mxu0 0
        %6541 = vmatmul.mubr.bf16.gmra.mxu0 %v661
        %v6542 = vpop.f32.mrf.mxu0
        %v6543 = vadd.f32 0.0, %v6542
        %v6544 = vpop.f32.mrf.mxu0
        %v6545 = vpop.f32.mrf.mxu0
        %v6546 = vpop.f32.mrf.mxu0
        %6547 = vdwg.mxu0
        %v6548 = vadd.f32 %v6447, %v6502
        %v6549 = vadd.f32 %v6448, %v6504
        %v6550 = vadd.f32 %v6449, %v6543
        %6551 = vrot.lane.b32.xlu0 %v6155, 109
        %v6552 = vpop.permute.xlu0 %6551
        %6553 = vrot.lane.b32.xlu0 %v6156, 109
        %v6554 = vpop.permute.xlu0 %6553
        %6555 = vrot.lane.b32.xlu0 %v6157, 109
        %v6556 = vpop.permute.xlu0 %6555
        %v6557 = vsel %vm762, %v6552, %v6554
        %v6558 = vsel %vm762, %v6554, %v6556
        %v6560 = vsel %vm362, %v6557, 0
        %v6563 = vsel %vm362, %v6558, 0
        %v6566 = vsel %vm362, %v6556, 0
        %6568 = vmatprep.subr.bf16.mxu0 0
        %6569 = vmatpush1.bf16.msra.mxu0 0
        %6570 = vmatprep.subr.bf16.mxu0 0
        %6571 = vmatpush1.bf16.msra.mxu0 0
        %6572 = vmatprep.subr.bf16.mxu0 0
        %6573 = vmatpush1.bf16.msra.mxu0 0
        %6574 = vmatprep.subr.bf16.mxu0 0
        %6575 = vmatpush1.bf16.msra.mxu0 0
        %6576 = vmatprep.subr.bf16.mxu0 0
        %6577 = vmatpush1.bf16.msra.mxu0 0
        %6578 = vmatprep.subr.bf16.mxu0 0
        %6579 = vmatpush1.bf16.msra.mxu0 0
        %6580 = vmatprep.subr.bf16.mxu0 0
        %6581 = vmatpush1.bf16.msra.mxu0 0
        %6582 = vmatprep.subr.bf16.mxu0 %v6563
        %6583 = vmatpush1.bf16.msra.mxu0 %v6560
        %6584 = vmatprep.subr.bf16.mxu0 0
        %6585 = vmatpush2.bf16.msra.mxu0 0
        %6586 = vmatprep.subr.bf16.mxu0 0
        %6587 = vmatpush2.bf16.msra.mxu0 0
        %6588 = vmatprep.subr.bf16.mxu0 0
        %6589 = vmatpush2.bf16.msra.mxu0 0
        %6590 = vmatprep.subr.bf16.mxu0 0
        %6591 = vmatpush2.bf16.msra.mxu0 0
        %6592 = vmatprep.subr.bf16.mxu0 0
        %6593 = vmatpush2.bf16.msra.mxu0 0
        %6594 = vmatprep.subr.bf16.mxu0 0
        %6595 = vmatpush2.bf16.msra.mxu0 0
        %6596 = vmatprep.subr.bf16.mxu0 0
        %6597 = vmatpush2.bf16.msra.mxu0 0
        %6598 = vmatprep.subr.bf16.mxu0 0
        %6599 = vmatpush2.bf16.msra.mxu0 0
        %6600 = vmatprep.mubr.bf16.mxu0 0
        %6601 = vmatmul.mubr.bf16.gmra.mxu0 %v766
        %v6602 = vpop.f32.mrf.mxu0
        %v6603 = vadd.f32 0.0, %v6602
        %v6604 = vpop.f32.mrf.mxu0
        %v6605 = vadd.f32 0.0, %v6604
        %v6606 = vpop.f32.mrf.mxu0
        %v6607 = vpop.f32.mrf.mxu0
        %6608 = vdwg.mxu0
        %6609 = vmatprep.subr.bf16.mxu0 0
        %6610 = vmatpush1.bf16.msra.mxu0 0
        %6611 = vmatprep.subr.bf16.mxu0 0
        %6612 = vmatpush1.bf16.msra.mxu0 0
        %6613 = vmatprep.subr.bf16.mxu0 0
        %6614 = vmatpush1.bf16.msra.mxu0 0
        %6615 = vmatprep.subr.bf16.mxu0 0
        %6616 = vmatpush1.bf16.msra.mxu0 0
        %6617 = vmatprep.subr.bf16.mxu0 0
        %6618 = vmatpush1.bf16.msra.mxu0 0
        %6619 = vmatprep.subr.bf16.mxu0 0
        %6620 = vmatpush1.bf16.msra.mxu0 0
        %6621 = vmatprep.subr.bf16.mxu0 0
        %6622 = vmatpush1.bf16.msra.mxu0 0
        %6623 = vmatprep.subr.bf16.mxu0 0
        %6624 = vmatpush1.bf16.msra.mxu0 %v6566
        %6625 = vmatprep.subr.bf16.mxu0 0
        %6626 = vmatpush2.bf16.msra.mxu0 0
        %6627 = vmatprep.subr.bf16.mxu0 0
        %6628 = vmatpush2.bf16.msra.mxu0 0
        %6629 = vmatprep.subr.bf16.mxu0 0
        %6630 = vmatpush2.bf16.msra.mxu0 0
        %6631 = vmatprep.subr.bf16.mxu0 0
        %6632 = vmatpush2.bf16.msra.mxu0 0
        %6633 = vmatprep.subr.bf16.mxu0 0
        %6634 = vmatpush2.bf16.msra.mxu0 0
        %6635 = vmatprep.subr.bf16.mxu0 0
        %6636 = vmatpush2.bf16.msra.mxu0 0
        %6637 = vmatprep.subr.bf16.mxu0 0
        %6638 = vmatpush2.bf16.msra.mxu0 0
        %6639 = vmatprep.subr.bf16.mxu0 0
        %6640 = vmatpush2.bf16.msra.mxu0 0
        %6641 = vmatprep.mubr.bf16.mxu0 0
        %6642 = vmatmul.mubr.bf16.gmra.mxu0 %v766
        %v6643 = vpop.f32.mrf.mxu0
        %v6644 = vadd.f32 0.0, %v6643
        %v6645 = vpop.f32.mrf.mxu0
        %v6646 = vpop.f32.mrf.mxu0
        %v6647 = vpop.f32.mrf.mxu0
        %6648 = vdwg.mxu0
        %v6649 = vadd.f32 %v6548, %v6603
        %v6650 = vadd.f32 %v6549, %v6605
        %v6651 = vadd.f32 %v6550, %v6644
        %6652 = vrot.lane.b32.xlu0 %v6155, 108
        %v6653 = vpop.permute.xlu0 %6652
        %6654 = vrot.lane.b32.xlu0 %v6156, 108
        %v6655 = vpop.permute.xlu0 %6654
        %6656 = vrot.lane.b32.xlu0 %v6157, 108
        %v6657 = vpop.permute.xlu0 %6656
        %v6658 = vsel %vm867, %v6653, %v6655
        %v6659 = vsel %vm867, %v6655, %v6657
        %v6661 = vsel %vm362, %v6658, 0
        %v6664 = vsel %vm362, %v6659, 0
        %v6667 = vsel %vm362, %v6657, 0
        %6669 = vmatprep.subr.bf16.mxu0 0
        %6670 = vmatpush1.bf16.msra.mxu0 0
        %6671 = vmatprep.subr.bf16.mxu0 0
        %6672 = vmatpush1.bf16.msra.mxu0 0
        %6673 = vmatprep.subr.bf16.mxu0 0
        %6674 = vmatpush1.bf16.msra.mxu0 0
        %6675 = vmatprep.subr.bf16.mxu0 0
        %6676 = vmatpush1.bf16.msra.mxu0 0
        %6677 = vmatprep.subr.bf16.mxu0 0
        %6678 = vmatpush1.bf16.msra.mxu0 0
        %6679 = vmatprep.subr.bf16.mxu0 0
        %6680 = vmatpush1.bf16.msra.mxu0 0
        %6681 = vmatprep.subr.bf16.mxu0 0
        %6682 = vmatpush1.bf16.msra.mxu0 0
        %6683 = vmatprep.subr.bf16.mxu0 %v6664
        %6684 = vmatpush1.bf16.msra.mxu0 %v6661
        %6685 = vmatprep.subr.bf16.mxu0 0
        %6686 = vmatpush2.bf16.msra.mxu0 0
        %6687 = vmatprep.subr.bf16.mxu0 0
        %6688 = vmatpush2.bf16.msra.mxu0 0
        %6689 = vmatprep.subr.bf16.mxu0 0
        %6690 = vmatpush2.bf16.msra.mxu0 0
        %6691 = vmatprep.subr.bf16.mxu0 0
        %6692 = vmatpush2.bf16.msra.mxu0 0
        %6693 = vmatprep.subr.bf16.mxu0 0
        %6694 = vmatpush2.bf16.msra.mxu0 0
        %6695 = vmatprep.subr.bf16.mxu0 0
        %6696 = vmatpush2.bf16.msra.mxu0 0
        %6697 = vmatprep.subr.bf16.mxu0 0
        %6698 = vmatpush2.bf16.msra.mxu0 0
        %6699 = vmatprep.subr.bf16.mxu0 0
        %6700 = vmatpush2.bf16.msra.mxu0 0
        %6701 = vmatprep.mubr.bf16.mxu0 0
        %6702 = vmatmul.mubr.bf16.gmra.mxu0 %v871
        %v6703 = vpop.f32.mrf.mxu0
        %v6704 = vadd.f32 0.0, %v6703
        %v6705 = vpop.f32.mrf.mxu0
        %v6706 = vadd.f32 0.0, %v6705
        %v6707 = vpop.f32.mrf.mxu0
        %v6708 = vpop.f32.mrf.mxu0
        %6709 = vdwg.mxu0
        %6710 = vmatprep.subr.bf16.mxu0 0
        %6711 = vmatpush1.bf16.msra.mxu0 0
        %6712 = vmatprep.subr.bf16.mxu0 0
        %6713 = vmatpush1.bf16.msra.mxu0 0
        %6714 = vmatprep.subr.bf16.mxu0 0
        %6715 = vmatpush1.bf16.msra.mxu0 0
        %6716 = vmatprep.subr.bf16.mxu0 0
        %6717 = vmatpush1.bf16.msra.mxu0 0
        %6718 = vmatprep.subr.bf16.mxu0 0
        %6719 = vmatpush1.bf16.msra.mxu0 0
        %6720 = vmatprep.subr.bf16.mxu0 0
        %6721 = vmatpush1.bf16.msra.mxu0 0
        %6722 = vmatprep.subr.bf16.mxu0 0
        %6723 = vmatpush1.bf16.msra.mxu0 0
        %6724 = vmatprep.subr.bf16.mxu0 0
        %6725 = vmatpush1.bf16.msra.mxu0 %v6667
        %6726 = vmatprep.subr.bf16.mxu0 0
        %6727 = vmatpush2.bf16.msra.mxu0 0
        %6728 = vmatprep.subr.bf16.mxu0 0
        %6729 = vmatpush2.bf16.msra.mxu0 0
        %6730 = vmatprep.subr.bf16.mxu0 0
        %6731 = vmatpush2.bf16.msra.mxu0 0
        %6732 = vmatprep.subr.bf16.mxu0 0
        %6733 = vmatpush2.bf16.msra.mxu0 0
        %6734 = vmatprep.subr.bf16.mxu0 0
        %6735 = vmatpush2.bf16.msra.mxu0 0
        %6736 = vmatprep.subr.bf16.mxu0 0
        %6737 = vmatpush2.bf16.msra.mxu0 0
        %6738 = vmatprep.subr.bf16.mxu0 0
        %6739 = vmatpush2.bf16.msra.mxu0 0
        %6740 = vmatprep.subr.bf16.mxu0 0
        %6741 = vmatpush2.bf16.msra.mxu0 0
        %6742 = vmatprep.mubr.bf16.mxu0 0
        %6743 = vmatmul.mubr.bf16.gmra.mxu0 %v871
        %v6744 = vpop.f32.mrf.mxu0
        %v6745 = vadd.f32 0.0, %v6744
        %v6746 = vpop.f32.mrf.mxu0
        %v6747 = vpop.f32.mrf.mxu0
        %v6748 = vpop.f32.mrf.mxu0
        %6749 = vdwg.mxu0
        %v6750 = vadd.f32 %v6649, %v6704
        %v6751 = vadd.f32 %v6650, %v6706
        %v6752 = vadd.f32 %v6651, %v6745
        %6753 = vrot.lane.b32.xlu0 %v6155, 92
        %v6754 = vpop.permute.xlu0 %6753
        %6755 = vrot.lane.b32.xlu0 %v6156, 92
        %v6756 = vpop.permute.xlu0 %6755
        %6757 = vrot.lane.b32.xlu0 %v6157, 92
        %v6758 = vpop.permute.xlu0 %6757
        %v6759 = vsel %vm972, %v6754, %v6756
        %v6760 = vsel %vm972, %v6756, %v6758
        %v6762 = vsel %vm362, %v6759, 0
        %v6765 = vsel %vm362, %v6760, 0
        %v6768 = vsel %vm362, %v6758, 0
        %6770 = vmatprep.subr.bf16.mxu0 0
        %6771 = vmatpush1.bf16.msra.mxu0 0
        %6772 = vmatprep.subr.bf16.mxu0 0
        %6773 = vmatpush1.bf16.msra.mxu0 0
        %6774 = vmatprep.subr.bf16.mxu0 0
        %6775 = vmatpush1.bf16.msra.mxu0 0
        %6776 = vmatprep.subr.bf16.mxu0 0
        %6777 = vmatpush1.bf16.msra.mxu0 0
        %6778 = vmatprep.subr.bf16.mxu0 0
        %6779 = vmatpush1.bf16.msra.mxu0 0
        %6780 = vmatprep.subr.bf16.mxu0 0
        %6781 = vmatpush1.bf16.msra.mxu0 0
        %6782 = vmatprep.subr.bf16.mxu0 0
        %6783 = vmatpush1.bf16.msra.mxu0 0
        %6784 = vmatprep.subr.bf16.mxu0 %v6765
        %6785 = vmatpush1.bf16.msra.mxu0 %v6762
        %6786 = vmatprep.subr.bf16.mxu0 0
        %6787 = vmatpush2.bf16.msra.mxu0 0
        %6788 = vmatprep.subr.bf16.mxu0 0
        %6789 = vmatpush2.bf16.msra.mxu0 0
        %6790 = vmatprep.subr.bf16.mxu0 0
        %6791 = vmatpush2.bf16.msra.mxu0 0
        %6792 = vmatprep.subr.bf16.mxu0 0
        %6793 = vmatpush2.bf16.msra.mxu0 0
        %6794 = vmatprep.subr.bf16.mxu0 0
        %6795 = vmatpush2.bf16.msra.mxu0 0
        %6796 = vmatprep.subr.bf16.mxu0 0
        %6797 = vmatpush2.bf16.msra.mxu0 0
        %6798 = vmatprep.subr.bf16.mxu0 0
        %6799 = vmatpush2.bf16.msra.mxu0 0
        %6800 = vmatprep.subr.bf16.mxu0 0
        %6801 = vmatpush2.bf16.msra.mxu0 0
        %6802 = vmatprep.mubr.bf16.mxu0 0
        %6803 = vmatmul.mubr.bf16.gmra.mxu0 %v976
        %v6804 = vpop.f32.mrf.mxu0
        %v6805 = vadd.f32 0.0, %v6804
        %v6806 = vpop.f32.mrf.mxu0
        %v6807 = vadd.f32 0.0, %v6806
        %v6808 = vpop.f32.mrf.mxu0
        %v6809 = vpop.f32.mrf.mxu0
        %6810 = vdwg.mxu0
        %6811 = vmatprep.subr.bf16.mxu0 0
        %6812 = vmatpush1.bf16.msra.mxu0 0
        %6813 = vmatprep.subr.bf16.mxu0 0
        %6814 = vmatpush1.bf16.msra.mxu0 0
        %6815 = vmatprep.subr.bf16.mxu0 0
        %6816 = vmatpush1.bf16.msra.mxu0 0
        %6817 = vmatprep.subr.bf16.mxu0 0
        %6818 = vmatpush1.bf16.msra.mxu0 0
        %6819 = vmatprep.subr.bf16.mxu0 0
        %6820 = vmatpush1.bf16.msra.mxu0 0
        %6821 = vmatprep.subr.bf16.mxu0 0
        %6822 = vmatpush1.bf16.msra.mxu0 0
        %6823 = vmatprep.subr.bf16.mxu0 0
        %6824 = vmatpush1.bf16.msra.mxu0 0
        %6825 = vmatprep.subr.bf16.mxu0 0
        %6826 = vmatpush1.bf16.msra.mxu0 %v6768
        %6827 = vmatprep.subr.bf16.mxu0 0
        %6828 = vmatpush2.bf16.msra.mxu0 0
        %6829 = vmatprep.subr.bf16.mxu0 0
        %6830 = vmatpush2.bf16.msra.mxu0 0
        %6831 = vmatprep.subr.bf16.mxu0 0
        %6832 = vmatpush2.bf16.msra.mxu0 0
        %6833 = vmatprep.subr.bf16.mxu0 0
        %6834 = vmatpush2.bf16.msra.mxu0 0
        %6835 = vmatprep.subr.bf16.mxu0 0
        %6836 = vmatpush2.bf16.msra.mxu0 0
        %6837 = vmatprep.subr.bf16.mxu0 0
        %6838 = vmatpush2.bf16.msra.mxu0 0
        %6839 = vmatprep.subr.bf16.mxu0 0
        %6840 = vmatpush2.bf16.msra.mxu0 0
        %6841 = vmatprep.subr.bf16.mxu0 0
        %6842 = vmatpush2.bf16.msra.mxu0 0
        %6843 = vmatprep.mubr.bf16.mxu0 0
        %6844 = vmatmul.mubr.bf16.gmra.mxu0 %v976
        %v6845 = vpop.f32.mrf.mxu0
        %v6846 = vadd.f32 0.0, %v6845
        %v6847 = vpop.f32.mrf.mxu0
        %v6848 = vpop.f32.mrf.mxu0
        %v6849 = vpop.f32.mrf.mxu0
        %6850 = vdwg.mxu0
        %v6851 = vadd.f32 %v6750, %v6805
        %v6852 = vadd.f32 %v6751, %v6807
        %v6853 = vadd.f32 %v6752, %v6846
        %6854 = vrot.lane.b32.xlu0 %v6155, 91
        %v6855 = vpop.permute.xlu0 %6854
        %6856 = vrot.lane.b32.xlu0 %v6156, 91
        %v6857 = vpop.permute.xlu0 %6856
        %6858 = vrot.lane.b32.xlu0 %v6157, 91
        %v6859 = vpop.permute.xlu0 %6858
        %v6860 = vsel %vm1077, %v6855, %v6857
        %v6861 = vsel %vm1077, %v6857, %v6859
        %v6863 = vsel %vm362, %v6860, 0
        %v6866 = vsel %vm362, %v6861, 0
        %v6869 = vsel %vm362, %v6859, 0
        %6871 = vmatprep.subr.bf16.mxu0 0
        %6872 = vmatpush1.bf16.msra.mxu0 0
        %6873 = vmatprep.subr.bf16.mxu0 0
        %6874 = vmatpush1.bf16.msra.mxu0 0
        %6875 = vmatprep.subr.bf16.mxu0 0
        %6876 = vmatpush1.bf16.msra.mxu0 0
        %6877 = vmatprep.subr.bf16.mxu0 0
        %6878 = vmatpush1.bf16.msra.mxu0 0
        %6879 = vmatprep.subr.bf16.mxu0 0
        %6880 = vmatpush1.bf16.msra.mxu0 0
        %6881 = vmatprep.subr.bf16.mxu0 0
        %6882 = vmatpush1.bf16.msra.mxu0 0
        %6883 = vmatprep.subr.bf16.mxu0 0
        %6884 = vmatpush1.bf16.msra.mxu0 0
        %6885 = vmatprep.subr.bf16.mxu0 %v6866
        %6886 = vmatpush1.bf16.msra.mxu0 %v6863
        %6887 = vmatprep.subr.bf16.mxu0 0
        %6888 = vmatpush2.bf16.msra.mxu0 0
        %6889 = vmatprep.subr.bf16.mxu0 0
        %6890 = vmatpush2.bf16.msra.mxu0 0
        %6891 = vmatprep.subr.bf16.mxu0 0
        %6892 = vmatpush2.bf16.msra.mxu0 0
        %6893 = vmatprep.subr.bf16.mxu0 0
        %6894 = vmatpush2.bf16.msra.mxu0 0
        %6895 = vmatprep.subr.bf16.mxu0 0
        %6896 = vmatpush2.bf16.msra.mxu0 0
        %6897 = vmatprep.subr.bf16.mxu0 0
        %6898 = vmatpush2.bf16.msra.mxu0 0
        %6899 = vmatprep.subr.bf16.mxu0 0
        %6900 = vmatpush2.bf16.msra.mxu0 0
        %6901 = vmatprep.subr.bf16.mxu0 0
        %6902 = vmatpush2.bf16.msra.mxu0 0
        %6903 = vmatprep.mubr.bf16.mxu0 0
        %6904 = vmatmul.mubr.bf16.gmra.mxu0 %v1081
        %v6905 = vpop.f32.mrf.mxu0
        %v6906 = vadd.f32 0.0, %v6905
        %v6907 = vpop.f32.mrf.mxu0
        %v6908 = vadd.f32 0.0, %v6907
        %v6909 = vpop.f32.mrf.mxu0
        %v6910 = vpop.f32.mrf.mxu0
        %6911 = vdwg.mxu0
        %6912 = vmatprep.subr.bf16.mxu0 0
        %6913 = vmatpush1.bf16.msra.mxu0 0
        %6914 = vmatprep.subr.bf16.mxu0 0
        %6915 = vmatpush1.bf16.msra.mxu0 0
        %6916 = vmatprep.subr.bf16.mxu0 0
        %6917 = vmatpush1.bf16.msra.mxu0 0
        %6918 = vmatprep.subr.bf16.mxu0 0
        %6919 = vmatpush1.bf16.msra.mxu0 0
        %6920 = vmatprep.subr.bf16.mxu0 0
        %6921 = vmatpush1.bf16.msra.mxu0 0
        %6922 = vmatprep.subr.bf16.mxu0 0
        %6923 = vmatpush1.bf16.msra.mxu0 0
        %6924 = vmatprep.subr.bf16.mxu0 0
        %6925 = vmatpush1.bf16.msra.mxu0 0
        %6926 = vmatprep.subr.bf16.mxu0 0
        %6927 = vmatpush1.bf16.msra.mxu0 %v6869
        %6928 = vmatprep.subr.bf16.mxu0 0
        %6929 = vmatpush2.bf16.msra.mxu0 0
        %6930 = vmatprep.subr.bf16.mxu0 0
        %6931 = vmatpush2.bf16.msra.mxu0 0
        %6932 = vmatprep.subr.bf16.mxu0 0
        %6933 = vmatpush2.bf16.msra.mxu0 0
        %6934 = vmatprep.subr.bf16.mxu0 0
        %6935 = vmatpush2.bf16.msra.mxu0 0
        %6936 = vmatprep.subr.bf16.mxu0 0
        %6937 = vmatpush2.bf16.msra.mxu0 0
        %6938 = vmatprep.subr.bf16.mxu0 0
        %6939 = vmatpush2.bf16.msra.mxu0 0
        %6940 = vmatprep.subr.bf16.mxu0 0
        %6941 = vmatpush2.bf16.msra.mxu0 0
        %6942 = vmatprep.subr.bf16.mxu0 0
        %6943 = vmatpush2.bf16.msra.mxu0 0
        %6944 = vmatprep.mubr.bf16.mxu0 0
        %6945 = vmatmul.mubr.bf16.gmra.mxu0 %v1081
        %v6946 = vpop.f32.mrf.mxu0
        %v6947 = vadd.f32 0.0, %v6946
        %v6948 = vpop.f32.mrf.mxu0
        %v6949 = vpop.f32.mrf.mxu0
        %v6950 = vpop.f32.mrf.mxu0
        %6951 = vdwg.mxu0
        %v6952 = vadd.f32 %v6851, %v6906
        %v6953 = vadd.f32 %v6852, %v6908
        %v6954 = vadd.f32 %v6853, %v6947
        %6955 = vrot.lane.b32.xlu0 %v6155, 90
        %v6956 = vpop.permute.xlu0 %6955
        %6957 = vrot.lane.b32.xlu0 %v6156, 90
        %v6958 = vpop.permute.xlu0 %6957
        %6959 = vrot.lane.b32.xlu0 %v6157, 90
        %v6960 = vpop.permute.xlu0 %6959
        %v6961 = vsel %vm1182, %v6956, %v6958
        %v6962 = vsel %vm1182, %v6958, %v6960
        %v6964 = vsel %vm362, %v6961, 0
        %v6967 = vsel %vm362, %v6962, 0
        %v6970 = vsel %vm362, %v6960, 0
        %6972 = vmatprep.subr.bf16.mxu0 0
        %6973 = vmatpush1.bf16.msra.mxu0 0
        %6974 = vmatprep.subr.bf16.mxu0 0
        %6975 = vmatpush1.bf16.msra.mxu0 0
        %6976 = vmatprep.subr.bf16.mxu0 0
        %6977 = vmatpush1.bf16.msra.mxu0 0
        %6978 = vmatprep.subr.bf16.mxu0 0
        %6979 = vmatpush1.bf16.msra.mxu0 0
        %6980 = vmatprep.subr.bf16.mxu0 0
        %6981 = vmatpush1.bf16.msra.mxu0 0
        %6982 = vmatprep.subr.bf16.mxu0 0
        %6983 = vmatpush1.bf16.msra.mxu0 0
        %6984 = vmatprep.subr.bf16.mxu0 0
        %6985 = vmatpush1.bf16.msra.mxu0 0
        %6986 = vmatprep.subr.bf16.mxu0 %v6967
        %6987 = vmatpush1.bf16.msra.mxu0 %v6964
        %6988 = vmatprep.subr.bf16.mxu0 0
        %6989 = vmatpush2.bf16.msra.mxu0 0
        %6990 = vmatprep.subr.bf16.mxu0 0
        %6991 = vmatpush2.bf16.msra.mxu0 0
        %6992 = vmatprep.subr.bf16.mxu0 0
        %6993 = vmatpush2.bf16.msra.mxu0 0
        %6994 = vmatprep.subr.bf16.mxu0 0
        %6995 = vmatpush2.bf16.msra.mxu0 0
        %6996 = vmatprep.subr.bf16.mxu0 0
        %6997 = vmatpush2.bf16.msra.mxu0 0
        %6998 = vmatprep.subr.bf16.mxu0 0
        %6999 = vmatpush2.bf16.msra.mxu0 0
        %7000 = vmatprep.subr.bf16.mxu0 0
        %7001 = vmatpush2.bf16.msra.mxu0 0
        %7002 = vmatprep.subr.bf16.mxu0 0
        %7003 = vmatpush2.bf16.msra.mxu0 0
        %7004 = vmatprep.mubr.bf16.mxu0 0
        %7005 = vmatmul.mubr.bf16.gmra.mxu0 %v1186
        %v7006 = vpop.f32.mrf.mxu0
        %v7007 = vadd.f32 0.0, %v7006
        %v7008 = vpop.f32.mrf.mxu0
        %v7009 = vadd.f32 0.0, %v7008
        %v7010 = vpop.f32.mrf.mxu0
        %v7011 = vpop.f32.mrf.mxu0
        %7012 = vdwg.mxu0
        %7013 = vmatprep.subr.bf16.mxu0 0
        %7014 = vmatpush1.bf16.msra.mxu0 0
        %7015 = vmatprep.subr.bf16.mxu0 0
        %7016 = vmatpush1.bf16.msra.mxu0 0
        %7017 = vmatprep.subr.bf16.mxu0 0
        %7018 = vmatpush1.bf16.msra.mxu0 0
        %7019 = vmatprep.subr.bf16.mxu0 0
        %7020 = vmatpush1.bf16.msra.mxu0 0
        %7021 = vmatprep.subr.bf16.mxu0 0
        %7022 = vmatpush1.bf16.msra.mxu0 0
        %7023 = vmatprep.subr.bf16.mxu0 0
        %7024 = vmatpush1.bf16.msra.mxu0 0
        %7025 = vmatprep.subr.bf16.mxu0 0
        %7026 = vmatpush1.bf16.msra.mxu0 0
        %7027 = vmatprep.subr.bf16.mxu0 0
        %7028 = vmatpush1.bf16.msra.mxu0 %v6970
        %7029 = vmatprep.subr.bf16.mxu0 0
        %7030 = vmatpush2.bf16.msra.mxu0 0
        %7031 = vmatprep.subr.bf16.mxu0 0
        %7032 = vmatpush2.bf16.msra.mxu0 0
        %7033 = vmatprep.subr.bf16.mxu0 0
        %7034 = vmatpush2.bf16.msra.mxu0 0
        %7035 = vmatprep.subr.bf16.mxu0 0
        %7036 = vmatpush2.bf16.msra.mxu0 0
        %7037 = vmatprep.subr.bf16.mxu0 0
        %7038 = vmatpush2.bf16.msra.mxu0 0
        %7039 = vmatprep.subr.bf16.mxu0 0
        %7040 = vmatpush2.bf16.msra.mxu0 0
        %7041 = vmatprep.subr.bf16.mxu0 0
        %7042 = vmatpush2.bf16.msra.mxu0 0
        %7043 = vmatprep.subr.bf16.mxu0 0
        %7044 = vmatpush2.bf16.msra.mxu0 0
        %7045 = vmatprep.mubr.bf16.mxu0 0
        %7046 = vmatmul.mubr.bf16.gmra.mxu0 %v1186
        %v7047 = vpop.f32.mrf.mxu0
        %v7048 = vadd.f32 0.0, %v7047
        %v7049 = vpop.f32.mrf.mxu0
        %v7050 = vpop.f32.mrf.mxu0
        %v7051 = vpop.f32.mrf.mxu0
        %7052 = vdwg.mxu0
        %v7053 = vadd.f32 %v6952, %v7007
        %v7054 = vadd.f32 %v6953, %v7009
        %v7055 = vadd.f32 %v6954, %v7048
        %v7056 = vadd.f32 %v7053, %v1284
        %v7057 = vadd.f32 %v7054, %v1284
        %v7058 = vadd.f32 %v7055, %v1284
        %v7059 = vsub.f32 %v7056, %v5173
        %v7060 = vsub.f32 %v7057, %v5174
        %v7061 = vsub.f32 %v7058, %v5175
        %v7062 = vmul.f32 %v7059, 0.5
        %v7063 = vmul.f32 %v7060, 0.5
        %v7064 = vmul.f32 %v7061, 0.5
        %v7065 = vadd.f32 %v5173, %v7062
        %v7066 = vadd.f32 %v5174, %v7063
        %v7067 = vadd.f32 %v5175, %v7064
        %vm7068 = vcmp.ge.f32.partialorder %v7065, 1.0
        %vm7069 = vcmp.ge.f32.partialorder %v7066, 1.0
        %vm7070 = vcmp.ge.f32.partialorder %v7067, 1.0
        %v7071 = vsel %vm7068, 1, 0
        %v7072 = vsel %vm7069, 1, 0
        %v7073 = vsel %vm7070, 1, 0
        %v7074 = vcvt.s32.f32 %v7071
        %v7075 = vcvt.s32.f32 %v7072
        %v7076 = vcvt.s32.f32 %v7073
        %v7077 = vmul.f32 %v7074, %v1314
        %v7078 = vmul.f32 %v7075, %v1318
        %v7079 = vmul.f32 %v7076, %v1322
        %7083 = vrot.lane.b32.xlu0 %v7077, 19
        %v7084 = vpop.permute.xlu0 %7083
        %7085 = vrot.lane.b32.xlu0 %v7078, 19
        %v7086 = vpop.permute.xlu0 %7085
        %7087 = vrot.lane.b32.xlu0 %v7079, 19
        %v7088 = vpop.permute.xlu0 %7087
        %v7089 = vsel %vm1338, %v7084, %v7086
        %v7090 = vsel %vm1338, %v7086, %v7088
        %7094 = vst.msk [vmem:[#allocation2] sm:$0xff] %vm1344, %v7084
        %7095 = vst [vmem:[#allocation2 + $0x8] sm:$0xff] %v7089
        %7096 = vst.msk [vmem:[#allocation2 + $0x10] sm:$0xff] %vm1347, %v7090
        %v7097 = vld [vmem:[#allocation2] sm:$0xff]
        %v7098 = vld [vmem:[#allocation2 + $0x8] sm:$0xff]
        %v7099 = vld [vmem:[#allocation2 + $0x10] sm:$0xff]
        %v7100 = vpack.c.bf16 %v7097, %v7097
        %v7101 = vpack.c.bf16 %v7098, %v7098
        %v7102 = vpack.c.bf16 %v7099, %v7099
        %7106 = vrot.lane.b32.xlu0 %v7100, 127
        %v7107 = vpop.permute.xlu0 %7106
        %7108 = vrot.lane.b32.xlu0 %v7101, 127
        %v7109 = vpop.permute.xlu0 %7108
        %7110 = vrot.lane.b32.xlu0 %v7102, 127
        %v7111 = vpop.permute.xlu0 %7110
        %v7112 = vsel %vm355, %v7107, %v7109
        %v7113 = vsel %vm355, %v7109, %v7111
        %v7115 = vsel %vm1370, %v7112, 0
        %v7118 = vsel %vm1370, %v7113, 0
        %v7121 = vsel %vm1370, %v7111, 0
        %7123 = vmatprep.subr.bf16.mxu0 0
        %7124 = vmatpush1.bf16.msra.mxu0 0
        %7125 = vmatprep.subr.bf16.mxu0 0
        %7126 = vmatpush1.bf16.msra.mxu0 0
        %7127 = vmatprep.subr.bf16.mxu0 0
        %7128 = vmatpush1.bf16.msra.mxu0 0
        %7129 = vmatprep.subr.bf16.mxu0 0
        %7130 = vmatpush1.bf16.msra.mxu0 0
        %7131 = vmatprep.subr.bf16.mxu0 0
        %7132 = vmatpush1.bf16.msra.mxu0 0
        %7133 = vmatprep.subr.bf16.mxu0 0
        %7134 = vmatpush1.bf16.msra.mxu0 0
        %7135 = vmatprep.subr.bf16.mxu0 0
        %7136 = vmatpush1.bf16.msra.mxu0 0
        %7137 = vmatprep.subr.bf16.mxu0 %v7118
        %7138 = vmatpush1.bf16.msra.mxu0 %v7115
        %7139 = vmatprep.subr.bf16.mxu0 0
        %7140 = vmatpush2.bf16.msra.mxu0 0
        %7141 = vmatprep.subr.bf16.mxu0 0
        %7142 = vmatpush2.bf16.msra.mxu0 0
        %7143 = vmatprep.subr.bf16.mxu0 0
        %7144 = vmatpush2.bf16.msra.mxu0 0
        %7145 = vmatprep.subr.bf16.mxu0 0
        %7146 = vmatpush2.bf16.msra.mxu0 0
        %7147 = vmatprep.subr.bf16.mxu0 0
        %7148 = vmatpush2.bf16.msra.mxu0 0
        %7149 = vmatprep.subr.bf16.mxu0 0
        %7150 = vmatpush2.bf16.msra.mxu0 0
        %7151 = vmatprep.subr.bf16.mxu0 0
        %7152 = vmatpush2.bf16.msra.mxu0 0
        %7153 = vmatprep.subr.bf16.mxu0 0
        %7154 = vmatpush2.bf16.msra.mxu0 0
        %7155 = vmatprep.mubr.bf16.mxu0 0
        %7156 = vmatmul.mubr.bf16.gmra.mxu0 %v1368
        %v7157 = vpop.f32.mrf.mxu0
        %v7158 = vadd.f32 0.0, %v7157
        %v7159 = vpop.f32.mrf.mxu0
        %v7160 = vadd.f32 0.0, %v7159
        %v7161 = vpop.f32.mrf.mxu0
        %v7162 = vpop.f32.mrf.mxu0
        %7163 = vdwg.mxu0
        %7164 = vmatprep.subr.bf16.mxu0 0
        %7165 = vmatpush1.bf16.msra.mxu0 0
        %7166 = vmatprep.subr.bf16.mxu0 0
        %7167 = vmatpush1.bf16.msra.mxu0 0
        %7168 = vmatprep.subr.bf16.mxu0 0
        %7169 = vmatpush1.bf16.msra.mxu0 0
        %7170 = vmatprep.subr.bf16.mxu0 0
        %7171 = vmatpush1.bf16.msra.mxu0 0
        %7172 = vmatprep.subr.bf16.mxu0 0
        %7173 = vmatpush1.bf16.msra.mxu0 0
        %7174 = vmatprep.subr.bf16.mxu0 0
        %7175 = vmatpush1.bf16.msra.mxu0 0
        %7176 = vmatprep.subr.bf16.mxu0 0
        %7177 = vmatpush1.bf16.msra.mxu0 0
        %7178 = vmatprep.subr.bf16.mxu0 0
        %7179 = vmatpush1.bf16.msra.mxu0 %v7121
        %7180 = vmatprep.subr.bf16.mxu0 0
        %7181 = vmatpush2.bf16.msra.mxu0 0
        %7182 = vmatprep.subr.bf16.mxu0 0
        %7183 = vmatpush2.bf16.msra.mxu0 0
        %7184 = vmatprep.subr.bf16.mxu0 0
        %7185 = vmatpush2.bf16.msra.mxu0 0
        %7186 = vmatprep.subr.bf16.mxu0 0
        %7187 = vmatpush2.bf16.msra.mxu0 0
        %7188 = vmatprep.subr.bf16.mxu0 0
        %7189 = vmatpush2.bf16.msra.mxu0 0
        %7190 = vmatprep.subr.bf16.mxu0 0
        %7191 = vmatpush2.bf16.msra.mxu0 0
        %7192 = vmatprep.subr.bf16.mxu0 0
        %7193 = vmatpush2.bf16.msra.mxu0 0
        %7194 = vmatprep.subr.bf16.mxu0 0
        %7195 = vmatpush2.bf16.msra.mxu0 0
        %7196 = vmatprep.mubr.bf16.mxu0 0
        %7197 = vmatmul.mubr.bf16.gmra.mxu0 %v1368
        %v7198 = vpop.f32.mrf.mxu0
        %v7199 = vadd.f32 0.0, %v7198
        %v7200 = vpop.f32.mrf.mxu0
        %v7201 = vpop.f32.mrf.mxu0
        %v7202 = vpop.f32.mrf.mxu0
        %7203 = vdwg.mxu0
        %v7205 = vsel %vm1370, %v7100, 0
        %v7208 = vsel %vm1370, %v7101, 0
        %v7211 = vsel %vm1370, %v7102, 0
        %7213 = vmatprep.subr.bf16.mxu0 0
        %7214 = vmatpush1.bf16.msra.mxu0 0
        %7215 = vmatprep.subr.bf16.mxu0 0
        %7216 = vmatpush1.bf16.msra.mxu0 0
        %7217 = vmatprep.subr.bf16.mxu0 0
        %7218 = vmatpush1.bf16.msra.mxu0 0
        %7219 = vmatprep.subr.bf16.mxu0 0
        %7220 = vmatpush1.bf16.msra.mxu0 0
        %7221 = vmatprep.subr.bf16.mxu0 0
        %7222 = vmatpush1.bf16.msra.mxu0 0
        %7223 = vmatprep.subr.bf16.mxu0 0
        %7224 = vmatpush1.bf16.msra.mxu0 0
        %7225 = vmatprep.subr.bf16.mxu0 0
        %7226 = vmatpush1.bf16.msra.mxu0 0
        %7227 = vmatprep.subr.bf16.mxu0 %v7208
        %7228 = vmatpush1.bf16.msra.mxu0 %v7205
        %7229 = vmatprep.subr.bf16.mxu0 0
        %7230 = vmatpush2.bf16.msra.mxu0 0
        %7231 = vmatprep.subr.bf16.mxu0 0
        %7232 = vmatpush2.bf16.msra.mxu0 0
        %7233 = vmatprep.subr.bf16.mxu0 0
        %7234 = vmatpush2.bf16.msra.mxu0 0
        %7235 = vmatprep.subr.bf16.mxu0 0
        %7236 = vmatpush2.bf16.msra.mxu0 0
        %7237 = vmatprep.subr.bf16.mxu0 0
        %7238 = vmatpush2.bf16.msra.mxu0 0
        %7239 = vmatprep.subr.bf16.mxu0 0
        %7240 = vmatpush2.bf16.msra.mxu0 0
        %7241 = vmatprep.subr.bf16.mxu0 0
        %7242 = vmatpush2.bf16.msra.mxu0 0
        %7243 = vmatprep.subr.bf16.mxu0 0
        %7244 = vmatpush2.bf16.msra.mxu0 0
        %7245 = vmatprep.mubr.bf16.mxu0 0
        %7246 = vmatmul.mubr.bf16.gmra.mxu0 %v1462
        %v7247 = vpop.f32.mrf.mxu0
        %v7248 = vadd.f32 %v7158, %v7247
        %v7249 = vpop.f32.mrf.mxu0
        %v7250 = vadd.f32 %v7160, %v7249
        %v7251 = vpop.f32.mrf.mxu0
        %v7252 = vpop.f32.mrf.mxu0
        %7253 = vdwg.mxu0
        %7254 = vmatprep.subr.bf16.mxu0 0
        %7255 = vmatpush1.bf16.msra.mxu0 0
        %7256 = vmatprep.subr.bf16.mxu0 0
        %7257 = vmatpush1.bf16.msra.mxu0 0
        %7258 = vmatprep.subr.bf16.mxu0 0
        %7259 = vmatpush1.bf16.msra.mxu0 0
        %7260 = vmatprep.subr.bf16.mxu0 0
        %7261 = vmatpush1.bf16.msra.mxu0 0
        %7262 = vmatprep.subr.bf16.mxu0 0
        %7263 = vmatpush1.bf16.msra.mxu0 0
        %7264 = vmatprep.subr.bf16.mxu0 0
        %7265 = vmatpush1.bf16.msra.mxu0 0
        %7266 = vmatprep.subr.bf16.mxu0 0
        %7267 = vmatpush1.bf16.msra.mxu0 0
        %7268 = vmatprep.subr.bf16.mxu0 0
        %7269 = vmatpush1.bf16.msra.mxu0 %v7211
        %7270 = vmatprep.subr.bf16.mxu0 0
        %7271 = vmatpush2.bf16.msra.mxu0 0
        %7272 = vmatprep.subr.bf16.mxu0 0
        %7273 = vmatpush2.bf16.msra.mxu0 0
        %7274 = vmatprep.subr.bf16.mxu0 0
        %7275 = vmatpush2.bf16.msra.mxu0 0
        %7276 = vmatprep.subr.bf16.mxu0 0
        %7277 = vmatpush2.bf16.msra.mxu0 0
        %7278 = vmatprep.subr.bf16.mxu0 0
        %7279 = vmatpush2.bf16.msra.mxu0 0
        %7280 = vmatprep.subr.bf16.mxu0 0
        %7281 = vmatpush2.bf16.msra.mxu0 0
        %7282 = vmatprep.subr.bf16.mxu0 0
        %7283 = vmatpush2.bf16.msra.mxu0 0
        %7284 = vmatprep.subr.bf16.mxu0 0
        %7285 = vmatpush2.bf16.msra.mxu0 0
        %7286 = vmatprep.mubr.bf16.mxu0 0
        %7287 = vmatmul.mubr.bf16.gmra.mxu0 %v1462
        %v7288 = vpop.f32.mrf.mxu0
        %v7289 = vadd.f32 %v7199, %v7288
        %v7290 = vpop.f32.mrf.mxu0
        %v7291 = vpop.f32.mrf.mxu0
        %v7292 = vpop.f32.mrf.mxu0
        %7293 = vdwg.mxu0
        %7294 = vrot.lane.b32.xlu0 %v7100, 126
        %v7295 = vpop.permute.xlu0 %7294
        %7296 = vrot.lane.b32.xlu0 %v7101, 126
        %v7297 = vpop.permute.xlu0 %7296
        %7298 = vrot.lane.b32.xlu0 %v7102, 126
        %v7299 = vpop.permute.xlu0 %7298
        %v7300 = vsel %vm552, %v7295, %v7297
        %v7301 = vsel %vm552, %v7297, %v7299
        %v7303 = vsel %vm1370, %v7300, 0
        %v7306 = vsel %vm1370, %v7301, 0
        %v7309 = vsel %vm1370, %v7299, 0
        %7311 = vmatprep.subr.bf16.mxu0 0
        %7312 = vmatpush1.bf16.msra.mxu0 0
        %7313 = vmatprep.subr.bf16.mxu0 0
        %7314 = vmatpush1.bf16.msra.mxu0 0
        %7315 = vmatprep.subr.bf16.mxu0 0
        %7316 = vmatpush1.bf16.msra.mxu0 0
        %7317 = vmatprep.subr.bf16.mxu0 0
        %7318 = vmatpush1.bf16.msra.mxu0 0
        %7319 = vmatprep.subr.bf16.mxu0 0
        %7320 = vmatpush1.bf16.msra.mxu0 0
        %7321 = vmatprep.subr.bf16.mxu0 0
        %7322 = vmatpush1.bf16.msra.mxu0 0
        %7323 = vmatprep.subr.bf16.mxu0 0
        %7324 = vmatpush1.bf16.msra.mxu0 0
        %7325 = vmatprep.subr.bf16.mxu0 %v7306
        %7326 = vmatpush1.bf16.msra.mxu0 %v7303
        %7327 = vmatprep.subr.bf16.mxu0 0
        %7328 = vmatpush2.bf16.msra.mxu0 0
        %7329 = vmatprep.subr.bf16.mxu0 0
        %7330 = vmatpush2.bf16.msra.mxu0 0
        %7331 = vmatprep.subr.bf16.mxu0 0
        %7332 = vmatpush2.bf16.msra.mxu0 0
        %7333 = vmatprep.subr.bf16.mxu0 0
        %7334 = vmatpush2.bf16.msra.mxu0 0
        %7335 = vmatprep.subr.bf16.mxu0 0
        %7336 = vmatpush2.bf16.msra.mxu0 0
        %7337 = vmatprep.subr.bf16.mxu0 0
        %7338 = vmatpush2.bf16.msra.mxu0 0
        %7339 = vmatprep.subr.bf16.mxu0 0
        %7340 = vmatpush2.bf16.msra.mxu0 0
        %7341 = vmatprep.subr.bf16.mxu0 0
        %7342 = vmatpush2.bf16.msra.mxu0 0
        %7343 = vmatprep.mubr.bf16.mxu0 0
        %7344 = vmatmul.mubr.bf16.gmra.mxu0 %v1563
        %v7345 = vpop.f32.mrf.mxu0
        %v7346 = vadd.f32 0.0, %v7345
        %v7347 = vpop.f32.mrf.mxu0
        %v7348 = vadd.f32 0.0, %v7347
        %v7349 = vpop.f32.mrf.mxu0
        %v7350 = vpop.f32.mrf.mxu0
        %7351 = vdwg.mxu0
        %7352 = vmatprep.subr.bf16.mxu0 0
        %7353 = vmatpush1.bf16.msra.mxu0 0
        %7354 = vmatprep.subr.bf16.mxu0 0
        %7355 = vmatpush1.bf16.msra.mxu0 0
        %7356 = vmatprep.subr.bf16.mxu0 0
        %7357 = vmatpush1.bf16.msra.mxu0 0
        %7358 = vmatprep.subr.bf16.mxu0 0
        %7359 = vmatpush1.bf16.msra.mxu0 0
        %7360 = vmatprep.subr.bf16.mxu0 0
        %7361 = vmatpush1.bf16.msra.mxu0 0
        %7362 = vmatprep.subr.bf16.mxu0 0
        %7363 = vmatpush1.bf16.msra.mxu0 0
        %7364 = vmatprep.subr.bf16.mxu0 0
        %7365 = vmatpush1.bf16.msra.mxu0 0
        %7366 = vmatprep.subr.bf16.mxu0 0
        %7367 = vmatpush1.bf16.msra.mxu0 %v7309
        %7368 = vmatprep.subr.bf16.mxu0 0
        %7369 = vmatpush2.bf16.msra.mxu0 0
        %7370 = vmatprep.subr.bf16.mxu0 0
        %7371 = vmatpush2.bf16.msra.mxu0 0
        %7372 = vmatprep.subr.bf16.mxu0 0
        %7373 = vmatpush2.bf16.msra.mxu0 0
        %7374 = vmatprep.subr.bf16.mxu0 0
        %7375 = vmatpush2.bf16.msra.mxu0 0
        %7376 = vmatprep.subr.bf16.mxu0 0
        %7377 = vmatpush2.bf16.msra.mxu0 0
        %7378 = vmatprep.subr.bf16.mxu0 0
        %7379 = vmatpush2.bf16.msra.mxu0 0
        %7380 = vmatprep.subr.bf16.mxu0 0
        %7381 = vmatpush2.bf16.msra.mxu0 0
        %7382 = vmatprep.subr.bf16.mxu0 0
        %7383 = vmatpush2.bf16.msra.mxu0 0
        %7384 = vmatprep.mubr.bf16.mxu0 0
        %7385 = vmatmul.mubr.bf16.gmra.mxu0 %v1563
        %v7386 = vpop.f32.mrf.mxu0
        %v7387 = vadd.f32 0.0, %v7386
        %v7388 = vpop.f32.mrf.mxu0
        %v7389 = vpop.f32.mrf.mxu0
        %v7390 = vpop.f32.mrf.mxu0
        %7391 = vdwg.mxu0
        %v7392 = vadd.f32 %v7248, %v7346
        %v7393 = vadd.f32 %v7250, %v7348
        %v7394 = vadd.f32 %v7289, %v7387
        %7395 = vrot.lane.b32.xlu0 %v7100, 110
        %v7396 = vpop.permute.xlu0 %7395
        %7397 = vrot.lane.b32.xlu0 %v7101, 110
        %v7398 = vpop.permute.xlu0 %7397
        %7399 = vrot.lane.b32.xlu0 %v7102, 110
        %v7400 = vpop.permute.xlu0 %7399
        %v7401 = vsel %vm657, %v7396, %v7398
        %v7402 = vsel %vm657, %v7398, %v7400
        %v7404 = vsel %vm1370, %v7401, 0
        %v7407 = vsel %vm1370, %v7402, 0
        %v7410 = vsel %vm1370, %v7400, 0
        %7412 = vmatprep.subr.bf16.mxu0 0
        %7413 = vmatpush1.bf16.msra.mxu0 0
        %7414 = vmatprep.subr.bf16.mxu0 0
        %7415 = vmatpush1.bf16.msra.mxu0 0
        %7416 = vmatprep.subr.bf16.mxu0 0
        %7417 = vmatpush1.bf16.msra.mxu0 0
        %7418 = vmatprep.subr.bf16.mxu0 0
        %7419 = vmatpush1.bf16.msra.mxu0 0
        %7420 = vmatprep.subr.bf16.mxu0 0
        %7421 = vmatpush1.bf16.msra.mxu0 0
        %7422 = vmatprep.subr.bf16.mxu0 0
        %7423 = vmatpush1.bf16.msra.mxu0 0
        %7424 = vmatprep.subr.bf16.mxu0 0
        %7425 = vmatpush1.bf16.msra.mxu0 0
        %7426 = vmatprep.subr.bf16.mxu0 %v7407
        %7427 = vmatpush1.bf16.msra.mxu0 %v7404
        %7428 = vmatprep.subr.bf16.mxu0 0
        %7429 = vmatpush2.bf16.msra.mxu0 0
        %7430 = vmatprep.subr.bf16.mxu0 0
        %7431 = vmatpush2.bf16.msra.mxu0 0
        %7432 = vmatprep.subr.bf16.mxu0 0
        %7433 = vmatpush2.bf16.msra.mxu0 0
        %7434 = vmatprep.subr.bf16.mxu0 0
        %7435 = vmatpush2.bf16.msra.mxu0 0
        %7436 = vmatprep.subr.bf16.mxu0 0
        %7437 = vmatpush2.bf16.msra.mxu0 0
        %7438 = vmatprep.subr.bf16.mxu0 0
        %7439 = vmatpush2.bf16.msra.mxu0 0
        %7440 = vmatprep.subr.bf16.mxu0 0
        %7441 = vmatpush2.bf16.msra.mxu0 0
        %7442 = vmatprep.subr.bf16.mxu0 0
        %7443 = vmatpush2.bf16.msra.mxu0 0
        %7444 = vmatprep.mubr.bf16.mxu0 0
        %7445 = vmatmul.mubr.bf16.gmra.mxu0 %v1667
        %v7446 = vpop.f32.mrf.mxu0
        %v7447 = vadd.f32 0.0, %v7446
        %v7448 = vpop.f32.mrf.mxu0
        %v7449 = vadd.f32 0.0, %v7448
        %v7450 = vpop.f32.mrf.mxu0
        %v7451 = vpop.f32.mrf.mxu0
        %7452 = vdwg.mxu0
        %7453 = vmatprep.subr.bf16.mxu0 0
        %7454 = vmatpush1.bf16.msra.mxu0 0
        %7455 = vmatprep.subr.bf16.mxu0 0
        %7456 = vmatpush1.bf16.msra.mxu0 0
        %7457 = vmatprep.subr.bf16.mxu0 0
        %7458 = vmatpush1.bf16.msra.mxu0 0
        %7459 = vmatprep.subr.bf16.mxu0 0
        %7460 = vmatpush1.bf16.msra.mxu0 0
        %7461 = vmatprep.subr.bf16.mxu0 0
        %7462 = vmatpush1.bf16.msra.mxu0 0
        %7463 = vmatprep.subr.bf16.mxu0 0
        %7464 = vmatpush1.bf16.msra.mxu0 0
        %7465 = vmatprep.subr.bf16.mxu0 0
        %7466 = vmatpush1.bf16.msra.mxu0 0
        %7467 = vmatprep.subr.bf16.mxu0 0
        %7468 = vmatpush1.bf16.msra.mxu0 %v7410
        %7469 = vmatprep.subr.bf16.mxu0 0
        %7470 = vmatpush2.bf16.msra.mxu0 0
        %7471 = vmatprep.subr.bf16.mxu0 0
        %7472 = vmatpush2.bf16.msra.mxu0 0
        %7473 = vmatprep.subr.bf16.mxu0 0
        %7474 = vmatpush2.bf16.msra.mxu0 0
        %7475 = vmatprep.subr.bf16.mxu0 0
        %7476 = vmatpush2.bf16.msra.mxu0 0
        %7477 = vmatprep.subr.bf16.mxu0 0
        %7478 = vmatpush2.bf16.msra.mxu0 0
        %7479 = vmatprep.subr.bf16.mxu0 0
        %7480 = vmatpush2.bf16.msra.mxu0 0
        %7481 = vmatprep.subr.bf16.mxu0 0
        %7482 = vmatpush2.bf16.msra.mxu0 0
        %7483 = vmatprep.subr.bf16.mxu0 0
        %7484 = vmatpush2.bf16.msra.mxu0 0
        %7485 = vmatprep.mubr.bf16.mxu0 0
        %7486 = vmatmul.mubr.bf16.gmra.mxu0 %v1667
        %v7487 = vpop.f32.mrf.mxu0
        %v7488 = vadd.f32 0.0, %v7487
        %v7489 = vpop.f32.mrf.mxu0
        %v7490 = vpop.f32.mrf.mxu0
        %v7491 = vpop.f32.mrf.mxu0
        %7492 = vdwg.mxu0
        %v7493 = vadd.f32 %v7392, %v7447
        %v7494 = vadd.f32 %v7393, %v7449
        %v7495 = vadd.f32 %v7394, %v7488
        %7496 = vrot.lane.b32.xlu0 %v7100, 109
        %v7497 = vpop.permute.xlu0 %7496
        %7498 = vrot.lane.b32.xlu0 %v7101, 109
        %v7499 = vpop.permute.xlu0 %7498
        %7500 = vrot.lane.b32.xlu0 %v7102, 109
        %v7501 = vpop.permute.xlu0 %7500
        %v7502 = vsel %vm762, %v7497, %v7499
        %v7503 = vsel %vm762, %v7499, %v7501
        %v7505 = vsel %vm1370, %v7502, 0
        %v7508 = vsel %vm1370, %v7503, 0
        %v7511 = vsel %vm1370, %v7501, 0
        %7513 = vmatprep.subr.bf16.mxu0 0
        %7514 = vmatpush1.bf16.msra.mxu0 0
        %7515 = vmatprep.subr.bf16.mxu0 0
        %7516 = vmatpush1.bf16.msra.mxu0 0
        %7517 = vmatprep.subr.bf16.mxu0 0
        %7518 = vmatpush1.bf16.msra.mxu0 0
        %7519 = vmatprep.subr.bf16.mxu0 0
        %7520 = vmatpush1.bf16.msra.mxu0 0
        %7521 = vmatprep.subr.bf16.mxu0 0
        %7522 = vmatpush1.bf16.msra.mxu0 0
        %7523 = vmatprep.subr.bf16.mxu0 0
        %7524 = vmatpush1.bf16.msra.mxu0 0
        %7525 = vmatprep.subr.bf16.mxu0 0
        %7526 = vmatpush1.bf16.msra.mxu0 0
        %7527 = vmatprep.subr.bf16.mxu0 %v7508
        %7528 = vmatpush1.bf16.msra.mxu0 %v7505
        %7529 = vmatprep.subr.bf16.mxu0 0
        %7530 = vmatpush2.bf16.msra.mxu0 0
        %7531 = vmatprep.subr.bf16.mxu0 0
        %7532 = vmatpush2.bf16.msra.mxu0 0
        %7533 = vmatprep.subr.bf16.mxu0 0
        %7534 = vmatpush2.bf16.msra.mxu0 0
        %7535 = vmatprep.subr.bf16.mxu0 0
        %7536 = vmatpush2.bf16.msra.mxu0 0
        %7537 = vmatprep.subr.bf16.mxu0 0
        %7538 = vmatpush2.bf16.msra.mxu0 0
        %7539 = vmatprep.subr.bf16.mxu0 0
        %7540 = vmatpush2.bf16.msra.mxu0 0
        %7541 = vmatprep.subr.bf16.mxu0 0
        %7542 = vmatpush2.bf16.msra.mxu0 0
        %7543 = vmatprep.subr.bf16.mxu0 0
        %7544 = vmatpush2.bf16.msra.mxu0 0
        %7545 = vmatprep.mubr.bf16.mxu0 0
        %7546 = vmatmul.mubr.bf16.gmra.mxu0 %v1771
        %v7547 = vpop.f32.mrf.mxu0
        %v7548 = vadd.f32 0.0, %v7547
        %v7549 = vpop.f32.mrf.mxu0
        %v7550 = vadd.f32 0.0, %v7549
        %v7551 = vpop.f32.mrf.mxu0
        %v7552 = vpop.f32.mrf.mxu0
        %7553 = vdwg.mxu0
        %7554 = vmatprep.subr.bf16.mxu0 0
        %7555 = vmatpush1.bf16.msra.mxu0 0
        %7556 = vmatprep.subr.bf16.mxu0 0
        %7557 = vmatpush1.bf16.msra.mxu0 0
        %7558 = vmatprep.subr.bf16.mxu0 0
        %7559 = vmatpush1.bf16.msra.mxu0 0
        %7560 = vmatprep.subr.bf16.mxu0 0
        %7561 = vmatpush1.bf16.msra.mxu0 0
        %7562 = vmatprep.subr.bf16.mxu0 0
        %7563 = vmatpush1.bf16.msra.mxu0 0
        %7564 = vmatprep.subr.bf16.mxu0 0
        %7565 = vmatpush1.bf16.msra.mxu0 0
        %7566 = vmatprep.subr.bf16.mxu0 0
        %7567 = vmatpush1.bf16.msra.mxu0 0
        %7568 = vmatprep.subr.bf16.mxu0 0
        %7569 = vmatpush1.bf16.msra.mxu0 %v7511
        %7570 = vmatprep.subr.bf16.mxu0 0
        %7571 = vmatpush2.bf16.msra.mxu0 0
        %7572 = vmatprep.subr.bf16.mxu0 0
        %7573 = vmatpush2.bf16.msra.mxu0 0
        %7574 = vmatprep.subr.bf16.mxu0 0
        %7575 = vmatpush2.bf16.msra.mxu0 0
        %7576 = vmatprep.subr.bf16.mxu0 0
        %7577 = vmatpush2.bf16.msra.mxu0 0
        %7578 = vmatprep.subr.bf16.mxu0 0
        %7579 = vmatpush2.bf16.msra.mxu0 0
        %7580 = vmatprep.subr.bf16.mxu0 0
        %7581 = vmatpush2.bf16.msra.mxu0 0
        %7582 = vmatprep.subr.bf16.mxu0 0
        %7583 = vmatpush2.bf16.msra.mxu0 0
        %7584 = vmatprep.subr.bf16.mxu0 0
        %7585 = vmatpush2.bf16.msra.mxu0 0
        %7586 = vmatprep.mubr.bf16.mxu0 0
        %7587 = vmatmul.mubr.bf16.gmra.mxu0 %v1771
        %v7588 = vpop.f32.mrf.mxu0
        %v7589 = vadd.f32 0.0, %v7588
        %v7590 = vpop.f32.mrf.mxu0
        %v7591 = vpop.f32.mrf.mxu0
        %v7592 = vpop.f32.mrf.mxu0
        %7593 = vdwg.mxu0
        %v7594 = vadd.f32 %v7493, %v7548
        %v7595 = vadd.f32 %v7494, %v7550
        %v7596 = vadd.f32 %v7495, %v7589
        %7597 = vrot.lane.b32.xlu0 %v7100, 108
        %v7598 = vpop.permute.xlu0 %7597
        %7599 = vrot.lane.b32.xlu0 %v7101, 108
        %v7600 = vpop.permute.xlu0 %7599
        %7601 = vrot.lane.b32.xlu0 %v7102, 108
        %v7602 = vpop.permute.xlu0 %7601
        %v7603 = vsel %vm867, %v7598, %v7600
        %v7604 = vsel %vm867, %v7600, %v7602
        %v7606 = vsel %vm1370, %v7603, 0
        %v7609 = vsel %vm1370, %v7604, 0
        %v7612 = vsel %vm1370, %v7602, 0
        %7614 = vmatprep.subr.bf16.mxu0 0
        %7615 = vmatpush1.bf16.msra.mxu0 0
        %7616 = vmatprep.subr.bf16.mxu0 0
        %7617 = vmatpush1.bf16.msra.mxu0 0
        %7618 = vmatprep.subr.bf16.mxu0 0
        %7619 = vmatpush1.bf16.msra.mxu0 0
        %7620 = vmatprep.subr.bf16.mxu0 0
        %7621 = vmatpush1.bf16.msra.mxu0 0
        %7622 = vmatprep.subr.bf16.mxu0 0
        %7623 = vmatpush1.bf16.msra.mxu0 0
        %7624 = vmatprep.subr.bf16.mxu0 0
        %7625 = vmatpush1.bf16.msra.mxu0 0
        %7626 = vmatprep.subr.bf16.mxu0 0
        %7627 = vmatpush1.bf16.msra.mxu0 0
        %7628 = vmatprep.subr.bf16.mxu0 %v7609
        %7629 = vmatpush1.bf16.msra.mxu0 %v7606
        %7630 = vmatprep.subr.bf16.mxu0 0
        %7631 = vmatpush2.bf16.msra.mxu0 0
        %7632 = vmatprep.subr.bf16.mxu0 0
        %7633 = vmatpush2.bf16.msra.mxu0 0
        %7634 = vmatprep.subr.bf16.mxu0 0
        %7635 = vmatpush2.bf16.msra.mxu0 0
        %7636 = vmatprep.subr.bf16.mxu0 0
        %7637 = vmatpush2.bf16.msra.mxu0 0
        %7638 = vmatprep.subr.bf16.mxu0 0
        %7639 = vmatpush2.bf16.msra.mxu0 0
        %7640 = vmatprep.subr.bf16.mxu0 0
        %7641 = vmatpush2.bf16.msra.mxu0 0
        %7642 = vmatprep.subr.bf16.mxu0 0
        %7643 = vmatpush2.bf16.msra.mxu0 0
        %7644 = vmatprep.subr.bf16.mxu0 0
        %7645 = vmatpush2.bf16.msra.mxu0 0
        %7646 = vmatprep.mubr.bf16.mxu0 0
        %7647 = vmatmul.mubr.bf16.gmra.mxu0 %v1875
        %v7648 = vpop.f32.mrf.mxu0
        %v7649 = vadd.f32 0.0, %v7648
        %v7650 = vpop.f32.mrf.mxu0
        %v7651 = vadd.f32 0.0, %v7650
        %v7652 = vpop.f32.mrf.mxu0
        %v7653 = vpop.f32.mrf.mxu0
        %7654 = vdwg.mxu0
        %7655 = vmatprep.subr.bf16.mxu0 0
        %7656 = vmatpush1.bf16.msra.mxu0 0
        %7657 = vmatprep.subr.bf16.mxu0 0
        %7658 = vmatpush1.bf16.msra.mxu0 0
        %7659 = vmatprep.subr.bf16.mxu0 0
        %7660 = vmatpush1.bf16.msra.mxu0 0
        %7661 = vmatprep.subr.bf16.mxu0 0
        %7662 = vmatpush1.bf16.msra.mxu0 0
        %7663 = vmatprep.subr.bf16.mxu0 0
        %7664 = vmatpush1.bf16.msra.mxu0 0
        %7665 = vmatprep.subr.bf16.mxu0 0
        %7666 = vmatpush1.bf16.msra.mxu0 0
        %7667 = vmatprep.subr.bf16.mxu0 0
        %7668 = vmatpush1.bf16.msra.mxu0 0
        %7669 = vmatprep.subr.bf16.mxu0 0
        %7670 = vmatpush1.bf16.msra.mxu0 %v7612
        %7671 = vmatprep.subr.bf16.mxu0 0
        %7672 = vmatpush2.bf16.msra.mxu0 0
        %7673 = vmatprep.subr.bf16.mxu0 0
        %7674 = vmatpush2.bf16.msra.mxu0 0
        %7675 = vmatprep.subr.bf16.mxu0 0
        %7676 = vmatpush2.bf16.msra.mxu0 0
        %7677 = vmatprep.subr.bf16.mxu0 0
        %7678 = vmatpush2.bf16.msra.mxu0 0
        %7679 = vmatprep.subr.bf16.mxu0 0
        %7680 = vmatpush2.bf16.msra.mxu0 0
        %7681 = vmatprep.subr.bf16.mxu0 0
        %7682 = vmatpush2.bf16.msra.mxu0 0
        %7683 = vmatprep.subr.bf16.mxu0 0
        %7684 = vmatpush2.bf16.msra.mxu0 0
        %7685 = vmatprep.subr.bf16.mxu0 0
        %7686 = vmatpush2.bf16.msra.mxu0 0
        %7687 = vmatprep.mubr.bf16.mxu0 0
        %7688 = vmatmul.mubr.bf16.gmra.mxu0 %v1875
        %v7689 = vpop.f32.mrf.mxu0
        %v7690 = vadd.f32 0.0, %v7689
        %v7691 = vpop.f32.mrf.mxu0
        %v7692 = vpop.f32.mrf.mxu0
        %v7693 = vpop.f32.mrf.mxu0
        %7694 = vdwg.mxu0
        %v7695 = vadd.f32 %v7594, %v7649
        %v7696 = vadd.f32 %v7595, %v7651
        %v7697 = vadd.f32 %v7596, %v7690
        %7698 = vrot.lane.b32.xlu0 %v7100, 92
        %v7699 = vpop.permute.xlu0 %7698
        %7700 = vrot.lane.b32.xlu0 %v7101, 92
        %v7701 = vpop.permute.xlu0 %7700
        %7702 = vrot.lane.b32.xlu0 %v7102, 92
        %v7703 = vpop.permute.xlu0 %7702
        %v7704 = vsel %vm972, %v7699, %v7701
        %v7705 = vsel %vm972, %v7701, %v7703
        %v7707 = vsel %vm1370, %v7704, 0
        %v7710 = vsel %vm1370, %v7705, 0
        %v7713 = vsel %vm1370, %v7703, 0
        %7715 = vmatprep.subr.bf16.mxu0 0
        %7716 = vmatpush1.bf16.msra.mxu0 0
        %7717 = vmatprep.subr.bf16.mxu0 0
        %7718 = vmatpush1.bf16.msra.mxu0 0
        %7719 = vmatprep.subr.bf16.mxu0 0
        %7720 = vmatpush1.bf16.msra.mxu0 0
        %7721 = vmatprep.subr.bf16.mxu0 0
        %7722 = vmatpush1.bf16.msra.mxu0 0
        %7723 = vmatprep.subr.bf16.mxu0 0
        %7724 = vmatpush1.bf16.msra.mxu0 0
        %7725 = vmatprep.subr.bf16.mxu0 0
        %7726 = vmatpush1.bf16.msra.mxu0 0
        %7727 = vmatprep.subr.bf16.mxu0 0
        %7728 = vmatpush1.bf16.msra.mxu0 0
        %7729 = vmatprep.subr.bf16.mxu0 %v7710
        %7730 = vmatpush1.bf16.msra.mxu0 %v7707
        %7731 = vmatprep.subr.bf16.mxu0 0
        %7732 = vmatpush2.bf16.msra.mxu0 0
        %7733 = vmatprep.subr.bf16.mxu0 0
        %7734 = vmatpush2.bf16.msra.mxu0 0
        %7735 = vmatprep.subr.bf16.mxu0 0
        %7736 = vmatpush2.bf16.msra.mxu0 0
        %7737 = vmatprep.subr.bf16.mxu0 0
        %7738 = vmatpush2.bf16.msra.mxu0 0
        %7739 = vmatprep.subr.bf16.mxu0 0
        %7740 = vmatpush2.bf16.msra.mxu0 0
        %7741 = vmatprep.subr.bf16.mxu0 0
        %7742 = vmatpush2.bf16.msra.mxu0 0
        %7743 = vmatprep.subr.bf16.mxu0 0
        %7744 = vmatpush2.bf16.msra.mxu0 0
        %7745 = vmatprep.subr.bf16.mxu0 0
        %7746 = vmatpush2.bf16.msra.mxu0 0
        %7747 = vmatprep.mubr.bf16.mxu0 0
        %7748 = vmatmul.mubr.bf16.gmra.mxu0 %v1979
        %v7749 = vpop.f32.mrf.mxu0
        %v7750 = vadd.f32 0.0, %v7749
        %v7751 = vpop.f32.mrf.mxu0
        %v7752 = vadd.f32 0.0, %v7751
        %v7753 = vpop.f32.mrf.mxu0
        %v7754 = vpop.f32.mrf.mxu0
        %7755 = vdwg.mxu0
        %7756 = vmatprep.subr.bf16.mxu0 0
        %7757 = vmatpush1.bf16.msra.mxu0 0
        %7758 = vmatprep.subr.bf16.mxu0 0
        %7759 = vmatpush1.bf16.msra.mxu0 0
        %7760 = vmatprep.subr.bf16.mxu0 0
        %7761 = vmatpush1.bf16.msra.mxu0 0
        %7762 = vmatprep.subr.bf16.mxu0 0
        %7763 = vmatpush1.bf16.msra.mxu0 0
        %7764 = vmatprep.subr.bf16.mxu0 0
        %7765 = vmatpush1.bf16.msra.mxu0 0
        %7766 = vmatprep.subr.bf16.mxu0 0
        %7767 = vmatpush1.bf16.msra.mxu0 0
        %7768 = vmatprep.subr.bf16.mxu0 0
        %7769 = vmatpush1.bf16.msra.mxu0 0
        %7770 = vmatprep.subr.bf16.mxu0 0
        %7771 = vmatpush1.bf16.msra.mxu0 %v7713
        %7772 = vmatprep.subr.bf16.mxu0 0
        %7773 = vmatpush2.bf16.msra.mxu0 0
        %7774 = vmatprep.subr.bf16.mxu0 0
        %7775 = vmatpush2.bf16.msra.mxu0 0
        %7776 = vmatprep.subr.bf16.mxu0 0
        %7777 = vmatpush2.bf16.msra.mxu0 0
        %7778 = vmatprep.subr.bf16.mxu0 0
        %7779 = vmatpush2.bf16.msra.mxu0 0
        %7780 = vmatprep.subr.bf16.mxu0 0
        %7781 = vmatpush2.bf16.msra.mxu0 0
        %7782 = vmatprep.subr.bf16.mxu0 0
        %7783 = vmatpush2.bf16.msra.mxu0 0
        %7784 = vmatprep.subr.bf16.mxu0 0
        %7785 = vmatpush2.bf16.msra.mxu0 0
        %7786 = vmatprep.subr.bf16.mxu0 0
        %7787 = vmatpush2.bf16.msra.mxu0 0
        %7788 = vmatprep.mubr.bf16.mxu0 0
        %7789 = vmatmul.mubr.bf16.gmra.mxu0 %v1979
        %v7790 = vpop.f32.mrf.mxu0
        %v7791 = vadd.f32 0.0, %v7790
        %v7792 = vpop.f32.mrf.mxu0
        %v7793 = vpop.f32.mrf.mxu0
        %v7794 = vpop.f32.mrf.mxu0
        %7795 = vdwg.mxu0
        %v7796 = vadd.f32 %v7695, %v7750
        %v7797 = vadd.f32 %v7696, %v7752
        %v7798 = vadd.f32 %v7697, %v7791
        %7799 = vrot.lane.b32.xlu0 %v7100, 91
        %v7800 = vpop.permute.xlu0 %7799
        %7801 = vrot.lane.b32.xlu0 %v7101, 91
        %v7802 = vpop.permute.xlu0 %7801
        %7803 = vrot.lane.b32.xlu0 %v7102, 91
        %v7804 = vpop.permute.xlu0 %7803
        %v7805 = vsel %vm1077, %v7800, %v7802
        %v7806 = vsel %vm1077, %v7802, %v7804
        %v7808 = vsel %vm1370, %v7805, 0
        %v7811 = vsel %vm1370, %v7806, 0
        %v7814 = vsel %vm1370, %v7804, 0
        %7816 = vmatprep.subr.bf16.mxu0 0
        %7817 = vmatpush1.bf16.msra.mxu0 0
        %7818 = vmatprep.subr.bf16.mxu0 0
        %7819 = vmatpush1.bf16.msra.mxu0 0
        %7820 = vmatprep.subr.bf16.mxu0 0
        %7821 = vmatpush1.bf16.msra.mxu0 0
        %7822 = vmatprep.subr.bf16.mxu0 0
        %7823 = vmatpush1.bf16.msra.mxu0 0
        %7824 = vmatprep.subr.bf16.mxu0 0
        %7825 = vmatpush1.bf16.msra.mxu0 0
        %7826 = vmatprep.subr.bf16.mxu0 0
        %7827 = vmatpush1.bf16.msra.mxu0 0
        %7828 = vmatprep.subr.bf16.mxu0 0
        %7829 = vmatpush1.bf16.msra.mxu0 0
        %7830 = vmatprep.subr.bf16.mxu0 %v7811
        %7831 = vmatpush1.bf16.msra.mxu0 %v7808
        %7832 = vmatprep.subr.bf16.mxu0 0
        %7833 = vmatpush2.bf16.msra.mxu0 0
        %7834 = vmatprep.subr.bf16.mxu0 0
        %7835 = vmatpush2.bf16.msra.mxu0 0
        %7836 = vmatprep.subr.bf16.mxu0 0
        %7837 = vmatpush2.bf16.msra.mxu0 0
        %7838 = vmatprep.subr.bf16.mxu0 0
        %7839 = vmatpush2.bf16.msra.mxu0 0
        %7840 = vmatprep.subr.bf16.mxu0 0
        %7841 = vmatpush2.bf16.msra.mxu0 0
        %7842 = vmatprep.subr.bf16.mxu0 0
        %7843 = vmatpush2.bf16.msra.mxu0 0
        %7844 = vmatprep.subr.bf16.mxu0 0
        %7845 = vmatpush2.bf16.msra.mxu0 0
        %7846 = vmatprep.subr.bf16.mxu0 0
        %7847 = vmatpush2.bf16.msra.mxu0 0
        %7848 = vmatprep.mubr.bf16.mxu0 0
        %7849 = vmatmul.mubr.bf16.gmra.mxu0 %v2083
        %v7850 = vpop.f32.mrf.mxu0
        %v7851 = vadd.f32 0.0, %v7850
        %v7852 = vpop.f32.mrf.mxu0
        %v7853 = vadd.f32 0.0, %v7852
        %v7854 = vpop.f32.mrf.mxu0
        %v7855 = vpop.f32.mrf.mxu0
        %7856 = vdwg.mxu0
        %7857 = vmatprep.subr.bf16.mxu0 0
        %7858 = vmatpush1.bf16.msra.mxu0 0
        %7859 = vmatprep.subr.bf16.mxu0 0
        %7860 = vmatpush1.bf16.msra.mxu0 0
        %7861 = vmatprep.subr.bf16.mxu0 0
        %7862 = vmatpush1.bf16.msra.mxu0 0
        %7863 = vmatprep.subr.bf16.mxu0 0
        %7864 = vmatpush1.bf16.msra.mxu0 0
        %7865 = vmatprep.subr.bf16.mxu0 0
        %7866 = vmatpush1.bf16.msra.mxu0 0
        %7867 = vmatprep.subr.bf16.mxu0 0
        %7868 = vmatpush1.bf16.msra.mxu0 0
        %7869 = vmatprep.subr.bf16.mxu0 0
        %7870 = vmatpush1.bf16.msra.mxu0 0
        %7871 = vmatprep.subr.bf16.mxu0 0
        %7872 = vmatpush1.bf16.msra.mxu0 %v7814
        %7873 = vmatprep.subr.bf16.mxu0 0
        %7874 = vmatpush2.bf16.msra.mxu0 0
        %7875 = vmatprep.subr.bf16.mxu0 0
        %7876 = vmatpush2.bf16.msra.mxu0 0
        %7877 = vmatprep.subr.bf16.mxu0 0
        %7878 = vmatpush2.bf16.msra.mxu0 0
        %7879 = vmatprep.subr.bf16.mxu0 0
        %7880 = vmatpush2.bf16.msra.mxu0 0
        %7881 = vmatprep.subr.bf16.mxu0 0
        %7882 = vmatpush2.bf16.msra.mxu0 0
        %7883 = vmatprep.subr.bf16.mxu0 0
        %7884 = vmatpush2.bf16.msra.mxu0 0
        %7885 = vmatprep.subr.bf16.mxu0 0
        %7886 = vmatpush2.bf16.msra.mxu0 0
        %7887 = vmatprep.subr.bf16.mxu0 0
        %7888 = vmatpush2.bf16.msra.mxu0 0
        %7889 = vmatprep.mubr.bf16.mxu0 0
        %7890 = vmatmul.mubr.bf16.gmra.mxu0 %v2083
        %v7891 = vpop.f32.mrf.mxu0
        %v7892 = vadd.f32 0.0, %v7891
        %v7893 = vpop.f32.mrf.mxu0
        %v7894 = vpop.f32.mrf.mxu0
        %v7895 = vpop.f32.mrf.mxu0
        %7896 = vdwg.mxu0
        %v7897 = vadd.f32 %v7796, %v7851
        %v7898 = vadd.f32 %v7797, %v7853
        %v7899 = vadd.f32 %v7798, %v7892
        %7900 = vrot.lane.b32.xlu0 %v7100, 90
        %v7901 = vpop.permute.xlu0 %7900
        %7902 = vrot.lane.b32.xlu0 %v7101, 90
        %v7903 = vpop.permute.xlu0 %7902
        %7904 = vrot.lane.b32.xlu0 %v7102, 90
        %v7905 = vpop.permute.xlu0 %7904
        %v7906 = vsel %vm1182, %v7901, %v7903
        %v7907 = vsel %vm1182, %v7903, %v7905
        %v7909 = vsel %vm1370, %v7906, 0
        %v7912 = vsel %vm1370, %v7907, 0
        %v7915 = vsel %vm1370, %v7905, 0
        %7917 = vmatprep.subr.bf16.mxu0 0
        %7918 = vmatpush1.bf16.msra.mxu0 0
        %7919 = vmatprep.subr.bf16.mxu0 0
        %7920 = vmatpush1.bf16.msra.mxu0 0
        %7921 = vmatprep.subr.bf16.mxu0 0
        %7922 = vmatpush1.bf16.msra.mxu0 0
        %7923 = vmatprep.subr.bf16.mxu0 0
        %7924 = vmatpush1.bf16.msra.mxu0 0
        %7925 = vmatprep.subr.bf16.mxu0 0
        %7926 = vmatpush1.bf16.msra.mxu0 0
        %7927 = vmatprep.subr.bf16.mxu0 0
        %7928 = vmatpush1.bf16.msra.mxu0 0
        %7929 = vmatprep.subr.bf16.mxu0 0
        %7930 = vmatpush1.bf16.msra.mxu0 0
        %7931 = vmatprep.subr.bf16.mxu0 %v7912
        %7932 = vmatpush1.bf16.msra.mxu0 %v7909
        %7933 = vmatprep.subr.bf16.mxu0 0
        %7934 = vmatpush2.bf16.msra.mxu0 0
        %7935 = vmatprep.subr.bf16.mxu0 0
        %7936 = vmatpush2.bf16.msra.mxu0 0
        %7937 = vmatprep.subr.bf16.mxu0 0
        %7938 = vmatpush2.bf16.msra.mxu0 0
        %7939 = vmatprep.subr.bf16.mxu0 0
        %7940 = vmatpush2.bf16.msra.mxu0 0
        %7941 = vmatprep.subr.bf16.mxu0 0
        %7942 = vmatpush2.bf16.msra.mxu0 0
        %7943 = vmatprep.subr.bf16.mxu0 0
        %7944 = vmatpush2.bf16.msra.mxu0 0
        %7945 = vmatprep.subr.bf16.mxu0 0
        %7946 = vmatpush2.bf16.msra.mxu0 0
        %7947 = vmatprep.subr.bf16.mxu0 0
        %7948 = vmatpush2.bf16.msra.mxu0 0
        %7949 = vmatprep.mubr.bf16.mxu0 0
        %7950 = vmatmul.mubr.bf16.gmra.mxu0 %v2187
        %v7951 = vpop.f32.mrf.mxu0
        %v7952 = vadd.f32 0.0, %v7951
        %v7953 = vpop.f32.mrf.mxu0
        %v7954 = vadd.f32 0.0, %v7953
        %v7955 = vpop.f32.mrf.mxu0
        %v7956 = vpop.f32.mrf.mxu0
        %7957 = vdwg.mxu0
        %7958 = vmatprep.subr.bf16.mxu0 0
        %7959 = vmatpush1.bf16.msra.mxu0 0
        %7960 = vmatprep.subr.bf16.mxu0 0
        %7961 = vmatpush1.bf16.msra.mxu0 0
        %7962 = vmatprep.subr.bf16.mxu0 0
        %7963 = vmatpush1.bf16.msra.mxu0 0
        %7964 = vmatprep.subr.bf16.mxu0 0
        %7965 = vmatpush1.bf16.msra.mxu0 0
        %7966 = vmatprep.subr.bf16.mxu0 0
        %7967 = vmatpush1.bf16.msra.mxu0 0
        %7968 = vmatprep.subr.bf16.mxu0 0
        %7969 = vmatpush1.bf16.msra.mxu0 0
        %7970 = vmatprep.subr.bf16.mxu0 0
        %7971 = vmatpush1.bf16.msra.mxu0 0
        %7972 = vmatprep.subr.bf16.mxu0 0
        %7973 = vmatpush1.bf16.msra.mxu0 %v7915
        %7974 = vmatprep.subr.bf16.mxu0 0
        %7975 = vmatpush2.bf16.msra.mxu0 0
        %7976 = vmatprep.subr.bf16.mxu0 0
        %7977 = vmatpush2.bf16.msra.mxu0 0
        %7978 = vmatprep.subr.bf16.mxu0 0
        %7979 = vmatpush2.bf16.msra.mxu0 0
        %7980 = vmatprep.subr.bf16.mxu0 0
        %7981 = vmatpush2.bf16.msra.mxu0 0
        %7982 = vmatprep.subr.bf16.mxu0 0
        %7983 = vmatpush2.bf16.msra.mxu0 0
        %7984 = vmatprep.subr.bf16.mxu0 0
        %7985 = vmatpush2.bf16.msra.mxu0 0
        %7986 = vmatprep.subr.bf16.mxu0 0
        %7987 = vmatpush2.bf16.msra.mxu0 0
        %7988 = vmatprep.subr.bf16.mxu0 0
        %7989 = vmatpush2.bf16.msra.mxu0 0
        %7990 = vmatprep.mubr.bf16.mxu0 0
        %7991 = vmatmul.mubr.bf16.gmra.mxu0 %v2187
        %v7992 = vpop.f32.mrf.mxu0
        %v7993 = vadd.f32 0.0, %v7992
        %v7994 = vpop.f32.mrf.mxu0
        %v7995 = vpop.f32.mrf.mxu0
        %v7996 = vpop.f32.mrf.mxu0
        %7997 = vdwg.mxu0
        %v7998 = vadd.f32 %v7897, %v7952
        %v7999 = vadd.f32 %v7898, %v7954
        %v8000 = vadd.f32 %v7899, %v7993
        %v8001 = vadd.f32 %v7998, %v2285
        %v8002 = vadd.f32 %v7999, %v2285
        %v8003 = vadd.f32 %v8000, %v2285
        %v8007 = vcombine.low %v8001, %v8002
        %8008 = vrot.lane.b32.xlu0 %v8007, 19
        %v8009 = vpop.permute.xlu0 %8008
        %8010 = vrot.lane.b32.xlu0 %v8003, 19
        %v8011 = vpop.permute.xlu0 %8010
        %v8012 = vrot.slane %v8009, 4
        %v8013 = vsel %vm1338, %v8012, %v8009
        %v8014 = vsel %vm1338, %v8012, %v8011
        %v8017 = vadd.f32 %v6150, %v8013
        %v8018 = vadd.f32 %v6151, %v8014
        %v8019 = vsub.f32 %v8017, %v6132
        %v8020 = vsub.f32 %v8018, %v6133
        %v8021 = vmul.f32 %v8019, 0.5
        %v8022 = vmul.f32 %v8020, 0.5
        %v8023 = vadd.f32 %v6132, %v8021
        %v8024 = vadd.f32 %v6133, %v8022
        %vm8025 = vcmp.ge.f32.partialorder %v8023, 1.0
        %vm8026 = vcmp.ge.f32.partialorder %v8024, 1.0
        %v8027 = vsel %vm8025, 1, 0
        %v8028 = vsel %vm8026, 1, 0
        %v8029 = vcvt.s32.f32 %v8027
        %v8030 = vcvt.s32.f32 %v8028
        %8033 = vrot.lane.b32.xlu0 %v8029, 109
        %v8034 = vpop.permute.xlu0 %8033
        %8035 = vrot.lane.b32.xlu0 %v8030, 109
        %v8036 = vpop.permute.xlu0 %8035
        %v8037 = vrot.slane %v8034, 4
        %v8038 = vrot.slane %v8036, 4
        %v8039 = vsel %vm1370, %v8037, %v8038
        %v8040 = vsel %vm2328, %v8034, %v8039
        %s8043 = scalar_lea.vmem %s293, 36 [#allocation4]
        %8044 = vst [vmem:[%s8043] sm:$0xff] %v8040
        %8045 = vst.msk [vmem:[%s8043 + $0x8] sm:$0xf] %vm2333, %v8036
        %s8046 = sand.u32 %s159, 1
        %s8047 = scalar_lea.sflag [#allocation5], %s8046
        %s8048 = sand.u32 %s159, 1
        %s8049 = smul.addr %s8048, 48
        %s8050 = scalar_lea.vmem [#allocation4], %s8049
        // Predicated region
        $region71: #{tpu_custom_call.1} parent=65 // pred_check
          %p8051 = pneg %p169
        $region72: #{tpu_custom_call.1} parent=65 // pred_check_branch
          %8053 = sbr.rel (%p8051) target = $region74
        $region73: #{tpu_custom_call.1} parent=65 // pred_region
          %s8055 = ssub.s32 768, 768
          %8056 = vsyncadd %s8047, %s8055
          %s8057 = smul.addr %s20, 3
          %s8058 = smul.addr %s8057, 64
          %s8059 = scalar_lea.hbm %s6, %s8058
          %s8060 = sshll.u32 %s8050, 4
          %s8061 = int_to_ptr.vmem [resolvable:$true] %s8060
          %8066 = dma.vmem_to_hbm [thread:$0]  %s8061, 768, %s8059, %s8047, 192, 384, 12
        $region74: #{tpu_custom_call.1} parent=65 // pred_fallthru
          _
      $region66: #{tpu_custom_call.1} parent=5 // pred_fallthru
        _
      %p8067 = scmp.le.s32.totalorder 2, %s15
      // Predicated region
      $region75: #{tpu_custom_call.1} parent=5 // pred_check
        %p8068 = pneg %p8067
      $region76: #{tpu_custom_call.1} parent=5 // pred_check_branch
        %8070 = sbr.rel (%p8068) target = $region78
      $region77: #{tpu_custom_call.1} parent=5 // pred_region
        %s8071 = ssub.s32 %s15, 2
        // Predicated region
        $region79: #{tpu_custom_call.1} parent=77 // pred_check
          %p8072 = pneg %p175
        $region80: #{tpu_custom_call.1} parent=77 // pred_check_branch
          %8074 = sbr.rel (%p8072) target = $region82
        $region81: #{tpu_custom_call.1} parent=77 // pred_region
          %s8075 = sand.u32 %s160, 1
          %s8076 = scalar_lea.sflag [#allocation5], %s8075
          %s8077 = sand.u32 %s160, 1
          %s8078 = smul.addr %s8077, 48
          %s8079 = scalar_lea.vmem [#allocation4], %s8078
          %8080 = dma.done %s8076, 768
        $region82: #{tpu_custom_call.1} parent=77 // pred_fallthru
          _
      $region78: #{tpu_custom_call.1} parent=5 // pred_fallthru
        _
    $region6: #{tpu_custom_call.1} parent=1 // loop_footer
      %s19 = sadd.s32 1, %s15
    $region7: #{tpu_custom_call.1} parent=1 // loop_footer_branch
      %14 = sbr.rel target = $region3
    $region8: #{tpu_custom_call.1} parent=1 // loop_exit
      _
    %8081 = vsyncpa [#allocation5], 1
    %s8082 = scalar_lea.sflag [#allocation5], 1
    %8083 = vsyncpa %s8082, 1

</llo_original>
